<compile_context>
chip_gen: v7x
topology: tpu7x:2x2x1
jax: 0.10.0
libtpu: 0.0.40
codegen_flags: <defaults>
</compile_context>

<pallas_src>
import jax
import jax.numpy as jnp
from jax.experimental import pallas as pl
from jax.experimental.pallas import tpu as pltpu


NEG_SLOPE = 0.1   # nn.LeakyReLU(0.1)
BN_EPS = 1e-5     # PyTorch BatchNorm default eps


# ----------------------------------------------------------------------------
# Shared math helpers (used both in-kernel and in the pure-JAX reference)
# ----------------------------------------------------------------------------
def _leaky(y, ns=NEG_SLOPE):
    return jnp.where(y >= 0.0, y, ns * y)


def _bn_cols(y, gamma, beta, eps=BN_EPS):
    # Per-column batch norm over ALL rows of y (training-mode batch stats,
    # biased variance), matching PyTorch BatchNorm1d/2d in train mode.
    mean = jnp.mean(y, axis=0, keepdims=True)
    d = y - mean
    var = jnp.mean(d * d, axis=0, keepdims=True)
    inv = jax.lax.rsqrt(var + eps)
    return d * inv * gamma + beta


# ----------------------------------------------------------------------------
# Kernel bodies
# ----------------------------------------------------------------------------
def _conv1_kernel(x_ref, w_ref, b_ref, o_ref):
    # Conv1 (as im2col matmul): matmul + bias + LeakyReLU(0.1).
    y = jnp.dot(x_ref[...], w_ref[...], preferred_element_type=jnp.float32)
    o_ref[...] = _leaky(y + b_ref[...]).astype(o_ref.dtype)


def _conv2_kernel(x_ref, w_ref, vec_ref, o_ref):
    # Conv2 (as im2col matmul): matmul + bias + LeakyReLU(0.1) + BatchNorm2d.
    # vec_ref rows: [bias, gamma, beta]  (single stacked operand -> one DMA).
    y = jnp.dot(x_ref[...], w_ref[...], preferred_element_type=jnp.float32)
    y = _leaky(y + vec_ref[0:1, :])
    o_ref[...] = _bn_cols(y, vec_ref[1:2, :], vec_ref[2:3, :]).astype(o_ref.dtype)


def _fc1_heads_kernel(x_ref, w_ref, vec_ref, hw_ref, hvec_ref, o_ref):
    # fc1 (Linear 6272->1024 + LeakyReLU + BatchNorm1d) fused with all three
    # output heads.  Grid axis j walks 256-column blocks of the fc1 output;
    # each step contributes its partial (M, 13) heads pre-activation, which
    # accumulates directly in the resident output block.  The heads epilogue
    # (sigmoid | BN+LeakyReLU) runs on the last step, on f32 values.
    j = pl.program_id(0)

    @pl.when(j == 0)
    def _():
        o_ref[...] = jnp.zeros_like(o_ref)

    # fc1 column block: full-K matmul, bias, LeakyReLU, BatchNorm1d (batch
    # statistics are per-column, so they are exact within a column block).
    y = jnp.dot(x_ref[...], w_ref[...], preferred_element_type=jnp.float32)
    y = _leaky(y + vec_ref[0:1, :])
    y = _bn_cols(y, vec_ref[1:2, :], vec_ref[2:3, :])

    # Partial heads pre-activation for this 256-column block (f32 matmul).
    o_ref[...] += jnp.dot(y, hw_ref[...].astype(jnp.float32),
                          preferred_element_type=jnp.float32)

    @pl.when(j == pl.num_programs(0) - 1)
    def _():
        # hvec rows: [bias, gamma, beta]; columns = [disc(1)|type(2)|class(10)]
        z = o_ref[...] + hvec_ref[0:1, :]
        z_sig = 0.5 * (jnp.tanh(0.5 * z) + 1.0)            # sigmoid via EUP tanh
        z_bn = _leaky(_bn_cols(z, hvec_ref[1:2, :], hvec_ref[2:3, :]))
        col = jax.lax.broadcasted_iota(jnp.int32, z.shape, 1)
        o_ref[...] = jnp.where(col == 0, z_sig, z_bn)


# ----------------------------------------------------------------------------
# pallas_call wrappers
# ----------------------------------------------------------------------------
def _single_tile_call(kernel, out_dtype, x, w, *extras):
    """One grid step; every operand is a full-array block."""
    M, _ = x.shape
    _, N = w.shape
    return pl.pallas_call(
        kernel,
        out_shape=jax.ShapeDtypeStruct((M, N), out_dtype),
        grid_spec=pltpu.PrefetchScalarGridSpec(
            num_scalar_prefetch=0,
            grid=(1,),
            in_specs=[pl.BlockSpec(x.shape, lambda i: (0, 0)),
                      pl.BlockSpec(w.shape, lambda i: (0, 0))]
                     + [pl.BlockSpec(e.shape, lambda i: (0, 0)) for e in extras],
            out_specs=pl.BlockSpec((M, N), lambda i: (0, 0)),
        ),
    )(x, w, *extras)


def fc1_heads_fused(x, w, vec, hw, hvec, *, tn=256):
    """out(M,13) = heads(BN(LeakyReLU(x @ w + b))) with heads columns
    [sigmoid disc | BN+LeakyReLU type | BN+LeakyReLU class].

    x:(M,6272) bf16, w:(6272,1024) bf16, vec:(3,1024) f32 [b,g,beta],
    hw:(1024,13) bf16, hvec:(3,13) f32.

    tn=256 keeps the double-buffered weight block at ~6.2 MiB (safe on every
    TPU generation's default scoped VMEM); raise to 512 (v7x) / 1024 (v6e)
    if tuning per generation.  The j axis is a reduction for the heads
    accumulator, hence "arbitrary".
    """
    M, K = x.shape
    _, N = w.shape
    NH = hw.shape[1]
    assert N % tn == 0
    assert M == x.shape[0]  # heads BN uses whole-batch stats: M must be full batch
    return pl.pallas_call(
        _fc1_heads_kernel,
        out_shape=jax.ShapeDtypeStruct((M, NH), jnp.float32),
        grid_spec=pltpu.PrefetchScalarGridSpec(
            num_scalar_prefetch=0,
            grid=(N // tn,),
            in_specs=[
                pl.BlockSpec((M, K), lambda j: (0, 0)),    # x: resident, full K
                pl.BlockSpec((K, tn), lambda j: (0, j)),   # fc1 weight column block
                pl.BlockSpec((3, tn), lambda j: (0, j)),   # [bias;gamma;beta] block
                pl.BlockSpec((tn, NH), lambda j: (j, 0)),  # heads weight row block
                pl.BlockSpec((3, NH), lambda j: (0, 0)),   # heads [bias;gamma;beta]
            ],
            out_specs=pl.BlockSpec((M, NH), lambda j: (0, 0)),
        ),
        compiler_params=pltpu.CompilerParams(
            dimension_semantics=("arbitrary",)),
    )(x, w, vec, hw, hvec)


# ----------------------------------------------------------------------------
# Glue: im2col via a single grouped-conv patch extraction (channel-major).
# ----------------------------------------------------------------------------
def _patches(x_nhwc, k, s, p):
    # Output features ordered (c, kh, kw), channel slowest.
    pt = jax.lax.conv_general_dilated_patches(
        x_nhwc, (k, k), (s, s), ((p, p), (p, p)),
        dimension_numbers=("NHWC", "HWIO", "NHWC"))
    return pt.reshape(-1, pt.shape[-1])


# ----------------------------------------------------------------------------
# Parameters
# ----------------------------------------------------------------------------
def init_params(key):
    """PyTorch-layout parameters. Conv weights are (O, I, kh, kw); fc weights
    are stored transposed as (in_features, out_features) with the fc1 input
    ordering matching PyTorch's NCHW flatten (c*49 + h*7 + w)."""
    ks = jax.random.split(key, 8)
    s = 0.05
    return {
        "conv1_w": jax.random.normal(ks[0], (64, 1, 4, 4), jnp.float32) * s,
        "conv1_b": jax.random.normal(ks[1], (64,), jnp.float32) * s,
        "conv2_w": jax.random.normal(ks[2], (128, 64, 4, 4), jnp.float32) * s,
        "conv2_b": jax.random.normal(ks[3], (128,), jnp.float32) * s,
        "fc1_w": jax.random.normal(ks[4], (7 * 7 * 128, 1024), jnp.float32) * s,
        "fc1_b": jnp.zeros((1024,), jnp.float32),
        "fcd_w": jax.random.normal(ks[5], (1024, 1), jnp.float32) * s,
        "fcd_b": jnp.zeros((1,), jnp.float32),
        "fct_w": jax.random.normal(ks[6], (1024, 2), jnp.float32) * s,
        "fct_b": jnp.zeros((2,), jnp.float32),
        "fcc_w": jax.random.normal(ks[7], (1024, 10), jnp.float32) * s,
        "fcc_b": jnp.zeros((10,), jnp.float32),
        # BatchNorm affine params (PyTorch default init: gamma=1, beta=0)
        "bn2d_g": jnp.ones((128,), jnp.float32),
        "bn2d_b": jnp.zeros((128,), jnp.float32),
        "bn1024_g": jnp.ones((1024,), jnp.float32),
        "bn1024_b": jnp.zeros((1024,), jnp.float32),
        "bn2_g": jnp.ones((2,), jnp.float32),
        "bn2_b": jnp.zeros((2,), jnp.float32),
        "bn10_g": jnp.ones((10,), jnp.float32),
        "bn10_b": jnp.zeros((10,), jnp.float32),
    }


def prepare_params(p):
    """One-time conversion of PyTorch-layout params to kernel-ready params."""
    # Conv weights -> im2col matmul weights.  conv_general_dilated_patches
    # orders patch features channel-major: row = c*kh*kw + di*kw + dj.
    w1 = jnp.transpose(p["conv1_w"], (1, 2, 3, 0)).reshape(1 * 4 * 4, 64)
    w2 = jnp.transpose(p["conv2_w"], (1, 2, 3, 0)).reshape(64 * 4 * 4, 128)
    # fc1 rows follow PyTorch's NCHW flatten (c*49 + h*7 + w).  Our conv2
    # activations are flattened NHWC (h*896 + w*128 + c), so permute the
    # weight rows once here instead of transposing activations per forward.
    fc1_w = (p["fc1_w"].reshape(128, 7, 7, 1024)
             .transpose(1, 2, 0, 3).reshape(7 * 7 * 128, 1024))
    # Fused heads: columns = [disc(1) | type(2) | class(10)].  Column 0 gets
    # dummy gamma/beta (its BN result is discarded by the sigmoid select).
    heads_w = jnp.concatenate([p["fcd_w"], p["fct_w"], p["fcc_w"]], axis=1)
    heads_b = jnp.concatenate([p["fcd_b"], p["fct_b"], p["fcc_b"]])
    heads_g = jnp.concatenate([jnp.ones((1,), jnp.float32), p["bn2_g"], p["bn10_g"]])
    heads_bb = jnp.concatenate([jnp.zeros((1,), jnp.float32), p["bn2_b"], p["bn10_b"]])
    return {
        "conv1_w": w1.astype(jnp.bfloat16),
        "conv1_b": p["conv1_b"].reshape(1, -1),
        "conv2_w": w2.astype(jnp.bfloat16),
        "conv2_vec": jnp.stack([p["conv2_b"], p["bn2d_g"], p["bn2d_b"]]),
        "fc1_w": fc1_w.astype(jnp.bfloat16),
        "fc1_vec": jnp.stack([p["fc1_b"], p["bn1024_g"], p["bn1024_b"]]),
        "heads_w": heads_w.astype(jnp.bfloat16),
        "heads_vec": jnp.stack([heads_b, heads_g, heads_bb]),
    }


# ----------------------------------------------------------------------------
# Discriminator forward (3 pallas_calls)
# ----------------------------------------------------------------------------
def discriminator_forward(kp, x_nchw):
    B = x_nchw.shape[0]
    # Input channels == 1, so NCHW -> NHWC is a pure reshape.
    x = x_nchw.reshape(B, 28, 28, 1).astype(jnp.bfloat16)

    # Conv1: Conv2d(1, 64, 4, 2, 1) + LeakyReLU(0.1)
    p1 = _patches(x, 4, 2, 1)                               # (B*14*14, 16) bf16
    h = _single_tile_call(_conv1_kernel, jnp.bfloat16,
                          p1, kp["conv1_w"], kp["conv1_b"])
    h = h.reshape(B, 14, 14, 64)

    # Conv2: Conv2d(64, 128, 4, 2, 1) + LeakyReLU(0.1) + BatchNorm2d(128)
    p2 = _patches(h, 4, 2, 1)                               # (B*7*7, 1024) bf16
    h = _single_tile_call(_conv2_kernel, jnp.bfloat16,
                          p2, kp["conv2_w"], kp["conv2_vec"])  # (B*49, 128) bf16

    # NHWC flatten (fc1 weight rows were pre-permuted to match).
    h = h.reshape(B, 7 * 7 * 128)

    # fc1 + BN1d + all three heads fused into one kernel.
    out = fc1_heads_fused(h, kp["fc1_w"], kp["fc1_vec"],
                          kp["heads_w"], kp["heads_vec"])   # (B, 13) f32
    x_d = out[:, 0:1]
    x_type = out[:, 1:3]
    x_dim = out[:, 3:13]
    return x_d, x_type, x_dim


# ----------------------------------------------------------------------------
# Pure-JAX reference (original PyTorch-layout params, matching bf16 cast
# points so only accumulation order differs from the Pallas path).
# ----------------------------------------------------------------------------
def reference_forward(p, x_nchw):
    dn = ("NCHW", "OIHW", "NCHW")
    x = x_nchw.astype(jnp.bfloat16)
    y = jax.lax.conv_general_dilated(
        x, p["conv1_w"].astype(jnp.bfloat16), (2, 2), ((1, 1), (1, 1)),
        dimension_numbers=dn, preferred_element_type=jnp.float32)
    y = _leaky(y + p["conv1_b"].reshape(1, -1, 1, 1)).astype(jnp.bfloat16)
    y = jax.lax.conv_general_dilated(
        y, p["conv2_w"].astype(jnp.bfloat16), (2, 2), ((1, 1), (1, 1)),
        dimension_numbers=dn, preferred_element_type=jnp.float32)
    y = _leaky(y + p["conv2_b"].reshape(1, -1, 1, 1))
    mean = y.mean(axis=(0, 2, 3), keepdims=True)
    var = ((y - mean) ** 2).mean(axis=(0, 2, 3), keepdims=True)
    y = (y - mean) * jax.lax.rsqrt(var + BN_EPS)
    y = y * p["bn2d_g"].reshape(1, -1, 1, 1) + p["bn2d_b"].reshape(1, -1, 1, 1)
    h = y.reshape(y.shape[0], -1).astype(jnp.bfloat16)      # PyTorch NCHW flatten
    z = jnp.dot(h, p["fc1_w"].astype(jnp.bfloat16),
                preferred_element_type=jnp.float32) + p["fc1_b"]
    z = _bn_cols(_leaky(z), p["bn1024_g"], p["bn1024_b"])

    def head(w, b):
        return jnp.dot(z, w.astype(jnp.bfloat16).astype(jnp.float32)) + b

    x_d = jax.nn.sigmoid(head(p["fcd_w"], p["fcd_b"]))
    x_type = _leaky(_bn_cols(head(p["fct_w"], p["fct_b"]), p["bn2_g"], p["bn2_b"]))
    x_dim = _leaky(_bn_cols(head(p["fcc_w"], p["fcc_b"]), p["bn10_g"], p["bn10_b"]))
    return x_d, x_type, x_dim


if __name__ == "__main__":
    key = jax.random.PRNGKey(0)
    k_params, k_x = jax.random.split(key)
    params = init_params(k_params)
    kparams = prepare_params(params)         # one-time prep, outside the forward

    # Architecture forces 28x28 spatial input (7*7*128 flatten); batch = 2.
    x = jax.random.normal(k_x, (2, 1, 28, 28), jnp.float32)

    fwd = jax.jit(discriminator_forward)
    x_d, x_type, x_dim = fwd(kparams, x)
    jax.block_until_ready((x_d, x_type, x_dim))

    assert x_d.shape == (2, 1)
    assert x_type.shape == (2, 2)
    assert x_dim.shape == (2, 10)
    assert bool(jnp.all(jnp.isfinite(x_d)))
    assert bool(jnp.all((x_d >= 0.0) & (x_d <= 1.0)))
    assert bool(jnp.all(jnp.isfinite(x_type)))
    assert bool(jnp.all(jnp.isfinite(x_dim)))

    # Cross-check the whole pipeline (patch ordering, fc1 row permutation,
    # fused BN/heads) against the pure-JAX reference.  Tolerance is loose
    # because train-mode BatchNorm over a batch of 2 amplifies tiny rounding
    # differences.
    r_d, r_t, r_c = jax.jit(reference_forward)(params, x)
    for name, a, b in (("disc", x_d, r_d), ("type", x_type, r_t),
                       ("class", x_dim, r_c)):
        err = float(jnp.max(jnp.abs(a.astype(jnp.float32) - b.astype(jnp.float32))))
        assert err < 0.1, f"{name} mismatch vs reference: max|diff|={err}"

    print("KERNEL_OK")
</pallas_src>

<mosaic_0001>
module attributes {stable_mosaic.version = 11 : i64} {
  func.func @_conv1_kernel(%arg0: i32, %arg1: memref<392x16xbf16, #tpu.memory_space<vmem>>, %arg2: memref<16x64xbf16, #tpu.memory_space<vmem>>, %arg3: memref<1x64xf32, #tpu.memory_space<vmem>>, %arg4: memref<392x64xbf16, #tpu.memory_space<vmem>>) attributes {dimension_semantics = [#tpu.dimension_semantics<arbitrary>], iteration_bounds = array<i64: 1>, scalar_prefetch = 0 : i64, scratch_operands = 0 : i64, tpu.core_type = #tpu.core_type<tc>, window_params = [{pipeline_mode = #tpu.pipeline_mode<synchronous>, transform_indices = @transform_0, window_bounds = array<i64: 392, 16>}, {pipeline_mode = #tpu.pipeline_mode<synchronous>, transform_indices = @transform_1, window_bounds = array<i64: 16, 64>}, {pipeline_mode = #tpu.pipeline_mode<synchronous>, transform_indices = @transform_2, window_bounds = array<i64: 1, 64>}, {pipeline_mode = #tpu.pipeline_mode<synchronous>, transform_indices = @transform_3, window_bounds = array<i64: 392, 64>}]} {
    %c0 = arith.constant 0 : index
    %c0_0 = arith.constant 0 : index
    %0 = vector.load %arg1[%c0, %c0_0] : memref<392x16xbf16, #tpu.memory_space<vmem>>, vector<392x16xbf16>
    %c0_1 = arith.constant 0 : index
    %c0_2 = arith.constant 0 : index
    %1 = vector.load %arg2[%c0_1, %c0_2] : memref<16x64xbf16, #tpu.memory_space<vmem>>, vector<16x64xbf16>
    %cst = arith.constant dense<0.000000e+00> : vector<392x64xf32>
    %2 = tpu.matmul %0, %1, %cst {dimension_numbers = #tpu.dot_dimension_numbers<[1], [0], [0], [1], [0, 0, 1, 1], [], []>} : vector<392x16xbf16>, vector<16x64xbf16>, vector<392x64xf32> -> vector<392x64xf32>
    %c0_3 = arith.constant 0 : index
    %c0_4 = arith.constant 0 : index
    %3 = vector.load %arg3[%c0_3, %c0_4] : memref<1x64xf32, #tpu.memory_space<vmem>>, vector<1x64xf32>
    %4 = vector.broadcast %3 : vector<1x64xf32> to vector<392x64xf32>
    %5 = arith.addf %2, %4 : vector<392x64xf32>
    %cst_5 = arith.constant 0.000000e+00 : f32
    %6 = vector.broadcast %cst_5 : f32 to vector<392x64xf32>
    %7 = arith.cmpf oge, %5, %6 : vector<392x64xf32>
    %cst_6 = arith.constant 1.000000e-01 : f32
    %8 = vector.broadcast %cst_6 : f32 to vector<392x64xf32>
    %9 = arith.mulf %8, %5 : vector<392x64xf32>
    %10 = arith.select %7, %5, %9 : vector<392x64xi1>, vector<392x64xf32>
    %11 = arith.truncf %10 : vector<392x64xf32> to vector<392x64xbf16>
    %c0_7 = arith.constant 0 : index
    %c0_8 = arith.constant 0 : index
    %12 = vector.load %arg4[%c0_7, %c0_8] : memref<392x64xbf16, #tpu.memory_space<vmem>>, vector<392x64xbf16>
    tpu.vector_store %arg4[%c0_7, %c0_8], %11 {strides = array<i32>} : memref<392x64xbf16, #tpu.memory_space<vmem>>, vector<392x64xbf16>,
    return
  }
  func.func @transform_0(%arg0: i32) -> (i32, i32) {
    %c0_i32 = arith.constant 0 : i32
    %c0_i32_0 = arith.constant 0 : i32
    %c0_i32_1 = arith.constant 0 : i32
    return %c0_i32, %c0_i32_0 : i32, i32
  }
  func.func @transform_1(%arg0: i32) -> (i32, i32) {
    %c0_i32 = arith.constant 0 : i32
    %c0_i32_0 = arith.constant 0 : i32
    %c0_i32_1 = arith.constant 0 : i32
    return %c0_i32, %c0_i32_0 : i32, i32
  }
  func.func @transform_2(%arg0: i32) -> (i32, i32) {
    %c0_i32 = arith.constant 0 : i32
    %c0_i32_0 = arith.constant 0 : i32
    %c0_i32_1 = arith.constant 0 : i32
    return %c0_i32, %c0_i32_0 : i32, i32
  }
  func.func @transform_3(%arg0: i32) -> (i32, i32) {
    %c0_i32 = arith.constant 0 : i32
    %c0_i32_0 = arith.constant 0 : i32
    %c0_i32_1 = arith.constant 0 : i32
    return %c0_i32, %c0_i32_0 : i32, i32
  }
}

module attributes {stable_mosaic.version = 11 : i64} {
  func.func @_conv2_kernel(%arg0: i32, %arg1: memref<98x1024xbf16, #tpu.memory_space<vmem>>, %arg2: memref<1024x128xbf16, #tpu.memory_space<vmem>>, %arg3: memref<3x128xf32, #tpu.memory_space<vmem>>, %arg4: memref<98x128xbf16, #tpu.memory_space<vmem>>) attributes {dimension_semantics = [#tpu.dimension_semantics<arbitrary>], iteration_bounds = array<i64: 1>, scalar_prefetch = 0 : i64, scratch_operands = 0 : i64, tpu.core_type = #tpu.core_type<tc>, window_params = [{pipeline_mode = #tpu.pipeline_mode<synchronous>, transform_indices = @transform_0, window_bounds = array<i64: 98, 1024>}, {pipeline_mode = #tpu.pipeline_mode<synchronous>, transform_indices = @transform_1, window_bounds = array<i64: 1024, 128>}, {pipeline_mode = #tpu.pipeline_mode<synchronous>, transform_indices = @transform_2, window_bounds = array<i64: 3, 128>}, {pipeline_mode = #tpu.pipeline_mode<synchronous>, transform_indices = @transform_3, window_bounds = array<i64: 98, 128>}]} {
    %c0 = arith.constant 0 : index
    %c0_0 = arith.constant 0 : index
    %0 = vector.load %arg1[%c0, %c0_0] : memref<98x1024xbf16, #tpu.memory_space<vmem>>, vector<98x1024xbf16>
    %c0_1 = arith.constant 0 : index
    %c0_2 = arith.constant 0 : index
    %1 = vector.load %arg2[%c0_1, %c0_2] : memref<1024x128xbf16, #tpu.memory_space<vmem>>, vector<1024x128xbf16>
    %cst = arith.constant dense<0.000000e+00> : vector<98x128xf32>
    %2 = tpu.matmul %0, %1, %cst {dimension_numbers = #tpu.dot_dimension_numbers<[1], [0], [0], [1], [0, 0, 1, 1], [], []>} : vector<98x1024xbf16>, vector<1024x128xbf16>, vector<98x128xf32> -> vector<98x128xf32>
    %c0_3 = arith.constant 0 : index
    %c0_4 = arith.constant 0 : index
    %3 = vector.load %arg3[%c0_3, %c0_4] : memref<3x128xf32, #tpu.memory_space<vmem>>, vector<1x128xf32>
    %4 = vector.broadcast %3 : vector<1x128xf32> to vector<98x128xf32>
    %5 = arith.addf %2, %4 : vector<98x128xf32>
    %cst_5 = arith.constant 0.000000e+00 : f32
    %6 = vector.broadcast %cst_5 : f32 to vector<98x128xf32>
    %7 = arith.cmpf oge, %5, %6 : vector<98x128xf32>
    %cst_6 = arith.constant 1.000000e-01 : f32
    %8 = vector.broadcast %cst_6 : f32 to vector<98x128xf32>
    %9 = arith.mulf %8, %5 : vector<98x128xf32>
    %10 = arith.select %7, %5, %9 : vector<98x128xi1>, vector<98x128xf32>
    %c1 = arith.constant 1 : index
    %c0_7 = arith.constant 0 : index
    %11 = vector.load %arg3[%c1, %c0_7] : memref<3x128xf32, #tpu.memory_space<vmem>>, vector<1x128xf32>
    %c2 = arith.constant 2 : index
    %c0_8 = arith.constant 0 : index
    %12 = vector.load %arg3[%c2, %c0_8] : memref<3x128xf32, #tpu.memory_space<vmem>>, vector<1x128xf32>
    %cst_9 = arith.constant dense<0.000000e+00> : vector<128xf32>
    %13 = vector.multi_reduction <add>, %10, %cst_9 [0] : vector<98x128xf32> to vector<128xf32>
    %14 = vector.shape_cast %13 : vector<128xf32> to vector<1x128xf32>
    %cst_10 = arith.constant 9.800000e+01 : f32
    %15 = vector.broadcast %cst_10 : f32 to vector<1x128xf32>
    %16 = arith.divf %14, %15 : vector<1x128xf32>
    %17 = vector.broadcast %16 : vector<1x128xf32> to vector<98x128xf32>
    %18 = arith.subf %10, %17 : vector<98x128xf32>
    %19 = arith.mulf %18, %18 : vector<98x128xf32>
    %cst_11 = arith.constant dense<0.000000e+00> : vector<128xf32>
    %20 = vector.multi_reduction <add>, %19, %cst_11 [0] : vector<98x128xf32> to vector<128xf32>
    %21 = vector.shape_cast %20 : vector<128xf32> to vector<1x128xf32>
    %cst_12 = arith.constant 9.800000e+01 : f32
    %22 = vector.broadcast %cst_12 : f32 to vector<1x128xf32>
    %23 = arith.divf %21, %22 : vector<1x128xf32>
    %cst_13 = arith.constant 9.99999974E-6 : f32
    %24 = vector.broadcast %cst_13 : f32 to vector<1x128xf32>
    %25 = arith.addf %23, %24 : vector<1x128xf32>
    %26 = math.rsqrt %25 : vector<1x128xf32>
    %27 = vector.broadcast %26 : vector<1x128xf32> to vector<98x128xf32>
    %28 = arith.mulf %18, %27 : vector<98x128xf32>
    %29 = vector.broadcast %11 : vector<1x128xf32> to vector<98x128xf32>
    %30 = arith.mulf %28, %29 : vector<98x128xf32>
    %31 = vector.broadcast %12 : vector<1x128xf32> to vector<98x128xf32>
    %32 = arith.addf %30, %31 : vector<98x128xf32>
    %33 = arith.truncf %32 : vector<98x128xf32> to vector<98x128xbf16>
    %c0_14 = arith.constant 0 : index
    %c0_15 = arith.constant 0 : index
    %34 = vector.load %arg4[%c0_14, %c0_15] : memref<98x128xbf16, #tpu.memory_space<vmem>>, vector<98x128xbf16>
    tpu.vector_store %arg4[%c0_14, %c0_15], %33 {strides = array<i32>} : memref<98x128xbf16, #tpu.memory_space<vmem>>, vector<98x128xbf16>,
    return
  }
  func.func @transform_0(%arg0: i32) -> (i32, i32) {
    %c0_i32 = arith.constant 0 : i32
    %c0_i32_0 = arith.constant 0 : i32
    %c0_i32_1 = arith.constant 0 : i32
    return %c0_i32, %c0_i32_0 : i32, i32
  }
  func.func @transform_1(%arg0: i32) -> (i32, i32) {
    %c0_i32 = arith.constant 0 : i32
    %c0_i32_0 = arith.constant 0 : i32
    %c0_i32_1 = arith.constant 0 : i32
    return %c0_i32, %c0_i32_0 : i32, i32
  }
  func.func @transform_2(%arg0: i32) -> (i32, i32) {
    %c0_i32 = arith.constant 0 : i32
    %c0_i32_0 = arith.constant 0 : i32
    %c0_i32_1 = arith.constant 0 : i32
    return %c0_i32, %c0_i32_0 : i32, i32
  }
  func.func @transform_3(%arg0: i32) -> (i32, i32) {
    %c0_i32 = arith.constant 0 : i32
    %c0_i32_0 = arith.constant 0 : i32
    %c0_i32_1 = arith.constant 0 : i32
    return %c0_i32, %c0_i32_0 : i32, i32
  }
}

module attributes {stable_mosaic.version = 11 : i64} {
  func.func @_fc1_heads_kernel(%arg0: i32, %arg1: memref<2x6272xbf16, #tpu.memory_space<vmem>>, %arg2: memref<6272x256xbf16, #tpu.memory_space<vmem>>, %arg3: memref<3x256xf32, #tpu.memory_space<vmem>>, %arg4: memref<256x13xbf16, #tpu.memory_space<vmem>>, %arg5: memref<3x13xf32, #tpu.memory_space<vmem>>, %arg6: memref<2x13xf32, #tpu.memory_space<vmem>>) attributes {dimension_semantics = [#tpu.dimension_semantics<arbitrary>], iteration_bounds = array<i64: 4>, scalar_prefetch = 0 : i64, scratch_operands = 0 : i64, tpu.core_type = #tpu.core_type<tc>, window_params = [{pipeline_mode = #tpu.pipeline_mode<synchronous>, transform_indices = @transform_0, window_bounds = array<i64: 2, 6272>}, {transform_indices = @transform_1, window_bounds = array<i64: 6272, 256>}, {transform_indices = @transform_2, window_bounds = array<i64: 3, 256>}, {transform_indices = @transform_3, window_bounds = array<i64: 256, 13>}, {pipeline_mode = #tpu.pipeline_mode<synchronous>, transform_indices = @transform_4, window_bounds = array<i64: 3, 13>}, {pipeline_mode = #tpu.pipeline_mode<synchronous>, transform_indices = @transform_5, window_bounds = array<i64: 2, 13>}]} {
    %c0_i32 = arith.constant 0 : i32
    %0 = arith.cmpi eq, %arg0, %c0_i32 : i32
    %1 = arith.extui %0 : i1 to i32
    %c0_i32_0 = arith.constant 0 : i32
    %2 = arith.cmpi ne, %1, %c0_i32_0 : i32
    scf.if %2 {
      %cst_23 = arith.constant 0.000000e+00 : f32
      %45 = vector.broadcast %cst_23 : f32 to vector<2x13xf32>
      %c0_24 = arith.constant 0 : index
      %c0_25 = arith.constant 0 : index
      %46 = vector.load %arg6[%c0_24, %c0_25] : memref<2x13xf32, #tpu.memory_space<vmem>>, vector<2x13xf32>
      tpu.vector_store %arg6[%c0_24, %c0_25], %45 {strides = array<i32>} : memref<2x13xf32, #tpu.memory_space<vmem>>, vector<2x13xf32>,
    } else {
    }
    %c0 = arith.constant 0 : index
    %c0_1 = arith.constant 0 : index
    %3 = vector.load %arg1[%c0, %c0_1] : memref<2x6272xbf16, #tpu.memory_space<vmem>>, vector<2x6272xbf16>
    %c0_2 = arith.constant 0 : index
    %c0_3 = arith.constant 0 : index
    %4 = vector.load %arg2[%c0_2, %c0_3] : memref<6272x256xbf16, #tpu.memory_space<vmem>>, vector<6272x256xbf16>
    %cst = arith.constant dense<0.000000e+00> : vector<2x256xf32>
    %5 = tpu.matmul %3, %4, %cst {dimension_numbers = #tpu.dot_dimension_numbers<[1], [0], [0], [1], [0, 0, 1, 1], [], []>} : vector<2x6272xbf16>, vector<6272x256xbf16>, vector<2x256xf32> -> vector<2x256xf32>
    %c0_4 = arith.constant 0 : index
    %c0_5 = arith.constant 0 : index
    %6 = vector.load %arg3[%c0_4, %c0_5] : memref<3x256xf32, #tpu.memory_space<vmem>>, vector<1x256xf32>
    %7 = vector.broadcast %6 : vector<1x256xf32> to vector<2x256xf32>
    %8 = arith.addf %5, %7 : vector<2x256xf32>
    %cst_6 = arith.constant 0.000000e+00 : f32
    %9 = vector.broadcast %cst_6 : f32 to vector<2x256xf32>
    %10 = arith.cmpf oge, %8, %9 : vector<2x256xf32>
    %cst_7 = arith.constant 1.000000e-01 : f32
    %11 = vector.broadcast %cst_7 : f32 to vector<2x256xf32>
    %12 = arith.mulf %11, %8 : vector<2x256xf32>
    %13 = arith.select %10, %8, %12 : vector<2x256xi1>, vector<2x256xf32>
    %c1 = arith.constant 1 : index
    %c0_8 = arith.constant 0 : index
    %14 = vector.load %arg3[%c1, %c0_8] : memref<3x256xf32, #tpu.memory_space<vmem>>, vector<1x256xf32>
    %c2 = arith.constant 2 : index
    %c0_9 = arith.constant 0 : index
    %15 = vector.load %arg3[%c2, %c0_9] : memref<3x256xf32, #tpu.memory_space<vmem>>, vector<1x256xf32>
    %cst_10 = arith.constant dense<0.000000e+00> : vector<256xf32>
    %16 = vector.multi_reduction <add>, %13, %cst_10 [0] : vector<2x256xf32> to vector<256xf32>
    %17 = vector.shape_cast %16 : vector<256xf32> to vector<1x256xf32>
    %cst_11 = arith.constant 2.000000e+00 : f32
    %18 = vector.broadcast %cst_11 : f32 to vector<1x256xf32>
    %19 = arith.divf %17, %18 : vector<1x256xf32>
    %20 = vector.broadcast %19 : vector<1x256xf32> to vector<2x256xf32>
    %21 = arith.subf %13, %20 : vector<2x256xf32>
    %22 = arith.mulf %21, %21 : vector<2x256xf32>
    %cst_12 = arith.constant dense<0.000000e+00> : vector<256xf32>
    %23 = vector.multi_reduction <add>, %22, %cst_12 [0] : vector<2x256xf32> to vector<256xf32>
    %24 = vector.shape_cast %23 : vector<256xf32> to vector<1x256xf32>
    %cst_13 = arith.constant 2.000000e+00 : f32
    %25 = vector.broadcast %cst_13 : f32 to vector<1x256xf32>
    %26 = arith.divf %24, %25 : vector<1x256xf32>
    %cst_14 = arith.constant 9.99999974E-6 : f32
    %27 = vector.broadcast %cst_14 : f32 to vector<1x256xf32>
    %28 = arith.addf %26, %27 : vector<1x256xf32>
    %29 = math.rsqrt %28 : vector<1x256xf32>
    %30 = vector.broadcast %29 : vector<1x256xf32> to vector<2x256xf32>
    %31 = arith.mulf %21, %30 : vector<2x256xf32>
    %32 = vector.broadcast %14 : vector<1x256xf32> to vector<2x256xf32>
    %33 = arith.mulf %31, %32 : vector<2x256xf32>
    %34 = vector.broadcast %15 : vector<1x256xf32> to vector<2x256xf32>
    %35 = arith.addf %33, %34 : vector<2x256xf32>
    %c0_15 = arith.constant 0 : index
    %c0_16 = arith.constant 0 : index
    %36 = vector.load %arg6[%c0_15, %c0_16] : memref<2x13xf32, #tpu.memory_space<vmem>>, vector<2x13xf32>
    %c0_17 = arith.constant 0 : index
    %c0_18 = arith.constant 0 : index
    %37 = vector.load %arg4[%c0_17, %c0_18] : memref<256x13xbf16, #tpu.memory_space<vmem>>, vector<256x13xbf16>
    %38 = arith.extf %37 : vector<256x13xbf16> to vector<256x13xf32>
    %cst_19 = arith.constant dense<0.000000e+00> : vector<2x13xf32>
    %39 = tpu.matmul %35, %38, %cst_19 {dimension_numbers = #tpu.dot_dimension_numbers<[1], [0], [0], [1], [0, 0, 1, 1], [], []>} : vector<2x256xf32>, vector<256x13xf32>, vector<2x13xf32> -> vector<2x13xf32>
    %40 = arith.addf %36, %39 : vector<2x13xf32>
    %c0_20 = arith.constant 0 : index
    %c0_21 = arith.constant 0 : index
    %41 = vector.load %arg6[%c0_20, %c0_21] : memref<2x13xf32, #tpu.memory_space<vmem>>, vector<2x13xf32>
    tpu.vector_store %arg6[%c0_20, %c0_21], %40 {strides = array<i32>} : memref<2x13xf32, #tpu.memory_space<vmem>>, vector<2x13xf32>,
    %c3_i32 = arith.constant 3 : i32
    %42 = arith.cmpi eq, %arg0, %c3_i32 : i32
    %43 = arith.extui %42 : i1 to i32
    %c0_i32_22 = arith.constant 0 : i32
    %44 = arith.cmpi ne, %43, %c0_i32_22 : i32
    scf.if %44 {
      %c0_23 = arith.constant 0 : index
      %c0_24 = arith.constant 0 : index
      %45 = vector.load %arg6[%c0_23, %c0_24] : memref<2x13xf32, #tpu.memory_space<vmem>>, vector<2x13xf32>
      %c0_25 = arith.constant 0 : index
      %c0_26 = arith.constant 0 : index
      %46 = vector.load %arg5[%c0_25, %c0_26] : memref<3x13xf32, #tpu.memory_space<vmem>>, vector<1x13xf32>
      %47 = vector.broadcast %46 : vector<1x13xf32> to vector<2x13xf32>
      %48 = arith.addf %45, %47 : vector<2x13xf32>
      %cst_27 = arith.constant 5.000000e-01 : f32
      %49 = vector.broadcast %cst_27 : f32 to vector<2x13xf32>
      %50 = arith.mulf %49, %48 : vector<2x13xf32>
      %51 = math.tanh %50 : vector<2x13xf32>
      %cst_28 = arith.constant 1.000000e+00 : f32
      %52 = vector.broadcast %cst_28 : f32 to vector<2x13xf32>
      %53 = arith.addf %51, %52 : vector<2x13xf32>
      %cst_29 = arith.constant 5.000000e-01 : f32
      %54 = vector.broadcast %cst_29 : f32 to vector<2x13xf32>
      %55 = arith.mulf %54, %53 : vector<2x13xf32>
      %c1_30 = arith.constant 1 : index
      %c0_31 = arith.constant 0 : index
      %56 = vector.load %arg5[%c1_30, %c0_31] : memref<3x13xf32, #tpu.memory_space<vmem>>, vector<1x13xf32>
      %c2_32 = arith.constant 2 : index
      %c0_33 = arith.constant 0 : index
      %57 = vector.load %arg5[%c2_32, %c0_33] : memref<3x13xf32, #tpu.memory_space<vmem>>, vector<1x13xf32>
      %cst_34 = arith.constant dense<0.000000e+00> : vector<13xf32>
      %58 = vector.multi_reduction <add>, %48, %cst_34 [0] : vector<2x13xf32> to vector<13xf32>
      %59 = vector.shape_cast %58 : vector<13xf32> to vector<1x13xf32>
      %cst_35 = arith.constant 2.000000e+00 : f32
      %60 = vector.broadcast %cst_35 : f32 to vector<1x13xf32>
      %61 = arith.divf %59, %60 : vector<1x13xf32>
      %62 = vector.broadcast %61 : vector<1x13xf32> to vector<2x13xf32>
      %63 = arith.subf %48, %62 : vector<2x13xf32>
      %64 = arith.mulf %63, %63 : vector<2x13xf32>
      %cst_36 = arith.constant dense<0.000000e+00> : vector<13xf32>
      %65 = vector.multi_reduction <add>, %64, %cst_36 [0] : vector<2x13xf32> to vector<13xf32>
      %66 = vector.shape_cast %65 : vector<13xf32> to vector<1x13xf32>
      %cst_37 = arith.constant 2.000000e+00 : f32
      %67 = vector.broadcast %cst_37 : f32 to vector<1x13xf32>
      %68 = arith.divf %66, %67 : vector<1x13xf32>
      %cst_38 = arith.constant 9.99999974E-6 : f32
      %69 = vector.broadcast %cst_38 : f32 to vector<1x13xf32>
      %70 = arith.addf %68, %69 : vector<1x13xf32>
      %71 = math.rsqrt %70 : vector<1x13xf32>
      %72 = vector.broadcast %71 : vector<1x13xf32> to vector<2x13xf32>
      %73 = arith.mulf %63, %72 : vector<2x13xf32>
      %74 = vector.broadcast %56 : vector<1x13xf32> to vector<2x13xf32>
      %75 = arith.mulf %73, %74 : vector<2x13xf32>
      %76 = vector.broadcast %57 : vector<1x13xf32> to vector<2x13xf32>
      %77 = arith.addf %75, %76 : vector<2x13xf32>
      %cst_39 = arith.constant 0.000000e+00 : f32
      %78 = vector.broadcast %cst_39 : f32 to vector<2x13xf32>
      %79 = arith.cmpf oge, %77, %78 : vector<2x13xf32>
      %cst_40 = arith.constant 1.000000e-01 : f32
      %80 = vector.broadcast %cst_40 : f32 to vector<2x13xf32>
      %81 = arith.mulf %80, %77 : vector<2x13xf32>
      %82 = arith.select %79, %77, %81 : vector<2x13xi1>, vector<2x13xf32>
      %83 = tpu.iota {dimensions = array<i32: 1>} : vector<2x13xi32>
      %c0_i32_41 = arith.constant 0 : i32
      %84 = vector.broadcast %c0_i32_41 : i32 to vector<2x13xi32>
      %85 = arith.cmpi eq, %83, %84 : vector<2x13xi32>
      %86 = arith.select %85, %55, %82 : vector<2x13xi1>, vector<2x13xf32>
      %c0_42 = arith.constant 0 : index
      %c0_43 = arith.constant 0 : index
      %87 = vector.load %arg6[%c0_42, %c0_43] : memref<2x13xf32, #tpu.memory_space<vmem>>, vector<2x13xf32>
      tpu.vector_store %arg6[%c0_42, %c0_43], %86 {strides = array<i32>} : memref<2x13xf32, #tpu.memory_space<vmem>>, vector<2x13xf32>,
    } else {
    }
    return
  }
  func.func @transform_0(%arg0: i32) -> (i32, i32) {
    %c0_i32 = arith.constant 0 : i32
    %c0_i32_0 = arith.constant 0 : i32
    %c0_i32_1 = arith.constant 0 : i32
    return %c0_i32, %c0_i32_0 : i32, i32
  }
  func.func @transform_1(%arg0: i32) -> (i32, i32) {
    %c0_i32 = arith.constant 0 : i32
    %c0_i32_0 = arith.constant 0 : i32
    return %c0_i32, %arg0 : i32, i32
  }
  func.func @transform_2(%arg0: i32) -> (i32, i32) {
    %c0_i32 = arith.constant 0 : i32
    %c0_i32_0 = arith.constant 0 : i32
    return %c0_i32, %arg0 : i32, i32
  }
  func.func @transform_3(%arg0: i32) -> (i32, i32) {
    %c0_i32 = arith.constant 0 : i32
    %c0_i32_0 = arith.constant 0 : i32
    return %arg0, %c0_i32 : i32, i32
  }
  func.func @transform_4(%arg0: i32) -> (i32, i32) {
    %c0_i32 = arith.constant 0 : i32
    %c0_i32_0 = arith.constant 0 : i32
    %c0_i32_1 = arith.constant 0 : i32
    return %c0_i32, %c0_i32_0 : i32, i32
  }
  func.func @transform_5(%arg0: i32) -> (i32, i32) {
    %c0_i32 = arith.constant 0 : i32
    %c0_i32_0 = arith.constant 0 : i32
    %c0_i32_1 = arith.constant 0 : i32
    return %c0_i32, %c0_i32_0 : i32, i32
  }
}

</mosaic_0001>

<llo_original>
// kernel: discriminator_forward.3
$region0: #{discriminator_forward.3}
  #allocation0 [shape = 'u32[]', space=smem, size = 0x4, offset = 0x4, fixed_abs, tag = 'smem constant byte address 0x4 - core index']
  #allocation1 [shape = 'u32[144,128]{1,0:T(1,128)}', space=vmem, size = 0x12000, scoped, tag = 'internal scratch']
  %s0 = inlined_call_operand.vmem [shape: bf16[392,16], index: 0, kind: input, shape index: {}]
  %s1 = inlined_call_operand.vmem [shape: bf16[16,64], index: 1, kind: input, shape index: {}]
  %s2 = inlined_call_operand.vmem [shape: f32[1,64], index: 2, kind: input, shape index: {}]
  %s3 = inlined_call_operand.vmem [shape: bf16[392,64], index: 3, kind: output, shape index: {}]
  %s4 = sld [smem:[#allocation0]]
  $region22: #{discriminator_forward.3} parent=0
    _
  %s6 = ssub.s32 1, %s4
  %s7 = scalar_select 0, %s6, %s4
  // Predicated region
  $region2: #{discriminator_forward.3} parent=0 // pred_check
    _
  $region3: #{discriminator_forward.3} parent=0 // pred_check_branch
    %9 = sbr.rel (0) target = $region5
  $region4: #{discriminator_forward.3} parent=0 // pred_region
    _
  $region5: #{discriminator_forward.3} parent=0 // pred_fallthru
    _
  // Predicated region
  $region6: #{discriminator_forward.3} parent=0 // pred_check
    _
  $region7: #{discriminator_forward.3} parent=0 // pred_check_branch
    %11 = sbr.rel (0) target = $region9
  $region8: #{discriminator_forward.3} parent=0 // pred_region
    _
  $region9: #{discriminator_forward.3} parent=0 // pred_fallthru
    _
  // Predicated region
  $region10: #{discriminator_forward.3} parent=0 // pred_check
    _
  $region11: #{discriminator_forward.3} parent=0 // pred_check_branch
    %13 = sbr.rel (0) target = $region13
  $region12: #{discriminator_forward.3} parent=0 // pred_region
    _
  $region13: #{discriminator_forward.3} parent=0 // pred_fallthru
    _
  %v15 = vld [vmem:[%s0] sm:$0xf]
  %v16 = vld [vmem:[%s0 + $0x4] sm:$0xf]
  %v17 = vld [vmem:[%s0 + $0x8] sm:$0xf]
  %v18 = vld [vmem:[%s0 + $0xc] sm:$0xf]
  %v19 = vld [vmem:[%s0 + $0x10] sm:$0xf]
  %v20 = vld [vmem:[%s0 + $0x14] sm:$0xf]
  %v21 = vld [vmem:[%s0 + $0x18] sm:$0xf]
  %v22 = vld [vmem:[%s0 + $0x1c] sm:$0xf]
  %v23 = vld [vmem:[%s0 + $0x20] sm:$0xf]
  %v24 = vld [vmem:[%s0 + $0x24] sm:$0xf]
  %v25 = vld [vmem:[%s0 + $0x28] sm:$0xf]
  %v26 = vld [vmem:[%s0 + $0x2c] sm:$0xf]
  %v27 = vld [vmem:[%s0 + $0x30] sm:$0xf]
  %v28 = vld [vmem:[%s0 + $0x34] sm:$0xf]
  %v29 = vld [vmem:[%s0 + $0x38] sm:$0xf]
  %v30 = vld [vmem:[%s0 + $0x3c] sm:$0xf]
  %v31 = vld [vmem:[%s0 + $0x40] sm:$0xf]
  %v32 = vld [vmem:[%s0 + $0x44] sm:$0xf]
  %v33 = vld [vmem:[%s0 + $0x48] sm:$0xf]
  %v34 = vld [vmem:[%s0 + $0x4c] sm:$0xf]
  %v35 = vld [vmem:[%s0 + $0x50] sm:$0xf]
  %v36 = vld [vmem:[%s0 + $0x54] sm:$0xf]
  %v37 = vld [vmem:[%s0 + $0x58] sm:$0xf]
  %v38 = vld [vmem:[%s0 + $0x5c] sm:$0xf]
  %v39 = vld [vmem:[%s0 + $0x60] sm:$0xf]
  %v40 = vld [vmem:[%s0 + $0x64] sm:$0xf]
  %v41 = vld [vmem:[%s0 + $0x68] sm:$0xf]
  %v42 = vld [vmem:[%s0 + $0x6c] sm:$0xf]
  %v43 = vld [vmem:[%s0 + $0x70] sm:$0xf]
  %v44 = vld [vmem:[%s0 + $0x74] sm:$0xf]
  %v45 = vld [vmem:[%s0 + $0x78] sm:$0xf]
  %v46 = vld [vmem:[%s0 + $0x7c] sm:$0xf]
  %v47 = vld [vmem:[%s0 + $0x80] sm:$0xf]
  %v48 = vld [vmem:[%s0 + $0x84] sm:$0xf]
  %v49 = vld [vmem:[%s0 + $0x88] sm:$0xf]
  %v50 = vld [vmem:[%s0 + $0x8c] sm:$0xf]
  %v51 = vld [vmem:[%s0 + $0x90] sm:$0xf]
  %v52 = vld [vmem:[%s0 + $0x94] sm:$0xf]
  %v53 = vld [vmem:[%s0 + $0x98] sm:$0xf]
  %v54 = vld [vmem:[%s0 + $0x9c] sm:$0xf]
  %v55 = vld [vmem:[%s0 + $0xa0] sm:$0xf]
  %v56 = vld [vmem:[%s0 + $0xa4] sm:$0xf]
  %v57 = vld [vmem:[%s0 + $0xa8] sm:$0xf]
  %v58 = vld [vmem:[%s0 + $0xac] sm:$0xf]
  %v59 = vld [vmem:[%s0 + $0xb0] sm:$0xf]
  %v60 = vld [vmem:[%s0 + $0xb4] sm:$0xf]
  %v61 = vld [vmem:[%s0 + $0xb8] sm:$0xf]
  %v62 = vld [vmem:[%s0 + $0xbc] sm:$0xf]
  %v63 = vld [vmem:[%s0 + $0xc0] sm:$0xf]
  %v64 = vld [vmem:[%s1] sm:$0xf]
  %v65 = vld [vmem:[%s1 + $0x4] sm:$0xf]
  %v66 = vld [vmem:[%s2] sm:$0x1]
  %v68 = vlaneseq
  %v69 = vshrl.u32 %v68, 7
  %v70 = vsub.s32 0, %v69
  %v71 = vrot.slane %v66, %v70
  %v122 = vunpack.c.l.b16 %v15
  %v123 = vunpack.c.l.b16 %v16
  %v124 = vunpack.c.l.b16 %v17
  %v125 = vunpack.c.l.b16 %v18
  %v126 = vunpack.c.l.b16 %v19
  %v127 = vunpack.c.l.b16 %v20
  %v128 = vunpack.c.l.b16 %v21
  %v129 = vunpack.c.l.b16 %v22
  %v130 = vunpack.c.l.b16 %v23
  %v131 = vunpack.c.l.b16 %v24
  %v132 = vunpack.c.l.b16 %v25
  %v133 = vunpack.c.l.b16 %v26
  %v134 = vunpack.c.l.b16 %v27
  %v135 = vunpack.c.l.b16 %v28
  %v136 = vunpack.c.l.b16 %v29
  %v137 = vunpack.c.l.b16 %v30
  %v138 = vunpack.c.l.b16 %v31
  %v139 = vunpack.c.l.b16 %v32
  %v140 = vunpack.c.l.b16 %v33
  %v141 = vunpack.c.l.b16 %v34
  %v142 = vunpack.c.l.b16 %v35
  %v143 = vunpack.c.l.b16 %v36
  %v144 = vunpack.c.l.b16 %v37
  %v145 = vunpack.c.l.b16 %v38
  %v146 = vunpack.c.l.b16 %v39
  %v147 = vunpack.c.l.b16 %v40
  %v148 = vunpack.c.l.b16 %v41
  %v149 = vunpack.c.l.b16 %v42
  %v150 = vunpack.c.l.b16 %v43
  %v151 = vunpack.c.l.b16 %v44
  %v152 = vunpack.c.l.b16 %v45
  %v153 = vunpack.c.l.b16 %v46
  %v154 = vunpack.c.l.b16 %v47
  %v155 = vunpack.c.l.b16 %v48
  %v156 = vunpack.c.l.b16 %v49
  %v157 = vunpack.c.l.b16 %v50
  %v158 = vunpack.c.l.b16 %v51
  %v159 = vunpack.c.l.b16 %v52
  %v160 = vunpack.c.l.b16 %v53
  %v161 = vunpack.c.l.b16 %v54
  %v162 = vunpack.c.l.b16 %v55
  %v163 = vunpack.c.l.b16 %v56
  %v164 = vunpack.c.l.b16 %v57
  %v165 = vunpack.c.l.b16 %v58
  %v166 = vunpack.c.l.b16 %v59
  %v167 = vunpack.c.l.b16 %v60
  %v168 = vunpack.c.l.b16 %v61
  %v169 = vunpack.c.l.b16 %v62
  %v170 = vunpack.c.l.b16 %v63
  %v171 = vpack.c.b16 %v123, %v122
  %v172 = vpack.c.b16 %v125, %v124
  %v173 = vpack.c.b16 %v127, %v126
  %v174 = vpack.c.b16 %v129, %v128
  %v175 = vpack.c.b16 %v131, %v130
  %v176 = vpack.c.b16 %v133, %v132
  %v177 = vpack.c.b16 %v135, %v134
  %v178 = vpack.c.b16 %v137, %v136
  %v179 = vpack.c.b16 %v139, %v138
  %v180 = vpack.c.b16 %v141, %v140
  %v181 = vpack.c.b16 %v143, %v142
  %v182 = vpack.c.b16 %v145, %v144
  %v183 = vpack.c.b16 %v147, %v146
  %v184 = vpack.c.b16 %v149, %v148
  %v185 = vpack.c.b16 %v151, %v150
  %v186 = vpack.c.b16 %v153, %v152
  %v187 = vpack.c.b16 %v155, %v154
  %v188 = vpack.c.b16 %v157, %v156
  %v189 = vpack.c.b16 %v159, %v158
  %v190 = vpack.c.b16 %v161, %v160
  %v191 = vpack.c.b16 %v163, %v162
  %v192 = vpack.c.b16 %v165, %v164
  %v193 = vpack.c.b16 %v167, %v166
  %v194 = vpack.c.b16 %v169, %v168
  %v195 = vpack.c.b16 %v170, %v170
  %v198 = vunpack.c.l.b16 %v64
  %v199 = vunpack.c.l.b16 %v65
  %v200 = vpack.c.b16 %v199, %v198
  %vm202 = vcmask 130048
  %v204 = vsel %vm202, %v171, 0
  %v207 = vsel %vm202, %v172, 0
  %v210 = vsel %vm202, %v173, 0
  %v213 = vsel %vm202, %v174, 0
  %v216 = vsel %vm202, %v175, 0
  %v219 = vsel %vm202, %v176, 0
  %v222 = vsel %vm202, %v177, 0
  %v225 = vsel %vm202, %v178, 0
  %v228 = vsel %vm202, %v179, 0
  %v231 = vsel %vm202, %v180, 0
  %v234 = vsel %vm202, %v181, 0
  %v237 = vsel %vm202, %v182, 0
  %v240 = vsel %vm202, %v183, 0
  %v243 = vsel %vm202, %v184, 0
  %v246 = vsel %vm202, %v185, 0
  %v249 = vsel %vm202, %v186, 0
  %v252 = vsel %vm202, %v187, 0
  %v255 = vsel %vm202, %v188, 0
  %v258 = vsel %vm202, %v189, 0
  %v261 = vsel %vm202, %v190, 0
  %v264 = vsel %vm202, %v191, 0
  %v267 = vsel %vm202, %v192, 0
  %v270 = vsel %vm202, %v193, 0
  %v273 = vsel %vm202, %v194, 0
  %v276 = vsel %vm202, %v195, 0
  %278 = vmatprep.subr.bf16.mxu0 0
  %279 = vmatpush1.bf16.msra.mxu0 %v200
  %280 = vmatprep.subr.bf16.mxu0 0
  %281 = vmatpush1.bf16.msra.mxu0 0
  %282 = vmatprep.subr.bf16.mxu0 0
  %283 = vmatpush1.bf16.msra.mxu0 0
  %284 = vmatprep.subr.bf16.mxu0 0
  %285 = vmatpush1.bf16.msra.mxu0 0
  %286 = vmatprep.subr.bf16.mxu0 0
  %287 = vmatpush1.bf16.msra.mxu0 0
  %288 = vmatprep.subr.bf16.mxu0 0
  %289 = vmatpush1.bf16.msra.mxu0 0
  %290 = vmatprep.subr.bf16.mxu0 0
  %291 = vmatpush1.bf16.msra.mxu0 0
  %292 = vmatprep.subr.bf16.mxu0 0
  %293 = vmatpush1.bf16.msra.mxu0 0
  %294 = vmatprep.subr.bf16.mxu0 0
  %295 = vmatpush1.bf16.msra.mxu0 0
  %296 = vmatprep.subr.bf16.mxu0 0
  %297 = vmatpush1.bf16.msra.mxu0 0
  %298 = vmatprep.subr.bf16.mxu0 0
  %299 = vmatpush1.bf16.msra.mxu0 0
  %300 = vmatprep.subr.bf16.mxu0 0
  %301 = vmatpush1.bf16.msra.mxu0 0
  %302 = vmatprep.subr.bf16.mxu0 0
  %303 = vmatpush1.bf16.msra.mxu0 0
  %304 = vmatprep.subr.bf16.mxu0 0
  %305 = vmatpush1.bf16.msra.mxu0 0
  %306 = vmatprep.subr.bf16.mxu0 0
  %307 = vmatpush1.bf16.msra.mxu0 0
  %308 = vmatprep.subr.bf16.mxu0 0
  %309 = vmatpush1.bf16.msra.mxu0 0
  %310 = vmatprep.mubr.bf16.mxu0 0
  %311 = vmatmul.mubr.bf16.gmra.mrb[0].mxu0 %v204
  %v312 = vpop.f32.mrb[0].mxu0
  %v313 = vadd.f32 %v71, %v312
  %v314 = vpop.f32.mrb[0].mxu0
  %v315 = vpop.f32.mrb[0].mxu0
  %v316 = vadd.f32 %v71, %v315
  %v317 = vpop.f32.mrb[0].mxu0
  %318 = vmatprep.mubr.bf16.mxu0 0
  %319 = vmatmul.mubr.bf16.gmra.mrb[0].mxu0 %v207
  %v320 = vpop.f32.mrb[0].mxu0
  %v321 = vadd.f32 %v71, %v320
  %v322 = vpop.f32.mrb[0].mxu0
  %v323 = vpop.f32.mrb[0].mxu0
  %v324 = vadd.f32 %v71, %v323
  %v325 = vpop.f32.mrb[0].mxu0
  %326 = vmatprep.mubr.bf16.mxu0 0
  %327 = vmatmul.mubr.bf16.gmra.mrb[0].mxu0 %v210
  %v328 = vpop.f32.mrb[0].mxu0
  %v329 = vadd.f32 %v71, %v328
  %v330 = vpop.f32.mrb[0].mxu0
  %v331 = vpop.f32.mrb[0].mxu0
  %v332 = vadd.f32 %v71, %v331
  %v333 = vpop.f32.mrb[0].mxu0
  %334 = vmatprep.mubr.bf16.mxu0 0
  %335 = vmatmul.mubr.bf16.gmra.mrb[0].mxu0 %v213
  %v336 = vpop.f32.mrb[0].mxu0
  %v337 = vadd.f32 %v71, %v336
  %v338 = vpop.f32.mrb[0].mxu0
  %v339 = vpop.f32.mrb[0].mxu0
  %v340 = vadd.f32 %v71, %v339
  %v341 = vpop.f32.mrb[0].mxu0
  %342 = vmatprep.mubr.bf16.mxu0 0
  %343 = vmatmul.mubr.bf16.gmra.mrb[0].mxu0 %v216
  %v344 = vpop.f32.mrb[0].mxu0
  %v345 = vadd.f32 %v71, %v344
  %v346 = vpop.f32.mrb[0].mxu0
  %v347 = vpop.f32.mrb[0].mxu0
  %v348 = vadd.f32 %v71, %v347
  %v349 = vpop.f32.mrb[0].mxu0
  %350 = vmatprep.mubr.bf16.mxu0 0
  %351 = vmatmul.mubr.bf16.gmra.mrb[0].mxu0 %v219
  %v352 = vpop.f32.mrb[0].mxu0
  %v353 = vadd.f32 %v71, %v352
  %v354 = vpop.f32.mrb[0].mxu0
  %v355 = vpop.f32.mrb[0].mxu0
  %v356 = vadd.f32 %v71, %v355
  %v357 = vpop.f32.mrb[0].mxu0
  %358 = vmatprep.mubr.bf16.mxu0 0
  %359 = vmatmul.mubr.bf16.gmra.mrb[0].mxu0 %v222
  %v360 = vpop.f32.mrb[0].mxu0
  %v361 = vadd.f32 %v71, %v360
  %v362 = vpop.f32.mrb[0].mxu0
  %v363 = vpop.f32.mrb[0].mxu0
  %v364 = vadd.f32 %v71, %v363
  %v365 = vpop.f32.mrb[0].mxu0
  %366 = vmatprep.mubr.bf16.mxu0 0
  %367 = vmatmul.mubr.bf16.gmra.mrb[0].mxu0 %v225
  %v368 = vpop.f32.mrb[0].mxu0
  %v369 = vadd.f32 %v71, %v368
  %v370 = vpop.f32.mrb[0].mxu0
  %v371 = vpop.f32.mrb[0].mxu0
  %v372 = vadd.f32 %v71, %v371
  %v373 = vpop.f32.mrb[0].mxu0
  %374 = vmatprep.mubr.bf16.mxu0 0
  %375 = vmatmul.mubr.bf16.gmra.mrb[0].mxu0 %v228
  %v376 = vpop.f32.mrb[0].mxu0
  %v377 = vadd.f32 %v71, %v376
  %v378 = vpop.f32.mrb[0].mxu0
  %v379 = vpop.f32.mrb[0].mxu0
  %v380 = vadd.f32 %v71, %v379
  %v381 = vpop.f32.mrb[0].mxu0
  %382 = vmatprep.mubr.bf16.mxu0 0
  %383 = vmatmul.mubr.bf16.gmra.mrb[0].mxu0 %v231
  %v384 = vpop.f32.mrb[0].mxu0
  %v385 = vadd.f32 %v71, %v384
  %v386 = vpop.f32.mrb[0].mxu0
  %v387 = vpop.f32.mrb[0].mxu0
  %v388 = vadd.f32 %v71, %v387
  %v389 = vpop.f32.mrb[0].mxu0
  %390 = vmatprep.mubr.bf16.mxu0 0
  %391 = vmatmul.mubr.bf16.gmra.mrb[0].mxu0 %v234
  %v392 = vpop.f32.mrb[0].mxu0
  %v393 = vadd.f32 %v71, %v392
  %v394 = vpop.f32.mrb[0].mxu0
  %v395 = vpop.f32.mrb[0].mxu0
  %v396 = vadd.f32 %v71, %v395
  %v397 = vpop.f32.mrb[0].mxu0
  %398 = vmatprep.mubr.bf16.mxu0 0
  %399 = vmatmul.mubr.bf16.gmra.mrb[0].mxu0 %v237
  %v400 = vpop.f32.mrb[0].mxu0
  %v401 = vadd.f32 %v71, %v400
  %v402 = vpop.f32.mrb[0].mxu0
  %v403 = vpop.f32.mrb[0].mxu0
  %v404 = vadd.f32 %v71, %v403
  %v405 = vpop.f32.mrb[0].mxu0
  %406 = vmatprep.mubr.bf16.mxu0 0
  %407 = vmatmul.mubr.bf16.gmra.mrb[0].mxu0 %v240
  %v408 = vpop.f32.mrb[0].mxu0
  %v409 = vadd.f32 %v71, %v408
  %v410 = vpop.f32.mrb[0].mxu0
  %v411 = vpop.f32.mrb[0].mxu0
  %v412 = vadd.f32 %v71, %v411
  %v413 = vpop.f32.mrb[0].mxu0
  %414 = vmatprep.mubr.bf16.mxu0 0
  %415 = vmatmul.mubr.bf16.gmra.mrb[0].mxu0 %v243
  %v416 = vpop.f32.mrb[0].mxu0
  %v417 = vadd.f32 %v71, %v416
  %v418 = vpop.f32.mrb[0].mxu0
  %v419 = vpop.f32.mrb[0].mxu0
  %v420 = vadd.f32 %v71, %v419
  %v421 = vpop.f32.mrb[0].mxu0
  %422 = vmatprep.mubr.bf16.mxu0 0
  %423 = vmatmul.mubr.bf16.gmra.mrb[0].mxu0 %v246
  %v424 = vpop.f32.mrb[0].mxu0
  %v425 = vadd.f32 %v71, %v424
  %v426 = vpop.f32.mrb[0].mxu0
  %v427 = vpop.f32.mrb[0].mxu0
  %v428 = vadd.f32 %v71, %v427
  %v429 = vpop.f32.mrb[0].mxu0
  %430 = vmatprep.mubr.bf16.mxu0 0
  %431 = vmatmul.mubr.bf16.gmra.mrb[0].mxu0 %v249
  %v432 = vpop.f32.mrb[0].mxu0
  %v433 = vadd.f32 %v71, %v432
  %v434 = vpop.f32.mrb[0].mxu0
  %v435 = vpop.f32.mrb[0].mxu0
  %v436 = vadd.f32 %v71, %v435
  %v437 = vpop.f32.mrb[0].mxu0
  %438 = vmatprep.mubr.bf16.mxu0 0
  %439 = vmatmul.mubr.bf16.gmra.mrb[0].mxu0 %v252
  %v440 = vpop.f32.mrb[0].mxu0
  %v441 = vadd.f32 %v71, %v440
  %v442 = vpop.f32.mrb[0].mxu0
  %v443 = vpop.f32.mrb[0].mxu0
  %v444 = vadd.f32 %v71, %v443
  %v445 = vpop.f32.mrb[0].mxu0
  %446 = vmatprep.mubr.bf16.mxu0 0
  %447 = vmatmul.mubr.bf16.gmra.mrb[0].mxu0 %v255
  %v448 = vpop.f32.mrb[0].mxu0
  %v449 = vadd.f32 %v71, %v448
  %v450 = vpop.f32.mrb[0].mxu0
  %v451 = vpop.f32.mrb[0].mxu0
  %v452 = vadd.f32 %v71, %v451
  %v453 = vpop.f32.mrb[0].mxu0
  %454 = vmatprep.mubr.bf16.mxu0 0
  %455 = vmatmul.mubr.bf16.gmra.mrb[0].mxu0 %v258
  %v456 = vpop.f32.mrb[0].mxu0
  %v457 = vadd.f32 %v71, %v456
  %v458 = vpop.f32.mrb[0].mxu0
  %v459 = vpop.f32.mrb[0].mxu0
  %v460 = vadd.f32 %v71, %v459
  %v461 = vpop.f32.mrb[0].mxu0
  %462 = vmatprep.mubr.bf16.mxu0 0
  %463 = vmatmul.mubr.bf16.gmra.mrb[0].mxu0 %v261
  %v464 = vpop.f32.mrb[0].mxu0
  %v465 = vadd.f32 %v71, %v464
  %v466 = vpop.f32.mrb[0].mxu0
  %v467 = vpop.f32.mrb[0].mxu0
  %v468 = vadd.f32 %v71, %v467
  %v469 = vpop.f32.mrb[0].mxu0
  %470 = vmatprep.mubr.bf16.mxu0 0
  %471 = vmatmul.mubr.bf16.gmra.mrb[0].mxu0 %v264
  %v472 = vpop.f32.mrb[0].mxu0
  %v473 = vadd.f32 %v71, %v472
  %v474 = vpop.f32.mrb[0].mxu0
  %v475 = vpop.f32.mrb[0].mxu0
  %v476 = vadd.f32 %v71, %v475
  %v477 = vpop.f32.mrb[0].mxu0
  %478 = vmatprep.mubr.bf16.mxu0 0
  %479 = vmatmul.mubr.bf16.gmra.mrb[0].mxu0 %v267
  %v480 = vpop.f32.mrb[0].mxu0
  %v481 = vadd.f32 %v71, %v480
  %v482 = vpop.f32.mrb[0].mxu0
  %v483 = vpop.f32.mrb[0].mxu0
  %v484 = vadd.f32 %v71, %v483
  %v485 = vpop.f32.mrb[0].mxu0
  %486 = vmatprep.mubr.bf16.mxu0 0
  %487 = vmatmul.mubr.bf16.gmra.mrb[0].mxu0 %v270
  %v488 = vpop.f32.mrb[0].mxu0
  %v489 = vadd.f32 %v71, %v488
  %v490 = vpop.f32.mrb[0].mxu0
  %v491 = vpop.f32.mrb[0].mxu0
  %v492 = vadd.f32 %v71, %v491
  %v493 = vpop.f32.mrb[0].mxu0
  %494 = vmatprep.mubr.bf16.mxu0 0
  %495 = vmatmul.mubr.bf16.gmra.mrb[0].mxu0 %v273
  %v496 = vpop.f32.mrb[0].mxu0
  %v497 = vadd.f32 %v71, %v496
  %v498 = vpop.f32.mrb[0].mxu0
  %v499 = vpop.f32.mrb[0].mxu0
  %v500 = vadd.f32 %v71, %v499
  %v501 = vpop.f32.mrb[0].mxu0
  %502 = vmatprep.mubr.bf16.mxu0 0
  %503 = vmatmul.mubr.bf16.gmra.mrb[0].mxu0 %v276
  %v504 = vpop.f32.mrb[0].mxu0
  %v505 = vadd.f32 %v71, %v504
  %v506 = vpop.f32.mrb[0].mxu0
  %v507 = vpop.f32.mrb[0].mxu0
  %v508 = vpop.f32.mrb[0].mxu0
  %509 = vdwg.mxu0
  %vm510 = vcmp.ge.f32.partialorder %v313, 0.0
  %vm511 = vcmp.ge.f32.partialorder %v316, 0.0
  %vm512 = vcmp.ge.f32.partialorder %v321, 0.0
  %vm513 = vcmp.ge.f32.partialorder %v324, 0.0
  %vm514 = vcmp.ge.f32.partialorder %v329, 0.0
  %vm515 = vcmp.ge.f32.partialorder %v332, 0.0
  %vm516 = vcmp.ge.f32.partialorder %v337, 0.0
  %vm517 = vcmp.ge.f32.partialorder %v340, 0.0
  %vm518 = vcmp.ge.f32.partialorder %v345, 0.0
  %vm519 = vcmp.ge.f32.partialorder %v348, 0.0
  %vm520 = vcmp.ge.f32.partialorder %v353, 0.0
  %vm521 = vcmp.ge.f32.partialorder %v356, 0.0
  %vm522 = vcmp.ge.f32.partialorder %v361, 0.0
  %vm523 = vcmp.ge.f32.partialorder %v364, 0.0
  %vm524 = vcmp.ge.f32.partialorder %v369, 0.0
  %vm525 = vcmp.ge.f32.partialorder %v372, 0.0
  %vm526 = vcmp.ge.f32.partialorder %v377, 0.0
  %vm527 = vcmp.ge.f32.partialorder %v380, 0.0
  %vm528 = vcmp.ge.f32.partialorder %v385, 0.0
  %vm529 = vcmp.ge.f32.partialorder %v388, 0.0
  %vm530 = vcmp.ge.f32.partialorder %v393, 0.0
  %vm531 = vcmp.ge.f32.partialorder %v396, 0.0
  %vm532 = vcmp.ge.f32.partialorder %v401, 0.0
  %vm533 = vcmp.ge.f32.partialorder %v404, 0.0
  %vm534 = vcmp.ge.f32.partialorder %v409, 0.0
  %vm535 = vcmp.ge.f32.partialorder %v412, 0.0
  %vm536 = vcmp.ge.f32.partialorder %v417, 0.0
  %vm537 = vcmp.ge.f32.partialorder %v420, 0.0
  %vm538 = vcmp.ge.f32.partialorder %v425, 0.0
  %vm539 = vcmp.ge.f32.partialorder %v428, 0.0
  %vm540 = vcmp.ge.f32.partialorder %v433, 0.0
  %vm541 = vcmp.ge.f32.partialorder %v436, 0.0
  %vm542 = vcmp.ge.f32.partialorder %v441, 0.0
  %vm543 = vcmp.ge.f32.partialorder %v444, 0.0
  %vm544 = vcmp.ge.f32.partialorder %v449, 0.0
  %vm545 = vcmp.ge.f32.partialorder %v452, 0.0
  %vm546 = vcmp.ge.f32.partialorder %v457, 0.0
  %vm547 = vcmp.ge.f32.partialorder %v460, 0.0
  %vm548 = vcmp.ge.f32.partialorder %v465, 0.0
  %vm549 = vcmp.ge.f32.partialorder %v468, 0.0
  %vm550 = vcmp.ge.f32.partialorder %v473, 0.0
  %vm551 = vcmp.ge.f32.partialorder %v476, 0.0
  %vm552 = vcmp.ge.f32.partialorder %v481, 0.0
  %vm553 = vcmp.ge.f32.partialorder %v484, 0.0
  %vm554 = vcmp.ge.f32.partialorder %v489, 0.0
  %vm555 = vcmp.ge.f32.partialorder %v492, 0.0
  %vm556 = vcmp.ge.f32.partialorder %v497, 0.0
  %vm557 = vcmp.ge.f32.partialorder %v500, 0.0
  %vm558 = vcmp.ge.f32.partialorder %v505, 0.0
  %v559 = vmul.f32 %v313, 0.1
  %v560 = vmul.f32 %v316, 0.1
  %v561 = vmul.f32 %v321, 0.1
  %v562 = vmul.f32 %v324, 0.1
  %v563 = vmul.f32 %v329, 0.1
  %v564 = vmul.f32 %v332, 0.1
  %v565 = vmul.f32 %v337, 0.1
  %v566 = vmul.f32 %v340, 0.1
  %v567 = vmul.f32 %v345, 0.1
  %v568 = vmul.f32 %v348, 0.1
  %v569 = vmul.f32 %v353, 0.1
  %v570 = vmul.f32 %v356, 0.1
  %v571 = vmul.f32 %v361, 0.1
  %v572 = vmul.f32 %v364, 0.1
  %v573 = vmul.f32 %v369, 0.1
  %v574 = vmul.f32 %v372, 0.1
  %v575 = vmul.f32 %v377, 0.1
  %v576 = vmul.f32 %v380, 0.1
  %v577 = vmul.f32 %v385, 0.1
  %v578 = vmul.f32 %v388, 0.1
  %v579 = vmul.f32 %v393, 0.1
  %v580 = vmul.f32 %v396, 0.1
  %v581 = vmul.f32 %v401, 0.1
  %v582 = vmul.f32 %v404, 0.1
  %v583 = vmul.f32 %v409, 0.1
  %v584 = vmul.f32 %v412, 0.1
  %v585 = vmul.f32 %v417, 0.1
  %v586 = vmul.f32 %v420, 0.1
  %v587 = vmul.f32 %v425, 0.1
  %v588 = vmul.f32 %v428, 0.1
  %v589 = vmul.f32 %v433, 0.1
  %v590 = vmul.f32 %v436, 0.1
  %v591 = vmul.f32 %v441, 0.1
  %v592 = vmul.f32 %v444, 0.1
  %v593 = vmul.f32 %v449, 0.1
  %v594 = vmul.f32 %v452, 0.1
  %v595 = vmul.f32 %v457, 0.1
  %v596 = vmul.f32 %v460, 0.1
  %v597 = vmul.f32 %v465, 0.1
  %v598 = vmul.f32 %v468, 0.1
  %v599 = vmul.f32 %v473, 0.1
  %v600 = vmul.f32 %v476, 0.1
  %v601 = vmul.f32 %v481, 0.1
  %v602 = vmul.f32 %v484, 0.1
  %v603 = vmul.f32 %v489, 0.1
  %v604 = vmul.f32 %v492, 0.1
  %v605 = vmul.f32 %v497, 0.1
  %v606 = vmul.f32 %v500, 0.1
  %v607 = vmul.f32 %v505, 0.1
  %v608 = vsel %vm510, %v313, %v559
  %v609 = vsel %vm511, %v316, %v560
  %v610 = vsel %vm512, %v321, %v561
  %v611 = vsel %vm513, %v324, %v562
  %v612 = vsel %vm514, %v329, %v563
  %v613 = vsel %vm515, %v332, %v564
  %v614 = vsel %vm516, %v337, %v565
  %v615 = vsel %vm517, %v340, %v566
  %v616 = vsel %vm518, %v345, %v567
  %v617 = vsel %vm519, %v348, %v568
  %v618 = vsel %vm520, %v353, %v569
  %v619 = vsel %vm521, %v356, %v570
  %v620 = vsel %vm522, %v361, %v571
  %v621 = vsel %vm523, %v364, %v572
  %v622 = vsel %vm524, %v369, %v573
  %v623 = vsel %vm525, %v372, %v574
  %v624 = vsel %vm526, %v377, %v575
  %v625 = vsel %vm527, %v380, %v576
  %v626 = vsel %vm528, %v385, %v577
  %v627 = vsel %vm529, %v388, %v578
  %v628 = vsel %vm530, %v393, %v579
  %v629 = vsel %vm531, %v396, %v580
  %v630 = vsel %vm532, %v401, %v581
  %v631 = vsel %vm533, %v404, %v582
  %v632 = vsel %vm534, %v409, %v583
  %v633 = vsel %vm535, %v412, %v584
  %v634 = vsel %vm536, %v417, %v585
  %v635 = vsel %vm537, %v420, %v586
  %v636 = vsel %vm538, %v425, %v587
  %v637 = vsel %vm539, %v428, %v588
  %v638 = vsel %vm540, %v433, %v589
  %v639 = vsel %vm541, %v436, %v590
  %v640 = vsel %vm542, %v441, %v591
  %v641 = vsel %vm543, %v444, %v592
  %v642 = vsel %vm544, %v449, %v593
  %v643 = vsel %vm545, %v452, %v594
  %v644 = vsel %vm546, %v457, %v595
  %v645 = vsel %vm547, %v460, %v596
  %v646 = vsel %vm548, %v465, %v597
  %v647 = vsel %vm549, %v468, %v598
  %v648 = vsel %vm550, %v473, %v599
  %v649 = vsel %vm551, %v476, %v600
  %v650 = vsel %vm552, %v481, %v601
  %v651 = vsel %vm553, %v484, %v602
  %v652 = vsel %vm554, %v489, %v603
  %v653 = vsel %vm555, %v492, %v604
  %v654 = vsel %vm556, %v497, %v605
  %v655 = vsel %vm557, %v500, %v606
  %v656 = vsel %vm558, %v505, %v607
  %v657 = vpack.c.bf16 %v609, %v608
  %v658 = vpack.c.bf16 %v611, %v610
  %v659 = vpack.c.bf16 %v613, %v612
  %v660 = vpack.c.bf16 %v615, %v614
  %v661 = vpack.c.bf16 %v617, %v616
  %v662 = vpack.c.bf16 %v619, %v618
  %v663 = vpack.c.bf16 %v621, %v620
  %v664 = vpack.c.bf16 %v623, %v622
  %v665 = vpack.c.bf16 %v625, %v624
  %v666 = vpack.c.bf16 %v627, %v626
  %v667 = vpack.c.bf16 %v629, %v628
  %v668 = vpack.c.bf16 %v631, %v630
  %v669 = vpack.c.bf16 %v633, %v632
  %v670 = vpack.c.bf16 %v635, %v634
  %v671 = vpack.c.bf16 %v637, %v636
  %v672 = vpack.c.bf16 %v639, %v638
  %v673 = vpack.c.bf16 %v641, %v640
  %v674 = vpack.c.bf16 %v643, %v642
  %v675 = vpack.c.bf16 %v645, %v644
  %v676 = vpack.c.bf16 %v647, %v646
  %v677 = vpack.c.bf16 %v649, %v648
  %v678 = vpack.c.bf16 %v651, %v650
  %v679 = vpack.c.bf16 %v653, %v652
  %v680 = vpack.c.bf16 %v655, %v654
  %v681 = vpack.c.bf16 %v656, %v656
  %v707 = vunpack.c.l.b16 %v657
  %v708 = vunpack.c.h.b16 %v657
  %v709 = vunpack.c.l.b16 %v658
  %v710 = vunpack.c.h.b16 %v658
  %v711 = vunpack.c.l.b16 %v659
  %v712 = vunpack.c.h.b16 %v659
  %v713 = vunpack.c.l.b16 %v660
  %v714 = vunpack.c.h.b16 %v660
  %v715 = vunpack.c.l.b16 %v661
  %v716 = vunpack.c.h.b16 %v661
  %v717 = vunpack.c.l.b16 %v662
  %v718 = vunpack.c.h.b16 %v662
  %v719 = vunpack.c.l.b16 %v663
  %v720 = vunpack.c.h.b16 %v663
  %v721 = vunpack.c.l.b16 %v664
  %v722 = vunpack.c.h.b16 %v664
  %v723 = vunpack.c.l.b16 %v665
  %v724 = vunpack.c.h.b16 %v665
  %v725 = vunpack.c.l.b16 %v666
  %v726 = vunpack.c.h.b16 %v666
  %v727 = vunpack.c.l.b16 %v667
  %v728 = vunpack.c.h.b16 %v667
  %v729 = vunpack.c.l.b16 %v668
  %v730 = vunpack.c.h.b16 %v668
  %v731 = vunpack.c.l.b16 %v669
  %v732 = vunpack.c.h.b16 %v669
  %v733 = vunpack.c.l.b16 %v670
  %v734 = vunpack.c.h.b16 %v670
  %v735 = vunpack.c.l.b16 %v671
  %v736 = vunpack.c.h.b16 %v671
  %v737 = vunpack.c.l.b16 %v672
  %v738 = vunpack.c.h.b16 %v672
  %v739 = vunpack.c.l.b16 %v673
  %v740 = vunpack.c.h.b16 %v673
  %v741 = vunpack.c.l.b16 %v674
  %v742 = vunpack.c.h.b16 %v674
  %v743 = vunpack.c.l.b16 %v675
  %v744 = vunpack.c.h.b16 %v675
  %v745 = vunpack.c.l.b16 %v676
  %v746 = vunpack.c.h.b16 %v676
  %v747 = vunpack.c.l.b16 %v677
  %v748 = vunpack.c.h.b16 %v677
  %v749 = vunpack.c.l.b16 %v678
  %v750 = vunpack.c.h.b16 %v678
  %v751 = vunpack.c.l.b16 %v679
  %v752 = vunpack.c.h.b16 %v679
  %v753 = vunpack.c.l.b16 %v680
  %v754 = vunpack.c.h.b16 %v680
  %v755 = vunpack.c.l.b16 %v681
  %v756 = vpack.c.b16 %v707, %v707
  %v757 = vpack.c.b16 %v708, %v708
  %v758 = vpack.c.b16 %v709, %v709
  %v759 = vpack.c.b16 %v710, %v710
  %v760 = vpack.c.b16 %v711, %v711
  %v761 = vpack.c.b16 %v712, %v712
  %v762 = vpack.c.b16 %v713, %v713
  %v763 = vpack.c.b16 %v714, %v714
  %v764 = vpack.c.b16 %v715, %v715
  %v765 = vpack.c.b16 %v716, %v716
  %v766 = vpack.c.b16 %v717, %v717
  %v767 = vpack.c.b16 %v718, %v718
  %v768 = vpack.c.b16 %v719, %v719
  %v769 = vpack.c.b16 %v720, %v720
  %v770 = vpack.c.b16 %v721, %v721
  %v771 = vpack.c.b16 %v722, %v722
  %v772 = vpack.c.b16 %v723, %v723
  %v773 = vpack.c.b16 %v724, %v724
  %v774 = vpack.c.b16 %v725, %v725
  %v775 = vpack.c.b16 %v726, %v726
  %v776 = vpack.c.b16 %v727, %v727
  %v777 = vpack.c.b16 %v728, %v728
  %v778 = vpack.c.b16 %v729, %v729
  %v779 = vpack.c.b16 %v730, %v730
  %v780 = vpack.c.b16 %v731, %v731
  %v781 = vpack.c.b16 %v732, %v732
  %v782 = vpack.c.b16 %v733, %v733
  %v783 = vpack.c.b16 %v734, %v734
  %v784 = vpack.c.b16 %v735, %v735
  %v785 = vpack.c.b16 %v736, %v736
  %v786 = vpack.c.b16 %v737, %v737
  %v787 = vpack.c.b16 %v738, %v738
  %v788 = vpack.c.b16 %v739, %v739
  %v789 = vpack.c.b16 %v740, %v740
  %v790 = vpack.c.b16 %v741, %v741
  %v791 = vpack.c.b16 %v742, %v742
  %v792 = vpack.c.b16 %v743, %v743
  %v793 = vpack.c.b16 %v744, %v744
  %v794 = vpack.c.b16 %v745, %v745
  %v795 = vpack.c.b16 %v746, %v746
  %v796 = vpack.c.b16 %v747, %v747
  %v797 = vpack.c.b16 %v748, %v748
  %v798 = vpack.c.b16 %v749, %v749
  %v799 = vpack.c.b16 %v750, %v750
  %v800 = vpack.c.b16 %v751, %v751
  %v801 = vpack.c.b16 %v752, %v752
  %v802 = vpack.c.b16 %v753, %v753
  %v803 = vpack.c.b16 %v754, %v754
  %v804 = vpack.c.b16 %v755, %v755
  %vm854 = vcmask 519168
  %855 = vst.msk [vmem:[%s3] sm:$0xf] %vm854, %v756
  %856 = vst.msk [vmem:[%s3 + $0x4] sm:$0xf] %vm854, %v757
  %857 = vst.msk [vmem:[%s3 + $0x8] sm:$0xf] %vm854, %v758
  %858 = vst.msk [vmem:[%s3 + $0xc] sm:$0xf] %vm854, %v759
  %859 = vst.msk [vmem:[%s3 + $0x10] sm:$0xf] %vm854, %v760
  %860 = vst.msk [vmem:[%s3 + $0x14] sm:$0xf] %vm854, %v761
  %861 = vst.msk [vmem:[%s3 + $0x18] sm:$0xf] %vm854, %v762
  %862 = vst.msk [vmem:[%s3 + $0x1c] sm:$0xf] %vm854, %v763
  %863 = vst.msk [vmem:[%s3 + $0x20] sm:$0xf] %vm854, %v764
  %864 = vst.msk [vmem:[%s3 + $0x24] sm:$0xf] %vm854, %v765
  %865 = vst.msk [vmem:[%s3 + $0x28] sm:$0xf] %vm854, %v766
  %866 = vst.msk [vmem:[%s3 + $0x2c] sm:$0xf] %vm854, %v767
  %867 = vst.msk [vmem:[%s3 + $0x30] sm:$0xf] %vm854, %v768
  %868 = vst.msk [vmem:[%s3 + $0x34] sm:$0xf] %vm854, %v769
  %869 = vst.msk [vmem:[%s3 + $0x38] sm:$0xf] %vm854, %v770
  %870 = vst.msk [vmem:[%s3 + $0x3c] sm:$0xf] %vm854, %v771
  %871 = vst.msk [vmem:[%s3 + $0x40] sm:$0xf] %vm854, %v772
  %872 = vst.msk [vmem:[%s3 + $0x44] sm:$0xf] %vm854, %v773
  %873 = vst.msk [vmem:[%s3 + $0x48] sm:$0xf] %vm854, %v774
  %874 = vst.msk [vmem:[%s3 + $0x4c] sm:$0xf] %vm854, %v775
  %875 = vst.msk [vmem:[%s3 + $0x50] sm:$0xf] %vm854, %v776
  %876 = vst.msk [vmem:[%s3 + $0x54] sm:$0xf] %vm854, %v777
  %877 = vst.msk [vmem:[%s3 + $0x58] sm:$0xf] %vm854, %v778
  %878 = vst.msk [vmem:[%s3 + $0x5c] sm:$0xf] %vm854, %v779
  %879 = vst.msk [vmem:[%s3 + $0x60] sm:$0xf] %vm854, %v780
  %880 = vst.msk [vmem:[%s3 + $0x64] sm:$0xf] %vm854, %v781
  %881 = vst.msk [vmem:[%s3 + $0x68] sm:$0xf] %vm854, %v782
  %882 = vst.msk [vmem:[%s3 + $0x6c] sm:$0xf] %vm854, %v783
  %883 = vst.msk [vmem:[%s3 + $0x70] sm:$0xf] %vm854, %v784
  %884 = vst.msk [vmem:[%s3 + $0x74] sm:$0xf] %vm854, %v785
  %885 = vst.msk [vmem:[%s3 + $0x78] sm:$0xf] %vm854, %v786
  %886 = vst.msk [vmem:[%s3 + $0x7c] sm:$0xf] %vm854, %v787
  %887 = vst.msk [vmem:[%s3 + $0x80] sm:$0xf] %vm854, %v788
  %888 = vst.msk [vmem:[%s3 + $0x84] sm:$0xf] %vm854, %v789
  %889 = vst.msk [vmem:[%s3 + $0x88] sm:$0xf] %vm854, %v790
  %890 = vst.msk [vmem:[%s3 + $0x8c] sm:$0xf] %vm854, %v791
  %891 = vst.msk [vmem:[%s3 + $0x90] sm:$0xf] %vm854, %v792
  %892 = vst.msk [vmem:[%s3 + $0x94] sm:$0xf] %vm854, %v793
  %893 = vst.msk [vmem:[%s3 + $0x98] sm:$0xf] %vm854, %v794
  %894 = vst.msk [vmem:[%s3 + $0x9c] sm:$0xf] %vm854, %v795
  %895 = vst.msk [vmem:[%s3 + $0xa0] sm:$0xf] %vm854, %v796
  %896 = vst.msk [vmem:[%s3 + $0xa4] sm:$0xf] %vm854, %v797
  %897 = vst.msk [vmem:[%s3 + $0xa8] sm:$0xf] %vm854, %v798
  %898 = vst.msk [vmem:[%s3 + $0xac] sm:$0xf] %vm854, %v799
  %899 = vst.msk [vmem:[%s3 + $0xb0] sm:$0xf] %vm854, %v800
  %900 = vst.msk [vmem:[%s3 + $0xb4] sm:$0xf] %vm854, %v801
  %901 = vst.msk [vmem:[%s3 + $0xb8] sm:$0xf] %vm854, %v802
  %902 = vst.msk [vmem:[%s3 + $0xbc] sm:$0xf] %vm854, %v803
  %903 = vst.msk [vmem:[%s3 + $0xc0] sm:$0xf] %vm854, %v804
  // Predicated region
  $region14: #{discriminator_forward.3} parent=0 // pred_check
    _
  $region15: #{discriminator_forward.3} parent=0 // pred_check_branch
    %905 = sbr.rel (0) target = $region17
  $region16: #{discriminator_forward.3} parent=0 // pred_region
    _
  $region17: #{discriminator_forward.3} parent=0 // pred_fallthru
    _
  // Predicated region
  $region18: #{discriminator_forward.3} parent=0 // pred_check
    _
  $region19: #{discriminator_forward.3} parent=0 // pred_check_branch
    %907 = sbr.rel (0) target = $region21
  $region20: #{discriminator_forward.3} parent=0 // pred_region
    _
  $region21: #{discriminator_forward.3} parent=0 // pred_fallthru
    _

// kernel: discriminator_forward.4
$region0: #{discriminator_forward.4}
  #allocation0 [shape = 'u32[]', space=smem, size = 0x4, offset = 0x4, fixed_abs, tag = 'smem constant byte address 0x4 - core index']
  #allocation1 [shape = 'u32[144,128]{1,0:T(1,128)}', space=vmem, size = 0x12000, scoped, tag = 'internal scratch']
  %s0 = inlined_call_operand.vmem [shape: bf16[98,1024], index: 0, kind: input, shape index: {}]
  %s1 = inlined_call_operand.vmem [shape: bf16[1024,128], index: 1, kind: input, shape index: {}]
  %s2 = inlined_call_operand.vmem [shape: f32[3,128], index: 2, kind: input, shape index: {}]
  %s3 = inlined_call_operand.vmem [shape: bf16[98,128], index: 3, kind: output, shape index: {}]
  %s4 = sld [smem:[#allocation0]]
  $region22: #{discriminator_forward.4} parent=0
    _
  %s6 = ssub.s32 1, %s4
  %s7 = scalar_select 0, %s6, %s4
  // Predicated region
  $region2: #{discriminator_forward.4} parent=0 // pred_check
    _
  $region3: #{discriminator_forward.4} parent=0 // pred_check_branch
    %9 = sbr.rel (0) target = $region5
  $region4: #{discriminator_forward.4} parent=0 // pred_region
    _
  $region5: #{discriminator_forward.4} parent=0 // pred_fallthru
    _
  // Predicated region
  $region6: #{discriminator_forward.4} parent=0 // pred_check
    _
  $region7: #{discriminator_forward.4} parent=0 // pred_check_branch
    %11 = sbr.rel (0) target = $region9
  $region8: #{discriminator_forward.4} parent=0 // pred_region
    _
  $region9: #{discriminator_forward.4} parent=0 // pred_fallthru
    _
  // Predicated region
  $region10: #{discriminator_forward.4} parent=0 // pred_check
    _
  $region11: #{discriminator_forward.4} parent=0 // pred_check_branch
    %13 = sbr.rel (0) target = $region13
  $region12: #{discriminator_forward.4} parent=0 // pred_region
    _
  $region13: #{discriminator_forward.4} parent=0 // pred_fallthru
    _
  %v15 = vld [vmem:[%s0] sm:$0xff]
  %v16 = vld [vmem:[%s0 + $0x8] sm:$0xff]
  %v17 = vld [vmem:[%s0 + $0x10] sm:$0xff]
  %v18 = vld [vmem:[%s0 + $0x18] sm:$0xff]
  %v19 = vld [vmem:[%s0 + $0x20] sm:$0xff]
  %v20 = vld [vmem:[%s0 + $0x28] sm:$0xff]
  %v21 = vld [vmem:[%s0 + $0x30] sm:$0xff]
  %v22 = vld [vmem:[%s0 + $0x38] sm:$0xff]
  %v23 = vld [vmem:[%s0 + $0x40] sm:$0xff]
  %v24 = vld [vmem:[%s0 + $0x48] sm:$0xff]
  %v25 = vld [vmem:[%s0 + $0x50] sm:$0xff]
  %v26 = vld [vmem:[%s0 + $0x58] sm:$0xff]
  %v27 = vld [vmem:[%s0 + $0x60] sm:$0xff]
  %v28 = vld [vmem:[%s0 + $0x68] sm:$0xff]
  %v29 = vld [vmem:[%s0 + $0x70] sm:$0xff]
  %v30 = vld [vmem:[%s0 + $0x78] sm:$0xff]
  %v31 = vld [vmem:[%s0 + $0x80] sm:$0xff]
  %v32 = vld [vmem:[%s0 + $0x88] sm:$0xff]
  %v33 = vld [vmem:[%s0 + $0x90] sm:$0xff]
  %v34 = vld [vmem:[%s0 + $0x98] sm:$0xff]
  %v35 = vld [vmem:[%s0 + $0xa0] sm:$0xff]
  %v36 = vld [vmem:[%s0 + $0xa8] sm:$0xff]
  %v37 = vld [vmem:[%s0 + $0xb0] sm:$0xff]
  %v38 = vld [vmem:[%s0 + $0xb8] sm:$0xff]
  %v39 = vld [vmem:[%s0 + $0xc0] sm:$0xff]
  %v40 = vld [vmem:[%s0 + $0xc8] sm:$0xff]
  %v41 = vld [vmem:[%s0 + $0xd0] sm:$0xff]
  %v42 = vld [vmem:[%s0 + $0xd8] sm:$0xff]
  %v43 = vld [vmem:[%s0 + $0xe0] sm:$0xff]
  %v44 = vld [vmem:[%s0 + $0xe8] sm:$0xff]
  %v45 = vld [vmem:[%s0 + $0xf0] sm:$0xff]
  %v46 = vld [vmem:[%s0 + $0xf8] sm:$0xff]
  %v47 = vld [vmem:[%s0 + $0x100] sm:$0xff]
  %v48 = vld [vmem:[%s0 + $0x108] sm:$0xff]
  %v49 = vld [vmem:[%s0 + $0x110] sm:$0xff]
  %v50 = vld [vmem:[%s0 + $0x118] sm:$0xff]
  %v51 = vld [vmem:[%s0 + $0x120] sm:$0xff]
  %v52 = vld [vmem:[%s0 + $0x128] sm:$0xff]
  %v53 = vld [vmem:[%s0 + $0x130] sm:$0xff]
  %v54 = vld [vmem:[%s0 + $0x138] sm:$0xff]
  %v55 = vld [vmem:[%s0 + $0x140] sm:$0xff]
  %v56 = vld [vmem:[%s0 + $0x148] sm:$0xff]
  %v57 = vld [vmem:[%s0 + $0x150] sm:$0xff]
  %v58 = vld [vmem:[%s0 + $0x158] sm:$0xff]
  %v59 = vld [vmem:[%s0 + $0x160] sm:$0xff]
  %v60 = vld [vmem:[%s0 + $0x168] sm:$0xff]
  %v61 = vld [vmem:[%s0 + $0x170] sm:$0xff]
  %v62 = vld [vmem:[%s0 + $0x178] sm:$0xff]
  %v63 = vld [vmem:[%s0 + $0x180] sm:$0x11]
  %v64 = vld [vmem:[%s0 + $0x188] sm:$0x11]
  %v65 = vld [vmem:[%s0 + $0x190] sm:$0x11]
  %v66 = vld [vmem:[%s0 + $0x198] sm:$0x11]
  %v67 = vld [vmem:[%s1] sm:$0xf]
  %v68 = vld [vmem:[%s1 + $0x4] sm:$0xf]
  %v69 = vld [vmem:[%s1 + $0x8] sm:$0xf]
  %v70 = vld [vmem:[%s1 + $0xc] sm:$0xf]
  %v71 = vld [vmem:[%s1 + $0x10] sm:$0xf]
  %v72 = vld [vmem:[%s1 + $0x14] sm:$0xf]
  %v73 = vld [vmem:[%s1 + $0x18] sm:$0xf]
  %v74 = vld [vmem:[%s1 + $0x1c] sm:$0xf]
  %v75 = vld [vmem:[%s1 + $0x20] sm:$0xf]
  %v76 = vld [vmem:[%s1 + $0x24] sm:$0xf]
  %v77 = vld [vmem:[%s1 + $0x28] sm:$0xf]
  %v78 = vld [vmem:[%s1 + $0x2c] sm:$0xf]
  %v79 = vld [vmem:[%s1 + $0x30] sm:$0xf]
  %v80 = vld [vmem:[%s1 + $0x34] sm:$0xf]
  %v81 = vld [vmem:[%s1 + $0x38] sm:$0xf]
  %v82 = vld [vmem:[%s1 + $0x3c] sm:$0xf]
  %v83 = vld [vmem:[%s1 + $0x40] sm:$0xf]
  %v84 = vld [vmem:[%s1 + $0x44] sm:$0xf]
  %v85 = vld [vmem:[%s1 + $0x48] sm:$0xf]
  %v86 = vld [vmem:[%s1 + $0x4c] sm:$0xf]
  %v87 = vld [vmem:[%s1 + $0x50] sm:$0xf]
  %v88 = vld [vmem:[%s1 + $0x54] sm:$0xf]
  %v89 = vld [vmem:[%s1 + $0x58] sm:$0xf]
  %v90 = vld [vmem:[%s1 + $0x5c] sm:$0xf]
  %v91 = vld [vmem:[%s1 + $0x60] sm:$0xf]
  %v92 = vld [vmem:[%s1 + $0x64] sm:$0xf]
  %v93 = vld [vmem:[%s1 + $0x68] sm:$0xf]
  %v94 = vld [vmem:[%s1 + $0x6c] sm:$0xf]
  %v95 = vld [vmem:[%s1 + $0x70] sm:$0xf]
  %v96 = vld [vmem:[%s1 + $0x74] sm:$0xf]
  %v97 = vld [vmem:[%s1 + $0x78] sm:$0xf]
  %v98 = vld [vmem:[%s1 + $0x7c] sm:$0xf]
  %v99 = vld [vmem:[%s1 + $0x80] sm:$0xf]
  %v100 = vld [vmem:[%s1 + $0x84] sm:$0xf]
  %v101 = vld [vmem:[%s1 + $0x88] sm:$0xf]
  %v102 = vld [vmem:[%s1 + $0x8c] sm:$0xf]
  %v103 = vld [vmem:[%s1 + $0x90] sm:$0xf]
  %v104 = vld [vmem:[%s1 + $0x94] sm:$0xf]
  %v105 = vld [vmem:[%s1 + $0x98] sm:$0xf]
  %v106 = vld [vmem:[%s1 + $0x9c] sm:$0xf]
  %v107 = vld [vmem:[%s1 + $0xa0] sm:$0xf]
  %v108 = vld [vmem:[%s1 + $0xa4] sm:$0xf]
  %v109 = vld [vmem:[%s1 + $0xa8] sm:$0xf]
  %v110 = vld [vmem:[%s1 + $0xac] sm:$0xf]
  %v111 = vld [vmem:[%s1 + $0xb0] sm:$0xf]
  %v112 = vld [vmem:[%s1 + $0xb4] sm:$0xf]
  %v113 = vld [vmem:[%s1 + $0xb8] sm:$0xf]
  %v114 = vld [vmem:[%s1 + $0xbc] sm:$0xf]
  %v115 = vld [vmem:[%s1 + $0xc0] sm:$0xf]
  %v116 = vld [vmem:[%s1 + $0xc4] sm:$0xf]
  %v117 = vld [vmem:[%s1 + $0xc8] sm:$0xf]
  %v118 = vld [vmem:[%s1 + $0xcc] sm:$0xf]
  %v119 = vld [vmem:[%s1 + $0xd0] sm:$0xf]
  %v120 = vld [vmem:[%s1 + $0xd4] sm:$0xf]
  %v121 = vld [vmem:[%s1 + $0xd8] sm:$0xf]
  %v122 = vld [vmem:[%s1 + $0xdc] sm:$0xf]
  %v123 = vld [vmem:[%s1 + $0xe0] sm:$0xf]
  %v124 = vld [vmem:[%s1 + $0xe4] sm:$0xf]
  %v125 = vld [vmem:[%s1 + $0xe8] sm:$0xf]
  %v126 = vld [vmem:[%s1 + $0xec] sm:$0xf]
  %v127 = vld [vmem:[%s1 + $0xf0] sm:$0xf]
  %v128 = vld [vmem:[%s1 + $0xf4] sm:$0xf]
  %v129 = vld [vmem:[%s1 + $0xf8] sm:$0xf]
  %v130 = vld [vmem:[%s1 + $0xfc] sm:$0xf]
  %v131 = vld [vmem:[%s1 + $0x100] sm:$0xf]
  %v132 = vld [vmem:[%s1 + $0x104] sm:$0xf]
  %v133 = vld [vmem:[%s1 + $0x108] sm:$0xf]
  %v134 = vld [vmem:[%s1 + $0x10c] sm:$0xf]
  %v135 = vld [vmem:[%s1 + $0x110] sm:$0xf]
  %v136 = vld [vmem:[%s1 + $0x114] sm:$0xf]
  %v137 = vld [vmem:[%s1 + $0x118] sm:$0xf]
  %v138 = vld [vmem:[%s1 + $0x11c] sm:$0xf]
  %v139 = vld [vmem:[%s1 + $0x120] sm:$0xf]
  %v140 = vld [vmem:[%s1 + $0x124] sm:$0xf]
  %v141 = vld [vmem:[%s1 + $0x128] sm:$0xf]
  %v142 = vld [vmem:[%s1 + $0x12c] sm:$0xf]
  %v143 = vld [vmem:[%s1 + $0x130] sm:$0xf]
  %v144 = vld [vmem:[%s1 + $0x134] sm:$0xf]
  %v145 = vld [vmem:[%s1 + $0x138] sm:$0xf]
  %v146 = vld [vmem:[%s1 + $0x13c] sm:$0xf]
  %v147 = vld [vmem:[%s1 + $0x140] sm:$0xf]
  %v148 = vld [vmem:[%s1 + $0x144] sm:$0xf]
  %v149 = vld [vmem:[%s1 + $0x148] sm:$0xf]
  %v150 = vld [vmem:[%s1 + $0x14c] sm:$0xf]
  %v151 = vld [vmem:[%s1 + $0x150] sm:$0xf]
  %v152 = vld [vmem:[%s1 + $0x154] sm:$0xf]
  %v153 = vld [vmem:[%s1 + $0x158] sm:$0xf]
  %v154 = vld [vmem:[%s1 + $0x15c] sm:$0xf]
  %v155 = vld [vmem:[%s1 + $0x160] sm:$0xf]
  %v156 = vld [vmem:[%s1 + $0x164] sm:$0xf]
  %v157 = vld [vmem:[%s1 + $0x168] sm:$0xf]
  %v158 = vld [vmem:[%s1 + $0x16c] sm:$0xf]
  %v159 = vld [vmem:[%s1 + $0x170] sm:$0xf]
  %v160 = vld [vmem:[%s1 + $0x174] sm:$0xf]
  %v161 = vld [vmem:[%s1 + $0x178] sm:$0xf]
  %v162 = vld [vmem:[%s1 + $0x17c] sm:$0xf]
  %v163 = vld [vmem:[%s1 + $0x180] sm:$0xf]
  %v164 = vld [vmem:[%s1 + $0x184] sm:$0xf]
  %v165 = vld [vmem:[%s1 + $0x188] sm:$0xf]
  %v166 = vld [vmem:[%s1 + $0x18c] sm:$0xf]
  %v167 = vld [vmem:[%s1 + $0x190] sm:$0xf]
  %v168 = vld [vmem:[%s1 + $0x194] sm:$0xf]
  %v169 = vld [vmem:[%s1 + $0x198] sm:$0xf]
  %v170 = vld [vmem:[%s1 + $0x19c] sm:$0xf]
  %v171 = vld [vmem:[%s1 + $0x1a0] sm:$0xf]
  %v172 = vld [vmem:[%s1 + $0x1a4] sm:$0xf]
  %v173 = vld [vmem:[%s1 + $0x1a8] sm:$0xf]
  %v174 = vld [vmem:[%s1 + $0x1ac] sm:$0xf]
  %v175 = vld [vmem:[%s1 + $0x1b0] sm:$0xf]
  %v176 = vld [vmem:[%s1 + $0x1b4] sm:$0xf]
  %v177 = vld [vmem:[%s1 + $0x1b8] sm:$0xf]
  %v178 = vld [vmem:[%s1 + $0x1bc] sm:$0xf]
  %v179 = vld [vmem:[%s1 + $0x1c0] sm:$0xf]
  %v180 = vld [vmem:[%s1 + $0x1c4] sm:$0xf]
  %v181 = vld [vmem:[%s1 + $0x1c8] sm:$0xf]
  %v182 = vld [vmem:[%s1 + $0x1cc] sm:$0xf]
  %v183 = vld [vmem:[%s1 + $0x1d0] sm:$0xf]
  %v184 = vld [vmem:[%s1 + $0x1d4] sm:$0xf]
  %v185 = vld [vmem:[%s1 + $0x1d8] sm:$0xf]
  %v186 = vld [vmem:[%s1 + $0x1dc] sm:$0xf]
  %v187 = vld [vmem:[%s1 + $0x1e0] sm:$0xf]
  %v188 = vld [vmem:[%s1 + $0x1e4] sm:$0xf]
  %v189 = vld [vmem:[%s1 + $0x1e8] sm:$0xf]
  %v190 = vld [vmem:[%s1 + $0x1ec] sm:$0xf]
  %v191 = vld [vmem:[%s1 + $0x1f0] sm:$0xf]
  %v192 = vld [vmem:[%s1 + $0x1f4] sm:$0xf]
  %v193 = vld [vmem:[%s1 + $0x1f8] sm:$0xf]
  %v194 = vld [vmem:[%s1 + $0x1fc] sm:$0xf]
  %v195 = vld [vmem:[%s2] sm:$0x1]
  %v196 = vlaneseq
  %v197 = vshrl.u32 %v196, 7
  %v198 = vsub.s32 0, %v197
  %v199 = vrot.slane %v195, %v198
  %v252 = vunpack.c.l.b16 %v15
  %v253 = vunpack.c.h.b16 %v15
  %v254 = vunpack.c.l.b16 %v16
  %v255 = vunpack.c.h.b16 %v16
  %v256 = vunpack.c.l.b16 %v17
  %v257 = vunpack.c.h.b16 %v17
  %v258 = vunpack.c.l.b16 %v18
  %v259 = vunpack.c.h.b16 %v18
  %v260 = vunpack.c.l.b16 %v19
  %v261 = vunpack.c.h.b16 %v19
  %v262 = vunpack.c.l.b16 %v20
  %v263 = vunpack.c.h.b16 %v20
  %v264 = vunpack.c.l.b16 %v21
  %v265 = vunpack.c.h.b16 %v21
  %v266 = vunpack.c.l.b16 %v22
  %v267 = vunpack.c.h.b16 %v22
  %v268 = vunpack.c.l.b16 %v23
  %v269 = vunpack.c.h.b16 %v23
  %v270 = vunpack.c.l.b16 %v24
  %v271 = vunpack.c.h.b16 %v24
  %v272 = vunpack.c.l.b16 %v25
  %v273 = vunpack.c.h.b16 %v25
  %v274 = vunpack.c.l.b16 %v26
  %v275 = vunpack.c.h.b16 %v26
  %v276 = vunpack.c.l.b16 %v27
  %v277 = vunpack.c.h.b16 %v27
  %v278 = vunpack.c.l.b16 %v28
  %v279 = vunpack.c.h.b16 %v28
  %v280 = vunpack.c.l.b16 %v29
  %v281 = vunpack.c.h.b16 %v29
  %v282 = vunpack.c.l.b16 %v30
  %v283 = vunpack.c.h.b16 %v30
  %v284 = vunpack.c.l.b16 %v31
  %v285 = vunpack.c.h.b16 %v31
  %v286 = vunpack.c.l.b16 %v32
  %v287 = vunpack.c.h.b16 %v32
  %v288 = vunpack.c.l.b16 %v33
  %v289 = vunpack.c.h.b16 %v33
  %v290 = vunpack.c.l.b16 %v34
  %v291 = vunpack.c.h.b16 %v34
  %v292 = vunpack.c.l.b16 %v35
  %v293 = vunpack.c.h.b16 %v35
  %v294 = vunpack.c.l.b16 %v36
  %v295 = vunpack.c.h.b16 %v36
  %v296 = vunpack.c.l.b16 %v37
  %v297 = vunpack.c.h.b16 %v37
  %v298 = vunpack.c.l.b16 %v38
  %v299 = vunpack.c.h.b16 %v38
  %v300 = vunpack.c.l.b16 %v39
  %v301 = vunpack.c.h.b16 %v39
  %v302 = vunpack.c.l.b16 %v40
  %v303 = vunpack.c.h.b16 %v40
  %v304 = vunpack.c.l.b16 %v41
  %v305 = vunpack.c.h.b16 %v41
  %v306 = vunpack.c.l.b16 %v42
  %v307 = vunpack.c.h.b16 %v42
  %v308 = vunpack.c.l.b16 %v43
  %v309 = vunpack.c.h.b16 %v43
  %v310 = vunpack.c.l.b16 %v44
  %v311 = vunpack.c.h.b16 %v44
  %v312 = vunpack.c.l.b16 %v45
  %v313 = vunpack.c.h.b16 %v45
  %v314 = vunpack.c.l.b16 %v46
  %v315 = vunpack.c.h.b16 %v46
  %v316 = vunpack.c.l.b16 %v47
  %v317 = vunpack.c.h.b16 %v47
  %v318 = vunpack.c.l.b16 %v48
  %v319 = vunpack.c.h.b16 %v48
  %v320 = vunpack.c.l.b16 %v49
  %v321 = vunpack.c.h.b16 %v49
  %v322 = vunpack.c.l.b16 %v50
  %v323 = vunpack.c.h.b16 %v50
  %v324 = vunpack.c.l.b16 %v51
  %v325 = vunpack.c.h.b16 %v51
  %v326 = vunpack.c.l.b16 %v52
  %v327 = vunpack.c.h.b16 %v52
  %v328 = vunpack.c.l.b16 %v53
  %v329 = vunpack.c.h.b16 %v53
  %v330 = vunpack.c.l.b16 %v54
  %v331 = vunpack.c.h.b16 %v54
  %v332 = vunpack.c.l.b16 %v55
  %v333 = vunpack.c.h.b16 %v55
  %v334 = vunpack.c.l.b16 %v56
  %v335 = vunpack.c.h.b16 %v56
  %v336 = vunpack.c.l.b16 %v57
  %v337 = vunpack.c.h.b16 %v57
  %v338 = vunpack.c.l.b16 %v58
  %v339 = vunpack.c.h.b16 %v58
  %v340 = vunpack.c.l.b16 %v59
  %v341 = vunpack.c.h.b16 %v59
  %v342 = vunpack.c.l.b16 %v60
  %v343 = vunpack.c.h.b16 %v60
  %v344 = vunpack.c.l.b16 %v61
  %v345 = vunpack.c.h.b16 %v61
  %v346 = vunpack.c.l.b16 %v62
  %v347 = vunpack.c.h.b16 %v62
  %v348 = vunpack.c.l.b16 %v63
  %v349 = vunpack.c.h.b16 %v63
  %v350 = vunpack.c.l.b16 %v64
  %v351 = vunpack.c.h.b16 %v64
  %v352 = vunpack.c.l.b16 %v65
  %v353 = vunpack.c.h.b16 %v65
  %v354 = vunpack.c.l.b16 %v66
  %v355 = vunpack.c.h.b16 %v66
  %v356 = vpack.c.b16 %v260, %v252
  %v357 = vpack.c.b16 %v261, %v253
  %v358 = vpack.c.b16 %v262, %v254
  %v359 = vpack.c.b16 %v263, %v255
  %v360 = vpack.c.b16 %v264, %v256
  %v361 = vpack.c.b16 %v265, %v257
  %v362 = vpack.c.b16 %v266, %v258
  %v363 = vpack.c.b16 %v267, %v259
  %v364 = vpack.c.b16 %v276, %v268
  %v365 = vpack.c.b16 %v277, %v269
  %v366 = vpack.c.b16 %v278, %v270
  %v367 = vpack.c.b16 %v279, %v271
  %v368 = vpack.c.b16 %v280, %v272
  %v369 = vpack.c.b16 %v281, %v273
  %v370 = vpack.c.b16 %v282, %v274
  %v371 = vpack.c.b16 %v283, %v275
  %v372 = vpack.c.b16 %v292, %v284
  %v373 = vpack.c.b16 %v293, %v285
  %v374 = vpack.c.b16 %v294, %v286
  %v375 = vpack.c.b16 %v295, %v287
  %v376 = vpack.c.b16 %v296, %v288
  %v377 = vpack.c.b16 %v297, %v289
  %v378 = vpack.c.b16 %v298, %v290
  %v379 = vpack.c.b16 %v299, %v291
  %v380 = vpack.c.b16 %v308, %v300
  %v381 = vpack.c.b16 %v309, %v301
  %v382 = vpack.c.b16 %v310, %v302
  %v383 = vpack.c.b16 %v311, %v303
  %v384 = vpack.c.b16 %v312, %v304
  %v385 = vpack.c.b16 %v313, %v305
  %v386 = vpack.c.b16 %v314, %v306
  %v387 = vpack.c.b16 %v315, %v307
  %v388 = vpack.c.b16 %v324, %v316
  %v389 = vpack.c.b16 %v325, %v317
  %v390 = vpack.c.b16 %v326, %v318
  %v391 = vpack.c.b16 %v327, %v319
  %v392 = vpack.c.b16 %v328, %v320
  %v393 = vpack.c.b16 %v329, %v321
  %v394 = vpack.c.b16 %v330, %v322
  %v395 = vpack.c.b16 %v331, %v323
  %v396 = vpack.c.b16 %v340, %v332
  %v397 = vpack.c.b16 %v341, %v333
  %v398 = vpack.c.b16 %v342, %v334
  %v399 = vpack.c.b16 %v343, %v335
  %v400 = vpack.c.b16 %v344, %v336
  %v401 = vpack.c.b16 %v345, %v337
  %v402 = vpack.c.b16 %v346, %v338
  %v403 = vpack.c.b16 %v347, %v339
  %v404 = vpack.c.b16 %v348, %v348
  %v405 = vpack.c.b16 %v349, %v349
  %v406 = vpack.c.b16 %v350, %v350
  %v407 = vpack.c.b16 %v351, %v351
  %v408 = vpack.c.b16 %v352, %v352
  %v409 = vpack.c.b16 %v353, %v353
  %v410 = vpack.c.b16 %v354, %v354
  %v411 = vpack.c.b16 %v355, %v355
  %v596 = vunpack.c.l.b16 %v67
  %v597 = vunpack.c.l.b16 %v68
  %v598 = vunpack.c.l.b16 %v69
  %v599 = vunpack.c.l.b16 %v70
  %v600 = vunpack.c.l.b16 %v71
  %v601 = vunpack.c.l.b16 %v72
  %v602 = vunpack.c.l.b16 %v73
  %v603 = vunpack.c.l.b16 %v74
  %v604 = vunpack.c.l.b16 %v75
  %v605 = vunpack.c.l.b16 %v76
  %v606 = vunpack.c.l.b16 %v77
  %v607 = vunpack.c.l.b16 %v78
  %v608 = vunpack.c.l.b16 %v79
  %v609 = vunpack.c.l.b16 %v80
  %v610 = vunpack.c.l.b16 %v81
  %v611 = vunpack.c.l.b16 %v82
  %v612 = vunpack.c.l.b16 %v83
  %v613 = vunpack.c.l.b16 %v84
  %v614 = vunpack.c.l.b16 %v85
  %v615 = vunpack.c.l.b16 %v86
  %v616 = vunpack.c.l.b16 %v87
  %v617 = vunpack.c.l.b16 %v88
  %v618 = vunpack.c.l.b16 %v89
  %v619 = vunpack.c.l.b16 %v90
  %v620 = vunpack.c.l.b16 %v91
  %v621 = vunpack.c.l.b16 %v92
  %v622 = vunpack.c.l.b16 %v93
  %v623 = vunpack.c.l.b16 %v94
  %v624 = vunpack.c.l.b16 %v95
  %v625 = vunpack.c.l.b16 %v96
  %v626 = vunpack.c.l.b16 %v97
  %v627 = vunpack.c.l.b16 %v98
  %v628 = vunpack.c.l.b16 %v99
  %v629 = vunpack.c.l.b16 %v100
  %v630 = vunpack.c.l.b16 %v101
  %v631 = vunpack.c.l.b16 %v102
  %v632 = vunpack.c.l.b16 %v103
  %v633 = vunpack.c.l.b16 %v104
  %v634 = vunpack.c.l.b16 %v105
  %v635 = vunpack.c.l.b16 %v106
  %v636 = vunpack.c.l.b16 %v107
  %v637 = vunpack.c.l.b16 %v108
  %v638 = vunpack.c.l.b16 %v109
  %v639 = vunpack.c.l.b16 %v110
  %v640 = vunpack.c.l.b16 %v111
  %v641 = vunpack.c.l.b16 %v112
  %v642 = vunpack.c.l.b16 %v113
  %v643 = vunpack.c.l.b16 %v114
  %v644 = vunpack.c.l.b16 %v115
  %v645 = vunpack.c.l.b16 %v116
  %v646 = vunpack.c.l.b16 %v117
  %v647 = vunpack.c.l.b16 %v118
  %v648 = vunpack.c.l.b16 %v119
  %v649 = vunpack.c.l.b16 %v120
  %v650 = vunpack.c.l.b16 %v121
  %v651 = vunpack.c.l.b16 %v122
  %v652 = vunpack.c.l.b16 %v123
  %v653 = vunpack.c.l.b16 %v124
  %v654 = vunpack.c.l.b16 %v125
  %v655 = vunpack.c.l.b16 %v126
  %v656 = vunpack.c.l.b16 %v127
  %v657 = vunpack.c.l.b16 %v128
  %v658 = vunpack.c.l.b16 %v129
  %v659 = vunpack.c.l.b16 %v130
  %v660 = vunpack.c.l.b16 %v131
  %v661 = vunpack.c.l.b16 %v132
  %v662 = vunpack.c.l.b16 %v133
  %v663 = vunpack.c.l.b16 %v134
  %v664 = vunpack.c.l.b16 %v135
  %v665 = vunpack.c.l.b16 %v136
  %v666 = vunpack.c.l.b16 %v137
  %v667 = vunpack.c.l.b16 %v138
  %v668 = vunpack.c.l.b16 %v139
  %v669 = vunpack.c.l.b16 %v140
  %v670 = vunpack.c.l.b16 %v141
  %v671 = vunpack.c.l.b16 %v142
  %v672 = vunpack.c.l.b16 %v143
  %v673 = vunpack.c.l.b16 %v144
  %v674 = vunpack.c.l.b16 %v145
  %v675 = vunpack.c.l.b16 %v146
  %v676 = vunpack.c.l.b16 %v147
  %v677 = vunpack.c.l.b16 %v148
  %v678 = vunpack.c.l.b16 %v149
  %v679 = vunpack.c.l.b16 %v150
  %v680 = vunpack.c.l.b16 %v151
  %v681 = vunpack.c.l.b16 %v152
  %v682 = vunpack.c.l.b16 %v153
  %v683 = vunpack.c.l.b16 %v154
  %v684 = vunpack.c.l.b16 %v155
  %v685 = vunpack.c.l.b16 %v156
  %v686 = vunpack.c.l.b16 %v157
  %v687 = vunpack.c.l.b16 %v158
  %v688 = vunpack.c.l.b16 %v159
  %v689 = vunpack.c.l.b16 %v160
  %v690 = vunpack.c.l.b16 %v161
  %v691 = vunpack.c.l.b16 %v162
  %v692 = vunpack.c.l.b16 %v163
  %v693 = vunpack.c.l.b16 %v164
  %v694 = vunpack.c.l.b16 %v165
  %v695 = vunpack.c.l.b16 %v166
  %v696 = vunpack.c.l.b16 %v167
  %v697 = vunpack.c.l.b16 %v168
  %v698 = vunpack.c.l.b16 %v169
  %v699 = vunpack.c.l.b16 %v170
  %v700 = vunpack.c.l.b16 %v171
  %v701 = vunpack.c.l.b16 %v172
  %v702 = vunpack.c.l.b16 %v173
  %v703 = vunpack.c.l.b16 %v174
  %v704 = vunpack.c.l.b16 %v175
  %v705 = vunpack.c.l.b16 %v176
  %v706 = vunpack.c.l.b16 %v177
  %v707 = vunpack.c.l.b16 %v178
  %v708 = vunpack.c.l.b16 %v179
  %v709 = vunpack.c.l.b16 %v180
  %v710 = vunpack.c.l.b16 %v181
  %v711 = vunpack.c.l.b16 %v182
  %v712 = vunpack.c.l.b16 %v183
  %v713 = vunpack.c.l.b16 %v184
  %v714 = vunpack.c.l.b16 %v185
  %v715 = vunpack.c.l.b16 %v186
  %v716 = vunpack.c.l.b16 %v187
  %v717 = vunpack.c.l.b16 %v188
  %v718 = vunpack.c.l.b16 %v189
  %v719 = vunpack.c.l.b16 %v190
  %v720 = vunpack.c.l.b16 %v191
  %v721 = vunpack.c.l.b16 %v192
  %v722 = vunpack.c.l.b16 %v193
  %v723 = vunpack.c.l.b16 %v194
  %v724 = vpack.c.b16 %v597, %v596
  %v725 = vpack.c.b16 %v599, %v598
  %v726 = vpack.c.b16 %v601, %v600
  %v727 = vpack.c.b16 %v603, %v602
  %v728 = vpack.c.b16 %v605, %v604
  %v729 = vpack.c.b16 %v607, %v606
  %v730 = vpack.c.b16 %v609, %v608
  %v731 = vpack.c.b16 %v611, %v610
  %v732 = vpack.c.b16 %v613, %v612
  %v733 = vpack.c.b16 %v615, %v614
  %v734 = vpack.c.b16 %v617, %v616
  %v735 = vpack.c.b16 %v619, %v618
  %v736 = vpack.c.b16 %v621, %v620
  %v737 = vpack.c.b16 %v623, %v622
  %v738 = vpack.c.b16 %v625, %v624
  %v739 = vpack.c.b16 %v627, %v626
  %v740 = vpack.c.b16 %v629, %v628
  %v741 = vpack.c.b16 %v631, %v630
  %v742 = vpack.c.b16 %v633, %v632
  %v743 = vpack.c.b16 %v635, %v634
  %v744 = vpack.c.b16 %v637, %v636
  %v745 = vpack.c.b16 %v639, %v638
  %v746 = vpack.c.b16 %v641, %v640
  %v747 = vpack.c.b16 %v643, %v642
  %v748 = vpack.c.b16 %v645, %v644
  %v749 = vpack.c.b16 %v647, %v646
  %v750 = vpack.c.b16 %v649, %v648
  %v751 = vpack.c.b16 %v651, %v650
  %v752 = vpack.c.b16 %v653, %v652
  %v753 = vpack.c.b16 %v655, %v654
  %v754 = vpack.c.b16 %v657, %v656
  %v755 = vpack.c.b16 %v659, %v658
  %v756 = vpack.c.b16 %v661, %v660
  %v757 = vpack.c.b16 %v663, %v662
  %v758 = vpack.c.b16 %v665, %v664
  %v759 = vpack.c.b16 %v667, %v666
  %v760 = vpack.c.b16 %v669, %v668
  %v761 = vpack.c.b16 %v671, %v670
  %v762 = vpack.c.b16 %v673, %v672
  %v763 = vpack.c.b16 %v675, %v674
  %v764 = vpack.c.b16 %v677, %v676
  %v765 = vpack.c.b16 %v679, %v678
  %v766 = vpack.c.b16 %v681, %v680
  %v767 = vpack.c.b16 %v683, %v682
  %v768 = vpack.c.b16 %v685, %v684
  %v769 = vpack.c.b16 %v687, %v686
  %v770 = vpack.c.b16 %v689, %v688
  %v771 = vpack.c.b16 %v691, %v690
  %v772 = vpack.c.b16 %v693, %v692
  %v773 = vpack.c.b16 %v695, %v694
  %v774 = vpack.c.b16 %v697, %v696
  %v775 = vpack.c.b16 %v699, %v698
  %v776 = vpack.c.b16 %v701, %v700
  %v777 = vpack.c.b16 %v703, %v702
  %v778 = vpack.c.b16 %v705, %v704
  %v779 = vpack.c.b16 %v707, %v706
  %v780 = vpack.c.b16 %v709, %v708
  %v781 = vpack.c.b16 %v711, %v710
  %v782 = vpack.c.b16 %v713, %v712
  %v783 = vpack.c.b16 %v715, %v714
  %v784 = vpack.c.b16 %v717, %v716
  %v785 = vpack.c.b16 %v719, %v718
  %v786 = vpack.c.b16 %v721, %v720
  %v787 = vpack.c.b16 %v723, %v722
  %852 = vmatprep.subr.bf16.mxu0 0
  %853 = vmatpush1.bf16.msra.mxu0 %v724
  %854 = vmatprep.subr.bf16.mxu0 0
  %855 = vmatpush1.bf16.msra.mxu0 %v725
  %856 = vmatprep.subr.bf16.mxu0 0
  %857 = vmatpush1.bf16.msra.mxu0 %v726
  %858 = vmatprep.subr.bf16.mxu0 0
  %859 = vmatpush1.bf16.msra.mxu0 %v727
  %860 = vmatprep.subr.bf16.mxu0 0
  %861 = vmatpush1.bf16.msra.mxu0 %v728
  %862 = vmatprep.subr.bf16.mxu0 0
  %863 = vmatpush1.bf16.msra.mxu0 %v729
  %864 = vmatprep.subr.bf16.mxu0 0
  %865 = vmatpush1.bf16.msra.mxu0 %v730
  %866 = vmatprep.subr.bf16.mxu0 0
  %867 = vmatpush1.bf16.msra.mxu0 %v731
  %868 = vmatprep.subr.bf16.mxu0 0
  %869 = vmatpush1.bf16.msra.mxu0 %v732
  %870 = vmatprep.subr.bf16.mxu0 0
  %871 = vmatpush1.bf16.msra.mxu0 %v733
  %872 = vmatprep.subr.bf16.mxu0 0
  %873 = vmatpush1.bf16.msra.mxu0 %v734
  %874 = vmatprep.subr.bf16.mxu0 0
  %875 = vmatpush1.bf16.msra.mxu0 %v735
  %876 = vmatprep.subr.bf16.mxu0 0
  %877 = vmatpush1.bf16.msra.mxu0 %v736
  %878 = vmatprep.subr.bf16.mxu0 0
  %879 = vmatpush1.bf16.msra.mxu0 %v737
  %880 = vmatprep.subr.bf16.mxu0 0
  %881 = vmatpush1.bf16.msra.mxu0 %v738
  %882 = vmatprep.subr.bf16.mxu0 0
  %883 = vmatpush1.bf16.msra.mxu0 %v739
  %884 = vmatprep.mubr.bf16.mxu0 %v357
  %885 = vmatmul.mubr.bf16.gmra.mrb[0].mxu0 %v356
  %v886 = vpop.f32.mrb[0].mxu0
  %v887 = vadd.f32 %v199, %v886
  %v888 = vpop.f32.mrb[0].mxu0
  %v889 = vpop.f32.mrb[0].mxu0
  %v890 = vadd.f32 %v199, %v889
  %v891 = vpop.f32.mrb[0].mxu0
  %892 = vmatprep.mubr.bf16.mxu0 %v365
  %893 = vmatmul.mubr.bf16.gmra.mrb[0].mxu0 %v364
  %v894 = vpop.f32.mrb[0].mxu0
  %v895 = vadd.f32 %v199, %v894
  %v896 = vpop.f32.mrb[0].mxu0
  %v897 = vpop.f32.mrb[0].mxu0
  %v898 = vadd.f32 %v199, %v897
  %v899 = vpop.f32.mrb[0].mxu0
  %900 = vmatprep.mubr.bf16.mxu0 %v373
  %901 = vmatmul.mubr.bf16.gmra.mrb[0].mxu0 %v372
  %v902 = vpop.f32.mrb[0].mxu0
  %v903 = vadd.f32 %v199, %v902
  %v904 = vpop.f32.mrb[0].mxu0
  %v905 = vpop.f32.mrb[0].mxu0
  %v906 = vadd.f32 %v199, %v905
  %v907 = vpop.f32.mrb[0].mxu0
  %908 = vmatprep.mubr.bf16.mxu0 %v381
  %909 = vmatmul.mubr.bf16.gmra.mrb[0].mxu0 %v380
  %v910 = vpop.f32.mrb[0].mxu0
  %v911 = vadd.f32 %v199, %v910
  %v912 = vpop.f32.mrb[0].mxu0
  %v913 = vpop.f32.mrb[0].mxu0
  %v914 = vadd.f32 %v199, %v913
  %v915 = vpop.f32.mrb[0].mxu0
  %916 = vmatprep.mubr.bf16.mxu0 %v389
  %917 = vmatmul.mubr.bf16.gmra.mrb[0].mxu0 %v388
  %v918 = vpop.f32.mrb[0].mxu0
  %v919 = vadd.f32 %v199, %v918
  %v920 = vpop.f32.mrb[0].mxu0
  %v921 = vpop.f32.mrb[0].mxu0
  %v922 = vadd.f32 %v199, %v921
  %v923 = vpop.f32.mrb[0].mxu0
  %924 = vmatprep.mubr.bf16.mxu0 %v397
  %925 = vmatmul.mubr.bf16.gmra.mrb[0].mxu0 %v396
  %v926 = vpop.f32.mrb[0].mxu0
  %v927 = vadd.f32 %v199, %v926
  %v928 = vpop.f32.mrb[0].mxu0
  %v929 = vpop.f32.mrb[0].mxu0
  %v930 = vadd.f32 %v199, %v929
  %v931 = vpop.f32.mrb[0].mxu0
  %932 = vmatprep.mubr.bf16.mxu0 %v405
  %933 = vmatmul.mubr.bf16.gmra.mrb[0].mxu0 %v404
  %v934 = vpop.f32.mrb[0].mxu0
  %v935 = vadd.f32 %v199, %v934
  %v936 = vpop.f32.mrb[0].mxu0
  %v937 = vpop.f32.mrb[0].mxu0
  %v938 = vpop.f32.mrb[0].mxu0
  %939 = vdwg.mxu0
  %940 = vmatprep.subr.bf16.mxu0 0
  %941 = vmatpush1.bf16.msra.mxu0 %v740
  %942 = vmatprep.subr.bf16.mxu0 0
  %943 = vmatpush1.bf16.msra.mxu0 %v741
  %944 = vmatprep.subr.bf16.mxu0 0
  %945 = vmatpush1.bf16.msra.mxu0 %v742
  %946 = vmatprep.subr.bf16.mxu0 0
  %947 = vmatpush1.bf16.msra.mxu0 %v743
  %948 = vmatprep.subr.bf16.mxu0 0
  %949 = vmatpush1.bf16.msra.mxu0 %v744
  %950 = vmatprep.subr.bf16.mxu0 0
  %951 = vmatpush1.bf16.msra.mxu0 %v745
  %952 = vmatprep.subr.bf16.mxu0 0
  %953 = vmatpush1.bf16.msra.mxu0 %v746
  %954 = vmatprep.subr.bf16.mxu0 0
  %955 = vmatpush1.bf16.msra.mxu0 %v747
  %956 = vmatprep.subr.bf16.mxu0 0
  %957 = vmatpush1.bf16.msra.mxu0 %v748
  %958 = vmatprep.subr.bf16.mxu0 0
  %959 = vmatpush1.bf16.msra.mxu0 %v749
  %960 = vmatprep.subr.bf16.mxu0 0
  %961 = vmatpush1.bf16.msra.mxu0 %v750
  %962 = vmatprep.subr.bf16.mxu0 0
  %963 = vmatpush1.bf16.msra.mxu0 %v751
  %964 = vmatprep.subr.bf16.mxu0 0
  %965 = vmatpush1.bf16.msra.mxu0 %v752
  %966 = vmatprep.subr.bf16.mxu0 0
  %967 = vmatpush1.bf16.msra.mxu0 %v753
  %968 = vmatprep.subr.bf16.mxu0 0
  %969 = vmatpush1.bf16.msra.mxu0 %v754
  %970 = vmatprep.subr.bf16.mxu0 0
  %971 = vmatpush1.bf16.msra.mxu0 %v755
  %972 = vmatprep.mubr.bf16.mxu0 %v359
  %973 = vmatmul.mubr.bf16.gmra.mrb[0].mxu0 %v358
  %v974 = vpop.f32.mrb[0].mxu0
  %v975 = vadd.f32 %v887, %v974
  %v976 = vpop.f32.mrb[0].mxu0
  %v977 = vpop.f32.mrb[0].mxu0
  %v978 = vadd.f32 %v890, %v977
  %v979 = vpop.f32.mrb[0].mxu0
  %980 = vmatprep.mubr.bf16.mxu0 %v367
  %981 = vmatmul.mubr.bf16.gmra.mrb[0].mxu0 %v366
  %v982 = vpop.f32.mrb[0].mxu0
  %v983 = vadd.f32 %v895, %v982
  %v984 = vpop.f32.mrb[0].mxu0
  %v985 = vpop.f32.mrb[0].mxu0
  %v986 = vadd.f32 %v898, %v985
  %v987 = vpop.f32.mrb[0].mxu0
  %988 = vmatprep.mubr.bf16.mxu0 %v375
  %989 = vmatmul.mubr.bf16.gmra.mrb[0].mxu0 %v374
  %v990 = vpop.f32.mrb[0].mxu0
  %v991 = vadd.f32 %v903, %v990
  %v992 = vpop.f32.mrb[0].mxu0
  %v993 = vpop.f32.mrb[0].mxu0
  %v994 = vadd.f32 %v906, %v993
  %v995 = vpop.f32.mrb[0].mxu0
  %996 = vmatprep.mubr.bf16.mxu0 %v383
  %997 = vmatmul.mubr.bf16.gmra.mrb[0].mxu0 %v382
  %v998 = vpop.f32.mrb[0].mxu0
  %v999 = vadd.f32 %v911, %v998
  %v1000 = vpop.f32.mrb[0].mxu0
  %v1001 = vpop.f32.mrb[0].mxu0
  %v1002 = vadd.f32 %v914, %v1001
  %v1003 = vpop.f32.mrb[0].mxu0
  %1004 = vmatprep.mubr.bf16.mxu0 %v391
  %1005 = vmatmul.mubr.bf16.gmra.mrb[0].mxu0 %v390
  %v1006 = vpop.f32.mrb[0].mxu0
  %v1007 = vadd.f32 %v919, %v1006
  %v1008 = vpop.f32.mrb[0].mxu0
  %v1009 = vpop.f32.mrb[0].mxu0
  %v1010 = vadd.f32 %v922, %v1009
  %v1011 = vpop.f32.mrb[0].mxu0
  %1012 = vmatprep.mubr.bf16.mxu0 %v399
  %1013 = vmatmul.mubr.bf16.gmra.mrb[0].mxu0 %v398
  %v1014 = vpop.f32.mrb[0].mxu0
  %v1015 = vadd.f32 %v927, %v1014
  %v1016 = vpop.f32.mrb[0].mxu0
  %v1017 = vpop.f32.mrb[0].mxu0
  %v1018 = vadd.f32 %v930, %v1017
  %v1019 = vpop.f32.mrb[0].mxu0
  %1020 = vmatprep.mubr.bf16.mxu0 %v407
  %1021 = vmatmul.mubr.bf16.gmra.mrb[0].mxu0 %v406
  %v1022 = vpop.f32.mrb[0].mxu0
  %v1023 = vadd.f32 %v935, %v1022
  %v1024 = vpop.f32.mrb[0].mxu0
  %v1025 = vpop.f32.mrb[0].mxu0
  %v1026 = vpop.f32.mrb[0].mxu0
  %1027 = vdwg.mxu0
  %1028 = vmatprep.subr.bf16.mxu0 0
  %1029 = vmatpush1.bf16.msra.mxu0 %v756
  %1030 = vmatprep.subr.bf16.mxu0 0
  %1031 = vmatpush1.bf16.msra.mxu0 %v757
  %1032 = vmatprep.subr.bf16.mxu0 0
  %1033 = vmatpush1.bf16.msra.mxu0 %v758
  %1034 = vmatprep.subr.bf16.mxu0 0
  %1035 = vmatpush1.bf16.msra.mxu0 %v759
  %1036 = vmatprep.subr.bf16.mxu0 0
  %1037 = vmatpush1.bf16.msra.mxu0 %v760
  %1038 = vmatprep.subr.bf16.mxu0 0
  %1039 = vmatpush1.bf16.msra.mxu0 %v761
  %1040 = vmatprep.subr.bf16.mxu0 0
  %1041 = vmatpush1.bf16.msra.mxu0 %v762
  %1042 = vmatprep.subr.bf16.mxu0 0
  %1043 = vmatpush1.bf16.msra.mxu0 %v763
  %1044 = vmatprep.subr.bf16.mxu0 0
  %1045 = vmatpush1.bf16.msra.mxu0 %v764
  %1046 = vmatprep.subr.bf16.mxu0 0
  %1047 = vmatpush1.bf16.msra.mxu0 %v765
  %1048 = vmatprep.subr.bf16.mxu0 0
  %1049 = vmatpush1.bf16.msra.mxu0 %v766
  %1050 = vmatprep.subr.bf16.mxu0 0
  %1051 = vmatpush1.bf16.msra.mxu0 %v767
  %1052 = vmatprep.subr.bf16.mxu0 0
  %1053 = vmatpush1.bf16.msra.mxu0 %v768
  %1054 = vmatprep.subr.bf16.mxu0 0
  %1055 = vmatpush1.bf16.msra.mxu0 %v769
  %1056 = vmatprep.subr.bf16.mxu0 0
  %1057 = vmatpush1.bf16.msra.mxu0 %v770
  %1058 = vmatprep.subr.bf16.mxu0 0
  %1059 = vmatpush1.bf16.msra.mxu0 %v771
  %1060 = vmatprep.mubr.bf16.mxu0 %v361
  %1061 = vmatmul.mubr.bf16.gmra.mrb[0].mxu0 %v360
  %v1062 = vpop.f32.mrb[0].mxu0
  %v1063 = vadd.f32 %v975, %v1062
  %v1064 = vpop.f32.mrb[0].mxu0
  %v1065 = vpop.f32.mrb[0].mxu0
  %v1066 = vadd.f32 %v978, %v1065
  %v1067 = vpop.f32.mrb[0].mxu0
  %1068 = vmatprep.mubr.bf16.mxu0 %v369
  %1069 = vmatmul.mubr.bf16.gmra.mrb[0].mxu0 %v368
  %v1070 = vpop.f32.mrb[0].mxu0
  %v1071 = vadd.f32 %v983, %v1070
  %v1072 = vpop.f32.mrb[0].mxu0
  %v1073 = vpop.f32.mrb[0].mxu0
  %v1074 = vadd.f32 %v986, %v1073
  %v1075 = vpop.f32.mrb[0].mxu0
  %1076 = vmatprep.mubr.bf16.mxu0 %v377
  %1077 = vmatmul.mubr.bf16.gmra.mrb[0].mxu0 %v376
  %v1078 = vpop.f32.mrb[0].mxu0
  %v1079 = vadd.f32 %v991, %v1078
  %v1080 = vpop.f32.mrb[0].mxu0
  %v1081 = vpop.f32.mrb[0].mxu0
  %v1082 = vadd.f32 %v994, %v1081
  %v1083 = vpop.f32.mrb[0].mxu0
  %1084 = vmatprep.mubr.bf16.mxu0 %v385
  %1085 = vmatmul.mubr.bf16.gmra.mrb[0].mxu0 %v384
  %v1086 = vpop.f32.mrb[0].mxu0
  %v1087 = vadd.f32 %v999, %v1086
  %v1088 = vpop.f32.mrb[0].mxu0
  %v1089 = vpop.f32.mrb[0].mxu0
  %v1090 = vadd.f32 %v1002, %v1089
  %v1091 = vpop.f32.mrb[0].mxu0
  %1092 = vmatprep.mubr.bf16.mxu0 %v393
  %1093 = vmatmul.mubr.bf16.gmra.mrb[0].mxu0 %v392
  %v1094 = vpop.f32.mrb[0].mxu0
  %v1095 = vadd.f32 %v1007, %v1094
  %v1096 = vpop.f32.mrb[0].mxu0
  %v1097 = vpop.f32.mrb[0].mxu0
  %v1098 = vadd.f32 %v1010, %v1097
  %v1099 = vpop.f32.mrb[0].mxu0
  %1100 = vmatprep.mubr.bf16.mxu0 %v401
  %1101 = vmatmul.mubr.bf16.gmra.mrb[0].mxu0 %v400
  %v1102 = vpop.f32.mrb[0].mxu0
  %v1103 = vadd.f32 %v1015, %v1102
  %v1104 = vpop.f32.mrb[0].mxu0
  %v1105 = vpop.f32.mrb[0].mxu0
  %v1106 = vadd.f32 %v1018, %v1105
  %v1107 = vpop.f32.mrb[0].mxu0
  %1108 = vmatprep.mubr.bf16.mxu0 %v409
  %1109 = vmatmul.mubr.bf16.gmra.mrb[0].mxu0 %v408
  %v1110 = vpop.f32.mrb[0].mxu0
  %v1111 = vadd.f32 %v1023, %v1110
  %v1112 = vpop.f32.mrb[0].mxu0
  %v1113 = vpop.f32.mrb[0].mxu0
  %v1114 = vpop.f32.mrb[0].mxu0
  %1115 = vdwg.mxu0
  %1116 = vmatprep.subr.bf16.mxu0 0
  %1117 = vmatpush1.bf16.msra.mxu0 %v772
  %1118 = vmatprep.subr.bf16.mxu0 0
  %1119 = vmatpush1.bf16.msra.mxu0 %v773
  %1120 = vmatprep.subr.bf16.mxu0 0
  %1121 = vmatpush1.bf16.msra.mxu0 %v774
  %1122 = vmatprep.subr.bf16.mxu0 0
  %1123 = vmatpush1.bf16.msra.mxu0 %v775
  %1124 = vmatprep.subr.bf16.mxu0 0
  %1125 = vmatpush1.bf16.msra.mxu0 %v776
  %1126 = vmatprep.subr.bf16.mxu0 0
  %1127 = vmatpush1.bf16.msra.mxu0 %v777
  %1128 = vmatprep.subr.bf16.mxu0 0
  %1129 = vmatpush1.bf16.msra.mxu0 %v778
  %1130 = vmatprep.subr.bf16.mxu0 0
  %1131 = vmatpush1.bf16.msra.mxu0 %v779
  %1132 = vmatprep.subr.bf16.mxu0 0
  %1133 = vmatpush1.bf16.msra.mxu0 %v780
  %1134 = vmatprep.subr.bf16.mxu0 0
  %1135 = vmatpush1.bf16.msra.mxu0 %v781
  %1136 = vmatprep.subr.bf16.mxu0 0
  %1137 = vmatpush1.bf16.msra.mxu0 %v782
  %1138 = vmatprep.subr.bf16.mxu0 0
  %1139 = vmatpush1.bf16.msra.mxu0 %v783
  %1140 = vmatprep.subr.bf16.mxu0 0
  %1141 = vmatpush1.bf16.msra.mxu0 %v784
  %1142 = vmatprep.subr.bf16.mxu0 0
  %1143 = vmatpush1.bf16.msra.mxu0 %v785
  %1144 = vmatprep.subr.bf16.mxu0 0
  %1145 = vmatpush1.bf16.msra.mxu0 %v786
  %1146 = vmatprep.subr.bf16.mxu0 0
  %1147 = vmatpush1.bf16.msra.mxu0 %v787
  %1148 = vmatprep.mubr.bf16.mxu0 %v363
  %1149 = vmatmul.mubr.bf16.gmra.mrb[0].mxu0 %v362
  %v1150 = vpop.f32.mrb[0].mxu0
  %v1151 = vadd.f32 %v1063, %v1150
  %v1152 = vpop.f32.mrb[0].mxu0
  %v1153 = vpop.f32.mrb[0].mxu0
  %v1154 = vadd.f32 %v1066, %v1153
  %v1155 = vpop.f32.mrb[0].mxu0
  %1156 = vmatprep.mubr.bf16.mxu0 %v371
  %1157 = vmatmul.mubr.bf16.gmra.mrb[0].mxu0 %v370
  %v1158 = vpop.f32.mrb[0].mxu0
  %v1159 = vadd.f32 %v1071, %v1158
  %v1160 = vpop.f32.mrb[0].mxu0
  %v1161 = vpop.f32.mrb[0].mxu0
  %v1162 = vadd.f32 %v1074, %v1161
  %v1163 = vpop.f32.mrb[0].mxu0
  %1164 = vmatprep.mubr.bf16.mxu0 %v379
  %1165 = vmatmul.mubr.bf16.gmra.mrb[0].mxu0 %v378
  %v1166 = vpop.f32.mrb[0].mxu0
  %v1167 = vadd.f32 %v1079, %v1166
  %v1168 = vpop.f32.mrb[0].mxu0
  %v1169 = vpop.f32.mrb[0].mxu0
  %v1170 = vadd.f32 %v1082, %v1169
  %v1171 = vpop.f32.mrb[0].mxu0
  %1172 = vmatprep.mubr.bf16.mxu0 %v387
  %1173 = vmatmul.mubr.bf16.gmra.mrb[0].mxu0 %v386
  %v1174 = vpop.f32.mrb[0].mxu0
  %v1175 = vadd.f32 %v1087, %v1174
  %v1176 = vpop.f32.mrb[0].mxu0
  %v1177 = vpop.f32.mrb[0].mxu0
  %v1178 = vadd.f32 %v1090, %v1177
  %v1179 = vpop.f32.mrb[0].mxu0
  %1180 = vmatprep.mubr.bf16.mxu0 %v395
  %1181 = vmatmul.mubr.bf16.gmra.mrb[0].mxu0 %v394
  %v1182 = vpop.f32.mrb[0].mxu0
  %v1183 = vadd.f32 %v1095, %v1182
  %v1184 = vpop.f32.mrb[0].mxu0
  %v1185 = vpop.f32.mrb[0].mxu0
  %v1186 = vadd.f32 %v1098, %v1185
  %v1187 = vpop.f32.mrb[0].mxu0
  %1188 = vmatprep.mubr.bf16.mxu0 %v403
  %1189 = vmatmul.mubr.bf16.gmra.mrb[0].mxu0 %v402
  %v1190 = vpop.f32.mrb[0].mxu0
  %v1191 = vadd.f32 %v1103, %v1190
  %v1192 = vpop.f32.mrb[0].mxu0
  %v1193 = vpop.f32.mrb[0].mxu0
  %v1194 = vadd.f32 %v1106, %v1193
  %v1195 = vpop.f32.mrb[0].mxu0
  %1196 = vmatprep.mubr.bf16.mxu0 %v411
  %1197 = vmatmul.mubr.bf16.gmra.mrb[0].mxu0 %v410
  %v1198 = vpop.f32.mrb[0].mxu0
  %v1199 = vadd.f32 %v1111, %v1198
  %v1200 = vpop.f32.mrb[0].mxu0
  %v1201 = vpop.f32.mrb[0].mxu0
  %v1202 = vpop.f32.mrb[0].mxu0
  %1203 = vdwg.mxu0
  %vm1204 = vcmp.ge.f32.partialorder %v1151, 0.0
  %vm1205 = vcmp.ge.f32.partialorder %v1154, 0.0
  %vm1206 = vcmp.ge.f32.partialorder %v1159, 0.0
  %vm1207 = vcmp.ge.f32.partialorder %v1162, 0.0
  %vm1208 = vcmp.ge.f32.partialorder %v1167, 0.0
  %vm1209 = vcmp.ge.f32.partialorder %v1170, 0.0
  %vm1210 = vcmp.ge.f32.partialorder %v1175, 0.0
  %vm1211 = vcmp.ge.f32.partialorder %v1178, 0.0
  %vm1212 = vcmp.ge.f32.partialorder %v1183, 0.0
  %vm1213 = vcmp.ge.f32.partialorder %v1186, 0.0
  %vm1214 = vcmp.ge.f32.partialorder %v1191, 0.0
  %vm1215 = vcmp.ge.f32.partialorder %v1194, 0.0
  %vm1216 = vcmp.ge.f32.partialorder %v1199, 0.0
  %v1217 = vmul.f32 %v1151, 0.1
  %v1218 = vmul.f32 %v1154, 0.1
  %v1219 = vmul.f32 %v1159, 0.1
  %v1220 = vmul.f32 %v1162, 0.1
  %v1221 = vmul.f32 %v1167, 0.1
  %v1222 = vmul.f32 %v1170, 0.1
  %v1223 = vmul.f32 %v1175, 0.1
  %v1224 = vmul.f32 %v1178, 0.1
  %v1225 = vmul.f32 %v1183, 0.1
  %v1226 = vmul.f32 %v1186, 0.1
  %v1227 = vmul.f32 %v1191, 0.1
  %v1228 = vmul.f32 %v1194, 0.1
  %v1229 = vmul.f32 %v1199, 0.1
  %v1230 = vsel %vm1204, %v1151, %v1217
  %v1231 = vsel %vm1205, %v1154, %v1218
  %v1232 = vsel %vm1206, %v1159, %v1219
  %v1233 = vsel %vm1207, %v1162, %v1220
  %v1234 = vsel %vm1208, %v1167, %v1221
  %v1235 = vsel %vm1209, %v1170, %v1222
  %v1236 = vsel %vm1210, %v1175, %v1223
  %v1237 = vsel %vm1211, %v1178, %v1224
  %v1238 = vsel %vm1212, %v1183, %v1225
  %v1239 = vsel %vm1213, %v1186, %v1226
  %v1240 = vsel %vm1214, %v1191, %v1227
  %v1241 = vsel %vm1215, %v1194, %v1228
  %v1242 = vsel %vm1216, %v1199, %v1229
  %v1243 = vld [vmem:[%s2 + $0x1] sm:$0x1]
  %v1244 = vld [vmem:[%s2 + $0x2] sm:$0x1]
  %v1245 = vadd.f32 %v1230, %v1231
  %v1246 = vadd.f32 %v1245, %v1232
  %v1247 = vadd.f32 %v1246, %v1233
  %v1248 = vadd.f32 %v1247, %v1234
  %v1249 = vadd.f32 %v1248, %v1235
  %v1250 = vadd.f32 %v1249, %v1236
  %v1251 = vadd.f32 %v1250, %v1237
  %v1252 = vadd.f32 %v1251, %v1238
  %v1253 = vadd.f32 %v1252, %v1239
  %v1254 = vadd.f32 %v1253, %v1240
  %v1255 = vadd.f32 %v1254, %v1241
  %vm1256 = vcmask 1041408
  %v1257 = vsel %vm1256, %v1242, 0.0
  %v1258 = vadd.f32 %v1255, %v1257
  %v1259 = vrot.slane %v1258, 4
  %v1260 = vadd.f32 %v1258, %v1259
  %v1261 = vrot.slane %v1260, 2
  %v1262 = vadd.f32 %v1260, %v1261
  %v1263 = vrot.slane %v1262, 1
  %v1264 = vadd.f32 %v1262, %v1263
  %v1265 = vrcp.pop 98.0
  %v1266 = vmul.f32 %v1264, %v1265
  %v1267 = vsub.f32 %v1230, %v1266
  %v1268 = vsub.f32 %v1231, %v1266
  %v1269 = vsub.f32 %v1232, %v1266
  %v1270 = vsub.f32 %v1233, %v1266
  %v1271 = vsub.f32 %v1234, %v1266
  %v1272 = vsub.f32 %v1235, %v1266
  %v1273 = vsub.f32 %v1236, %v1266
  %v1274 = vsub.f32 %v1237, %v1266
  %v1275 = vsub.f32 %v1238, %v1266
  %v1276 = vsub.f32 %v1239, %v1266
  %v1277 = vsub.f32 %v1240, %v1266
  %v1278 = vsub.f32 %v1241, %v1266
  %v1279 = vsub.f32 %v1242, %v1266
  %v1280 = vmul.f32 %v1267, %v1267
  %v1281 = vmul.f32 %v1268, %v1268
  %v1282 = vmul.f32 %v1269, %v1269
  %v1283 = vmul.f32 %v1270, %v1270
  %v1284 = vmul.f32 %v1271, %v1271
  %v1285 = vmul.f32 %v1272, %v1272
  %v1286 = vmul.f32 %v1273, %v1273
  %v1287 = vmul.f32 %v1274, %v1274
  %v1288 = vmul.f32 %v1275, %v1275
  %v1289 = vmul.f32 %v1276, %v1276
  %v1290 = vmul.f32 %v1277, %v1277
  %v1291 = vmul.f32 %v1278, %v1278
  %v1292 = vmul.f32 %v1279, %v1279
  %v1293 = vadd.f32 %v1280, %v1281
  %v1294 = vadd.f32 %v1293, %v1282
  %v1295 = vadd.f32 %v1294, %v1283
  %v1296 = vadd.f32 %v1295, %v1284
  %v1297 = vadd.f32 %v1296, %v1285
  %v1298 = vadd.f32 %v1297, %v1286
  %v1299 = vadd.f32 %v1298, %v1287
  %v1300 = vadd.f32 %v1299, %v1288
  %v1301 = vadd.f32 %v1300, %v1289
  %v1302 = vadd.f32 %v1301, %v1290
  %v1303 = vadd.f32 %v1302, %v1291
  %v1304 = vsel %vm1256, %v1292, 0.0
  %v1305 = vadd.f32 %v1303, %v1304
  %v1306 = vrot.slane %v1305, 4
  %v1307 = vadd.f32 %v1305, %v1306
  %v1308 = vrot.slane %v1307, 2
  %v1309 = vadd.f32 %v1307, %v1308
  %v1310 = vrot.slane %v1309, 1
  %v1311 = vadd.f32 %v1309, %v1310
  %v1312 = vmul.f32 %v1311, %v1265
  %v1313 = vadd.f32 %v1312, 1e-05
  %v1314 = vrsqrt.pop %v1313
  %v1315 = vmul.f32 %v1267, %v1314
  %v1316 = vmul.f32 %v1268, %v1314
  %v1317 = vmul.f32 %v1269, %v1314
  %v1318 = vmul.f32 %v1270, %v1314
  %v1319 = vmul.f32 %v1271, %v1314
  %v1320 = vmul.f32 %v1272, %v1314
  %v1321 = vmul.f32 %v1273, %v1314
  %v1322 = vmul.f32 %v1274, %v1314
  %v1323 = vmul.f32 %v1275, %v1314
  %v1324 = vmul.f32 %v1276, %v1314
  %v1325 = vmul.f32 %v1277, %v1314
  %v1326 = vmul.f32 %v1278, %v1314
  %v1327 = vmul.f32 %v1279, %v1314
  %v1328 = vlaneseq
  %v1329 = vshrl.u32 %v1328, 7
  %v1330 = vsub.s32 0, %v1329
  %v1331 = vrot.slane %v1243, %v1330
  %v1332 = vmul.f32 %v1315, %v1331
  %v1333 = vmul.f32 %v1316, %v1331
  %v1334 = vmul.f32 %v1317, %v1331
  %v1335 = vmul.f32 %v1318, %v1331
  %v1336 = vmul.f32 %v1319, %v1331
  %v1337 = vmul.f32 %v1320, %v1331
  %v1338 = vmul.f32 %v1321, %v1331
  %v1339 = vmul.f32 %v1322, %v1331
  %v1340 = vmul.f32 %v1323, %v1331
  %v1341 = vmul.f32 %v1324, %v1331
  %v1342 = vmul.f32 %v1325, %v1331
  %v1343 = vmul.f32 %v1326, %v1331
  %v1344 = vmul.f32 %v1327, %v1331
  %v1345 = vlaneseq
  %v1346 = vshrl.u32 %v1345, 7
  %v1347 = vsub.s32 0, %v1346
  %v1348 = vrot.slane %v1244, %v1347
  %v1349 = vadd.f32 %v1332, %v1348
  %v1350 = vadd.f32 %v1333, %v1348
  %v1351 = vadd.f32 %v1334, %v1348
  %v1352 = vadd.f32 %v1335, %v1348
  %v1353 = vadd.f32 %v1336, %v1348
  %v1354 = vadd.f32 %v1337, %v1348
  %v1355 = vadd.f32 %v1338, %v1348
  %v1356 = vadd.f32 %v1339, %v1348
  %v1357 = vadd.f32 %v1340, %v1348
  %v1358 = vadd.f32 %v1341, %v1348
  %v1359 = vadd.f32 %v1342, %v1348
  %v1360 = vadd.f32 %v1343, %v1348
  %v1361 = vadd.f32 %v1344, %v1348
  %v1362 = vpack.c.bf16 %v1350, %v1349
  %v1363 = vpack.c.bf16 %v1352, %v1351
  %v1364 = vpack.c.bf16 %v1354, %v1353
  %v1365 = vpack.c.bf16 %v1356, %v1355
  %v1366 = vpack.c.bf16 %v1358, %v1357
  %v1367 = vpack.c.bf16 %v1360, %v1359
  %v1368 = vpack.c.bf16 %v1361, %v1361
  %v1376 = vunpack.c.l.b16 %v1362
  %v1377 = vunpack.c.h.b16 %v1362
  %v1378 = vunpack.c.l.b16 %v1363
  %v1379 = vunpack.c.h.b16 %v1363
  %v1380 = vunpack.c.l.b16 %v1364
  %v1381 = vunpack.c.h.b16 %v1364
  %v1382 = vunpack.c.l.b16 %v1365
  %v1383 = vunpack.c.h.b16 %v1365
  %v1384 = vunpack.c.l.b16 %v1366
  %v1385 = vunpack.c.h.b16 %v1366
  %v1386 = vunpack.c.l.b16 %v1367
  %v1387 = vunpack.c.h.b16 %v1367
  %v1388 = vunpack.c.l.b16 %v1368
  %v1389 = vpack.c.b16 %v1376, %v1376
  %v1390 = vpack.c.b16 %v1377, %v1377
  %v1391 = vpack.c.b16 %v1378, %v1378
  %v1392 = vpack.c.b16 %v1379, %v1379
  %v1393 = vpack.c.b16 %v1380, %v1380
  %v1394 = vpack.c.b16 %v1381, %v1381
  %v1395 = vpack.c.b16 %v1382, %v1382
  %v1396 = vpack.c.b16 %v1383, %v1383
  %v1397 = vpack.c.b16 %v1384, %v1384
  %v1398 = vpack.c.b16 %v1385, %v1385
  %v1399 = vpack.c.b16 %v1386, %v1386
  %v1400 = vpack.c.b16 %v1387, %v1387
  %v1401 = vpack.c.b16 %v1388, %v1388
  %1415 = vst [vmem:[%s3] sm:$0xf] %v1389
  %1416 = vst [vmem:[%s3 + $0x4] sm:$0xf] %v1390
  %1417 = vst [vmem:[%s3 + $0x8] sm:$0xf] %v1391
  %1418 = vst [vmem:[%s3 + $0xc] sm:$0xf] %v1392
  %1419 = vst [vmem:[%s3 + $0x10] sm:$0xf] %v1393
  %1420 = vst [vmem:[%s3 + $0x14] sm:$0xf] %v1394
  %1421 = vst [vmem:[%s3 + $0x18] sm:$0xf] %v1395
  %1422 = vst [vmem:[%s3 + $0x1c] sm:$0xf] %v1396
  %1423 = vst [vmem:[%s3 + $0x20] sm:$0xf] %v1397
  %1424 = vst [vmem:[%s3 + $0x24] sm:$0xf] %v1398
  %1425 = vst [vmem:[%s3 + $0x28] sm:$0xf] %v1399
  %1426 = vst [vmem:[%s3 + $0x2c] sm:$0xf] %v1400
  %1427 = vst [vmem:[%s3 + $0x30] sm:$0x1] %v1401
  // Predicated region
  $region14: #{discriminator_forward.4} parent=0 // pred_check
    _
  $region15: #{discriminator_forward.4} parent=0 // pred_check_branch
    %1429 = sbr.rel (0) target = $region17
  $region16: #{discriminator_forward.4} parent=0 // pred_region
    _
  $region17: #{discriminator_forward.4} parent=0 // pred_fallthru
    _
  // Predicated region
  $region18: #{discriminator_forward.4} parent=0 // pred_check
    _
  $region19: #{discriminator_forward.4} parent=0 // pred_check_branch
    %1431 = sbr.rel (0) target = $region21
  $region20: #{discriminator_forward.4} parent=0 // pred_region
    _
  $region21: #{discriminator_forward.4} parent=0 // pred_fallthru
    _

// kernel: discriminator_forward.5
$region0: #{discriminator_forward.5}
  #allocation0 [shape = 'u32[]', space=smem, size = 0x4, offset = 0x4, fixed_abs, tag = 'smem constant byte address 0x4 - core index']
  #allocation1 [shape = 'u32[144,128]{1,0:T(1,128)}', space=vmem, size = 0x12000, scoped, tag = 'internal scratch']
  %s0 = inlined_call_operand.vmem [shape: bf16[2,6272], index: 0, kind: input, shape index: {}]
  %s1 = inlined_call_operand.hbm [shape: bf16[6272,1024], index: 1, kind: input, shape index: {}]
  %s2 = inlined_call_operand.vmem [shape: f32[3,1024], index: 2, kind: input, shape index: {}]
  %s3 = inlined_call_operand.vmem [shape: bf16[1024,13], index: 3, kind: input, shape index: {}]
  %s4 = inlined_call_operand.vmem [shape: f32[3,13], index: 4, kind: input, shape index: {}]
  %s5 = inlined_call_operand.vmem [shape: f32[2,13], index: 5, kind: output, shape index: {}]
  %s6 = sld [smem:[#allocation0]]
  $region65: #{discriminator_forward.5} parent=0
    _
  %s8 = ssub.s32 1, %s6
  %s9 = scalar_select 0, %s8, %s6
  $region1: #{discriminator_forward.5} parent=0
    #allocation2 [shape = 'u8[6422528]{0}', space=vmem, size = 0x620000, scoped, tag = 'input window, operand 1']
    #allocation3 [shape = 's32[2]{0}', space=sflag, size = 0x8, scoped, tag = 'scoped memory for discriminator_forward.5']
    %10 = vsyncpa [#allocation3], 0
    %s11 = scalar_lea.sflag [#allocation3], 1
    %12 = vsyncpa %s11, 0
    loop: start=0, step=1, limit=6
    $region2: #{discriminator_forward.5} parent=1 // loop_pre_header
      _
    $region3: #{discriminator_forward.5} parent=1 // loop_header
      %s14 = sphi 0, %s18
      %p15 = scmp.ge.s32.totalorder %s14, 6
      %s22 = sphi 0, %s22
      %s24 = sphi 0, %s22
      %s25 = sphi 0, %s24
      %s39 = sphi 0, %s25
      %s45 = sphi 0, %s47
      %s48 = sphi 0, %s45
      %s49 = sphi 0, %s48
      %s65 = sphi 0, %s49
      %s71 = sphi 0, %s73
      %s74 = sphi 0, %s71
      %s75 = sphi 0, %s74
      %s91 = sphi 0, %s75
      %s97 = sphi 0, %s99
      %s100 = sphi 0, %s97
      %s101 = sphi 0, %s100
      %s117 = sphi 0, %s101
      %s121 = sphi 0, %s121
      %s123 = sphi 0, %s121
      %s124 = sphi 0, %s123
      %s138 = sphi 0, %s124
      %s142 = sphi 0, %s142
      %s144 = sphi 0, %s142
      %s145 = sphi 0, %s144
      %s159 = sphi 0, %s145
    $region4: #{discriminator_forward.5} parent=1 // loop_header_branch
      %17 = sbr.rel (%p15) target = $region8
    $region5: #{discriminator_forward.5} parent=1 // loop_body
      %s19 = ssub.s32 %s14, 1
      %s20 = ssub.s32 %s14, 2
      %s21 = sadd.s32 %s14, 1
      %s23 = sadd.s32 %s22, 1
      %p26 = scmp.eq.s32.totalorder %s14, 3
      %p27 = scmp.ne.s32.totalorder %s22, %s24
      %p28 = scmp.eq.s32.totalorder %s14, 0
      %p29 = por %p27, %p28
      %p30 = scmp.ne.s32.totalorder %s22, %s24
      %p31 = scmp.eq.s32.totalorder %s19, 3
      %p32 = por %p30, %p31
      %p33 = scmp.ne.s32.totalorder %s24, %s25
      %p34 = scmp.eq.s32.totalorder %s19, 0
      %p35 = por %p33, %p34
      %p36 = scmp.ne.s32.totalorder %s24, %s25
      %p37 = scmp.eq.s32.totalorder %s20, 3
      %p38 = por %p36, %p37
      %p40 = scmp.ne.s32.totalorder %s25, %s39
      %p41 = scmp.eq.s32.totalorder %s20, 0
      %p42 = por %p40, %p41
      %s43 = ssub.s32 %s14, %s21
      %p44 = scmp.eq.s32.totalorder %s43, 0
      %s46 = sadd.s32 %s45, 1
      %s47 = scalar_select %p44, %s45, %s46
      %p50 = pneg %p44
      %p51 = scmp.eq.s32.totalorder %s14, 3
      %p52 = por %p50, %p51
      %p53 = scmp.ne.s32.totalorder %s45, %s48
      %p54 = scmp.eq.s32.totalorder %s14, 0
      %p55 = por %p53, %p54
      %p56 = scmp.ne.s32.totalorder %s45, %s48
      %p57 = scmp.eq.s32.totalorder %s19, 3
      %p58 = por %p56, %p57
      %p59 = scmp.ne.s32.totalorder %s48, %s49
      %p60 = scmp.eq.s32.totalorder %s19, 0
      %p61 = por %p59, %p60
      %p62 = scmp.ne.s32.totalorder %s48, %s49
      %p63 = scmp.eq.s32.totalorder %s20, 3
      %p64 = por %p62, %p63
      %p66 = scmp.ne.s32.totalorder %s49, %s65
      %p67 = scmp.eq.s32.totalorder %s20, 0
      %p68 = por %p66, %p67
      %s69 = ssub.s32 %s14, %s21
      %p70 = scmp.eq.s32.totalorder %s69, 0
      %s72 = sadd.s32 %s71, 1
      %s73 = scalar_select %p70, %s71, %s72
      %p76 = pneg %p70
      %p77 = scmp.eq.s32.totalorder %s14, 3
      %p78 = por %p76, %p77
      %p79 = scmp.ne.s32.totalorder %s71, %s74
      %p80 = scmp.eq.s32.totalorder %s14, 0
      %p81 = por %p79, %p80
      %p82 = scmp.ne.s32.totalorder %s71, %s74
      %p83 = scmp.eq.s32.totalorder %s19, 3
      %p84 = por %p82, %p83
      %p85 = scmp.ne.s32.totalorder %s74, %s75
      %p86 = scmp.eq.s32.totalorder %s19, 0
      %p87 = por %p85, %p86
      %p88 = scmp.ne.s32.totalorder %s74, %s75
      %p89 = scmp.eq.s32.totalorder %s20, 3
      %p90 = por %p88, %p89
      %p92 = scmp.ne.s32.totalorder %s75, %s91
      %p93 = scmp.eq.s32.totalorder %s20, 0
      %p94 = por %p92, %p93
      %s95 = ssub.s32 %s14, %s21
      %p96 = scmp.eq.s32.totalorder %s95, 0
      %s98 = sadd.s32 %s97, 1
      %s99 = scalar_select %p96, %s97, %s98
      %p102 = pneg %p96
      %p103 = scmp.eq.s32.totalorder %s14, 3
      %p104 = por %p102, %p103
      %p105 = scmp.ne.s32.totalorder %s97, %s100
      %p106 = scmp.eq.s32.totalorder %s14, 0
      %p107 = por %p105, %p106
      %p108 = scmp.ne.s32.totalorder %s97, %s100
      %p109 = scmp.eq.s32.totalorder %s19, 3
      %p110 = por %p108, %p109
      %p111 = scmp.ne.s32.totalorder %s100, %s101
      %p112 = scmp.eq.s32.totalorder %s19, 0
      %p113 = por %p111, %p112
      %p114 = scmp.ne.s32.totalorder %s100, %s101
      %p115 = scmp.eq.s32.totalorder %s20, 3
      %p116 = por %p114, %p115
      %p118 = scmp.ne.s32.totalorder %s101, %s117
      %p119 = scmp.eq.s32.totalorder %s20, 0
      %p120 = por %p118, %p119
      %s122 = sadd.s32 %s121, 1
      %p125 = scmp.eq.s32.totalorder %s14, 3
      %p126 = scmp.ne.s32.totalorder %s121, %s123
      %p127 = scmp.eq.s32.totalorder %s14, 0
      %p128 = por %p126, %p127
      %p129 = scmp.ne.s32.totalorder %s121, %s123
      %p130 = scmp.eq.s32.totalorder %s19, 3
      %p131 = por %p129, %p130
      %p132 = scmp.ne.s32.totalorder %s123, %s124
      %p133 = scmp.eq.s32.totalorder %s19, 0
      %p134 = por %p132, %p133
      %p135 = scmp.ne.s32.totalorder %s123, %s124
      %p136 = scmp.eq.s32.totalorder %s20, 3
      %p137 = por %p135, %p136
      %p139 = scmp.ne.s32.totalorder %s124, %s138
      %p140 = scmp.eq.s32.totalorder %s20, 0
      %p141 = por %p139, %p140
      %s143 = sadd.s32 %s142, 1
      %p146 = scmp.eq.s32.totalorder %s14, 3
      %p147 = scmp.ne.s32.totalorder %s142, %s144
      %p148 = scmp.eq.s32.totalorder %s14, 0
      %p149 = por %p147, %p148
      %p150 = scmp.ne.s32.totalorder %s142, %s144
      %p151 = scmp.eq.s32.totalorder %s19, 3
      %p152 = por %p150, %p151
      %p153 = scmp.ne.s32.totalorder %s144, %s145
      %p154 = scmp.eq.s32.totalorder %s19, 0
      %p155 = por %p153, %p154
      %p156 = scmp.ne.s32.totalorder %s144, %s145
      %p157 = scmp.eq.s32.totalorder %s20, 3
      %p158 = por %p156, %p157
      %p160 = scmp.ne.s32.totalorder %s145, %s159
      %p161 = scmp.eq.s32.totalorder %s20, 0
      %p162 = por %p160, %p161
      %p163 = scmp.le.s32.totalorder 1, %s14
      %p164 = scmp.lt.s32.totalorder %s14, 5
      %p165 = pnand %p163, %p164
      %p166 = pneg %p165
      // Predicated region
      $region9: #{discriminator_forward.5} parent=5 // pred_check
        _
      $region10: #{discriminator_forward.5} parent=5 // pred_check_branch
        %168 = sbr.rel (%p165) target = $region12
      $region11: #{discriminator_forward.5} parent=5 // pred_region
        %s169 = ssub.s32 %s14, 1
        // Predicated region
        $region13: #{discriminator_forward.5} parent=11 // pred_check
          %p170 = pneg %p35
        $region14: #{discriminator_forward.5} parent=11 // pred_check_branch
          %172 = sbr.rel (%p170) target = $region16
        $region15: #{discriminator_forward.5} parent=11 // pred_region
          _
        $region16: #{discriminator_forward.5} parent=11 // pred_fallthru
          _
        // Predicated region
        $region17: #{discriminator_forward.5} parent=11 // pred_check
          %p173 = pneg %p134
        $region18: #{discriminator_forward.5} parent=11 // pred_check_branch
          %175 = sbr.rel (%p173) target = $region20
        $region19: #{discriminator_forward.5} parent=11 // pred_region
          _
        $region20: #{discriminator_forward.5} parent=11 // pred_fallthru
          _
      $region12: #{discriminator_forward.5} parent=5 // pred_fallthru
        _
      %p176 = scmp.lt.s32.totalorder %s14, 4
      // Predicated region
      $region21: #{discriminator_forward.5} parent=5 // pred_check
        %p177 = pneg %p176
      $region22: #{discriminator_forward.5} parent=5 // pred_check_branch
        %179 = sbr.rel (%p177) target = $region24
      $region23: #{discriminator_forward.5} parent=5 // pred_region
        // Predicated region
        $region25: #{discriminator_forward.5} parent=23 // pred_check
          %p180 = pneg %p55
        $region26: #{discriminator_forward.5} parent=23 // pred_check_branch
          %182 = sbr.rel (%p180) target = $region28
        $region27: #{discriminator_forward.5} parent=23 // pred_region
          %s183 = sand.u32 %s45, 1
          %s184 = scalar_lea.sflag [#allocation3], %s183
          %s185 = sand.u32 %s45, 1
          %s186 = smul.addr %s185, 6272
          %s187 = scalar_lea.vmem [#allocation2], %s186
          %s188 = smul.u32 2, %s14
          %s190 = ssub.s32 100352, 100352
          %191 = vsyncadd %s184, %s190
          %s192 = smul.addr %s188, 64
          %s193 = scalar_lea.hbm %s1, %s192
          %s194 = sshll.u32 %s187, 4
          %s195 = int_to_ptr.vmem [resolvable:$true] %s194
          %200 = dma.hbm_to_vmem [thread:$0]  %s193, 100352, %s195, %s184, 512, 128, 8
        $region28: #{discriminator_forward.5} parent=23 // pred_fallthru
          _
        // Predicated region
        $region29: #{discriminator_forward.5} parent=23 // pred_check
          %p201 = pneg %p81
        $region30: #{discriminator_forward.5} parent=23 // pred_check_branch
          %203 = sbr.rel (%p201) target = $region32
        $region31: #{discriminator_forward.5} parent=23 // pred_region
          %s204 = smul.u32 2, %s14
          %p205 = scmp.lt.s32.totalorder %s204, 7
          %s206 = scalar_select %p205, %s204, 7
          %s207 = smul.addr %s206, 4
          %s208 = scalar_lea.vmem %s2, %s207
          %s209 = smul.u32 2, %s14
        $region32: #{discriminator_forward.5} parent=23 // pred_fallthru
          _
        // Predicated region
        $region33: #{discriminator_forward.5} parent=23 // pred_check
          %p210 = pneg %p107
        $region34: #{discriminator_forward.5} parent=23 // pred_check_branch
          %212 = sbr.rel (%p210) target = $region36
        $region35: #{discriminator_forward.5} parent=23 // pred_region
          %s213 = smul.u32 32, %s14
          %p214 = scmp.lt.s32.totalorder %s213, 127
          %s215 = scalar_select %p214, %s213, 127
          %s216 = smul.addr %s215, 4
          %s217 = scalar_lea.vmem %s3, %s216
          %s218 = smul.u32 32, %s14
        $region36: #{discriminator_forward.5} parent=23 // pred_fallthru
          _
      $region24: #{discriminator_forward.5} parent=5 // pred_fallthru
        _
      %p219 = scmp.le.s32.totalorder 1, %s14
      %p220 = scmp.lt.s32.totalorder %s14, 5
      %p221 = pnand %p219, %p220
      %p222 = pneg %p221
      // Predicated region
      $region37: #{discriminator_forward.5} parent=5 // pred_check
        _
      $region38: #{discriminator_forward.5} parent=5 // pred_check_branch
        %224 = sbr.rel (%p221) target = $region40
      $region39: #{discriminator_forward.5} parent=5 // pred_region
        %s225 = ssub.s32 %s14, 1
        %s226 = sand.u32 %s48, 1
        %s227 = scalar_lea.sflag [#allocation3], %s226
        %s228 = sand.u32 %s48, 1
        %s229 = smul.addr %s228, 6272
        %s230 = scalar_lea.vmem [#allocation2], %s229
        // Predicated region
        $region41: #{discriminator_forward.5} parent=39 // pred_check
          %p231 = pneg %p61
        $region42: #{discriminator_forward.5} parent=39 // pred_check_branch
          %233 = sbr.rel (%p231) target = $region44
        $region43: #{discriminator_forward.5} parent=39 // pred_region
          %234 = dma.done %s227, 100352
        $region44: #{discriminator_forward.5} parent=39 // pred_fallthru
          _
        %p235 = pneg %p35
        %p236 = pneg %p32
        %s237 = sand.u32 %s48, 1
        %s238 = scalar_lea.sflag [#allocation3], %s237
        %s239 = sand.u32 %s48, 1
        %s240 = smul.addr %s239, 6272
        %s241 = scalar_lea.vmem [#allocation2], %s240
        %p242 = pneg %p61
        %p243 = pneg %p58
        %s244 = smul.u32 2, %s19
        %p245 = scmp.lt.s32.totalorder %s244, 7
        %s246 = scalar_select %p245, %s244, 7
        %s247 = smul.addr %s246, 4
        %s248 = scalar_lea.vmem %s2, %s247
        %p249 = pneg %p87
        %p250 = pneg %p84
        %s251 = smul.u32 32, %s19
        %p252 = scmp.lt.s32.totalorder %s251, 127
        %s253 = scalar_select %p252, %s251, 127
        %s254 = smul.addr %s253, 4
        %s255 = scalar_lea.vmem %s3, %s254
        %p256 = pneg %p113
        %p257 = pneg %p110
        %p258 = pneg %p134
        %p259 = pneg %p131
        %p260 = pneg %p155
        %p261 = pneg %p152
        %s262 = smul.u32 2, %s19
        %s263 = smul.u32 2, %s19
        %p264 = scmp.lt.s32.totalorder %s263, 7
        %s265 = scalar_select %p264, %s263, 7
        %s266 = smul.addr %s265, 4
        %s267 = scalar_lea.vmem %s2, %s266
        %s268 = smul.u32 2, %s19
        %s269 = smul.u32 32, %s19
        %p270 = scmp.lt.s32.totalorder %s269, 127
        %s271 = scalar_select %p270, %s269, 127
        %s272 = smul.addr %s271, 4
        %s273 = scalar_lea.vmem %s3, %s272
        %s274 = smul.u32 32, %s19
        %p276 = scmp.eq.s32.totalorder %s19, 0
        // Predicated region
        $region45: #{discriminator_forward.5} parent=39 // pred_check
          %p277 = pneg %p276
        $region46: #{discriminator_forward.5} parent=39 // pred_check_branch
          %279 = sbr.rel (%p277) target = $region48
        $region47: #{discriminator_forward.5} parent=39 // pred_region
          %vm280 = vcmask 99328
          %281 = vst.msk [vmem:[%s5] sm:$0x3] %vm280, 0.0
        $region48: #{discriminator_forward.5} parent=39 // pred_fallthru
          _
        %v282 = vld [vmem:[%s0] sm:$0xff]
        %v283 = vld [vmem:[%s0 + $0x8] sm:$0xff]
        %v284 = vld [vmem:[%s0 + $0x10] sm:$0xff]
        %v285 = vld [vmem:[%s0 + $0x18] sm:$0xff]
        %v286 = vld [vmem:[%s0 + $0x20] sm:$0xff]
        %v287 = vld [vmem:[%s0 + $0x28] sm:$0xff]
        %v288 = vld [vmem:[%s0 + $0x30] sm:$0x1]
        %v289 = vld [vmem:[%s230] sm:$0xff]
        %v290 = vld [vmem:[%s230 + $0x8] sm:$0xff]
        %v291 = vld [vmem:[%s230 + $0x10] sm:$0xff]
        %v292 = vld [vmem:[%s230 + $0x18] sm:$0xff]
        %v293 = vld [vmem:[%s230 + $0x20] sm:$0xff]
        %v294 = vld [vmem:[%s230 + $0x28] sm:$0xff]
        %v295 = vld [vmem:[%s230 + $0x30] sm:$0xff]
        %v296 = vld [vmem:[%s230 + $0x38] sm:$0xff]
        %v297 = vld [vmem:[%s230 + $0x40] sm:$0xff]
        %v298 = vld [vmem:[%s230 + $0x48] sm:$0xff]
        %v299 = vld [vmem:[%s230 + $0x50] sm:$0xff]
        %v300 = vld [vmem:[%s230 + $0x58] sm:$0xff]
        %v301 = vld [vmem:[%s230 + $0x60] sm:$0xff]
        %v302 = vld [vmem:[%s230 + $0x68] sm:$0xff]
        %v303 = vld [vmem:[%s230 + $0x70] sm:$0xff]
        %v304 = vld [vmem:[%s230 + $0x78] sm:$0xff]
        %v305 = vld [vmem:[%s230 + $0x80] sm:$0xff]
        %v306 = vld [vmem:[%s230 + $0x88] sm:$0xff]
        %v307 = vld [vmem:[%s230 + $0x90] sm:$0xff]
        %v308 = vld [vmem:[%s230 + $0x98] sm:$0xff]
        %v309 = vld [vmem:[%s230 + $0xa0] sm:$0xff]
        %v310 = vld [vmem:[%s230 + $0xa8] sm:$0xff]
        %v311 = vld [vmem:[%s230 + $0xb0] sm:$0xff]
        %v312 = vld [vmem:[%s230 + $0xb8] sm:$0xff]
        %v313 = vld [vmem:[%s230 + $0xc0] sm:$0xff]
        %v314 = vld [vmem:[%s230 + $0xc8] sm:$0xff]
        %v315 = vld [vmem:[%s230 + $0xd0] sm:$0xff]
        %v316 = vld [vmem:[%s230 + $0xd8] sm:$0xff]
        %v317 = vld [vmem:[%s230 + $0xe0] sm:$0xff]
        %v318 = vld [vmem:[%s230 + $0xe8] sm:$0xff]
        %v319 = vld [vmem:[%s230 + $0xf0] sm:$0xff]
        %v320 = vld [vmem:[%s230 + $0xf8] sm:$0xff]
        %v321 = vld [vmem:[%s230 + $0x100] sm:$0xff]
        %v322 = vld [vmem:[%s230 + $0x108] sm:$0xff]
        %v323 = vld [vmem:[%s230 + $0x110] sm:$0xff]
        %v324 = vld [vmem:[%s230 + $0x118] sm:$0xff]
        %v325 = vld [vmem:[%s230 + $0x120] sm:$0xff]
        %v326 = vld [vmem:[%s230 + $0x128] sm:$0xff]
        %v327 = vld [vmem:[%s230 + $0x130] sm:$0xff]
        %v328 = vld [vmem:[%s230 + $0x138] sm:$0xff]
        %v329 = vld [vmem:[%s230 + $0x140] sm:$0xff]
        %v330 = vld [vmem:[%s230 + $0x148] sm:$0xff]
        %v331 = vld [vmem:[%s230 + $0x150] sm:$0xff]
        %v332 = vld [vmem:[%s230 + $0x158] sm:$0xff]
        %v333 = vld [vmem:[%s230 + $0x160] sm:$0xff]
        %v334 = vld [vmem:[%s230 + $0x168] sm:$0xff]
        %v335 = vld [vmem:[%s230 + $0x170] sm:$0xff]
        %v336 = vld [vmem:[%s230 + $0x178] sm:$0xff]
        %v337 = vld [vmem:[%s230 + $0x180] sm:$0xff]
        %v338 = vld [vmem:[%s230 + $0x188] sm:$0xff]
        %v339 = vld [vmem:[%s230 + $0x190] sm:$0xff]
        %v340 = vld [vmem:[%s230 + $0x198] sm:$0xff]
        %v341 = vld [vmem:[%s230 + $0x1a0] sm:$0xff]
        %v342 = vld [vmem:[%s230 + $0x1a8] sm:$0xff]
        %v343 = vld [vmem:[%s230 + $0x1b0] sm:$0xff]
        %v344 = vld [vmem:[%s230 + $0x1b8] sm:$0xff]
        %v345 = vld [vmem:[%s230 + $0x1c0] sm:$0xff]
        %v346 = vld [vmem:[%s230 + $0x1c8] sm:$0xff]
        %v347 = vld [vmem:[%s230 + $0x1d0] sm:$0xff]
        %v348 = vld [vmem:[%s230 + $0x1d8] sm:$0xff]
        %v349 = vld [vmem:[%s230 + $0x1e0] sm:$0xff]
        %v350 = vld [vmem:[%s230 + $0x1e8] sm:$0xff]
        %v351 = vld [vmem:[%s230 + $0x1f0] sm:$0xff]
        %v352 = vld [vmem:[%s230 + $0x1f8] sm:$0xff]
        %v353 = vld [vmem:[%s230 + $0x200] sm:$0xff]
        %v354 = vld [vmem:[%s230 + $0x208] sm:$0xff]
        %v355 = vld [vmem:[%s230 + $0x210] sm:$0xff]
        %v356 = vld [vmem:[%s230 + $0x218] sm:$0xff]
        %v357 = vld [vmem:[%s230 + $0x220] sm:$0xff]
        %v358 = vld [vmem:[%s230 + $0x228] sm:$0xff]
        %v359 = vld [vmem:[%s230 + $0x230] sm:$0xff]
        %v360 = vld [vmem:[%s230 + $0x238] sm:$0xff]
        %v361 = vld [vmem:[%s230 + $0x240] sm:$0xff]
        %v362 = vld [vmem:[%s230 + $0x248] sm:$0xff]
        %v363 = vld [vmem:[%s230 + $0x250] sm:$0xff]
        %v364 = vld [vmem:[%s230 + $0x258] sm:$0xff]
        %v365 = vld [vmem:[%s230 + $0x260] sm:$0xff]
        %v366 = vld [vmem:[%s230 + $0x268] sm:$0xff]
        %v367 = vld [vmem:[%s230 + $0x270] sm:$0xff]
        %v368 = vld [vmem:[%s230 + $0x278] sm:$0xff]
        %v369 = vld [vmem:[%s230 + $0x280] sm:$0xff]
        %v370 = vld [vmem:[%s230 + $0x288] sm:$0xff]
        %v371 = vld [vmem:[%s230 + $0x290] sm:$0xff]
        %v372 = vld [vmem:[%s230 + $0x298] sm:$0xff]
        %v373 = vld [vmem:[%s230 + $0x2a0] sm:$0xff]
        %v374 = vld [vmem:[%s230 + $0x2a8] sm:$0xff]
        %v375 = vld [vmem:[%s230 + $0x2b0] sm:$0xff]
        %v376 = vld [vmem:[%s230 + $0x2b8] sm:$0xff]
        %v377 = vld [vmem:[%s230 + $0x2c0] sm:$0xff]
        %v378 = vld [vmem:[%s230 + $0x2c8] sm:$0xff]
        %v379 = vld [vmem:[%s230 + $0x2d0] sm:$0xff]
        %v380 = vld [vmem:[%s230 + $0x2d8] sm:$0xff]
        %v381 = vld [vmem:[%s230 + $0x2e0] sm:$0xff]
        %v382 = vld [vmem:[%s230 + $0x2e8] sm:$0xff]
        %v383 = vld [vmem:[%s230 + $0x2f0] sm:$0xff]
        %v384 = vld [vmem:[%s230 + $0x2f8] sm:$0xff]
        %v385 = vld [vmem:[%s230 + $0x300] sm:$0xff]
        %v386 = vld [vmem:[%s230 + $0x308] sm:$0xff]
        %v387 = vld [vmem:[%s230 + $0x310] sm:$0xff]
        %v388 = vld [vmem:[%s230 + $0x318] sm:$0xff]
        %v389 = vld [vmem:[%s230 + $0x320] sm:$0xff]
        %v390 = vld [vmem:[%s230 + $0x328] sm:$0xff]
        %v391 = vld [vmem:[%s230 + $0x330] sm:$0xff]
        %v392 = vld [vmem:[%s230 + $0x338] sm:$0xff]
        %v393 = vld [vmem:[%s230 + $0x340] sm:$0xff]
        %v394 = vld [vmem:[%s230 + $0x348] sm:$0xff]
        %v395 = vld [vmem:[%s230 + $0x350] sm:$0xff]
        %v396 = vld [vmem:[%s230 + $0x358] sm:$0xff]
        %v397 = vld [vmem:[%s230 + $0x360] sm:$0xff]
        %v398 = vld [vmem:[%s230 + $0x368] sm:$0xff]
        %v399 = vld [vmem:[%s230 + $0x370] sm:$0xff]
        %v400 = vld [vmem:[%s230 + $0x378] sm:$0xff]
        %v401 = vld [vmem:[%s230 + $0x380] sm:$0xff]
        %v402 = vld [vmem:[%s230 + $0x388] sm:$0xff]
        %v403 = vld [vmem:[%s230 + $0x390] sm:$0xff]
        %v404 = vld [vmem:[%s230 + $0x398] sm:$0xff]
        %v405 = vld [vmem:[%s230 + $0x3a0] sm:$0xff]
        %v406 = vld [vmem:[%s230 + $0x3a8] sm:$0xff]
        %v407 = vld [vmem:[%s230 + $0x3b0] sm:$0xff]
        %v408 = vld [vmem:[%s230 + $0x3b8] sm:$0xff]
        %v409 = vld [vmem:[%s230 + $0x3c0] sm:$0xff]
        %v410 = vld [vmem:[%s230 + $0x3c8] sm:$0xff]
        %v411 = vld [vmem:[%s230 + $0x3d0] sm:$0xff]
        %v412 = vld [vmem:[%s230 + $0x3d8] sm:$0xff]
        %v413 = vld [vmem:[%s230 + $0x3e0] sm:$0xff]
        %v414 = vld [vmem:[%s230 + $0x3e8] sm:$0xff]
        %v415 = vld [vmem:[%s230 + $0x3f0] sm:$0xff]
        %v416 = vld [vmem:[%s230 + $0x3f8] sm:$0xff]
        %v417 = vld [vmem:[%s230 + $0x400] sm:$0xff]
        %v418 = vld [vmem:[%s230 + $0x408] sm:$0xff]
        %v419 = vld [vmem:[%s230 + $0x410] sm:$0xff]
        %v420 = vld [vmem:[%s230 + $0x418] sm:$0xff]
        %v421 = vld [vmem:[%s230 + $0x420] sm:$0xff]
        %v422 = vld [vmem:[%s230 + $0x428] sm:$0xff]
        %v423 = vld [vmem:[%s230 + $0x430] sm:$0xff]
        %v424 = vld [vmem:[%s230 + $0x438] sm:$0xff]
        %v425 = vld [vmem:[%s230 + $0x440] sm:$0xff]
        %v426 = vld [vmem:[%s230 + $0x448] sm:$0xff]
        %v427 = vld [vmem:[%s230 + $0x450] sm:$0xff]
        %v428 = vld [vmem:[%s230 + $0x458] sm:$0xff]
        %v429 = vld [vmem:[%s230 + $0x460] sm:$0xff]
        %v430 = vld [vmem:[%s230 + $0x468] sm:$0xff]
        %v431 = vld [vmem:[%s230 + $0x470] sm:$0xff]
        %v432 = vld [vmem:[%s230 + $0x478] sm:$0xff]
        %v433 = vld [vmem:[%s230 + $0x480] sm:$0xff]
        %v434 = vld [vmem:[%s230 + $0x488] sm:$0xff]
        %v435 = vld [vmem:[%s230 + $0x490] sm:$0xff]
        %v436 = vld [vmem:[%s230 + $0x498] sm:$0xff]
        %v437 = vld [vmem:[%s230 + $0x4a0] sm:$0xff]
        %v438 = vld [vmem:[%s230 + $0x4a8] sm:$0xff]
        %v439 = vld [vmem:[%s230 + $0x4b0] sm:$0xff]
        %v440 = vld [vmem:[%s230 + $0x4b8] sm:$0xff]
        %v441 = vld [vmem:[%s230 + $0x4c0] sm:$0xff]
        %v442 = vld [vmem:[%s230 + $0x4c8] sm:$0xff]
        %v443 = vld [vmem:[%s230 + $0x4d0] sm:$0xff]
        %v444 = vld [vmem:[%s230 + $0x4d8] sm:$0xff]
        %v445 = vld [vmem:[%s230 + $0x4e0] sm:$0xff]
        %v446 = vld [vmem:[%s230 + $0x4e8] sm:$0xff]
        %v447 = vld [vmem:[%s230 + $0x4f0] sm:$0xff]
        %v448 = vld [vmem:[%s230 + $0x4f8] sm:$0xff]
        %v449 = vld [vmem:[%s230 + $0x500] sm:$0xff]
        %v450 = vld [vmem:[%s230 + $0x508] sm:$0xff]
        %v451 = vld [vmem:[%s230 + $0x510] sm:$0xff]
        %v452 = vld [vmem:[%s230 + $0x518] sm:$0xff]
        %v453 = vld [vmem:[%s230 + $0x520] sm:$0xff]
        %v454 = vld [vmem:[%s230 + $0x528] sm:$0xff]
        %v455 = vld [vmem:[%s230 + $0x530] sm:$0xff]
        %v456 = vld [vmem:[%s230 + $0x538] sm:$0xff]
        %v457 = vld [vmem:[%s230 + $0x540] sm:$0xff]
        %v458 = vld [vmem:[%s230 + $0x548] sm:$0xff]
        %v459 = vld [vmem:[%s230 + $0x550] sm:$0xff]
        %v460 = vld [vmem:[%s230 + $0x558] sm:$0xff]
        %v461 = vld [vmem:[%s230 + $0x560] sm:$0xff]
        %v462 = vld [vmem:[%s230 + $0x568] sm:$0xff]
        %v463 = vld [vmem:[%s230 + $0x570] sm:$0xff]
        %v464 = vld [vmem:[%s230 + $0x578] sm:$0xff]
        %v465 = vld [vmem:[%s230 + $0x580] sm:$0xff]
        %v466 = vld [vmem:[%s230 + $0x588] sm:$0xff]
        %v467 = vld [vmem:[%s230 + $0x590] sm:$0xff]
        %v468 = vld [vmem:[%s230 + $0x598] sm:$0xff]
        %v469 = vld [vmem:[%s230 + $0x5a0] sm:$0xff]
        %v470 = vld [vmem:[%s230 + $0x5a8] sm:$0xff]
        %v471 = vld [vmem:[%s230 + $0x5b0] sm:$0xff]
        %v472 = vld [vmem:[%s230 + $0x5b8] sm:$0xff]
        %v473 = vld [vmem:[%s230 + $0x5c0] sm:$0xff]
        %v474 = vld [vmem:[%s230 + $0x5c8] sm:$0xff]
        %v475 = vld [vmem:[%s230 + $0x5d0] sm:$0xff]
        %v476 = vld [vmem:[%s230 + $0x5d8] sm:$0xff]
        %v477 = vld [vmem:[%s230 + $0x5e0] sm:$0xff]
        %v478 = vld [vmem:[%s230 + $0x5e8] sm:$0xff]
        %v479 = vld [vmem:[%s230 + $0x5f0] sm:$0xff]
        %v480 = vld [vmem:[%s230 + $0x5f8] sm:$0xff]
        %v481 = vld [vmem:[%s230 + $0x600] sm:$0xff]
        %v482 = vld [vmem:[%s230 + $0x608] sm:$0xff]
        %v483 = vld [vmem:[%s230 + $0x610] sm:$0xff]
        %v484 = vld [vmem:[%s230 + $0x618] sm:$0xff]
        %v485 = vld [vmem:[%s230 + $0x620] sm:$0xff]
        %v486 = vld [vmem:[%s230 + $0x628] sm:$0xff]
        %v487 = vld [vmem:[%s230 + $0x630] sm:$0xff]
        %v488 = vld [vmem:[%s230 + $0x638] sm:$0xff]
        %v489 = vld [vmem:[%s230 + $0x640] sm:$0xff]
        %v490 = vld [vmem:[%s230 + $0x648] sm:$0xff]
        %v491 = vld [vmem:[%s230 + $0x650] sm:$0xff]
        %v492 = vld [vmem:[%s230 + $0x658] sm:$0xff]
        %v493 = vld [vmem:[%s230 + $0x660] sm:$0xff]
        %v494 = vld [vmem:[%s230 + $0x668] sm:$0xff]
        %v495 = vld [vmem:[%s230 + $0x670] sm:$0xff]
        %v496 = vld [vmem:[%s230 + $0x678] sm:$0xff]
        %v497 = vld [vmem:[%s230 + $0x680] sm:$0xff]
        %v498 = vld [vmem:[%s230 + $0x688] sm:$0xff]
        %v499 = vld [vmem:[%s230 + $0x690] sm:$0xff]
        %v500 = vld [vmem:[%s230 + $0x698] sm:$0xff]
        %v501 = vld [vmem:[%s230 + $0x6a0] sm:$0xff]
        %v502 = vld [vmem:[%s230 + $0x6a8] sm:$0xff]
        %v503 = vld [vmem:[%s230 + $0x6b0] sm:$0xff]
        %v504 = vld [vmem:[%s230 + $0x6b8] sm:$0xff]
        %v505 = vld [vmem:[%s230 + $0x6c0] sm:$0xff]
        %v506 = vld [vmem:[%s230 + $0x6c8] sm:$0xff]
        %v507 = vld [vmem:[%s230 + $0x6d0] sm:$0xff]
        %v508 = vld [vmem:[%s230 + $0x6d8] sm:$0xff]
        %v509 = vld [vmem:[%s230 + $0x6e0] sm:$0xff]
        %v510 = vld [vmem:[%s230 + $0x6e8] sm:$0xff]
        %v511 = vld [vmem:[%s230 + $0x6f0] sm:$0xff]
        %v512 = vld [vmem:[%s230 + $0x6f8] sm:$0xff]
        %v513 = vld [vmem:[%s230 + $0x700] sm:$0xff]
        %v514 = vld [vmem:[%s230 + $0x708] sm:$0xff]
        %v515 = vld [vmem:[%s230 + $0x710] sm:$0xff]
        %v516 = vld [vmem:[%s230 + $0x718] sm:$0xff]
        %v517 = vld [vmem:[%s230 + $0x720] sm:$0xff]
        %v518 = vld [vmem:[%s230 + $0x728] sm:$0xff]
        %v519 = vld [vmem:[%s230 + $0x730] sm:$0xff]
        %v520 = vld [vmem:[%s230 + $0x738] sm:$0xff]
        %v521 = vld [vmem:[%s230 + $0x740] sm:$0xff]
        %v522 = vld [vmem:[%s230 + $0x748] sm:$0xff]
        %v523 = vld [vmem:[%s230 + $0x750] sm:$0xff]
        %v524 = vld [vmem:[%s230 + $0x758] sm:$0xff]
        %v525 = vld [vmem:[%s230 + $0x760] sm:$0xff]
        %v526 = vld [vmem:[%s230 + $0x768] sm:$0xff]
        %v527 = vld [vmem:[%s230 + $0x770] sm:$0xff]
        %v528 = vld [vmem:[%s230 + $0x778] sm:$0xff]
        %v529 = vld [vmem:[%s230 + $0x780] sm:$0xff]
        %v530 = vld [vmem:[%s230 + $0x788] sm:$0xff]
        %v531 = vld [vmem:[%s230 + $0x790] sm:$0xff]
        %v532 = vld [vmem:[%s230 + $0x798] sm:$0xff]
        %v533 = vld [vmem:[%s230 + $0x7a0] sm:$0xff]
        %v534 = vld [vmem:[%s230 + $0x7a8] sm:$0xff]
        %v535 = vld [vmem:[%s230 + $0x7b0] sm:$0xff]
        %v536 = vld [vmem:[%s230 + $0x7b8] sm:$0xff]
        %v537 = vld [vmem:[%s230 + $0x7c0] sm:$0xff]
        %v538 = vld [vmem:[%s230 + $0x7c8] sm:$0xff]
        %v539 = vld [vmem:[%s230 + $0x7d0] sm:$0xff]
        %v540 = vld [vmem:[%s230 + $0x7d8] sm:$0xff]
        %v541 = vld [vmem:[%s230 + $0x7e0] sm:$0xff]
        %v542 = vld [vmem:[%s230 + $0x7e8] sm:$0xff]
        %v543 = vld [vmem:[%s230 + $0x7f0] sm:$0xff]
        %v544 = vld [vmem:[%s230 + $0x7f8] sm:$0xff]
        %v545 = vld [vmem:[%s230 + $0x800] sm:$0xff]
        %v546 = vld [vmem:[%s230 + $0x808] sm:$0xff]
        %v547 = vld [vmem:[%s230 + $0x810] sm:$0xff]
        %v548 = vld [vmem:[%s230 + $0x818] sm:$0xff]
        %v549 = vld [vmem:[%s230 + $0x820] sm:$0xff]
        %v550 = vld [vmem:[%s230 + $0x828] sm:$0xff]
        %v551 = vld [vmem:[%s230 + $0x830] sm:$0xff]
        %v552 = vld [vmem:[%s230 + $0x838] sm:$0xff]
        %v553 = vld [vmem:[%s230 + $0x840] sm:$0xff]
        %v554 = vld [vmem:[%s230 + $0x848] sm:$0xff]
        %v555 = vld [vmem:[%s230 + $0x850] sm:$0xff]
        %v556 = vld [vmem:[%s230 + $0x858] sm:$0xff]
        %v557 = vld [vmem:[%s230 + $0x860] sm:$0xff]
        %v558 = vld [vmem:[%s230 + $0x868] sm:$0xff]
        %v559 = vld [vmem:[%s230 + $0x870] sm:$0xff]
        %v560 = vld [vmem:[%s230 + $0x878] sm:$0xff]
        %v561 = vld [vmem:[%s230 + $0x880] sm:$0xff]
        %v562 = vld [vmem:[%s230 + $0x888] sm:$0xff]
        %v563 = vld [vmem:[%s230 + $0x890] sm:$0xff]
        %v564 = vld [vmem:[%s230 + $0x898] sm:$0xff]
        %v565 = vld [vmem:[%s230 + $0x8a0] sm:$0xff]
        %v566 = vld [vmem:[%s230 + $0x8a8] sm:$0xff]
        %v567 = vld [vmem:[%s230 + $0x8b0] sm:$0xff]
        %v568 = vld [vmem:[%s230 + $0x8b8] sm:$0xff]
        %v569 = vld [vmem:[%s230 + $0x8c0] sm:$0xff]
        %v570 = vld [vmem:[%s230 + $0x8c8] sm:$0xff]
        %v571 = vld [vmem:[%s230 + $0x8d0] sm:$0xff]
        %v572 = vld [vmem:[%s230 + $0x8d8] sm:$0xff]
        %v573 = vld [vmem:[%s230 + $0x8e0] sm:$0xff]
        %v574 = vld [vmem:[%s230 + $0x8e8] sm:$0xff]
        %v575 = vld [vmem:[%s230 + $0x8f0] sm:$0xff]
        %v576 = vld [vmem:[%s230 + $0x8f8] sm:$0xff]
        %v577 = vld [vmem:[%s230 + $0x900] sm:$0xff]
        %v578 = vld [vmem:[%s230 + $0x908] sm:$0xff]
        %v579 = vld [vmem:[%s230 + $0x910] sm:$0xff]
        %v580 = vld [vmem:[%s230 + $0x918] sm:$0xff]
        %v581 = vld [vmem:[%s230 + $0x920] sm:$0xff]
        %v582 = vld [vmem:[%s230 + $0x928] sm:$0xff]
        %v583 = vld [vmem:[%s230 + $0x930] sm:$0xff]
        %v584 = vld [vmem:[%s230 + $0x938] sm:$0xff]
        %v585 = vld [vmem:[%s230 + $0x940] sm:$0xff]
        %v586 = vld [vmem:[%s230 + $0x948] sm:$0xff]
        %v587 = vld [vmem:[%s230 + $0x950] sm:$0xff]
        %v588 = vld [vmem:[%s230 + $0x958] sm:$0xff]
        %v589 = vld [vmem:[%s230 + $0x960] sm:$0xff]
        %v590 = vld [vmem:[%s230 + $0x968] sm:$0xff]
        %v591 = vld [vmem:[%s230 + $0x970] sm:$0xff]
        %v592 = vld [vmem:[%s230 + $0x978] sm:$0xff]
        %v593 = vld [vmem:[%s230 + $0x980] sm:$0xff]
        %v594 = vld [vmem:[%s230 + $0x988] sm:$0xff]
        %v595 = vld [vmem:[%s230 + $0x990] sm:$0xff]
        %v596 = vld [vmem:[%s230 + $0x998] sm:$0xff]
        %v597 = vld [vmem:[%s230 + $0x9a0] sm:$0xff]
        %v598 = vld [vmem:[%s230 + $0x9a8] sm:$0xff]
        %v599 = vld [vmem:[%s230 + $0x9b0] sm:$0xff]
        %v600 = vld [vmem:[%s230 + $0x9b8] sm:$0xff]
        %v601 = vld [vmem:[%s230 + $0x9c0] sm:$0xff]
        %v602 = vld [vmem:[%s230 + $0x9c8] sm:$0xff]
        %v603 = vld [vmem:[%s230 + $0x9d0] sm:$0xff]
        %v604 = vld [vmem:[%s230 + $0x9d8] sm:$0xff]
        %v605 = vld [vmem:[%s230 + $0x9e0] sm:$0xff]
        %v606 = vld [vmem:[%s230 + $0x9e8] sm:$0xff]
        %v607 = vld [vmem:[%s230 + $0x9f0] sm:$0xff]
        %v608 = vld [vmem:[%s230 + $0x9f8] sm:$0xff]
        %v609 = vld [vmem:[%s230 + $0xa00] sm:$0xff]
        %v610 = vld [vmem:[%s230 + $0xa08] sm:$0xff]
        %v611 = vld [vmem:[%s230 + $0xa10] sm:$0xff]
        %v612 = vld [vmem:[%s230 + $0xa18] sm:$0xff]
        %v613 = vld [vmem:[%s230 + $0xa20] sm:$0xff]
        %v614 = vld [vmem:[%s230 + $0xa28] sm:$0xff]
        %v615 = vld [vmem:[%s230 + $0xa30] sm:$0xff]
        %v616 = vld [vmem:[%s230 + $0xa38] sm:$0xff]
        %v617 = vld [vmem:[%s230 + $0xa40] sm:$0xff]
        %v618 = vld [vmem:[%s230 + $0xa48] sm:$0xff]
        %v619 = vld [vmem:[%s230 + $0xa50] sm:$0xff]
        %v620 = vld [vmem:[%s230 + $0xa58] sm:$0xff]
        %v621 = vld [vmem:[%s230 + $0xa60] sm:$0xff]
        %v622 = vld [vmem:[%s230 + $0xa68] sm:$0xff]
        %v623 = vld [vmem:[%s230 + $0xa70] sm:$0xff]
        %v624 = vld [vmem:[%s230 + $0xa78] sm:$0xff]
        %v625 = vld [vmem:[%s230 + $0xa80] sm:$0xff]
        %v626 = vld [vmem:[%s230 + $0xa88] sm:$0xff]
        %v627 = vld [vmem:[%s230 + $0xa90] sm:$0xff]
        %v628 = vld [vmem:[%s230 + $0xa98] sm:$0xff]
        %v629 = vld [vmem:[%s230 + $0xaa0] sm:$0xff]
        %v630 = vld [vmem:[%s230 + $0xaa8] sm:$0xff]
        %v631 = vld [vmem:[%s230 + $0xab0] sm:$0xff]
        %v632 = vld [vmem:[%s230 + $0xab8] sm:$0xff]
        %v633 = vld [vmem:[%s230 + $0xac0] sm:$0xff]
        %v634 = vld [vmem:[%s230 + $0xac8] sm:$0xff]
        %v635 = vld [vmem:[%s230 + $0xad0] sm:$0xff]
        %v636 = vld [vmem:[%s230 + $0xad8] sm:$0xff]
        %v637 = vld [vmem:[%s230 + $0xae0] sm:$0xff]
        %v638 = vld [vmem:[%s230 + $0xae8] sm:$0xff]
        %v639 = vld [vmem:[%s230 + $0xaf0] sm:$0xff]
        %v640 = vld [vmem:[%s230 + $0xaf8] sm:$0xff]
        %v641 = vld [vmem:[%s230 + $0xb00] sm:$0xff]
        %v642 = vld [vmem:[%s230 + $0xb08] sm:$0xff]
        %v643 = vld [vmem:[%s230 + $0xb10] sm:$0xff]
        %v644 = vld [vmem:[%s230 + $0xb18] sm:$0xff]
        %v645 = vld [vmem:[%s230 + $0xb20] sm:$0xff]
        %v646 = vld [vmem:[%s230 + $0xb28] sm:$0xff]
        %v647 = vld [vmem:[%s230 + $0xb30] sm:$0xff]
        %v648 = vld [vmem:[%s230 + $0xb38] sm:$0xff]
        %v649 = vld [vmem:[%s230 + $0xb40] sm:$0xff]
        %v650 = vld [vmem:[%s230 + $0xb48] sm:$0xff]
        %v651 = vld [vmem:[%s230 + $0xb50] sm:$0xff]
        %v652 = vld [vmem:[%s230 + $0xb58] sm:$0xff]
        %v653 = vld [vmem:[%s230 + $0xb60] sm:$0xff]
        %v654 = vld [vmem:[%s230 + $0xb68] sm:$0xff]
        %v655 = vld [vmem:[%s230 + $0xb70] sm:$0xff]
        %v656 = vld [vmem:[%s230 + $0xb78] sm:$0xff]
        %v657 = vld [vmem:[%s230 + $0xb80] sm:$0xff]
        %v658 = vld [vmem:[%s230 + $0xb88] sm:$0xff]
        %v659 = vld [vmem:[%s230 + $0xb90] sm:$0xff]
        %v660 = vld [vmem:[%s230 + $0xb98] sm:$0xff]
        %v661 = vld [vmem:[%s230 + $0xba0] sm:$0xff]
        %v662 = vld [vmem:[%s230 + $0xba8] sm:$0xff]
        %v663 = vld [vmem:[%s230 + $0xbb0] sm:$0xff]
        %v664 = vld [vmem:[%s230 + $0xbb8] sm:$0xff]
        %v665 = vld [vmem:[%s230 + $0xbc0] sm:$0xff]
        %v666 = vld [vmem:[%s230 + $0xbc8] sm:$0xff]
        %v667 = vld [vmem:[%s230 + $0xbd0] sm:$0xff]
        %v668 = vld [vmem:[%s230 + $0xbd8] sm:$0xff]
        %v669 = vld [vmem:[%s230 + $0xbe0] sm:$0xff]
        %v670 = vld [vmem:[%s230 + $0xbe8] sm:$0xff]
        %v671 = vld [vmem:[%s230 + $0xbf0] sm:$0xff]
        %v672 = vld [vmem:[%s230 + $0xbf8] sm:$0xff]
        %v673 = vld [vmem:[%s230 + $0xc00] sm:$0xff]
        %v674 = vld [vmem:[%s230 + $0xc08] sm:$0xff]
        %v675 = vld [vmem:[%s230 + $0xc10] sm:$0xff]
        %v676 = vld [vmem:[%s230 + $0xc18] sm:$0xff]
        %v677 = vld [vmem:[%s230 + $0xc20] sm:$0xff]
        %v678 = vld [vmem:[%s230 + $0xc28] sm:$0xff]
        %v679 = vld [vmem:[%s230 + $0xc30] sm:$0xff]
        %v680 = vld [vmem:[%s230 + $0xc38] sm:$0xff]
        %v681 = vld [vmem:[%s230 + $0xc40] sm:$0xff]
        %v682 = vld [vmem:[%s230 + $0xc48] sm:$0xff]
        %v683 = vld [vmem:[%s230 + $0xc50] sm:$0xff]
        %v684 = vld [vmem:[%s230 + $0xc58] sm:$0xff]
        %v685 = vld [vmem:[%s230 + $0xc60] sm:$0xff]
        %v686 = vld [vmem:[%s230 + $0xc68] sm:$0xff]
        %v687 = vld [vmem:[%s230 + $0xc70] sm:$0xff]
        %v688 = vld [vmem:[%s230 + $0xc78] sm:$0xff]
        %v689 = vld [vmem:[%s230 + $0xc80] sm:$0xff]
        %v690 = vld [vmem:[%s230 + $0xc88] sm:$0xff]
        %v691 = vld [vmem:[%s230 + $0xc90] sm:$0xff]
        %v692 = vld [vmem:[%s230 + $0xc98] sm:$0xff]
        %v693 = vld [vmem:[%s230 + $0xca0] sm:$0xff]
        %v694 = vld [vmem:[%s230 + $0xca8] sm:$0xff]
        %v695 = vld [vmem:[%s230 + $0xcb0] sm:$0xff]
        %v696 = vld [vmem:[%s230 + $0xcb8] sm:$0xff]
        %v697 = vld [vmem:[%s230 + $0xcc0] sm:$0xff]
        %v698 = vld [vmem:[%s230 + $0xcc8] sm:$0xff]
        %v699 = vld [vmem:[%s230 + $0xcd0] sm:$0xff]
        %v700 = vld [vmem:[%s230 + $0xcd8] sm:$0xff]
        %v701 = vld [vmem:[%s230 + $0xce0] sm:$0xff]
        %v702 = vld [vmem:[%s230 + $0xce8] sm:$0xff]
        %v703 = vld [vmem:[%s230 + $0xcf0] sm:$0xff]
        %v704 = vld [vmem:[%s230 + $0xcf8] sm:$0xff]
        %v705 = vld [vmem:[%s230 + $0xd00] sm:$0xff]
        %v706 = vld [vmem:[%s230 + $0xd08] sm:$0xff]
        %v707 = vld [vmem:[%s230 + $0xd10] sm:$0xff]
        %v708 = vld [vmem:[%s230 + $0xd18] sm:$0xff]
        %v709 = vld [vmem:[%s230 + $0xd20] sm:$0xff]
        %v710 = vld [vmem:[%s230 + $0xd28] sm:$0xff]
        %v711 = vld [vmem:[%s230 + $0xd30] sm:$0xff]
        %v712 = vld [vmem:[%s230 + $0xd38] sm:$0xff]
        %v713 = vld [vmem:[%s230 + $0xd40] sm:$0xff]
        %v714 = vld [vmem:[%s230 + $0xd48] sm:$0xff]
        %v715 = vld [vmem:[%s230 + $0xd50] sm:$0xff]
        %v716 = vld [vmem:[%s230 + $0xd58] sm:$0xff]
        %v717 = vld [vmem:[%s230 + $0xd60] sm:$0xff]
        %v718 = vld [vmem:[%s230 + $0xd68] sm:$0xff]
        %v719 = vld [vmem:[%s230 + $0xd70] sm:$0xff]
        %v720 = vld [vmem:[%s230 + $0xd78] sm:$0xff]
        %v721 = vld [vmem:[%s230 + $0xd80] sm:$0xff]
        %v722 = vld [vmem:[%s230 + $0xd88] sm:$0xff]
        %v723 = vld [vmem:[%s230 + $0xd90] sm:$0xff]
        %v724 = vld [vmem:[%s230 + $0xd98] sm:$0xff]
        %v725 = vld [vmem:[%s230 + $0xda0] sm:$0xff]
        %v726 = vld [vmem:[%s230 + $0xda8] sm:$0xff]
        %v727 = vld [vmem:[%s230 + $0xdb0] sm:$0xff]
        %v728 = vld [vmem:[%s230 + $0xdb8] sm:$0xff]
        %v729 = vld [vmem:[%s230 + $0xdc0] sm:$0xff]
        %v730 = vld [vmem:[%s230 + $0xdc8] sm:$0xff]
        %v731 = vld [vmem:[%s230 + $0xdd0] sm:$0xff]
        %v732 = vld [vmem:[%s230 + $0xdd8] sm:$0xff]
        %v733 = vld [vmem:[%s230 + $0xde0] sm:$0xff]
        %v734 = vld [vmem:[%s230 + $0xde8] sm:$0xff]
        %v735 = vld [vmem:[%s230 + $0xdf0] sm:$0xff]
        %v736 = vld [vmem:[%s230 + $0xdf8] sm:$0xff]
        %v737 = vld [vmem:[%s230 + $0xe00] sm:$0xff]
        %v738 = vld [vmem:[%s230 + $0xe08] sm:$0xff]
        %v739 = vld [vmem:[%s230 + $0xe10] sm:$0xff]
        %v740 = vld [vmem:[%s230 + $0xe18] sm:$0xff]
        %v741 = vld [vmem:[%s230 + $0xe20] sm:$0xff]
        %v742 = vld [vmem:[%s230 + $0xe28] sm:$0xff]
        %v743 = vld [vmem:[%s230 + $0xe30] sm:$0xff]
        %v744 = vld [vmem:[%s230 + $0xe38] sm:$0xff]
        %v745 = vld [vmem:[%s230 + $0xe40] sm:$0xff]
        %v746 = vld [vmem:[%s230 + $0xe48] sm:$0xff]
        %v747 = vld [vmem:[%s230 + $0xe50] sm:$0xff]
        %v748 = vld [vmem:[%s230 + $0xe58] sm:$0xff]
        %v749 = vld [vmem:[%s230 + $0xe60] sm:$0xff]
        %v750 = vld [vmem:[%s230 + $0xe68] sm:$0xff]
        %v751 = vld [vmem:[%s230 + $0xe70] sm:$0xff]
        %v752 = vld [vmem:[%s230 + $0xe78] sm:$0xff]
        %v753 = vld [vmem:[%s230 + $0xe80] sm:$0xff]
        %v754 = vld [vmem:[%s230 + $0xe88] sm:$0xff]
        %v755 = vld [vmem:[%s230 + $0xe90] sm:$0xff]
        %v756 = vld [vmem:[%s230 + $0xe98] sm:$0xff]
        %v757 = vld [vmem:[%s230 + $0xea0] sm:$0xff]
        %v758 = vld [vmem:[%s230 + $0xea8] sm:$0xff]
        %v759 = vld [vmem:[%s230 + $0xeb0] sm:$0xff]
        %v760 = vld [vmem:[%s230 + $0xeb8] sm:$0xff]
        %v761 = vld [vmem:[%s230 + $0xec0] sm:$0xff]
        %v762 = vld [vmem:[%s230 + $0xec8] sm:$0xff]
        %v763 = vld [vmem:[%s230 + $0xed0] sm:$0xff]
        %v764 = vld [vmem:[%s230 + $0xed8] sm:$0xff]
        %v765 = vld [vmem:[%s230 + $0xee0] sm:$0xff]
        %v766 = vld [vmem:[%s230 + $0xee8] sm:$0xff]
        %v767 = vld [vmem:[%s230 + $0xef0] sm:$0xff]
        %v768 = vld [vmem:[%s230 + $0xef8] sm:$0xff]
        %v769 = vld [vmem:[%s230 + $0xf00] sm:$0xff]
        %v770 = vld [vmem:[%s230 + $0xf08] sm:$0xff]
        %v771 = vld [vmem:[%s230 + $0xf10] sm:$0xff]
        %v772 = vld [vmem:[%s230 + $0xf18] sm:$0xff]
        %v773 = vld [vmem:[%s230 + $0xf20] sm:$0xff]
        %v774 = vld [vmem:[%s230 + $0xf28] sm:$0xff]
        %v775 = vld [vmem:[%s230 + $0xf30] sm:$0xff]
        %v776 = vld [vmem:[%s230 + $0xf38] sm:$0xff]
        %v777 = vld [vmem:[%s230 + $0xf40] sm:$0xff]
        %v778 = vld [vmem:[%s230 + $0xf48] sm:$0xff]
        %v779 = vld [vmem:[%s230 + $0xf50] sm:$0xff]
        %v780 = vld [vmem:[%s230 + $0xf58] sm:$0xff]
        %v781 = vld [vmem:[%s230 + $0xf60] sm:$0xff]
        %v782 = vld [vmem:[%s230 + $0xf68] sm:$0xff]
        %v783 = vld [vmem:[%s230 + $0xf70] sm:$0xff]
        %v784 = vld [vmem:[%s230 + $0xf78] sm:$0xff]
        %v785 = vld [vmem:[%s230 + $0xf80] sm:$0xff]
        %v786 = vld [vmem:[%s230 + $0xf88] sm:$0xff]
        %v787 = vld [vmem:[%s230 + $0xf90] sm:$0xff]
        %v788 = vld [vmem:[%s230 + $0xf98] sm:$0xff]
        %v789 = vld [vmem:[%s230 + $0xfa0] sm:$0xff]
        %v790 = vld [vmem:[%s230 + $0xfa8] sm:$0xff]
        %v791 = vld [vmem:[%s230 + $0xfb0] sm:$0xff]
        %v792 = vld [vmem:[%s230 + $0xfb8] sm:$0xff]
        %v793 = vld [vmem:[%s230 + $0xfc0] sm:$0xff]
        %v794 = vld [vmem:[%s230 + $0xfc8] sm:$0xff]
        %v795 = vld [vmem:[%s230 + $0xfd0] sm:$0xff]
        %v796 = vld [vmem:[%s230 + $0xfd8] sm:$0xff]
        %v797 = vld [vmem:[%s230 + $0xfe0] sm:$0xff]
        %v798 = vld [vmem:[%s230 + $0xfe8] sm:$0xff]
        %v799 = vld [vmem:[%s230 + $0xff0] sm:$0xff]
        %v800 = vld [vmem:[%s230 + $0xff8] sm:$0xff]
        %v801 = vld [vmem:[%s230 + $0x1000] sm:$0xff]
        %v802 = vld [vmem:[%s230 + $0x1008] sm:$0xff]
        %v803 = vld [vmem:[%s230 + $0x1010] sm:$0xff]
        %v804 = vld [vmem:[%s230 + $0x1018] sm:$0xff]
        %v805 = vld [vmem:[%s230 + $0x1020] sm:$0xff]
        %v806 = vld [vmem:[%s230 + $0x1028] sm:$0xff]
        %v807 = vld [vmem:[%s230 + $0x1030] sm:$0xff]
        %v808 = vld [vmem:[%s230 + $0x1038] sm:$0xff]
        %v809 = vld [vmem:[%s230 + $0x1040] sm:$0xff]
        %v810 = vld [vmem:[%s230 + $0x1048] sm:$0xff]
        %v811 = vld [vmem:[%s230 + $0x1050] sm:$0xff]
        %v812 = vld [vmem:[%s230 + $0x1058] sm:$0xff]
        %v813 = vld [vmem:[%s230 + $0x1060] sm:$0xff]
        %v814 = vld [vmem:[%s230 + $0x1068] sm:$0xff]
        %v815 = vld [vmem:[%s230 + $0x1070] sm:$0xff]
        %v816 = vld [vmem:[%s230 + $0x1078] sm:$0xff]
        %v817 = vld [vmem:[%s230 + $0x1080] sm:$0xff]
        %v818 = vld [vmem:[%s230 + $0x1088] sm:$0xff]
        %v819 = vld [vmem:[%s230 + $0x1090] sm:$0xff]
        %v820 = vld [vmem:[%s230 + $0x1098] sm:$0xff]
        %v821 = vld [vmem:[%s230 + $0x10a0] sm:$0xff]
        %v822 = vld [vmem:[%s230 + $0x10a8] sm:$0xff]
        %v823 = vld [vmem:[%s230 + $0x10b0] sm:$0xff]
        %v824 = vld [vmem:[%s230 + $0x10b8] sm:$0xff]
        %v825 = vld [vmem:[%s230 + $0x10c0] sm:$0xff]
        %v826 = vld [vmem:[%s230 + $0x10c8] sm:$0xff]
        %v827 = vld [vmem:[%s230 + $0x10d0] sm:$0xff]
        %v828 = vld [vmem:[%s230 + $0x10d8] sm:$0xff]
        %v829 = vld [vmem:[%s230 + $0x10e0] sm:$0xff]
        %v830 = vld [vmem:[%s230 + $0x10e8] sm:$0xff]
        %v831 = vld [vmem:[%s230 + $0x10f0] sm:$0xff]
        %v832 = vld [vmem:[%s230 + $0x10f8] sm:$0xff]
        %v833 = vld [vmem:[%s230 + $0x1100] sm:$0xff]
        %v834 = vld [vmem:[%s230 + $0x1108] sm:$0xff]
        %v835 = vld [vmem:[%s230 + $0x1110] sm:$0xff]
        %v836 = vld [vmem:[%s230 + $0x1118] sm:$0xff]
        %v837 = vld [vmem:[%s230 + $0x1120] sm:$0xff]
        %v838 = vld [vmem:[%s230 + $0x1128] sm:$0xff]
        %v839 = vld [vmem:[%s230 + $0x1130] sm:$0xff]
        %v840 = vld [vmem:[%s230 + $0x1138] sm:$0xff]
        %v841 = vld [vmem:[%s230 + $0x1140] sm:$0xff]
        %v842 = vld [vmem:[%s230 + $0x1148] sm:$0xff]
        %v843 = vld [vmem:[%s230 + $0x1150] sm:$0xff]
        %v844 = vld [vmem:[%s230 + $0x1158] sm:$0xff]
        %v845 = vld [vmem:[%s230 + $0x1160] sm:$0xff]
        %v846 = vld [vmem:[%s230 + $0x1168] sm:$0xff]
        %v847 = vld [vmem:[%s230 + $0x1170] sm:$0xff]
        %v848 = vld [vmem:[%s230 + $0x1178] sm:$0xff]
        %v849 = vld [vmem:[%s230 + $0x1180] sm:$0xff]
        %v850 = vld [vmem:[%s230 + $0x1188] sm:$0xff]
        %v851 = vld [vmem:[%s230 + $0x1190] sm:$0xff]
        %v852 = vld [vmem:[%s230 + $0x1198] sm:$0xff]
        %v853 = vld [vmem:[%s230 + $0x11a0] sm:$0xff]
        %v854 = vld [vmem:[%s230 + $0x11a8] sm:$0xff]
        %v855 = vld [vmem:[%s230 + $0x11b0] sm:$0xff]
        %v856 = vld [vmem:[%s230 + $0x11b8] sm:$0xff]
        %v857 = vld [vmem:[%s230 + $0x11c0] sm:$0xff]
        %v858 = vld [vmem:[%s230 + $0x11c8] sm:$0xff]
        %v859 = vld [vmem:[%s230 + $0x11d0] sm:$0xff]
        %v860 = vld [vmem:[%s230 + $0x11d8] sm:$0xff]
        %v861 = vld [vmem:[%s230 + $0x11e0] sm:$0xff]
        %v862 = vld [vmem:[%s230 + $0x11e8] sm:$0xff]
        %v863 = vld [vmem:[%s230 + $0x11f0] sm:$0xff]
        %v864 = vld [vmem:[%s230 + $0x11f8] sm:$0xff]
        %v865 = vld [vmem:[%s230 + $0x1200] sm:$0xff]
        %v866 = vld [vmem:[%s230 + $0x1208] sm:$0xff]
        %v867 = vld [vmem:[%s230 + $0x1210] sm:$0xff]
        %v868 = vld [vmem:[%s230 + $0x1218] sm:$0xff]
        %v869 = vld [vmem:[%s230 + $0x1220] sm:$0xff]
        %v870 = vld [vmem:[%s230 + $0x1228] sm:$0xff]
        %v871 = vld [vmem:[%s230 + $0x1230] sm:$0xff]
        %v872 = vld [vmem:[%s230 + $0x1238] sm:$0xff]
        %v873 = vld [vmem:[%s230 + $0x1240] sm:$0xff]
        %v874 = vld [vmem:[%s230 + $0x1248] sm:$0xff]
        %v875 = vld [vmem:[%s230 + $0x1250] sm:$0xff]
        %v876 = vld [vmem:[%s230 + $0x1258] sm:$0xff]
        %v877 = vld [vmem:[%s230 + $0x1260] sm:$0xff]
        %v878 = vld [vmem:[%s230 + $0x1268] sm:$0xff]
        %v879 = vld [vmem:[%s230 + $0x1270] sm:$0xff]
        %v880 = vld [vmem:[%s230 + $0x1278] sm:$0xff]
        %v881 = vld [vmem:[%s230 + $0x1280] sm:$0xff]
        %v882 = vld [vmem:[%s230 + $0x1288] sm:$0xff]
        %v883 = vld [vmem:[%s230 + $0x1290] sm:$0xff]
        %v884 = vld [vmem:[%s230 + $0x1298] sm:$0xff]
        %v885 = vld [vmem:[%s230 + $0x12a0] sm:$0xff]
        %v886 = vld [vmem:[%s230 + $0x12a8] sm:$0xff]
        %v887 = vld [vmem:[%s230 + $0x12b0] sm:$0xff]
        %v888 = vld [vmem:[%s230 + $0x12b8] sm:$0xff]
        %v889 = vld [vmem:[%s230 + $0x12c0] sm:$0xff]
        %v890 = vld [vmem:[%s230 + $0x12c8] sm:$0xff]
        %v891 = vld [vmem:[%s230 + $0x12d0] sm:$0xff]
        %v892 = vld [vmem:[%s230 + $0x12d8] sm:$0xff]
        %v893 = vld [vmem:[%s230 + $0x12e0] sm:$0xff]
        %v894 = vld [vmem:[%s230 + $0x12e8] sm:$0xff]
        %v895 = vld [vmem:[%s230 + $0x12f0] sm:$0xff]
        %v896 = vld [vmem:[%s230 + $0x12f8] sm:$0xff]
        %v897 = vld [vmem:[%s230 + $0x1300] sm:$0xff]
        %v898 = vld [vmem:[%s230 + $0x1308] sm:$0xff]
        %v899 = vld [vmem:[%s230 + $0x1310] sm:$0xff]
        %v900 = vld [vmem:[%s230 + $0x1318] sm:$0xff]
        %v901 = vld [vmem:[%s230 + $0x1320] sm:$0xff]
        %v902 = vld [vmem:[%s230 + $0x1328] sm:$0xff]
        %v903 = vld [vmem:[%s230 + $0x1330] sm:$0xff]
        %v904 = vld [vmem:[%s230 + $0x1338] sm:$0xff]
        %v905 = vld [vmem:[%s230 + $0x1340] sm:$0xff]
        %v906 = vld [vmem:[%s230 + $0x1348] sm:$0xff]
        %v907 = vld [vmem:[%s230 + $0x1350] sm:$0xff]
        %v908 = vld [vmem:[%s230 + $0x1358] sm:$0xff]
        %v909 = vld [vmem:[%s230 + $0x1360] sm:$0xff]
        %v910 = vld [vmem:[%s230 + $0x1368] sm:$0xff]
        %v911 = vld [vmem:[%s230 + $0x1370] sm:$0xff]
        %v912 = vld [vmem:[%s230 + $0x1378] sm:$0xff]
        %v913 = vld [vmem:[%s230 + $0x1380] sm:$0xff]
        %v914 = vld [vmem:[%s230 + $0x1388] sm:$0xff]
        %v915 = vld [vmem:[%s230 + $0x1390] sm:$0xff]
        %v916 = vld [vmem:[%s230 + $0x1398] sm:$0xff]
        %v917 = vld [vmem:[%s230 + $0x13a0] sm:$0xff]
        %v918 = vld [vmem:[%s230 + $0x13a8] sm:$0xff]
        %v919 = vld [vmem:[%s230 + $0x13b0] sm:$0xff]
        %v920 = vld [vmem:[%s230 + $0x13b8] sm:$0xff]
        %v921 = vld [vmem:[%s230 + $0x13c0] sm:$0xff]
        %v922 = vld [vmem:[%s230 + $0x13c8] sm:$0xff]
        %v923 = vld [vmem:[%s230 + $0x13d0] sm:$0xff]
        %v924 = vld [vmem:[%s230 + $0x13d8] sm:$0xff]
        %v925 = vld [vmem:[%s230 + $0x13e0] sm:$0xff]
        %v926 = vld [vmem:[%s230 + $0x13e8] sm:$0xff]
        %v927 = vld [vmem:[%s230 + $0x13f0] sm:$0xff]
        %v928 = vld [vmem:[%s230 + $0x13f8] sm:$0xff]
        %v929 = vld [vmem:[%s230 + $0x1400] sm:$0xff]
        %v930 = vld [vmem:[%s230 + $0x1408] sm:$0xff]
        %v931 = vld [vmem:[%s230 + $0x1410] sm:$0xff]
        %v932 = vld [vmem:[%s230 + $0x1418] sm:$0xff]
        %v933 = vld [vmem:[%s230 + $0x1420] sm:$0xff]
        %v934 = vld [vmem:[%s230 + $0x1428] sm:$0xff]
        %v935 = vld [vmem:[%s230 + $0x1430] sm:$0xff]
        %v936 = vld [vmem:[%s230 + $0x1438] sm:$0xff]
        %v937 = vld [vmem:[%s230 + $0x1440] sm:$0xff]
        %v938 = vld [vmem:[%s230 + $0x1448] sm:$0xff]
        %v939 = vld [vmem:[%s230 + $0x1450] sm:$0xff]
        %v940 = vld [vmem:[%s230 + $0x1458] sm:$0xff]
        %v941 = vld [vmem:[%s230 + $0x1460] sm:$0xff]
        %v942 = vld [vmem:[%s230 + $0x1468] sm:$0xff]
        %v943 = vld [vmem:[%s230 + $0x1470] sm:$0xff]
        %v944 = vld [vmem:[%s230 + $0x1478] sm:$0xff]
        %v945 = vld [vmem:[%s230 + $0x1480] sm:$0xff]
        %v946 = vld [vmem:[%s230 + $0x1488] sm:$0xff]
        %v947 = vld [vmem:[%s230 + $0x1490] sm:$0xff]
        %v948 = vld [vmem:[%s230 + $0x1498] sm:$0xff]
        %v949 = vld [vmem:[%s230 + $0x14a0] sm:$0xff]
        %v950 = vld [vmem:[%s230 + $0x14a8] sm:$0xff]
        %v951 = vld [vmem:[%s230 + $0x14b0] sm:$0xff]
        %v952 = vld [vmem:[%s230 + $0x14b8] sm:$0xff]
        %v953 = vld [vmem:[%s230 + $0x14c0] sm:$0xff]
        %v954 = vld [vmem:[%s230 + $0x14c8] sm:$0xff]
        %v955 = vld [vmem:[%s230 + $0x14d0] sm:$0xff]
        %v956 = vld [vmem:[%s230 + $0x14d8] sm:$0xff]
        %v957 = vld [vmem:[%s230 + $0x14e0] sm:$0xff]
        %v958 = vld [vmem:[%s230 + $0x14e8] sm:$0xff]
        %v959 = vld [vmem:[%s230 + $0x14f0] sm:$0xff]
        %v960 = vld [vmem:[%s230 + $0x14f8] sm:$0xff]
        %v961 = vld [vmem:[%s230 + $0x1500] sm:$0xff]
        %v962 = vld [vmem:[%s230 + $0x1508] sm:$0xff]
        %v963 = vld [vmem:[%s230 + $0x1510] sm:$0xff]
        %v964 = vld [vmem:[%s230 + $0x1518] sm:$0xff]
        %v965 = vld [vmem:[%s230 + $0x1520] sm:$0xff]
        %v966 = vld [vmem:[%s230 + $0x1528] sm:$0xff]
        %v967 = vld [vmem:[%s230 + $0x1530] sm:$0xff]
        %v968 = vld [vmem:[%s230 + $0x1538] sm:$0xff]
        %v969 = vld [vmem:[%s230 + $0x1540] sm:$0xff]
        %v970 = vld [vmem:[%s230 + $0x1548] sm:$0xff]
        %v971 = vld [vmem:[%s230 + $0x1550] sm:$0xff]
        %v972 = vld [vmem:[%s230 + $0x1558] sm:$0xff]
        %v973 = vld [vmem:[%s230 + $0x1560] sm:$0xff]
        %v974 = vld [vmem:[%s230 + $0x1568] sm:$0xff]
        %v975 = vld [vmem:[%s230 + $0x1570] sm:$0xff]
        %v976 = vld [vmem:[%s230 + $0x1578] sm:$0xff]
        %v977 = vld [vmem:[%s230 + $0x1580] sm:$0xff]
        %v978 = vld [vmem:[%s230 + $0x1588] sm:$0xff]
        %v979 = vld [vmem:[%s230 + $0x1590] sm:$0xff]
        %v980 = vld [vmem:[%s230 + $0x1598] sm:$0xff]
        %v981 = vld [vmem:[%s230 + $0x15a0] sm:$0xff]
        %v982 = vld [vmem:[%s230 + $0x15a8] sm:$0xff]
        %v983 = vld [vmem:[%s230 + $0x15b0] sm:$0xff]
        %v984 = vld [vmem:[%s230 + $0x15b8] sm:$0xff]
        %v985 = vld [vmem:[%s230 + $0x15c0] sm:$0xff]
        %v986 = vld [vmem:[%s230 + $0x15c8] sm:$0xff]
        %v987 = vld [vmem:[%s230 + $0x15d0] sm:$0xff]
        %v988 = vld [vmem:[%s230 + $0x15d8] sm:$0xff]
        %v989 = vld [vmem:[%s230 + $0x15e0] sm:$0xff]
        %v990 = vld [vmem:[%s230 + $0x15e8] sm:$0xff]
        %v991 = vld [vmem:[%s230 + $0x15f0] sm:$0xff]
        %v992 = vld [vmem:[%s230 + $0x15f8] sm:$0xff]
        %v993 = vld [vmem:[%s230 + $0x1600] sm:$0xff]
        %v994 = vld [vmem:[%s230 + $0x1608] sm:$0xff]
        %v995 = vld [vmem:[%s230 + $0x1610] sm:$0xff]
        %v996 = vld [vmem:[%s230 + $0x1618] sm:$0xff]
        %v997 = vld [vmem:[%s230 + $0x1620] sm:$0xff]
        %v998 = vld [vmem:[%s230 + $0x1628] sm:$0xff]
        %v999 = vld [vmem:[%s230 + $0x1630] sm:$0xff]
        %v1000 = vld [vmem:[%s230 + $0x1638] sm:$0xff]
        %v1001 = vld [vmem:[%s230 + $0x1640] sm:$0xff]
        %v1002 = vld [vmem:[%s230 + $0x1648] sm:$0xff]
        %v1003 = vld [vmem:[%s230 + $0x1650] sm:$0xff]
        %v1004 = vld [vmem:[%s230 + $0x1658] sm:$0xff]
        %v1005 = vld [vmem:[%s230 + $0x1660] sm:$0xff]
        %v1006 = vld [vmem:[%s230 + $0x1668] sm:$0xff]
        %v1007 = vld [vmem:[%s230 + $0x1670] sm:$0xff]
        %v1008 = vld [vmem:[%s230 + $0x1678] sm:$0xff]
        %v1009 = vld [vmem:[%s230 + $0x1680] sm:$0xff]
        %v1010 = vld [vmem:[%s230 + $0x1688] sm:$0xff]
        %v1011 = vld [vmem:[%s230 + $0x1690] sm:$0xff]
        %v1012 = vld [vmem:[%s230 + $0x1698] sm:$0xff]
        %v1013 = vld [vmem:[%s230 + $0x16a0] sm:$0xff]
        %v1014 = vld [vmem:[%s230 + $0x16a8] sm:$0xff]
        %v1015 = vld [vmem:[%s230 + $0x16b0] sm:$0xff]
        %v1016 = vld [vmem:[%s230 + $0x16b8] sm:$0xff]
        %v1017 = vld [vmem:[%s230 + $0x16c0] sm:$0xff]
        %v1018 = vld [vmem:[%s230 + $0x16c8] sm:$0xff]
        %v1019 = vld [vmem:[%s230 + $0x16d0] sm:$0xff]
        %v1020 = vld [vmem:[%s230 + $0x16d8] sm:$0xff]
        %v1021 = vld [vmem:[%s230 + $0x16e0] sm:$0xff]
        %v1022 = vld [vmem:[%s230 + $0x16e8] sm:$0xff]
        %v1023 = vld [vmem:[%s230 + $0x16f0] sm:$0xff]
        %v1024 = vld [vmem:[%s230 + $0x16f8] sm:$0xff]
        %v1025 = vld [vmem:[%s230 + $0x1700] sm:$0xff]
        %v1026 = vld [vmem:[%s230 + $0x1708] sm:$0xff]
        %v1027 = vld [vmem:[%s230 + $0x1710] sm:$0xff]
        %v1028 = vld [vmem:[%s230 + $0x1718] sm:$0xff]
        %v1029 = vld [vmem:[%s230 + $0x1720] sm:$0xff]
        %v1030 = vld [vmem:[%s230 + $0x1728] sm:$0xff]
        %v1031 = vld [vmem:[%s230 + $0x1730] sm:$0xff]
        %v1032 = vld [vmem:[%s230 + $0x1738] sm:$0xff]
        %v1033 = vld [vmem:[%s230 + $0x1740] sm:$0xff]
        %v1034 = vld [vmem:[%s230 + $0x1748] sm:$0xff]
        %v1035 = vld [vmem:[%s230 + $0x1750] sm:$0xff]
        %v1036 = vld [vmem:[%s230 + $0x1758] sm:$0xff]
        %v1037 = vld [vmem:[%s230 + $0x1760] sm:$0xff]
        %v1038 = vld [vmem:[%s230 + $0x1768] sm:$0xff]
        %v1039 = vld [vmem:[%s230 + $0x1770] sm:$0xff]
        %v1040 = vld [vmem:[%s230 + $0x1778] sm:$0xff]
        %v1041 = vld [vmem:[%s230 + $0x1780] sm:$0xff]
        %v1042 = vld [vmem:[%s230 + $0x1788] sm:$0xff]
        %v1043 = vld [vmem:[%s230 + $0x1790] sm:$0xff]
        %v1044 = vld [vmem:[%s230 + $0x1798] sm:$0xff]
        %v1045 = vld [vmem:[%s230 + $0x17a0] sm:$0xff]
        %v1046 = vld [vmem:[%s230 + $0x17a8] sm:$0xff]
        %v1047 = vld [vmem:[%s230 + $0x17b0] sm:$0xff]
        %v1048 = vld [vmem:[%s230 + $0x17b8] sm:$0xff]
        %v1049 = vld [vmem:[%s230 + $0x17c0] sm:$0xff]
        %v1050 = vld [vmem:[%s230 + $0x17c8] sm:$0xff]
        %v1051 = vld [vmem:[%s230 + $0x17d0] sm:$0xff]
        %v1052 = vld [vmem:[%s230 + $0x17d8] sm:$0xff]
        %v1053 = vld [vmem:[%s230 + $0x17e0] sm:$0xff]
        %v1054 = vld [vmem:[%s230 + $0x17e8] sm:$0xff]
        %v1055 = vld [vmem:[%s230 + $0x17f0] sm:$0xff]
        %v1056 = vld [vmem:[%s230 + $0x17f8] sm:$0xff]
        %v1057 = vld [vmem:[%s230 + $0x1800] sm:$0xff]
        %v1058 = vld [vmem:[%s230 + $0x1808] sm:$0xff]
        %v1059 = vld [vmem:[%s230 + $0x1810] sm:$0xff]
        %v1060 = vld [vmem:[%s230 + $0x1818] sm:$0xff]
        %v1061 = vld [vmem:[%s230 + $0x1820] sm:$0xff]
        %v1062 = vld [vmem:[%s230 + $0x1828] sm:$0xff]
        %v1063 = vld [vmem:[%s230 + $0x1830] sm:$0xff]
        %v1064 = vld [vmem:[%s230 + $0x1838] sm:$0xff]
        %v1065 = vld [vmem:[%s230 + $0x1840] sm:$0xff]
        %v1066 = vld [vmem:[%s230 + $0x1848] sm:$0xff]
        %v1067 = vld [vmem:[%s230 + $0x1850] sm:$0xff]
        %v1068 = vld [vmem:[%s230 + $0x1858] sm:$0xff]
        %v1069 = vld [vmem:[%s230 + $0x1860] sm:$0xff]
        %v1070 = vld [vmem:[%s230 + $0x1868] sm:$0xff]
        %v1071 = vld [vmem:[%s230 + $0x1870] sm:$0xff]
        %v1072 = vld [vmem:[%s230 + $0x1878] sm:$0xff]
        %v1073 = vld [vmem:[%s267] ss:$4 sm:$0x3]
        %v1075 = vlaneseq
        %v1076 = vshrl.u32 %v1075, 7
        %v1077 = vsub.s32 0, %v1076
        %v1078 = vrot.slane %v1073, %v1077
        %v1079 = vlaneseq
        %v1080 = vshrl.u32 %v1079, 7
        %v1081 = vsub.s32 1, %v1080
        %v1082 = vrot.slane %v1073, %v1081
        %v1092 = vcombine.high %v282, %v282
        %v1094 = vunpack.c.l.s4 1966171168
        %v1095 = vunpack.c.0.s8 %v1094
        %v1096 = vlaneseq
        %v1097 = vshrl.u32 %v1096, 7
        %v1098 = vsub.s32 %v1095, %v1097
        %v1099 = vrot.slane %v282, %v1098
        %v1101 = vunpack.c.l.s4 1966171168
        %v1102 = vunpack.c.0.s8 %v1101
        %v1103 = vlaneseq
        %v1104 = vshrl.u32 %v1103, 7
        %v1105 = vsub.s32 %v1102, %v1104
        %v1106 = vrot.slane %v1092, %v1105
        %v1107 = vcombine.high %v1099, %v1099
        %v1108 = vcombine.high %v1106, %v1106
        %v1110 = vunpack.c.l.s4 1966171168
        %v1111 = vunpack.c.0.s8 %v1110
        %v1112 = vlaneseq
        %v1113 = vshrl.u32 %v1112, 7
        %v1114 = vsub.s32 %v1111, %v1113
        %v1115 = vrot.slane %v1099, %v1114
        %v1117 = vunpack.c.l.s4 1966171168
        %v1118 = vunpack.c.0.s8 %v1117
        %v1119 = vlaneseq
        %v1120 = vshrl.u32 %v1119, 7
        %v1121 = vsub.s32 %v1118, %v1120
        %v1122 = vrot.slane %v1106, %v1121
        %v1124 = vunpack.c.l.s4 1966171168
        %v1125 = vunpack.c.0.s8 %v1124
        %v1126 = vlaneseq
        %v1127 = vshrl.u32 %v1126, 7
        %v1128 = vsub.s32 %v1125, %v1127
        %v1129 = vrot.slane %v1107, %v1128
        %v1131 = vunpack.c.l.s4 1966171168
        %v1132 = vunpack.c.0.s8 %v1131
        %v1133 = vlaneseq
        %v1134 = vshrl.u32 %v1133, 7
        %v1135 = vsub.s32 %v1132, %v1134
        %v1136 = vrot.slane %v1108, %v1135
        %v1137 = vcombine.high %v1115, %v1115
        %v1138 = vcombine.high %v1122, %v1122
        %v1139 = vcombine.high %v1129, %v1129
        %v1140 = vcombine.high %v1136, %v1136
        %v1141 = vcombine.high %v283, %v283
        %v1143 = vunpack.c.l.s4 1966171168
        %v1144 = vunpack.c.0.s8 %v1143
        %v1145 = vlaneseq
        %v1146 = vshrl.u32 %v1145, 7
        %v1147 = vsub.s32 %v1144, %v1146
        %v1148 = vrot.slane %v283, %v1147
        %v1150 = vunpack.c.l.s4 1966171168
        %v1151 = vunpack.c.0.s8 %v1150
        %v1152 = vlaneseq
        %v1153 = vshrl.u32 %v1152, 7
        %v1154 = vsub.s32 %v1151, %v1153
        %v1155 = vrot.slane %v1141, %v1154
        %v1156 = vcombine.high %v1148, %v1148
        %v1157 = vcombine.high %v1155, %v1155
        %v1159 = vunpack.c.l.s4 1966171168
        %v1160 = vunpack.c.0.s8 %v1159
        %v1161 = vlaneseq
        %v1162 = vshrl.u32 %v1161, 7
        %v1163 = vsub.s32 %v1160, %v1162
        %v1164 = vrot.slane %v1148, %v1163
        %v1166 = vunpack.c.l.s4 1966171168
        %v1167 = vunpack.c.0.s8 %v1166
        %v1168 = vlaneseq
        %v1169 = vshrl.u32 %v1168, 7
        %v1170 = vsub.s32 %v1167, %v1169
        %v1171 = vrot.slane %v1155, %v1170
        %v1173 = vunpack.c.l.s4 1966171168
        %v1174 = vunpack.c.0.s8 %v1173
        %v1175 = vlaneseq
        %v1176 = vshrl.u32 %v1175, 7
        %v1177 = vsub.s32 %v1174, %v1176
        %v1178 = vrot.slane %v1156, %v1177
        %v1180 = vunpack.c.l.s4 1966171168
        %v1181 = vunpack.c.0.s8 %v1180
        %v1182 = vlaneseq
        %v1183 = vshrl.u32 %v1182, 7
        %v1184 = vsub.s32 %v1181, %v1183
        %v1185 = vrot.slane %v1157, %v1184
        %v1186 = vcombine.high %v1164, %v1164
        %v1187 = vcombine.high %v1171, %v1171
        %v1188 = vcombine.high %v1178, %v1178
        %v1189 = vcombine.high %v1185, %v1185
        %v1190 = vcombine.high %v284, %v284
        %v1192 = vunpack.c.l.s4 1966171168
        %v1193 = vunpack.c.0.s8 %v1192
        %v1194 = vlaneseq
        %v1195 = vshrl.u32 %v1194, 7
        %v1196 = vsub.s32 %v1193, %v1195
        %v1197 = vrot.slane %v284, %v1196
        %v1199 = vunpack.c.l.s4 1966171168
        %v1200 = vunpack.c.0.s8 %v1199
        %v1201 = vlaneseq
        %v1202 = vshrl.u32 %v1201, 7
        %v1203 = vsub.s32 %v1200, %v1202
        %v1204 = vrot.slane %v1190, %v1203
        %v1205 = vcombine.high %v1197, %v1197
        %v1206 = vcombine.high %v1204, %v1204
        %v1208 = vunpack.c.l.s4 1966171168
        %v1209 = vunpack.c.0.s8 %v1208
        %v1210 = vlaneseq
        %v1211 = vshrl.u32 %v1210, 7
        %v1212 = vsub.s32 %v1209, %v1211
        %v1213 = vrot.slane %v1197, %v1212
        %v1215 = vunpack.c.l.s4 1966171168
        %v1216 = vunpack.c.0.s8 %v1215
        %v1217 = vlaneseq
        %v1218 = vshrl.u32 %v1217, 7
        %v1219 = vsub.s32 %v1216, %v1218
        %v1220 = vrot.slane %v1204, %v1219
        %v1222 = vunpack.c.l.s4 1966171168
        %v1223 = vunpack.c.0.s8 %v1222
        %v1224 = vlaneseq
        %v1225 = vshrl.u32 %v1224, 7
        %v1226 = vsub.s32 %v1223, %v1225
        %v1227 = vrot.slane %v1205, %v1226
        %v1229 = vunpack.c.l.s4 1966171168
        %v1230 = vunpack.c.0.s8 %v1229
        %v1231 = vlaneseq
        %v1232 = vshrl.u32 %v1231, 7
        %v1233 = vsub.s32 %v1230, %v1232
        %v1234 = vrot.slane %v1206, %v1233
        %v1235 = vcombine.high %v1213, %v1213
        %v1236 = vcombine.high %v1220, %v1220
        %v1237 = vcombine.high %v1227, %v1227
        %v1238 = vcombine.high %v1234, %v1234
        %v1239 = vcombine.high %v285, %v285
        %v1241 = vunpack.c.l.s4 1966171168
        %v1242 = vunpack.c.0.s8 %v1241
        %v1243 = vlaneseq
        %v1244 = vshrl.u32 %v1243, 7
        %v1245 = vsub.s32 %v1242, %v1244
        %v1246 = vrot.slane %v285, %v1245
        %v1248 = vunpack.c.l.s4 1966171168
        %v1249 = vunpack.c.0.s8 %v1248
        %v1250 = vlaneseq
        %v1251 = vshrl.u32 %v1250, 7
        %v1252 = vsub.s32 %v1249, %v1251
        %v1253 = vrot.slane %v1239, %v1252
        %v1254 = vcombine.high %v1246, %v1246
        %v1255 = vcombine.high %v1253, %v1253
        %v1257 = vunpack.c.l.s4 1966171168
        %v1258 = vunpack.c.0.s8 %v1257
        %v1259 = vlaneseq
        %v1260 = vshrl.u32 %v1259, 7
        %v1261 = vsub.s32 %v1258, %v1260
        %v1262 = vrot.slane %v1246, %v1261
        %v1264 = vunpack.c.l.s4 1966171168
        %v1265 = vunpack.c.0.s8 %v1264
        %v1266 = vlaneseq
        %v1267 = vshrl.u32 %v1266, 7
        %v1268 = vsub.s32 %v1265, %v1267
        %v1269 = vrot.slane %v1253, %v1268
        %v1271 = vunpack.c.l.s4 1966171168
        %v1272 = vunpack.c.0.s8 %v1271
        %v1273 = vlaneseq
        %v1274 = vshrl.u32 %v1273, 7
        %v1275 = vsub.s32 %v1272, %v1274
        %v1276 = vrot.slane %v1254, %v1275
        %v1278 = vunpack.c.l.s4 1966171168
        %v1279 = vunpack.c.0.s8 %v1278
        %v1280 = vlaneseq
        %v1281 = vshrl.u32 %v1280, 7
        %v1282 = vsub.s32 %v1279, %v1281
        %v1283 = vrot.slane %v1255, %v1282
        %v1284 = vcombine.high %v1262, %v1262
        %v1285 = vcombine.high %v1269, %v1269
        %v1286 = vcombine.high %v1276, %v1276
        %v1287 = vcombine.high %v1283, %v1283
        %v1288 = vcombine.high %v286, %v286
        %v1290 = vunpack.c.l.s4 1966171168
        %v1291 = vunpack.c.0.s8 %v1290
        %v1292 = vlaneseq
        %v1293 = vshrl.u32 %v1292, 7
        %v1294 = vsub.s32 %v1291, %v1293
        %v1295 = vrot.slane %v286, %v1294
        %v1297 = vunpack.c.l.s4 1966171168
        %v1298 = vunpack.c.0.s8 %v1297
        %v1299 = vlaneseq
        %v1300 = vshrl.u32 %v1299, 7
        %v1301 = vsub.s32 %v1298, %v1300
        %v1302 = vrot.slane %v1288, %v1301
        %v1303 = vcombine.high %v1295, %v1295
        %v1304 = vcombine.high %v1302, %v1302
        %v1306 = vunpack.c.l.s4 1966171168
        %v1307 = vunpack.c.0.s8 %v1306
        %v1308 = vlaneseq
        %v1309 = vshrl.u32 %v1308, 7
        %v1310 = vsub.s32 %v1307, %v1309
        %v1311 = vrot.slane %v1295, %v1310
        %v1313 = vunpack.c.l.s4 1966171168
        %v1314 = vunpack.c.0.s8 %v1313
        %v1315 = vlaneseq
        %v1316 = vshrl.u32 %v1315, 7
        %v1317 = vsub.s32 %v1314, %v1316
        %v1318 = vrot.slane %v1302, %v1317
        %v1320 = vunpack.c.l.s4 1966171168
        %v1321 = vunpack.c.0.s8 %v1320
        %v1322 = vlaneseq
        %v1323 = vshrl.u32 %v1322, 7
        %v1324 = vsub.s32 %v1321, %v1323
        %v1325 = vrot.slane %v1303, %v1324
        %v1327 = vunpack.c.l.s4 1966171168
        %v1328 = vunpack.c.0.s8 %v1327
        %v1329 = vlaneseq
        %v1330 = vshrl.u32 %v1329, 7
        %v1331 = vsub.s32 %v1328, %v1330
        %v1332 = vrot.slane %v1304, %v1331
        %v1333 = vcombine.high %v1311, %v1311
        %v1334 = vcombine.high %v1318, %v1318
        %v1335 = vcombine.high %v1325, %v1325
        %v1336 = vcombine.high %v1332, %v1332
        %v1337 = vcombine.high %v287, %v287
        %v1339 = vunpack.c.l.s4 1966171168
        %v1340 = vunpack.c.0.s8 %v1339
        %v1341 = vlaneseq
        %v1342 = vshrl.u32 %v1341, 7
        %v1343 = vsub.s32 %v1340, %v1342
        %v1344 = vrot.slane %v287, %v1343
        %v1346 = vunpack.c.l.s4 1966171168
        %v1347 = vunpack.c.0.s8 %v1346
        %v1348 = vlaneseq
        %v1349 = vshrl.u32 %v1348, 7
        %v1350 = vsub.s32 %v1347, %v1349
        %v1351 = vrot.slane %v1337, %v1350
        %v1352 = vcombine.high %v1344, %v1344
        %v1353 = vcombine.high %v1351, %v1351
        %v1355 = vunpack.c.l.s4 1966171168
        %v1356 = vunpack.c.0.s8 %v1355
        %v1357 = vlaneseq
        %v1358 = vshrl.u32 %v1357, 7
        %v1359 = vsub.s32 %v1356, %v1358
        %v1360 = vrot.slane %v1344, %v1359
        %v1362 = vunpack.c.l.s4 1966171168
        %v1363 = vunpack.c.0.s8 %v1362
        %v1364 = vlaneseq
        %v1365 = vshrl.u32 %v1364, 7
        %v1366 = vsub.s32 %v1363, %v1365
        %v1367 = vrot.slane %v1351, %v1366
        %v1369 = vunpack.c.l.s4 1966171168
        %v1370 = vunpack.c.0.s8 %v1369
        %v1371 = vlaneseq
        %v1372 = vshrl.u32 %v1371, 7
        %v1373 = vsub.s32 %v1370, %v1372
        %v1374 = vrot.slane %v1352, %v1373
        %v1376 = vunpack.c.l.s4 1966171168
        %v1377 = vunpack.c.0.s8 %v1376
        %v1378 = vlaneseq
        %v1379 = vshrl.u32 %v1378, 7
        %v1380 = vsub.s32 %v1377, %v1379
        %v1381 = vrot.slane %v1353, %v1380
        %v1382 = vcombine.high %v1360, %v1360
        %v1383 = vcombine.high %v1367, %v1367
        %v1384 = vcombine.high %v1374, %v1374
        %v1385 = vcombine.high %v1381, %v1381
        %v1387 = vunpack.c.l.s4 1966171168
        %v1388 = vunpack.c.0.s8 %v1387
        %v1389 = vlaneseq
        %v1390 = vshrl.u32 %v1389, 7
        %v1391 = vsub.s32 %v1388, %v1390
        %v1392 = vrot.slane %v288, %v1391
        %v1394 = vunpack.c.l.s4 1966171168
        %v1395 = vunpack.c.0.s8 %v1394
        %v1396 = vlaneseq
        %v1397 = vshrl.u32 %v1396, 7
        %v1398 = vsub.s32 %v1395, %v1397
        %v1399 = vrot.slane %v1392, %v1398
        %v2233 = vunpack.c.l.b16 %v289
        %v2234 = vunpack.c.h.b16 %v289
        %v2235 = vunpack.c.l.b16 %v290
        %v2236 = vunpack.c.h.b16 %v290
        %v2237 = vunpack.c.l.b16 %v291
        %v2238 = vunpack.c.h.b16 %v291
        %v2239 = vunpack.c.l.b16 %v292
        %v2240 = vunpack.c.h.b16 %v292
        %v2241 = vunpack.c.l.b16 %v293
        %v2242 = vunpack.c.h.b16 %v293
        %v2243 = vunpack.c.l.b16 %v294
        %v2244 = vunpack.c.h.b16 %v294
        %v2245 = vunpack.c.l.b16 %v295
        %v2246 = vunpack.c.h.b16 %v295
        %v2247 = vunpack.c.l.b16 %v296
        %v2248 = vunpack.c.h.b16 %v296
        %v2249 = vunpack.c.l.b16 %v297
        %v2250 = vunpack.c.h.b16 %v297
        %v2251 = vunpack.c.l.b16 %v298
        %v2252 = vunpack.c.h.b16 %v298
        %v2253 = vunpack.c.l.b16 %v299
        %v2254 = vunpack.c.h.b16 %v299
        %v2255 = vunpack.c.l.b16 %v300
        %v2256 = vunpack.c.h.b16 %v300
        %v2257 = vunpack.c.l.b16 %v301
        %v2258 = vunpack.c.h.b16 %v301
        %v2259 = vunpack.c.l.b16 %v302
        %v2260 = vunpack.c.h.b16 %v302
        %v2261 = vunpack.c.l.b16 %v303
        %v2262 = vunpack.c.h.b16 %v303
        %v2263 = vunpack.c.l.b16 %v304
        %v2264 = vunpack.c.h.b16 %v304
        %v2265 = vunpack.c.l.b16 %v305
        %v2266 = vunpack.c.h.b16 %v305
        %v2267 = vunpack.c.l.b16 %v306
        %v2268 = vunpack.c.h.b16 %v306
        %v2269 = vunpack.c.l.b16 %v307
        %v2270 = vunpack.c.h.b16 %v307
        %v2271 = vunpack.c.l.b16 %v308
        %v2272 = vunpack.c.h.b16 %v308
        %v2273 = vunpack.c.l.b16 %v309
        %v2274 = vunpack.c.h.b16 %v309
        %v2275 = vunpack.c.l.b16 %v310
        %v2276 = vunpack.c.h.b16 %v310
        %v2277 = vunpack.c.l.b16 %v311
        %v2278 = vunpack.c.h.b16 %v311
        %v2279 = vunpack.c.l.b16 %v312
        %v2280 = vunpack.c.h.b16 %v312
        %v2281 = vunpack.c.l.b16 %v313
        %v2282 = vunpack.c.h.b16 %v313
        %v2283 = vunpack.c.l.b16 %v314
        %v2284 = vunpack.c.h.b16 %v314
        %v2285 = vunpack.c.l.b16 %v315
        %v2286 = vunpack.c.h.b16 %v315
        %v2287 = vunpack.c.l.b16 %v316
        %v2288 = vunpack.c.h.b16 %v316
        %v2289 = vunpack.c.l.b16 %v317
        %v2290 = vunpack.c.h.b16 %v317
        %v2291 = vunpack.c.l.b16 %v318
        %v2292 = vunpack.c.h.b16 %v318
        %v2293 = vunpack.c.l.b16 %v319
        %v2294 = vunpack.c.h.b16 %v319
        %v2295 = vunpack.c.l.b16 %v320
        %v2296 = vunpack.c.h.b16 %v320
        %v2297 = vunpack.c.l.b16 %v321
        %v2298 = vunpack.c.h.b16 %v321
        %v2299 = vunpack.c.l.b16 %v322
        %v2300 = vunpack.c.h.b16 %v322
        %v2301 = vunpack.c.l.b16 %v323
        %v2302 = vunpack.c.h.b16 %v323
        %v2303 = vunpack.c.l.b16 %v324
        %v2304 = vunpack.c.h.b16 %v324
        %v2305 = vunpack.c.l.b16 %v325
        %v2306 = vunpack.c.h.b16 %v325
        %v2307 = vunpack.c.l.b16 %v326
        %v2308 = vunpack.c.h.b16 %v326
        %v2309 = vunpack.c.l.b16 %v327
        %v2310 = vunpack.c.h.b16 %v327
        %v2311 = vunpack.c.l.b16 %v328
        %v2312 = vunpack.c.h.b16 %v328
        %v2313 = vunpack.c.l.b16 %v329
        %v2314 = vunpack.c.h.b16 %v329
        %v2315 = vunpack.c.l.b16 %v330
        %v2316 = vunpack.c.h.b16 %v330
        %v2317 = vunpack.c.l.b16 %v331
        %v2318 = vunpack.c.h.b16 %v331
        %v2319 = vunpack.c.l.b16 %v332
        %v2320 = vunpack.c.h.b16 %v332
        %v2321 = vunpack.c.l.b16 %v333
        %v2322 = vunpack.c.h.b16 %v333
        %v2323 = vunpack.c.l.b16 %v334
        %v2324 = vunpack.c.h.b16 %v334
        %v2325 = vunpack.c.l.b16 %v335
        %v2326 = vunpack.c.h.b16 %v335
        %v2327 = vunpack.c.l.b16 %v336
        %v2328 = vunpack.c.h.b16 %v336
        %v2329 = vunpack.c.l.b16 %v337
        %v2330 = vunpack.c.h.b16 %v337
        %v2331 = vunpack.c.l.b16 %v338
        %v2332 = vunpack.c.h.b16 %v338
        %v2333 = vunpack.c.l.b16 %v339
        %v2334 = vunpack.c.h.b16 %v339
        %v2335 = vunpack.c.l.b16 %v340
        %v2336 = vunpack.c.h.b16 %v340
        %v2337 = vunpack.c.l.b16 %v341
        %v2338 = vunpack.c.h.b16 %v341
        %v2339 = vunpack.c.l.b16 %v342
        %v2340 = vunpack.c.h.b16 %v342
        %v2341 = vunpack.c.l.b16 %v343
        %v2342 = vunpack.c.h.b16 %v343
        %v2343 = vunpack.c.l.b16 %v344
        %v2344 = vunpack.c.h.b16 %v344
        %v2345 = vunpack.c.l.b16 %v345
        %v2346 = vunpack.c.h.b16 %v345
        %v2347 = vunpack.c.l.b16 %v346
        %v2348 = vunpack.c.h.b16 %v346
        %v2349 = vunpack.c.l.b16 %v347
        %v2350 = vunpack.c.h.b16 %v347
        %v2351 = vunpack.c.l.b16 %v348
        %v2352 = vunpack.c.h.b16 %v348
        %v2353 = vunpack.c.l.b16 %v349
        %v2354 = vunpack.c.h.b16 %v349
        %v2355 = vunpack.c.l.b16 %v350
        %v2356 = vunpack.c.h.b16 %v350
        %v2357 = vunpack.c.l.b16 %v351
        %v2358 = vunpack.c.h.b16 %v351
        %v2359 = vunpack.c.l.b16 %v352
        %v2360 = vunpack.c.h.b16 %v352
        %v2361 = vunpack.c.l.b16 %v353
        %v2362 = vunpack.c.h.b16 %v353
        %v2363 = vunpack.c.l.b16 %v354
        %v2364 = vunpack.c.h.b16 %v354
        %v2365 = vunpack.c.l.b16 %v355
        %v2366 = vunpack.c.h.b16 %v355
        %v2367 = vunpack.c.l.b16 %v356
        %v2368 = vunpack.c.h.b16 %v356
        %v2369 = vunpack.c.l.b16 %v357
        %v2370 = vunpack.c.h.b16 %v357
        %v2371 = vunpack.c.l.b16 %v358
        %v2372 = vunpack.c.h.b16 %v358
        %v2373 = vunpack.c.l.b16 %v359
        %v2374 = vunpack.c.h.b16 %v359
        %v2375 = vunpack.c.l.b16 %v360
        %v2376 = vunpack.c.h.b16 %v360
        %v2377 = vunpack.c.l.b16 %v361
        %v2378 = vunpack.c.h.b16 %v361
        %v2379 = vunpack.c.l.b16 %v362
        %v2380 = vunpack.c.h.b16 %v362
        %v2381 = vunpack.c.l.b16 %v363
        %v2382 = vunpack.c.h.b16 %v363
        %v2383 = vunpack.c.l.b16 %v364
        %v2384 = vunpack.c.h.b16 %v364
        %v2385 = vunpack.c.l.b16 %v365
        %v2386 = vunpack.c.h.b16 %v365
        %v2387 = vunpack.c.l.b16 %v366
        %v2388 = vunpack.c.h.b16 %v366
        %v2389 = vunpack.c.l.b16 %v367
        %v2390 = vunpack.c.h.b16 %v367
        %v2391 = vunpack.c.l.b16 %v368
        %v2392 = vunpack.c.h.b16 %v368
        %v2393 = vunpack.c.l.b16 %v369
        %v2394 = vunpack.c.h.b16 %v369
        %v2395 = vunpack.c.l.b16 %v370
        %v2396 = vunpack.c.h.b16 %v370
        %v2397 = vunpack.c.l.b16 %v371
        %v2398 = vunpack.c.h.b16 %v371
        %v2399 = vunpack.c.l.b16 %v372
        %v2400 = vunpack.c.h.b16 %v372
        %v2401 = vunpack.c.l.b16 %v373
        %v2402 = vunpack.c.h.b16 %v373
        %v2403 = vunpack.c.l.b16 %v374
        %v2404 = vunpack.c.h.b16 %v374
        %v2405 = vunpack.c.l.b16 %v375
        %v2406 = vunpack.c.h.b16 %v375
        %v2407 = vunpack.c.l.b16 %v376
        %v2408 = vunpack.c.h.b16 %v376
        %v2409 = vunpack.c.l.b16 %v377
        %v2410 = vunpack.c.h.b16 %v377
        %v2411 = vunpack.c.l.b16 %v378
        %v2412 = vunpack.c.h.b16 %v378
        %v2413 = vunpack.c.l.b16 %v379
        %v2414 = vunpack.c.h.b16 %v379
        %v2415 = vunpack.c.l.b16 %v380
        %v2416 = vunpack.c.h.b16 %v380
        %v2417 = vunpack.c.l.b16 %v381
        %v2418 = vunpack.c.h.b16 %v381
        %v2419 = vunpack.c.l.b16 %v382
        %v2420 = vunpack.c.h.b16 %v382
        %v2421 = vunpack.c.l.b16 %v383
        %v2422 = vunpack.c.h.b16 %v383
        %v2423 = vunpack.c.l.b16 %v384
        %v2424 = vunpack.c.h.b16 %v384
        %v2425 = vunpack.c.l.b16 %v385
        %v2426 = vunpack.c.h.b16 %v385
        %v2427 = vunpack.c.l.b16 %v386
        %v2428 = vunpack.c.h.b16 %v386
        %v2429 = vunpack.c.l.b16 %v387
        %v2430 = vunpack.c.h.b16 %v387
        %v2431 = vunpack.c.l.b16 %v388
        %v2432 = vunpack.c.h.b16 %v388
        %v2433 = vunpack.c.l.b16 %v389
        %v2434 = vunpack.c.h.b16 %v389
        %v2435 = vunpack.c.l.b16 %v390
        %v2436 = vunpack.c.h.b16 %v390
        %v2437 = vunpack.c.l.b16 %v391
        %v2438 = vunpack.c.h.b16 %v391
        %v2439 = vunpack.c.l.b16 %v392
        %v2440 = vunpack.c.h.b16 %v392
        %v2441 = vunpack.c.l.b16 %v393
        %v2442 = vunpack.c.h.b16 %v393
        %v2443 = vunpack.c.l.b16 %v394
        %v2444 = vunpack.c.h.b16 %v394
        %v2445 = vunpack.c.l.b16 %v395
        %v2446 = vunpack.c.h.b16 %v395
        %v2447 = vunpack.c.l.b16 %v396
        %v2448 = vunpack.c.h.b16 %v396
        %v2449 = vunpack.c.l.b16 %v397
        %v2450 = vunpack.c.h.b16 %v397
        %v2451 = vunpack.c.l.b16 %v398
        %v2452 = vunpack.c.h.b16 %v398
        %v2453 = vunpack.c.l.b16 %v399
        %v2454 = vunpack.c.h.b16 %v399
        %v2455 = vunpack.c.l.b16 %v400
        %v2456 = vunpack.c.h.b16 %v400
        %v2457 = vunpack.c.l.b16 %v401
        %v2458 = vunpack.c.h.b16 %v401
        %v2459 = vunpack.c.l.b16 %v402
        %v2460 = vunpack.c.h.b16 %v402
        %v2461 = vunpack.c.l.b16 %v403
        %v2462 = vunpack.c.h.b16 %v403
        %v2463 = vunpack.c.l.b16 %v404
        %v2464 = vunpack.c.h.b16 %v404
        %v2465 = vunpack.c.l.b16 %v405
        %v2466 = vunpack.c.h.b16 %v405
        %v2467 = vunpack.c.l.b16 %v406
        %v2468 = vunpack.c.h.b16 %v406
        %v2469 = vunpack.c.l.b16 %v407
        %v2470 = vunpack.c.h.b16 %v407
        %v2471 = vunpack.c.l.b16 %v408
        %v2472 = vunpack.c.h.b16 %v408
        %v2473 = vunpack.c.l.b16 %v409
        %v2474 = vunpack.c.h.b16 %v409
        %v2475 = vunpack.c.l.b16 %v410
        %v2476 = vunpack.c.h.b16 %v410
        %v2477 = vunpack.c.l.b16 %v411
        %v2478 = vunpack.c.h.b16 %v411
        %v2479 = vunpack.c.l.b16 %v412
        %v2480 = vunpack.c.h.b16 %v412
        %v2481 = vunpack.c.l.b16 %v413
        %v2482 = vunpack.c.h.b16 %v413
        %v2483 = vunpack.c.l.b16 %v414
        %v2484 = vunpack.c.h.b16 %v414
        %v2485 = vunpack.c.l.b16 %v415
        %v2486 = vunpack.c.h.b16 %v415
        %v2487 = vunpack.c.l.b16 %v416
        %v2488 = vunpack.c.h.b16 %v416
        %v2489 = vunpack.c.l.b16 %v417
        %v2490 = vunpack.c.h.b16 %v417
        %v2491 = vunpack.c.l.b16 %v418
        %v2492 = vunpack.c.h.b16 %v418
        %v2493 = vunpack.c.l.b16 %v419
        %v2494 = vunpack.c.h.b16 %v419
        %v2495 = vunpack.c.l.b16 %v420
        %v2496 = vunpack.c.h.b16 %v420
        %v2497 = vunpack.c.l.b16 %v421
        %v2498 = vunpack.c.h.b16 %v421
        %v2499 = vunpack.c.l.b16 %v422
        %v2500 = vunpack.c.h.b16 %v422
        %v2501 = vunpack.c.l.b16 %v423
        %v2502 = vunpack.c.h.b16 %v423
        %v2503 = vunpack.c.l.b16 %v424
        %v2504 = vunpack.c.h.b16 %v424
        %v2505 = vunpack.c.l.b16 %v425
        %v2506 = vunpack.c.h.b16 %v425
        %v2507 = vunpack.c.l.b16 %v426
        %v2508 = vunpack.c.h.b16 %v426
        %v2509 = vunpack.c.l.b16 %v427
        %v2510 = vunpack.c.h.b16 %v427
        %v2511 = vunpack.c.l.b16 %v428
        %v2512 = vunpack.c.h.b16 %v428
        %v2513 = vunpack.c.l.b16 %v429
        %v2514 = vunpack.c.h.b16 %v429
        %v2515 = vunpack.c.l.b16 %v430
        %v2516 = vunpack.c.h.b16 %v430
        %v2517 = vunpack.c.l.b16 %v431
        %v2518 = vunpack.c.h.b16 %v431
        %v2519 = vunpack.c.l.b16 %v432
        %v2520 = vunpack.c.h.b16 %v432
        %v2521 = vunpack.c.l.b16 %v433
        %v2522 = vunpack.c.h.b16 %v433
        %v2523 = vunpack.c.l.b16 %v434
        %v2524 = vunpack.c.h.b16 %v434
        %v2525 = vunpack.c.l.b16 %v435
        %v2526 = vunpack.c.h.b16 %v435
        %v2527 = vunpack.c.l.b16 %v436
        %v2528 = vunpack.c.h.b16 %v436
        %v2529 = vunpack.c.l.b16 %v437
        %v2530 = vunpack.c.h.b16 %v437
        %v2531 = vunpack.c.l.b16 %v438
        %v2532 = vunpack.c.h.b16 %v438
        %v2533 = vunpack.c.l.b16 %v439
        %v2534 = vunpack.c.h.b16 %v439
        %v2535 = vunpack.c.l.b16 %v440
        %v2536 = vunpack.c.h.b16 %v440
        %v2537 = vunpack.c.l.b16 %v441
        %v2538 = vunpack.c.h.b16 %v441
        %v2539 = vunpack.c.l.b16 %v442
        %v2540 = vunpack.c.h.b16 %v442
        %v2541 = vunpack.c.l.b16 %v443
        %v2542 = vunpack.c.h.b16 %v443
        %v2543 = vunpack.c.l.b16 %v444
        %v2544 = vunpack.c.h.b16 %v444
        %v2545 = vunpack.c.l.b16 %v445
        %v2546 = vunpack.c.h.b16 %v445
        %v2547 = vunpack.c.l.b16 %v446
        %v2548 = vunpack.c.h.b16 %v446
        %v2549 = vunpack.c.l.b16 %v447
        %v2550 = vunpack.c.h.b16 %v447
        %v2551 = vunpack.c.l.b16 %v448
        %v2552 = vunpack.c.h.b16 %v448
        %v2553 = vunpack.c.l.b16 %v449
        %v2554 = vunpack.c.h.b16 %v449
        %v2555 = vunpack.c.l.b16 %v450
        %v2556 = vunpack.c.h.b16 %v450
        %v2557 = vunpack.c.l.b16 %v451
        %v2558 = vunpack.c.h.b16 %v451
        %v2559 = vunpack.c.l.b16 %v452
        %v2560 = vunpack.c.h.b16 %v452
        %v2561 = vunpack.c.l.b16 %v453
        %v2562 = vunpack.c.h.b16 %v453
        %v2563 = vunpack.c.l.b16 %v454
        %v2564 = vunpack.c.h.b16 %v454
        %v2565 = vunpack.c.l.b16 %v455
        %v2566 = vunpack.c.h.b16 %v455
        %v2567 = vunpack.c.l.b16 %v456
        %v2568 = vunpack.c.h.b16 %v456
        %v2569 = vunpack.c.l.b16 %v457
        %v2570 = vunpack.c.h.b16 %v457
        %v2571 = vunpack.c.l.b16 %v458
        %v2572 = vunpack.c.h.b16 %v458
        %v2573 = vunpack.c.l.b16 %v459
        %v2574 = vunpack.c.h.b16 %v459
        %v2575 = vunpack.c.l.b16 %v460
        %v2576 = vunpack.c.h.b16 %v460
        %v2577 = vunpack.c.l.b16 %v461
        %v2578 = vunpack.c.h.b16 %v461
        %v2579 = vunpack.c.l.b16 %v462
        %v2580 = vunpack.c.h.b16 %v462
        %v2581 = vunpack.c.l.b16 %v463
        %v2582 = vunpack.c.h.b16 %v463
        %v2583 = vunpack.c.l.b16 %v464
        %v2584 = vunpack.c.h.b16 %v464
        %v2585 = vunpack.c.l.b16 %v465
        %v2586 = vunpack.c.h.b16 %v465
        %v2587 = vunpack.c.l.b16 %v466
        %v2588 = vunpack.c.h.b16 %v466
        %v2589 = vunpack.c.l.b16 %v467
        %v2590 = vunpack.c.h.b16 %v467
        %v2591 = vunpack.c.l.b16 %v468
        %v2592 = vunpack.c.h.b16 %v468
        %v2593 = vunpack.c.l.b16 %v469
        %v2594 = vunpack.c.h.b16 %v469
        %v2595 = vunpack.c.l.b16 %v470
        %v2596 = vunpack.c.h.b16 %v470
        %v2597 = vunpack.c.l.b16 %v471
        %v2598 = vunpack.c.h.b16 %v471
        %v2599 = vunpack.c.l.b16 %v472
        %v2600 = vunpack.c.h.b16 %v472
        %v2601 = vunpack.c.l.b16 %v473
        %v2602 = vunpack.c.h.b16 %v473
        %v2603 = vunpack.c.l.b16 %v474
        %v2604 = vunpack.c.h.b16 %v474
        %v2605 = vunpack.c.l.b16 %v475
        %v2606 = vunpack.c.h.b16 %v475
        %v2607 = vunpack.c.l.b16 %v476
        %v2608 = vunpack.c.h.b16 %v476
        %v2609 = vunpack.c.l.b16 %v477
        %v2610 = vunpack.c.h.b16 %v477
        %v2611 = vunpack.c.l.b16 %v478
        %v2612 = vunpack.c.h.b16 %v478
        %v2613 = vunpack.c.l.b16 %v479
        %v2614 = vunpack.c.h.b16 %v479
        %v2615 = vunpack.c.l.b16 %v480
        %v2616 = vunpack.c.h.b16 %v480
        %v2617 = vunpack.c.l.b16 %v481
        %v2618 = vunpack.c.h.b16 %v481
        %v2619 = vunpack.c.l.b16 %v482
        %v2620 = vunpack.c.h.b16 %v482
        %v2621 = vunpack.c.l.b16 %v483
        %v2622 = vunpack.c.h.b16 %v483
        %v2623 = vunpack.c.l.b16 %v484
        %v2624 = vunpack.c.h.b16 %v484
        %v2625 = vunpack.c.l.b16 %v485
        %v2626 = vunpack.c.h.b16 %v485
        %v2627 = vunpack.c.l.b16 %v486
        %v2628 = vunpack.c.h.b16 %v486
        %v2629 = vunpack.c.l.b16 %v487
        %v2630 = vunpack.c.h.b16 %v487
        %v2631 = vunpack.c.l.b16 %v488
        %v2632 = vunpack.c.h.b16 %v488
        %v2633 = vunpack.c.l.b16 %v489
        %v2634 = vunpack.c.h.b16 %v489
        %v2635 = vunpack.c.l.b16 %v490
        %v2636 = vunpack.c.h.b16 %v490
        %v2637 = vunpack.c.l.b16 %v491
        %v2638 = vunpack.c.h.b16 %v491
        %v2639 = vunpack.c.l.b16 %v492
        %v2640 = vunpack.c.h.b16 %v492
        %v2641 = vunpack.c.l.b16 %v493
        %v2642 = vunpack.c.h.b16 %v493
        %v2643 = vunpack.c.l.b16 %v494
        %v2644 = vunpack.c.h.b16 %v494
        %v2645 = vunpack.c.l.b16 %v495
        %v2646 = vunpack.c.h.b16 %v495
        %v2647 = vunpack.c.l.b16 %v496
        %v2648 = vunpack.c.h.b16 %v496
        %v2649 = vunpack.c.l.b16 %v497
        %v2650 = vunpack.c.h.b16 %v497
        %v2651 = vunpack.c.l.b16 %v498
        %v2652 = vunpack.c.h.b16 %v498
        %v2653 = vunpack.c.l.b16 %v499
        %v2654 = vunpack.c.h.b16 %v499
        %v2655 = vunpack.c.l.b16 %v500
        %v2656 = vunpack.c.h.b16 %v500
        %v2657 = vunpack.c.l.b16 %v501
        %v2658 = vunpack.c.h.b16 %v501
        %v2659 = vunpack.c.l.b16 %v502
        %v2660 = vunpack.c.h.b16 %v502
        %v2661 = vunpack.c.l.b16 %v503
        %v2662 = vunpack.c.h.b16 %v503
        %v2663 = vunpack.c.l.b16 %v504
        %v2664 = vunpack.c.h.b16 %v504
        %v2665 = vunpack.c.l.b16 %v505
        %v2666 = vunpack.c.h.b16 %v505
        %v2667 = vunpack.c.l.b16 %v506
        %v2668 = vunpack.c.h.b16 %v506
        %v2669 = vunpack.c.l.b16 %v507
        %v2670 = vunpack.c.h.b16 %v507
        %v2671 = vunpack.c.l.b16 %v508
        %v2672 = vunpack.c.h.b16 %v508
        %v2673 = vunpack.c.l.b16 %v509
        %v2674 = vunpack.c.h.b16 %v509
        %v2675 = vunpack.c.l.b16 %v510
        %v2676 = vunpack.c.h.b16 %v510
        %v2677 = vunpack.c.l.b16 %v511
        %v2678 = vunpack.c.h.b16 %v511
        %v2679 = vunpack.c.l.b16 %v512
        %v2680 = vunpack.c.h.b16 %v512
        %v2681 = vunpack.c.l.b16 %v513
        %v2682 = vunpack.c.h.b16 %v513
        %v2683 = vunpack.c.l.b16 %v514
        %v2684 = vunpack.c.h.b16 %v514
        %v2685 = vunpack.c.l.b16 %v515
        %v2686 = vunpack.c.h.b16 %v515
        %v2687 = vunpack.c.l.b16 %v516
        %v2688 = vunpack.c.h.b16 %v516
        %v2689 = vunpack.c.l.b16 %v517
        %v2690 = vunpack.c.h.b16 %v517
        %v2691 = vunpack.c.l.b16 %v518
        %v2692 = vunpack.c.h.b16 %v518
        %v2693 = vunpack.c.l.b16 %v519
        %v2694 = vunpack.c.h.b16 %v519
        %v2695 = vunpack.c.l.b16 %v520
        %v2696 = vunpack.c.h.b16 %v520
        %v2697 = vunpack.c.l.b16 %v521
        %v2698 = vunpack.c.h.b16 %v521
        %v2699 = vunpack.c.l.b16 %v522
        %v2700 = vunpack.c.h.b16 %v522
        %v2701 = vunpack.c.l.b16 %v523
        %v2702 = vunpack.c.h.b16 %v523
        %v2703 = vunpack.c.l.b16 %v524
        %v2704 = vunpack.c.h.b16 %v524
        %v2705 = vunpack.c.l.b16 %v525
        %v2706 = vunpack.c.h.b16 %v525
        %v2707 = vunpack.c.l.b16 %v526
        %v2708 = vunpack.c.h.b16 %v526
        %v2709 = vunpack.c.l.b16 %v527
        %v2710 = vunpack.c.h.b16 %v527
        %v2711 = vunpack.c.l.b16 %v528
        %v2712 = vunpack.c.h.b16 %v528
        %v2713 = vunpack.c.l.b16 %v529
        %v2714 = vunpack.c.h.b16 %v529
        %v2715 = vunpack.c.l.b16 %v530
        %v2716 = vunpack.c.h.b16 %v530
        %v2717 = vunpack.c.l.b16 %v531
        %v2718 = vunpack.c.h.b16 %v531
        %v2719 = vunpack.c.l.b16 %v532
        %v2720 = vunpack.c.h.b16 %v532
        %v2721 = vunpack.c.l.b16 %v533
        %v2722 = vunpack.c.h.b16 %v533
        %v2723 = vunpack.c.l.b16 %v534
        %v2724 = vunpack.c.h.b16 %v534
        %v2725 = vunpack.c.l.b16 %v535
        %v2726 = vunpack.c.h.b16 %v535
        %v2727 = vunpack.c.l.b16 %v536
        %v2728 = vunpack.c.h.b16 %v536
        %v2729 = vunpack.c.l.b16 %v537
        %v2730 = vunpack.c.h.b16 %v537
        %v2731 = vunpack.c.l.b16 %v538
        %v2732 = vunpack.c.h.b16 %v538
        %v2733 = vunpack.c.l.b16 %v539
        %v2734 = vunpack.c.h.b16 %v539
        %v2735 = vunpack.c.l.b16 %v540
        %v2736 = vunpack.c.h.b16 %v540
        %v2737 = vunpack.c.l.b16 %v541
        %v2738 = vunpack.c.h.b16 %v541
        %v2739 = vunpack.c.l.b16 %v542
        %v2740 = vunpack.c.h.b16 %v542
        %v2741 = vunpack.c.l.b16 %v543
        %v2742 = vunpack.c.h.b16 %v543
        %v2743 = vunpack.c.l.b16 %v544
        %v2744 = vunpack.c.h.b16 %v544
        %v2745 = vunpack.c.l.b16 %v545
        %v2746 = vunpack.c.h.b16 %v545
        %v2747 = vunpack.c.l.b16 %v546
        %v2748 = vunpack.c.h.b16 %v546
        %v2749 = vunpack.c.l.b16 %v547
        %v2750 = vunpack.c.h.b16 %v547
        %v2751 = vunpack.c.l.b16 %v548
        %v2752 = vunpack.c.h.b16 %v548
        %v2753 = vunpack.c.l.b16 %v549
        %v2754 = vunpack.c.h.b16 %v549
        %v2755 = vunpack.c.l.b16 %v550
        %v2756 = vunpack.c.h.b16 %v550
        %v2757 = vunpack.c.l.b16 %v551
        %v2758 = vunpack.c.h.b16 %v551
        %v2759 = vunpack.c.l.b16 %v552
        %v2760 = vunpack.c.h.b16 %v552
        %v2761 = vunpack.c.l.b16 %v553
        %v2762 = vunpack.c.h.b16 %v553
        %v2763 = vunpack.c.l.b16 %v554
        %v2764 = vunpack.c.h.b16 %v554
        %v2765 = vunpack.c.l.b16 %v555
        %v2766 = vunpack.c.h.b16 %v555
        %v2767 = vunpack.c.l.b16 %v556
        %v2768 = vunpack.c.h.b16 %v556
        %v2769 = vunpack.c.l.b16 %v557
        %v2770 = vunpack.c.h.b16 %v557
        %v2771 = vunpack.c.l.b16 %v558
        %v2772 = vunpack.c.h.b16 %v558
        %v2773 = vunpack.c.l.b16 %v559
        %v2774 = vunpack.c.h.b16 %v559
        %v2775 = vunpack.c.l.b16 %v560
        %v2776 = vunpack.c.h.b16 %v560
        %v2777 = vunpack.c.l.b16 %v561
        %v2778 = vunpack.c.h.b16 %v561
        %v2779 = vunpack.c.l.b16 %v562
        %v2780 = vunpack.c.h.b16 %v562
        %v2781 = vunpack.c.l.b16 %v563
        %v2782 = vunpack.c.h.b16 %v563
        %v2783 = vunpack.c.l.b16 %v564
        %v2784 = vunpack.c.h.b16 %v564
        %v2785 = vunpack.c.l.b16 %v565
        %v2786 = vunpack.c.h.b16 %v565
        %v2787 = vunpack.c.l.b16 %v566
        %v2788 = vunpack.c.h.b16 %v566
        %v2789 = vunpack.c.l.b16 %v567
        %v2790 = vunpack.c.h.b16 %v567
        %v2791 = vunpack.c.l.b16 %v568
        %v2792 = vunpack.c.h.b16 %v568
        %v2793 = vunpack.c.l.b16 %v569
        %v2794 = vunpack.c.h.b16 %v569
        %v2795 = vunpack.c.l.b16 %v570
        %v2796 = vunpack.c.h.b16 %v570
        %v2797 = vunpack.c.l.b16 %v571
        %v2798 = vunpack.c.h.b16 %v571
        %v2799 = vunpack.c.l.b16 %v572
        %v2800 = vunpack.c.h.b16 %v572
        %v2801 = vunpack.c.l.b16 %v573
        %v2802 = vunpack.c.h.b16 %v573
        %v2803 = vunpack.c.l.b16 %v574
        %v2804 = vunpack.c.h.b16 %v574
        %v2805 = vunpack.c.l.b16 %v575
        %v2806 = vunpack.c.h.b16 %v575
        %v2807 = vunpack.c.l.b16 %v576
        %v2808 = vunpack.c.h.b16 %v576
        %v2809 = vunpack.c.l.b16 %v577
        %v2810 = vunpack.c.h.b16 %v577
        %v2811 = vunpack.c.l.b16 %v578
        %v2812 = vunpack.c.h.b16 %v578
        %v2813 = vunpack.c.l.b16 %v579
        %v2814 = vunpack.c.h.b16 %v579
        %v2815 = vunpack.c.l.b16 %v580
        %v2816 = vunpack.c.h.b16 %v580
        %v2817 = vunpack.c.l.b16 %v581
        %v2818 = vunpack.c.h.b16 %v581
        %v2819 = vunpack.c.l.b16 %v582
        %v2820 = vunpack.c.h.b16 %v582
        %v2821 = vunpack.c.l.b16 %v583
        %v2822 = vunpack.c.h.b16 %v583
        %v2823 = vunpack.c.l.b16 %v584
        %v2824 = vunpack.c.h.b16 %v584
        %v2825 = vunpack.c.l.b16 %v585
        %v2826 = vunpack.c.h.b16 %v585
        %v2827 = vunpack.c.l.b16 %v586
        %v2828 = vunpack.c.h.b16 %v586
        %v2829 = vunpack.c.l.b16 %v587
        %v2830 = vunpack.c.h.b16 %v587
        %v2831 = vunpack.c.l.b16 %v588
        %v2832 = vunpack.c.h.b16 %v588
        %v2833 = vunpack.c.l.b16 %v589
        %v2834 = vunpack.c.h.b16 %v589
        %v2835 = vunpack.c.l.b16 %v590
        %v2836 = vunpack.c.h.b16 %v590
        %v2837 = vunpack.c.l.b16 %v591
        %v2838 = vunpack.c.h.b16 %v591
        %v2839 = vunpack.c.l.b16 %v592
        %v2840 = vunpack.c.h.b16 %v592
        %v2841 = vunpack.c.l.b16 %v593
        %v2842 = vunpack.c.h.b16 %v593
        %v2843 = vunpack.c.l.b16 %v594
        %v2844 = vunpack.c.h.b16 %v594
        %v2845 = vunpack.c.l.b16 %v595
        %v2846 = vunpack.c.h.b16 %v595
        %v2847 = vunpack.c.l.b16 %v596
        %v2848 = vunpack.c.h.b16 %v596
        %v2849 = vunpack.c.l.b16 %v597
        %v2850 = vunpack.c.h.b16 %v597
        %v2851 = vunpack.c.l.b16 %v598
        %v2852 = vunpack.c.h.b16 %v598
        %v2853 = vunpack.c.l.b16 %v599
        %v2854 = vunpack.c.h.b16 %v599
        %v2855 = vunpack.c.l.b16 %v600
        %v2856 = vunpack.c.h.b16 %v600
        %v2857 = vunpack.c.l.b16 %v601
        %v2858 = vunpack.c.h.b16 %v601
        %v2859 = vunpack.c.l.b16 %v602
        %v2860 = vunpack.c.h.b16 %v602
        %v2861 = vunpack.c.l.b16 %v603
        %v2862 = vunpack.c.h.b16 %v603
        %v2863 = vunpack.c.l.b16 %v604
        %v2864 = vunpack.c.h.b16 %v604
        %v2865 = vunpack.c.l.b16 %v605
        %v2866 = vunpack.c.h.b16 %v605
        %v2867 = vunpack.c.l.b16 %v606
        %v2868 = vunpack.c.h.b16 %v606
        %v2869 = vunpack.c.l.b16 %v607
        %v2870 = vunpack.c.h.b16 %v607
        %v2871 = vunpack.c.l.b16 %v608
        %v2872 = vunpack.c.h.b16 %v608
        %v2873 = vunpack.c.l.b16 %v609
        %v2874 = vunpack.c.h.b16 %v609
        %v2875 = vunpack.c.l.b16 %v610
        %v2876 = vunpack.c.h.b16 %v610
        %v2877 = vunpack.c.l.b16 %v611
        %v2878 = vunpack.c.h.b16 %v611
        %v2879 = vunpack.c.l.b16 %v612
        %v2880 = vunpack.c.h.b16 %v612
        %v2881 = vunpack.c.l.b16 %v613
        %v2882 = vunpack.c.h.b16 %v613
        %v2883 = vunpack.c.l.b16 %v614
        %v2884 = vunpack.c.h.b16 %v614
        %v2885 = vunpack.c.l.b16 %v615
        %v2886 = vunpack.c.h.b16 %v615
        %v2887 = vunpack.c.l.b16 %v616
        %v2888 = vunpack.c.h.b16 %v616
        %v2889 = vunpack.c.l.b16 %v617
        %v2890 = vunpack.c.h.b16 %v617
        %v2891 = vunpack.c.l.b16 %v618
        %v2892 = vunpack.c.h.b16 %v618
        %v2893 = vunpack.c.l.b16 %v619
        %v2894 = vunpack.c.h.b16 %v619
        %v2895 = vunpack.c.l.b16 %v620
        %v2896 = vunpack.c.h.b16 %v620
        %v2897 = vunpack.c.l.b16 %v621
        %v2898 = vunpack.c.h.b16 %v621
        %v2899 = vunpack.c.l.b16 %v622
        %v2900 = vunpack.c.h.b16 %v622
        %v2901 = vunpack.c.l.b16 %v623
        %v2902 = vunpack.c.h.b16 %v623
        %v2903 = vunpack.c.l.b16 %v624
        %v2904 = vunpack.c.h.b16 %v624
        %v2905 = vunpack.c.l.b16 %v625
        %v2906 = vunpack.c.h.b16 %v625
        %v2907 = vunpack.c.l.b16 %v626
        %v2908 = vunpack.c.h.b16 %v626
        %v2909 = vunpack.c.l.b16 %v627
        %v2910 = vunpack.c.h.b16 %v627
        %v2911 = vunpack.c.l.b16 %v628
        %v2912 = vunpack.c.h.b16 %v628
        %v2913 = vunpack.c.l.b16 %v629
        %v2914 = vunpack.c.h.b16 %v629
        %v2915 = vunpack.c.l.b16 %v630
        %v2916 = vunpack.c.h.b16 %v630
        %v2917 = vunpack.c.l.b16 %v631
        %v2918 = vunpack.c.h.b16 %v631
        %v2919 = vunpack.c.l.b16 %v632
        %v2920 = vunpack.c.h.b16 %v632
        %v2921 = vunpack.c.l.b16 %v633
        %v2922 = vunpack.c.h.b16 %v633
        %v2923 = vunpack.c.l.b16 %v634
        %v2924 = vunpack.c.h.b16 %v634
        %v2925 = vunpack.c.l.b16 %v635
        %v2926 = vunpack.c.h.b16 %v635
        %v2927 = vunpack.c.l.b16 %v636
        %v2928 = vunpack.c.h.b16 %v636
        %v2929 = vunpack.c.l.b16 %v637
        %v2930 = vunpack.c.h.b16 %v637
        %v2931 = vunpack.c.l.b16 %v638
        %v2932 = vunpack.c.h.b16 %v638
        %v2933 = vunpack.c.l.b16 %v639
        %v2934 = vunpack.c.h.b16 %v639
        %v2935 = vunpack.c.l.b16 %v640
        %v2936 = vunpack.c.h.b16 %v640
        %v2937 = vunpack.c.l.b16 %v641
        %v2938 = vunpack.c.h.b16 %v641
        %v2939 = vunpack.c.l.b16 %v642
        %v2940 = vunpack.c.h.b16 %v642
        %v2941 = vunpack.c.l.b16 %v643
        %v2942 = vunpack.c.h.b16 %v643
        %v2943 = vunpack.c.l.b16 %v644
        %v2944 = vunpack.c.h.b16 %v644
        %v2945 = vunpack.c.l.b16 %v645
        %v2946 = vunpack.c.h.b16 %v645
        %v2947 = vunpack.c.l.b16 %v646
        %v2948 = vunpack.c.h.b16 %v646
        %v2949 = vunpack.c.l.b16 %v647
        %v2950 = vunpack.c.h.b16 %v647
        %v2951 = vunpack.c.l.b16 %v648
        %v2952 = vunpack.c.h.b16 %v648
        %v2953 = vunpack.c.l.b16 %v649
        %v2954 = vunpack.c.h.b16 %v649
        %v2955 = vunpack.c.l.b16 %v650
        %v2956 = vunpack.c.h.b16 %v650
        %v2957 = vunpack.c.l.b16 %v651
        %v2958 = vunpack.c.h.b16 %v651
        %v2959 = vunpack.c.l.b16 %v652
        %v2960 = vunpack.c.h.b16 %v652
        %v2961 = vunpack.c.l.b16 %v653
        %v2962 = vunpack.c.h.b16 %v653
        %v2963 = vunpack.c.l.b16 %v654
        %v2964 = vunpack.c.h.b16 %v654
        %v2965 = vunpack.c.l.b16 %v655
        %v2966 = vunpack.c.h.b16 %v655
        %v2967 = vunpack.c.l.b16 %v656
        %v2968 = vunpack.c.h.b16 %v656
        %v2969 = vunpack.c.l.b16 %v657
        %v2970 = vunpack.c.h.b16 %v657
        %v2971 = vunpack.c.l.b16 %v658
        %v2972 = vunpack.c.h.b16 %v658
        %v2973 = vunpack.c.l.b16 %v659
        %v2974 = vunpack.c.h.b16 %v659
        %v2975 = vunpack.c.l.b16 %v660
        %v2976 = vunpack.c.h.b16 %v660
        %v2977 = vunpack.c.l.b16 %v661
        %v2978 = vunpack.c.h.b16 %v661
        %v2979 = vunpack.c.l.b16 %v662
        %v2980 = vunpack.c.h.b16 %v662
        %v2981 = vunpack.c.l.b16 %v663
        %v2982 = vunpack.c.h.b16 %v663
        %v2983 = vunpack.c.l.b16 %v664
        %v2984 = vunpack.c.h.b16 %v664
        %v2985 = vunpack.c.l.b16 %v665
        %v2986 = vunpack.c.h.b16 %v665
        %v2987 = vunpack.c.l.b16 %v666
        %v2988 = vunpack.c.h.b16 %v666
        %v2989 = vunpack.c.l.b16 %v667
        %v2990 = vunpack.c.h.b16 %v667
        %v2991 = vunpack.c.l.b16 %v668
        %v2992 = vunpack.c.h.b16 %v668
        %v2993 = vunpack.c.l.b16 %v669
        %v2994 = vunpack.c.h.b16 %v669
        %v2995 = vunpack.c.l.b16 %v670
        %v2996 = vunpack.c.h.b16 %v670
        %v2997 = vunpack.c.l.b16 %v671
        %v2998 = vunpack.c.h.b16 %v671
        %v2999 = vunpack.c.l.b16 %v672
        %v3000 = vunpack.c.h.b16 %v672
        %v3001 = vunpack.c.l.b16 %v673
        %v3002 = vunpack.c.h.b16 %v673
        %v3003 = vunpack.c.l.b16 %v674
        %v3004 = vunpack.c.h.b16 %v674
        %v3005 = vunpack.c.l.b16 %v675
        %v3006 = vunpack.c.h.b16 %v675
        %v3007 = vunpack.c.l.b16 %v676
        %v3008 = vunpack.c.h.b16 %v676
        %v3009 = vunpack.c.l.b16 %v677
        %v3010 = vunpack.c.h.b16 %v677
        %v3011 = vunpack.c.l.b16 %v678
        %v3012 = vunpack.c.h.b16 %v678
        %v3013 = vunpack.c.l.b16 %v679
        %v3014 = vunpack.c.h.b16 %v679
        %v3015 = vunpack.c.l.b16 %v680
        %v3016 = vunpack.c.h.b16 %v680
        %v3017 = vunpack.c.l.b16 %v681
        %v3018 = vunpack.c.h.b16 %v681
        %v3019 = vunpack.c.l.b16 %v682
        %v3020 = vunpack.c.h.b16 %v682
        %v3021 = vunpack.c.l.b16 %v683
        %v3022 = vunpack.c.h.b16 %v683
        %v3023 = vunpack.c.l.b16 %v684
        %v3024 = vunpack.c.h.b16 %v684
        %v3025 = vunpack.c.l.b16 %v685
        %v3026 = vunpack.c.h.b16 %v685
        %v3027 = vunpack.c.l.b16 %v686
        %v3028 = vunpack.c.h.b16 %v686
        %v3029 = vunpack.c.l.b16 %v687
        %v3030 = vunpack.c.h.b16 %v687
        %v3031 = vunpack.c.l.b16 %v688
        %v3032 = vunpack.c.h.b16 %v688
        %v3033 = vunpack.c.l.b16 %v689
        %v3034 = vunpack.c.h.b16 %v689
        %v3035 = vunpack.c.l.b16 %v690
        %v3036 = vunpack.c.h.b16 %v690
        %v3037 = vunpack.c.l.b16 %v691
        %v3038 = vunpack.c.h.b16 %v691
        %v3039 = vunpack.c.l.b16 %v692
        %v3040 = vunpack.c.h.b16 %v692
        %v3041 = vunpack.c.l.b16 %v693
        %v3042 = vunpack.c.h.b16 %v693
        %v3043 = vunpack.c.l.b16 %v694
        %v3044 = vunpack.c.h.b16 %v694
        %v3045 = vunpack.c.l.b16 %v695
        %v3046 = vunpack.c.h.b16 %v695
        %v3047 = vunpack.c.l.b16 %v696
        %v3048 = vunpack.c.h.b16 %v696
        %v3049 = vunpack.c.l.b16 %v697
        %v3050 = vunpack.c.h.b16 %v697
        %v3051 = vunpack.c.l.b16 %v698
        %v3052 = vunpack.c.h.b16 %v698
        %v3053 = vunpack.c.l.b16 %v699
        %v3054 = vunpack.c.h.b16 %v699
        %v3055 = vunpack.c.l.b16 %v700
        %v3056 = vunpack.c.h.b16 %v700
        %v3057 = vunpack.c.l.b16 %v701
        %v3058 = vunpack.c.h.b16 %v701
        %v3059 = vunpack.c.l.b16 %v702
        %v3060 = vunpack.c.h.b16 %v702
        %v3061 = vunpack.c.l.b16 %v703
        %v3062 = vunpack.c.h.b16 %v703
        %v3063 = vunpack.c.l.b16 %v704
        %v3064 = vunpack.c.h.b16 %v704
        %v3065 = vunpack.c.l.b16 %v705
        %v3066 = vunpack.c.h.b16 %v705
        %v3067 = vunpack.c.l.b16 %v706
        %v3068 = vunpack.c.h.b16 %v706
        %v3069 = vunpack.c.l.b16 %v707
        %v3070 = vunpack.c.h.b16 %v707
        %v3071 = vunpack.c.l.b16 %v708
        %v3072 = vunpack.c.h.b16 %v708
        %v3073 = vunpack.c.l.b16 %v709
        %v3074 = vunpack.c.h.b16 %v709
        %v3075 = vunpack.c.l.b16 %v710
        %v3076 = vunpack.c.h.b16 %v710
        %v3077 = vunpack.c.l.b16 %v711
        %v3078 = vunpack.c.h.b16 %v711
        %v3079 = vunpack.c.l.b16 %v712
        %v3080 = vunpack.c.h.b16 %v712
        %v3081 = vunpack.c.l.b16 %v713
        %v3082 = vunpack.c.h.b16 %v713
        %v3083 = vunpack.c.l.b16 %v714
        %v3084 = vunpack.c.h.b16 %v714
        %v3085 = vunpack.c.l.b16 %v715
        %v3086 = vunpack.c.h.b16 %v715
        %v3087 = vunpack.c.l.b16 %v716
        %v3088 = vunpack.c.h.b16 %v716
        %v3089 = vunpack.c.l.b16 %v717
        %v3090 = vunpack.c.h.b16 %v717
        %v3091 = vunpack.c.l.b16 %v718
        %v3092 = vunpack.c.h.b16 %v718
        %v3093 = vunpack.c.l.b16 %v719
        %v3094 = vunpack.c.h.b16 %v719
        %v3095 = vunpack.c.l.b16 %v720
        %v3096 = vunpack.c.h.b16 %v720
        %v3097 = vunpack.c.l.b16 %v721
        %v3098 = vunpack.c.h.b16 %v721
        %v3099 = vunpack.c.l.b16 %v722
        %v3100 = vunpack.c.h.b16 %v722
        %v3101 = vunpack.c.l.b16 %v723
        %v3102 = vunpack.c.h.b16 %v723
        %v3103 = vunpack.c.l.b16 %v724
        %v3104 = vunpack.c.h.b16 %v724
        %v3105 = vunpack.c.l.b16 %v725
        %v3106 = vunpack.c.h.b16 %v725
        %v3107 = vunpack.c.l.b16 %v726
        %v3108 = vunpack.c.h.b16 %v726
        %v3109 = vunpack.c.l.b16 %v727
        %v3110 = vunpack.c.h.b16 %v727
        %v3111 = vunpack.c.l.b16 %v728
        %v3112 = vunpack.c.h.b16 %v728
        %v3113 = vunpack.c.l.b16 %v729
        %v3114 = vunpack.c.h.b16 %v729
        %v3115 = vunpack.c.l.b16 %v730
        %v3116 = vunpack.c.h.b16 %v730
        %v3117 = vunpack.c.l.b16 %v731
        %v3118 = vunpack.c.h.b16 %v731
        %v3119 = vunpack.c.l.b16 %v732
        %v3120 = vunpack.c.h.b16 %v732
        %v3121 = vunpack.c.l.b16 %v733
        %v3122 = vunpack.c.h.b16 %v733
        %v3123 = vunpack.c.l.b16 %v734
        %v3124 = vunpack.c.h.b16 %v734
        %v3125 = vunpack.c.l.b16 %v735
        %v3126 = vunpack.c.h.b16 %v735
        %v3127 = vunpack.c.l.b16 %v736
        %v3128 = vunpack.c.h.b16 %v736
        %v3129 = vunpack.c.l.b16 %v737
        %v3130 = vunpack.c.h.b16 %v737
        %v3131 = vunpack.c.l.b16 %v738
        %v3132 = vunpack.c.h.b16 %v738
        %v3133 = vunpack.c.l.b16 %v739
        %v3134 = vunpack.c.h.b16 %v739
        %v3135 = vunpack.c.l.b16 %v740
        %v3136 = vunpack.c.h.b16 %v740
        %v3137 = vunpack.c.l.b16 %v741
        %v3138 = vunpack.c.h.b16 %v741
        %v3139 = vunpack.c.l.b16 %v742
        %v3140 = vunpack.c.h.b16 %v742
        %v3141 = vunpack.c.l.b16 %v743
        %v3142 = vunpack.c.h.b16 %v743
        %v3143 = vunpack.c.l.b16 %v744
        %v3144 = vunpack.c.h.b16 %v744
        %v3145 = vunpack.c.l.b16 %v745
        %v3146 = vunpack.c.h.b16 %v745
        %v3147 = vunpack.c.l.b16 %v746
        %v3148 = vunpack.c.h.b16 %v746
        %v3149 = vunpack.c.l.b16 %v747
        %v3150 = vunpack.c.h.b16 %v747
        %v3151 = vunpack.c.l.b16 %v748
        %v3152 = vunpack.c.h.b16 %v748
        %v3153 = vunpack.c.l.b16 %v749
        %v3154 = vunpack.c.h.b16 %v749
        %v3155 = vunpack.c.l.b16 %v750
        %v3156 = vunpack.c.h.b16 %v750
        %v3157 = vunpack.c.l.b16 %v751
        %v3158 = vunpack.c.h.b16 %v751
        %v3159 = vunpack.c.l.b16 %v752
        %v3160 = vunpack.c.h.b16 %v752
        %v3161 = vunpack.c.l.b16 %v753
        %v3162 = vunpack.c.h.b16 %v753
        %v3163 = vunpack.c.l.b16 %v754
        %v3164 = vunpack.c.h.b16 %v754
        %v3165 = vunpack.c.l.b16 %v755
        %v3166 = vunpack.c.h.b16 %v755
        %v3167 = vunpack.c.l.b16 %v756
        %v3168 = vunpack.c.h.b16 %v756
        %v3169 = vunpack.c.l.b16 %v757
        %v3170 = vunpack.c.h.b16 %v757
        %v3171 = vunpack.c.l.b16 %v758
        %v3172 = vunpack.c.h.b16 %v758
        %v3173 = vunpack.c.l.b16 %v759
        %v3174 = vunpack.c.h.b16 %v759
        %v3175 = vunpack.c.l.b16 %v760
        %v3176 = vunpack.c.h.b16 %v760
        %v3177 = vunpack.c.l.b16 %v761
        %v3178 = vunpack.c.h.b16 %v761
        %v3179 = vunpack.c.l.b16 %v762
        %v3180 = vunpack.c.h.b16 %v762
        %v3181 = vunpack.c.l.b16 %v763
        %v3182 = vunpack.c.h.b16 %v763
        %v3183 = vunpack.c.l.b16 %v764
        %v3184 = vunpack.c.h.b16 %v764
        %v3185 = vunpack.c.l.b16 %v765
        %v3186 = vunpack.c.h.b16 %v765
        %v3187 = vunpack.c.l.b16 %v766
        %v3188 = vunpack.c.h.b16 %v766
        %v3189 = vunpack.c.l.b16 %v767
        %v3190 = vunpack.c.h.b16 %v767
        %v3191 = vunpack.c.l.b16 %v768
        %v3192 = vunpack.c.h.b16 %v768
        %v3193 = vunpack.c.l.b16 %v769
        %v3194 = vunpack.c.h.b16 %v769
        %v3195 = vunpack.c.l.b16 %v770
        %v3196 = vunpack.c.h.b16 %v770
        %v3197 = vunpack.c.l.b16 %v771
        %v3198 = vunpack.c.h.b16 %v771
        %v3199 = vunpack.c.l.b16 %v772
        %v3200 = vunpack.c.h.b16 %v772
        %v3201 = vunpack.c.l.b16 %v773
        %v3202 = vunpack.c.h.b16 %v773
        %v3203 = vunpack.c.l.b16 %v774
        %v3204 = vunpack.c.h.b16 %v774
        %v3205 = vunpack.c.l.b16 %v775
        %v3206 = vunpack.c.h.b16 %v775
        %v3207 = vunpack.c.l.b16 %v776
        %v3208 = vunpack.c.h.b16 %v776
        %v3209 = vunpack.c.l.b16 %v777
        %v3210 = vunpack.c.h.b16 %v777
        %v3211 = vunpack.c.l.b16 %v778
        %v3212 = vunpack.c.h.b16 %v778
        %v3213 = vunpack.c.l.b16 %v779
        %v3214 = vunpack.c.h.b16 %v779
        %v3215 = vunpack.c.l.b16 %v780
        %v3216 = vunpack.c.h.b16 %v780
        %v3217 = vunpack.c.l.b16 %v781
        %v3218 = vunpack.c.h.b16 %v781
        %v3219 = vunpack.c.l.b16 %v782
        %v3220 = vunpack.c.h.b16 %v782
        %v3221 = vunpack.c.l.b16 %v783
        %v3222 = vunpack.c.h.b16 %v783
        %v3223 = vunpack.c.l.b16 %v784
        %v3224 = vunpack.c.h.b16 %v784
        %v3225 = vunpack.c.l.b16 %v785
        %v3226 = vunpack.c.h.b16 %v785
        %v3227 = vunpack.c.l.b16 %v786
        %v3228 = vunpack.c.h.b16 %v786
        %v3229 = vunpack.c.l.b16 %v787
        %v3230 = vunpack.c.h.b16 %v787
        %v3231 = vunpack.c.l.b16 %v788
        %v3232 = vunpack.c.h.b16 %v788
        %v3233 = vunpack.c.l.b16 %v789
        %v3234 = vunpack.c.h.b16 %v789
        %v3235 = vunpack.c.l.b16 %v790
        %v3236 = vunpack.c.h.b16 %v790
        %v3237 = vunpack.c.l.b16 %v791
        %v3238 = vunpack.c.h.b16 %v791
        %v3239 = vunpack.c.l.b16 %v792
        %v3240 = vunpack.c.h.b16 %v792
        %v3241 = vunpack.c.l.b16 %v793
        %v3242 = vunpack.c.h.b16 %v793
        %v3243 = vunpack.c.l.b16 %v794
        %v3244 = vunpack.c.h.b16 %v794
        %v3245 = vunpack.c.l.b16 %v795
        %v3246 = vunpack.c.h.b16 %v795
        %v3247 = vunpack.c.l.b16 %v796
        %v3248 = vunpack.c.h.b16 %v796
        %v3249 = vunpack.c.l.b16 %v797
        %v3250 = vunpack.c.h.b16 %v797
        %v3251 = vunpack.c.l.b16 %v798
        %v3252 = vunpack.c.h.b16 %v798
        %v3253 = vunpack.c.l.b16 %v799
        %v3254 = vunpack.c.h.b16 %v799
        %v3255 = vunpack.c.l.b16 %v800
        %v3256 = vunpack.c.h.b16 %v800
        %v3257 = vunpack.c.l.b16 %v801
        %v3258 = vunpack.c.h.b16 %v801
        %v3259 = vunpack.c.l.b16 %v802
        %v3260 = vunpack.c.h.b16 %v802
        %v3261 = vunpack.c.l.b16 %v803
        %v3262 = vunpack.c.h.b16 %v803
        %v3263 = vunpack.c.l.b16 %v804
        %v3264 = vunpack.c.h.b16 %v804
        %v3265 = vunpack.c.l.b16 %v805
        %v3266 = vunpack.c.h.b16 %v805
        %v3267 = vunpack.c.l.b16 %v806
        %v3268 = vunpack.c.h.b16 %v806
        %v3269 = vunpack.c.l.b16 %v807
        %v3270 = vunpack.c.h.b16 %v807
        %v3271 = vunpack.c.l.b16 %v808
        %v3272 = vunpack.c.h.b16 %v808
        %v3273 = vunpack.c.l.b16 %v809
        %v3274 = vunpack.c.h.b16 %v809
        %v3275 = vunpack.c.l.b16 %v810
        %v3276 = vunpack.c.h.b16 %v810
        %v3277 = vunpack.c.l.b16 %v811
        %v3278 = vunpack.c.h.b16 %v811
        %v3279 = vunpack.c.l.b16 %v812
        %v3280 = vunpack.c.h.b16 %v812
        %v3281 = vunpack.c.l.b16 %v813
        %v3282 = vunpack.c.h.b16 %v813
        %v3283 = vunpack.c.l.b16 %v814
        %v3284 = vunpack.c.h.b16 %v814
        %v3285 = vunpack.c.l.b16 %v815
        %v3286 = vunpack.c.h.b16 %v815
        %v3287 = vunpack.c.l.b16 %v816
        %v3288 = vunpack.c.h.b16 %v816
        %v3289 = vunpack.c.l.b16 %v817
        %v3290 = vunpack.c.h.b16 %v817
        %v3291 = vunpack.c.l.b16 %v818
        %v3292 = vunpack.c.h.b16 %v818
        %v3293 = vunpack.c.l.b16 %v819
        %v3294 = vunpack.c.h.b16 %v819
        %v3295 = vunpack.c.l.b16 %v820
        %v3296 = vunpack.c.h.b16 %v820
        %v3297 = vunpack.c.l.b16 %v821
        %v3298 = vunpack.c.h.b16 %v821
        %v3299 = vunpack.c.l.b16 %v822
        %v3300 = vunpack.c.h.b16 %v822
        %v3301 = vunpack.c.l.b16 %v823
        %v3302 = vunpack.c.h.b16 %v823
        %v3303 = vunpack.c.l.b16 %v824
        %v3304 = vunpack.c.h.b16 %v824
        %v3305 = vunpack.c.l.b16 %v825
        %v3306 = vunpack.c.h.b16 %v825
        %v3307 = vunpack.c.l.b16 %v826
        %v3308 = vunpack.c.h.b16 %v826
        %v3309 = vunpack.c.l.b16 %v827
        %v3310 = vunpack.c.h.b16 %v827
        %v3311 = vunpack.c.l.b16 %v828
        %v3312 = vunpack.c.h.b16 %v828
        %v3313 = vunpack.c.l.b16 %v829
        %v3314 = vunpack.c.h.b16 %v829
        %v3315 = vunpack.c.l.b16 %v830
        %v3316 = vunpack.c.h.b16 %v830
        %v3317 = vunpack.c.l.b16 %v831
        %v3318 = vunpack.c.h.b16 %v831
        %v3319 = vunpack.c.l.b16 %v832
        %v3320 = vunpack.c.h.b16 %v832
        %v3321 = vunpack.c.l.b16 %v833
        %v3322 = vunpack.c.h.b16 %v833
        %v3323 = vunpack.c.l.b16 %v834
        %v3324 = vunpack.c.h.b16 %v834
        %v3325 = vunpack.c.l.b16 %v835
        %v3326 = vunpack.c.h.b16 %v835
        %v3327 = vunpack.c.l.b16 %v836
        %v3328 = vunpack.c.h.b16 %v836
        %v3329 = vunpack.c.l.b16 %v837
        %v3330 = vunpack.c.h.b16 %v837
        %v3331 = vunpack.c.l.b16 %v838
        %v3332 = vunpack.c.h.b16 %v838
        %v3333 = vunpack.c.l.b16 %v839
        %v3334 = vunpack.c.h.b16 %v839
        %v3335 = vunpack.c.l.b16 %v840
        %v3336 = vunpack.c.h.b16 %v840
        %v3337 = vunpack.c.l.b16 %v841
        %v3338 = vunpack.c.h.b16 %v841
        %v3339 = vunpack.c.l.b16 %v842
        %v3340 = vunpack.c.h.b16 %v842
        %v3341 = vunpack.c.l.b16 %v843
        %v3342 = vunpack.c.h.b16 %v843
        %v3343 = vunpack.c.l.b16 %v844
        %v3344 = vunpack.c.h.b16 %v844
        %v3345 = vunpack.c.l.b16 %v845
        %v3346 = vunpack.c.h.b16 %v845
        %v3347 = vunpack.c.l.b16 %v846
        %v3348 = vunpack.c.h.b16 %v846
        %v3349 = vunpack.c.l.b16 %v847
        %v3350 = vunpack.c.h.b16 %v847
        %v3351 = vunpack.c.l.b16 %v848
        %v3352 = vunpack.c.h.b16 %v848
        %v3353 = vunpack.c.l.b16 %v849
        %v3354 = vunpack.c.h.b16 %v849
        %v3355 = vunpack.c.l.b16 %v850
        %v3356 = vunpack.c.h.b16 %v850
        %v3357 = vunpack.c.l.b16 %v851
        %v3358 = vunpack.c.h.b16 %v851
        %v3359 = vunpack.c.l.b16 %v852
        %v3360 = vunpack.c.h.b16 %v852
        %v3361 = vunpack.c.l.b16 %v853
        %v3362 = vunpack.c.h.b16 %v853
        %v3363 = vunpack.c.l.b16 %v854
        %v3364 = vunpack.c.h.b16 %v854
        %v3365 = vunpack.c.l.b16 %v855
        %v3366 = vunpack.c.h.b16 %v855
        %v3367 = vunpack.c.l.b16 %v856
        %v3368 = vunpack.c.h.b16 %v856
        %v3369 = vunpack.c.l.b16 %v857
        %v3370 = vunpack.c.h.b16 %v857
        %v3371 = vunpack.c.l.b16 %v858
        %v3372 = vunpack.c.h.b16 %v858
        %v3373 = vunpack.c.l.b16 %v859
        %v3374 = vunpack.c.h.b16 %v859
        %v3375 = vunpack.c.l.b16 %v860
        %v3376 = vunpack.c.h.b16 %v860
        %v3377 = vunpack.c.l.b16 %v861
        %v3378 = vunpack.c.h.b16 %v861
        %v3379 = vunpack.c.l.b16 %v862
        %v3380 = vunpack.c.h.b16 %v862
        %v3381 = vunpack.c.l.b16 %v863
        %v3382 = vunpack.c.h.b16 %v863
        %v3383 = vunpack.c.l.b16 %v864
        %v3384 = vunpack.c.h.b16 %v864
        %v3385 = vunpack.c.l.b16 %v865
        %v3386 = vunpack.c.h.b16 %v865
        %v3387 = vunpack.c.l.b16 %v866
        %v3388 = vunpack.c.h.b16 %v866
        %v3389 = vunpack.c.l.b16 %v867
        %v3390 = vunpack.c.h.b16 %v867
        %v3391 = vunpack.c.l.b16 %v868
        %v3392 = vunpack.c.h.b16 %v868
        %v3393 = vunpack.c.l.b16 %v869
        %v3394 = vunpack.c.h.b16 %v869
        %v3395 = vunpack.c.l.b16 %v870
        %v3396 = vunpack.c.h.b16 %v870
        %v3397 = vunpack.c.l.b16 %v871
        %v3398 = vunpack.c.h.b16 %v871
        %v3399 = vunpack.c.l.b16 %v872
        %v3400 = vunpack.c.h.b16 %v872
        %v3401 = vunpack.c.l.b16 %v873
        %v3402 = vunpack.c.h.b16 %v873
        %v3403 = vunpack.c.l.b16 %v874
        %v3404 = vunpack.c.h.b16 %v874
        %v3405 = vunpack.c.l.b16 %v875
        %v3406 = vunpack.c.h.b16 %v875
        %v3407 = vunpack.c.l.b16 %v876
        %v3408 = vunpack.c.h.b16 %v876
        %v3409 = vunpack.c.l.b16 %v877
        %v3410 = vunpack.c.h.b16 %v877
        %v3411 = vunpack.c.l.b16 %v878
        %v3412 = vunpack.c.h.b16 %v878
        %v3413 = vunpack.c.l.b16 %v879
        %v3414 = vunpack.c.h.b16 %v879
        %v3415 = vunpack.c.l.b16 %v880
        %v3416 = vunpack.c.h.b16 %v880
        %v3417 = vunpack.c.l.b16 %v881
        %v3418 = vunpack.c.h.b16 %v881
        %v3419 = vunpack.c.l.b16 %v882
        %v3420 = vunpack.c.h.b16 %v882
        %v3421 = vunpack.c.l.b16 %v883
        %v3422 = vunpack.c.h.b16 %v883
        %v3423 = vunpack.c.l.b16 %v884
        %v3424 = vunpack.c.h.b16 %v884
        %v3425 = vunpack.c.l.b16 %v885
        %v3426 = vunpack.c.h.b16 %v885
        %v3427 = vunpack.c.l.b16 %v886
        %v3428 = vunpack.c.h.b16 %v886
        %v3429 = vunpack.c.l.b16 %v887
        %v3430 = vunpack.c.h.b16 %v887
        %v3431 = vunpack.c.l.b16 %v888
        %v3432 = vunpack.c.h.b16 %v888
        %v3433 = vunpack.c.l.b16 %v889
        %v3434 = vunpack.c.h.b16 %v889
        %v3435 = vunpack.c.l.b16 %v890
        %v3436 = vunpack.c.h.b16 %v890
        %v3437 = vunpack.c.l.b16 %v891
        %v3438 = vunpack.c.h.b16 %v891
        %v3439 = vunpack.c.l.b16 %v892
        %v3440 = vunpack.c.h.b16 %v892
        %v3441 = vunpack.c.l.b16 %v893
        %v3442 = vunpack.c.h.b16 %v893
        %v3443 = vunpack.c.l.b16 %v894
        %v3444 = vunpack.c.h.b16 %v894
        %v3445 = vunpack.c.l.b16 %v895
        %v3446 = vunpack.c.h.b16 %v895
        %v3447 = vunpack.c.l.b16 %v896
        %v3448 = vunpack.c.h.b16 %v896
        %v3449 = vunpack.c.l.b16 %v897
        %v3450 = vunpack.c.h.b16 %v897
        %v3451 = vunpack.c.l.b16 %v898
        %v3452 = vunpack.c.h.b16 %v898
        %v3453 = vunpack.c.l.b16 %v899
        %v3454 = vunpack.c.h.b16 %v899
        %v3455 = vunpack.c.l.b16 %v900
        %v3456 = vunpack.c.h.b16 %v900
        %v3457 = vunpack.c.l.b16 %v901
        %v3458 = vunpack.c.h.b16 %v901
        %v3459 = vunpack.c.l.b16 %v902
        %v3460 = vunpack.c.h.b16 %v902
        %v3461 = vunpack.c.l.b16 %v903
        %v3462 = vunpack.c.h.b16 %v903
        %v3463 = vunpack.c.l.b16 %v904
        %v3464 = vunpack.c.h.b16 %v904
        %v3465 = vunpack.c.l.b16 %v905
        %v3466 = vunpack.c.h.b16 %v905
        %v3467 = vunpack.c.l.b16 %v906
        %v3468 = vunpack.c.h.b16 %v906
        %v3469 = vunpack.c.l.b16 %v907
        %v3470 = vunpack.c.h.b16 %v907
        %v3471 = vunpack.c.l.b16 %v908
        %v3472 = vunpack.c.h.b16 %v908
        %v3473 = vunpack.c.l.b16 %v909
        %v3474 = vunpack.c.h.b16 %v909
        %v3475 = vunpack.c.l.b16 %v910
        %v3476 = vunpack.c.h.b16 %v910
        %v3477 = vunpack.c.l.b16 %v911
        %v3478 = vunpack.c.h.b16 %v911
        %v3479 = vunpack.c.l.b16 %v912
        %v3480 = vunpack.c.h.b16 %v912
        %v3481 = vunpack.c.l.b16 %v913
        %v3482 = vunpack.c.h.b16 %v913
        %v3483 = vunpack.c.l.b16 %v914
        %v3484 = vunpack.c.h.b16 %v914
        %v3485 = vunpack.c.l.b16 %v915
        %v3486 = vunpack.c.h.b16 %v915
        %v3487 = vunpack.c.l.b16 %v916
        %v3488 = vunpack.c.h.b16 %v916
        %v3489 = vunpack.c.l.b16 %v917
        %v3490 = vunpack.c.h.b16 %v917
        %v3491 = vunpack.c.l.b16 %v918
        %v3492 = vunpack.c.h.b16 %v918
        %v3493 = vunpack.c.l.b16 %v919
        %v3494 = vunpack.c.h.b16 %v919
        %v3495 = vunpack.c.l.b16 %v920
        %v3496 = vunpack.c.h.b16 %v920
        %v3497 = vunpack.c.l.b16 %v921
        %v3498 = vunpack.c.h.b16 %v921
        %v3499 = vunpack.c.l.b16 %v922
        %v3500 = vunpack.c.h.b16 %v922
        %v3501 = vunpack.c.l.b16 %v923
        %v3502 = vunpack.c.h.b16 %v923
        %v3503 = vunpack.c.l.b16 %v924
        %v3504 = vunpack.c.h.b16 %v924
        %v3505 = vunpack.c.l.b16 %v925
        %v3506 = vunpack.c.h.b16 %v925
        %v3507 = vunpack.c.l.b16 %v926
        %v3508 = vunpack.c.h.b16 %v926
        %v3509 = vunpack.c.l.b16 %v927
        %v3510 = vunpack.c.h.b16 %v927
        %v3511 = vunpack.c.l.b16 %v928
        %v3512 = vunpack.c.h.b16 %v928
        %v3513 = vunpack.c.l.b16 %v929
        %v3514 = vunpack.c.h.b16 %v929
        %v3515 = vunpack.c.l.b16 %v930
        %v3516 = vunpack.c.h.b16 %v930
        %v3517 = vunpack.c.l.b16 %v931
        %v3518 = vunpack.c.h.b16 %v931
        %v3519 = vunpack.c.l.b16 %v932
        %v3520 = vunpack.c.h.b16 %v932
        %v3521 = vunpack.c.l.b16 %v933
        %v3522 = vunpack.c.h.b16 %v933
        %v3523 = vunpack.c.l.b16 %v934
        %v3524 = vunpack.c.h.b16 %v934
        %v3525 = vunpack.c.l.b16 %v935
        %v3526 = vunpack.c.h.b16 %v935
        %v3527 = vunpack.c.l.b16 %v936
        %v3528 = vunpack.c.h.b16 %v936
        %v3529 = vunpack.c.l.b16 %v937
        %v3530 = vunpack.c.h.b16 %v937
        %v3531 = vunpack.c.l.b16 %v938
        %v3532 = vunpack.c.h.b16 %v938
        %v3533 = vunpack.c.l.b16 %v939
        %v3534 = vunpack.c.h.b16 %v939
        %v3535 = vunpack.c.l.b16 %v940
        %v3536 = vunpack.c.h.b16 %v940
        %v3537 = vunpack.c.l.b16 %v941
        %v3538 = vunpack.c.h.b16 %v941
        %v3539 = vunpack.c.l.b16 %v942
        %v3540 = vunpack.c.h.b16 %v942
        %v3541 = vunpack.c.l.b16 %v943
        %v3542 = vunpack.c.h.b16 %v943
        %v3543 = vunpack.c.l.b16 %v944
        %v3544 = vunpack.c.h.b16 %v944
        %v3545 = vunpack.c.l.b16 %v945
        %v3546 = vunpack.c.h.b16 %v945
        %v3547 = vunpack.c.l.b16 %v946
        %v3548 = vunpack.c.h.b16 %v946
        %v3549 = vunpack.c.l.b16 %v947
        %v3550 = vunpack.c.h.b16 %v947
        %v3551 = vunpack.c.l.b16 %v948
        %v3552 = vunpack.c.h.b16 %v948
        %v3553 = vunpack.c.l.b16 %v949
        %v3554 = vunpack.c.h.b16 %v949
        %v3555 = vunpack.c.l.b16 %v950
        %v3556 = vunpack.c.h.b16 %v950
        %v3557 = vunpack.c.l.b16 %v951
        %v3558 = vunpack.c.h.b16 %v951
        %v3559 = vunpack.c.l.b16 %v952
        %v3560 = vunpack.c.h.b16 %v952
        %v3561 = vunpack.c.l.b16 %v953
        %v3562 = vunpack.c.h.b16 %v953
        %v3563 = vunpack.c.l.b16 %v954
        %v3564 = vunpack.c.h.b16 %v954
        %v3565 = vunpack.c.l.b16 %v955
        %v3566 = vunpack.c.h.b16 %v955
        %v3567 = vunpack.c.l.b16 %v956
        %v3568 = vunpack.c.h.b16 %v956
        %v3569 = vunpack.c.l.b16 %v957
        %v3570 = vunpack.c.h.b16 %v957
        %v3571 = vunpack.c.l.b16 %v958
        %v3572 = vunpack.c.h.b16 %v958
        %v3573 = vunpack.c.l.b16 %v959
        %v3574 = vunpack.c.h.b16 %v959
        %v3575 = vunpack.c.l.b16 %v960
        %v3576 = vunpack.c.h.b16 %v960
        %v3577 = vunpack.c.l.b16 %v961
        %v3578 = vunpack.c.h.b16 %v961
        %v3579 = vunpack.c.l.b16 %v962
        %v3580 = vunpack.c.h.b16 %v962
        %v3581 = vunpack.c.l.b16 %v963
        %v3582 = vunpack.c.h.b16 %v963
        %v3583 = vunpack.c.l.b16 %v964
        %v3584 = vunpack.c.h.b16 %v964
        %v3585 = vunpack.c.l.b16 %v965
        %v3586 = vunpack.c.h.b16 %v965
        %v3587 = vunpack.c.l.b16 %v966
        %v3588 = vunpack.c.h.b16 %v966
        %v3589 = vunpack.c.l.b16 %v967
        %v3590 = vunpack.c.h.b16 %v967
        %v3591 = vunpack.c.l.b16 %v968
        %v3592 = vunpack.c.h.b16 %v968
        %v3593 = vunpack.c.l.b16 %v969
        %v3594 = vunpack.c.h.b16 %v969
        %v3595 = vunpack.c.l.b16 %v970
        %v3596 = vunpack.c.h.b16 %v970
        %v3597 = vunpack.c.l.b16 %v971
        %v3598 = vunpack.c.h.b16 %v971
        %v3599 = vunpack.c.l.b16 %v972
        %v3600 = vunpack.c.h.b16 %v972
        %v3601 = vunpack.c.l.b16 %v973
        %v3602 = vunpack.c.h.b16 %v973
        %v3603 = vunpack.c.l.b16 %v974
        %v3604 = vunpack.c.h.b16 %v974
        %v3605 = vunpack.c.l.b16 %v975
        %v3606 = vunpack.c.h.b16 %v975
        %v3607 = vunpack.c.l.b16 %v976
        %v3608 = vunpack.c.h.b16 %v976
        %v3609 = vunpack.c.l.b16 %v977
        %v3610 = vunpack.c.h.b16 %v977
        %v3611 = vunpack.c.l.b16 %v978
        %v3612 = vunpack.c.h.b16 %v978
        %v3613 = vunpack.c.l.b16 %v979
        %v3614 = vunpack.c.h.b16 %v979
        %v3615 = vunpack.c.l.b16 %v980
        %v3616 = vunpack.c.h.b16 %v980
        %v3617 = vunpack.c.l.b16 %v981
        %v3618 = vunpack.c.h.b16 %v981
        %v3619 = vunpack.c.l.b16 %v982
        %v3620 = vunpack.c.h.b16 %v982
        %v3621 = vunpack.c.l.b16 %v983
        %v3622 = vunpack.c.h.b16 %v983
        %v3623 = vunpack.c.l.b16 %v984
        %v3624 = vunpack.c.h.b16 %v984
        %v3625 = vunpack.c.l.b16 %v985
        %v3626 = vunpack.c.h.b16 %v985
        %v3627 = vunpack.c.l.b16 %v986
        %v3628 = vunpack.c.h.b16 %v986
        %v3629 = vunpack.c.l.b16 %v987
        %v3630 = vunpack.c.h.b16 %v987
        %v3631 = vunpack.c.l.b16 %v988
        %v3632 = vunpack.c.h.b16 %v988
        %v3633 = vunpack.c.l.b16 %v989
        %v3634 = vunpack.c.h.b16 %v989
        %v3635 = vunpack.c.l.b16 %v990
        %v3636 = vunpack.c.h.b16 %v990
        %v3637 = vunpack.c.l.b16 %v991
        %v3638 = vunpack.c.h.b16 %v991
        %v3639 = vunpack.c.l.b16 %v992
        %v3640 = vunpack.c.h.b16 %v992
        %v3641 = vunpack.c.l.b16 %v993
        %v3642 = vunpack.c.h.b16 %v993
        %v3643 = vunpack.c.l.b16 %v994
        %v3644 = vunpack.c.h.b16 %v994
        %v3645 = vunpack.c.l.b16 %v995
        %v3646 = vunpack.c.h.b16 %v995
        %v3647 = vunpack.c.l.b16 %v996
        %v3648 = vunpack.c.h.b16 %v996
        %v3649 = vunpack.c.l.b16 %v997
        %v3650 = vunpack.c.h.b16 %v997
        %v3651 = vunpack.c.l.b16 %v998
        %v3652 = vunpack.c.h.b16 %v998
        %v3653 = vunpack.c.l.b16 %v999
        %v3654 = vunpack.c.h.b16 %v999
        %v3655 = vunpack.c.l.b16 %v1000
        %v3656 = vunpack.c.h.b16 %v1000
        %v3657 = vunpack.c.l.b16 %v1001
        %v3658 = vunpack.c.h.b16 %v1001
        %v3659 = vunpack.c.l.b16 %v1002
        %v3660 = vunpack.c.h.b16 %v1002
        %v3661 = vunpack.c.l.b16 %v1003
        %v3662 = vunpack.c.h.b16 %v1003
        %v3663 = vunpack.c.l.b16 %v1004
        %v3664 = vunpack.c.h.b16 %v1004
        %v3665 = vunpack.c.l.b16 %v1005
        %v3666 = vunpack.c.h.b16 %v1005
        %v3667 = vunpack.c.l.b16 %v1006
        %v3668 = vunpack.c.h.b16 %v1006
        %v3669 = vunpack.c.l.b16 %v1007
        %v3670 = vunpack.c.h.b16 %v1007
        %v3671 = vunpack.c.l.b16 %v1008
        %v3672 = vunpack.c.h.b16 %v1008
        %v3673 = vunpack.c.l.b16 %v1009
        %v3674 = vunpack.c.h.b16 %v1009
        %v3675 = vunpack.c.l.b16 %v1010
        %v3676 = vunpack.c.h.b16 %v1010
        %v3677 = vunpack.c.l.b16 %v1011
        %v3678 = vunpack.c.h.b16 %v1011
        %v3679 = vunpack.c.l.b16 %v1012
        %v3680 = vunpack.c.h.b16 %v1012
        %v3681 = vunpack.c.l.b16 %v1013
        %v3682 = vunpack.c.h.b16 %v1013
        %v3683 = vunpack.c.l.b16 %v1014
        %v3684 = vunpack.c.h.b16 %v1014
        %v3685 = vunpack.c.l.b16 %v1015
        %v3686 = vunpack.c.h.b16 %v1015
        %v3687 = vunpack.c.l.b16 %v1016
        %v3688 = vunpack.c.h.b16 %v1016
        %v3689 = vunpack.c.l.b16 %v1017
        %v3690 = vunpack.c.h.b16 %v1017
        %v3691 = vunpack.c.l.b16 %v1018
        %v3692 = vunpack.c.h.b16 %v1018
        %v3693 = vunpack.c.l.b16 %v1019
        %v3694 = vunpack.c.h.b16 %v1019
        %v3695 = vunpack.c.l.b16 %v1020
        %v3696 = vunpack.c.h.b16 %v1020
        %v3697 = vunpack.c.l.b16 %v1021
        %v3698 = vunpack.c.h.b16 %v1021
        %v3699 = vunpack.c.l.b16 %v1022
        %v3700 = vunpack.c.h.b16 %v1022
        %v3701 = vunpack.c.l.b16 %v1023
        %v3702 = vunpack.c.h.b16 %v1023
        %v3703 = vunpack.c.l.b16 %v1024
        %v3704 = vunpack.c.h.b16 %v1024
        %v3705 = vunpack.c.l.b16 %v1025
        %v3706 = vunpack.c.h.b16 %v1025
        %v3707 = vunpack.c.l.b16 %v1026
        %v3708 = vunpack.c.h.b16 %v1026
        %v3709 = vunpack.c.l.b16 %v1027
        %v3710 = vunpack.c.h.b16 %v1027
        %v3711 = vunpack.c.l.b16 %v1028
        %v3712 = vunpack.c.h.b16 %v1028
        %v3713 = vunpack.c.l.b16 %v1029
        %v3714 = vunpack.c.h.b16 %v1029
        %v3715 = vunpack.c.l.b16 %v1030
        %v3716 = vunpack.c.h.b16 %v1030
        %v3717 = vunpack.c.l.b16 %v1031
        %v3718 = vunpack.c.h.b16 %v1031
        %v3719 = vunpack.c.l.b16 %v1032
        %v3720 = vunpack.c.h.b16 %v1032
        %v3721 = vunpack.c.l.b16 %v1033
        %v3722 = vunpack.c.h.b16 %v1033
        %v3723 = vunpack.c.l.b16 %v1034
        %v3724 = vunpack.c.h.b16 %v1034
        %v3725 = vunpack.c.l.b16 %v1035
        %v3726 = vunpack.c.h.b16 %v1035
        %v3727 = vunpack.c.l.b16 %v1036
        %v3728 = vunpack.c.h.b16 %v1036
        %v3729 = vunpack.c.l.b16 %v1037
        %v3730 = vunpack.c.h.b16 %v1037
        %v3731 = vunpack.c.l.b16 %v1038
        %v3732 = vunpack.c.h.b16 %v1038
        %v3733 = vunpack.c.l.b16 %v1039
        %v3734 = vunpack.c.h.b16 %v1039
        %v3735 = vunpack.c.l.b16 %v1040
        %v3736 = vunpack.c.h.b16 %v1040
        %v3737 = vunpack.c.l.b16 %v1041
        %v3738 = vunpack.c.h.b16 %v1041
        %v3739 = vunpack.c.l.b16 %v1042
        %v3740 = vunpack.c.h.b16 %v1042
        %v3741 = vunpack.c.l.b16 %v1043
        %v3742 = vunpack.c.h.b16 %v1043
        %v3743 = vunpack.c.l.b16 %v1044
        %v3744 = vunpack.c.h.b16 %v1044
        %v3745 = vunpack.c.l.b16 %v1045
        %v3746 = vunpack.c.h.b16 %v1045
        %v3747 = vunpack.c.l.b16 %v1046
        %v3748 = vunpack.c.h.b16 %v1046
        %v3749 = vunpack.c.l.b16 %v1047
        %v3750 = vunpack.c.h.b16 %v1047
        %v3751 = vunpack.c.l.b16 %v1048
        %v3752 = vunpack.c.h.b16 %v1048
        %v3753 = vunpack.c.l.b16 %v1049
        %v3754 = vunpack.c.h.b16 %v1049
        %v3755 = vunpack.c.l.b16 %v1050
        %v3756 = vunpack.c.h.b16 %v1050
        %v3757 = vunpack.c.l.b16 %v1051
        %v3758 = vunpack.c.h.b16 %v1051
        %v3759 = vunpack.c.l.b16 %v1052
        %v3760 = vunpack.c.h.b16 %v1052
        %v3761 = vunpack.c.l.b16 %v1053
        %v3762 = vunpack.c.h.b16 %v1053
        %v3763 = vunpack.c.l.b16 %v1054
        %v3764 = vunpack.c.h.b16 %v1054
        %v3765 = vunpack.c.l.b16 %v1055
        %v3766 = vunpack.c.h.b16 %v1055
        %v3767 = vunpack.c.l.b16 %v1056
        %v3768 = vunpack.c.h.b16 %v1056
        %v3769 = vunpack.c.l.b16 %v1057
        %v3770 = vunpack.c.h.b16 %v1057
        %v3771 = vunpack.c.l.b16 %v1058
        %v3772 = vunpack.c.h.b16 %v1058
        %v3773 = vunpack.c.l.b16 %v1059
        %v3774 = vunpack.c.h.b16 %v1059
        %v3775 = vunpack.c.l.b16 %v1060
        %v3776 = vunpack.c.h.b16 %v1060
        %v3777 = vunpack.c.l.b16 %v1061
        %v3778 = vunpack.c.h.b16 %v1061
        %v3779 = vunpack.c.l.b16 %v1062
        %v3780 = vunpack.c.h.b16 %v1062
        %v3781 = vunpack.c.l.b16 %v1063
        %v3782 = vunpack.c.h.b16 %v1063
        %v3783 = vunpack.c.l.b16 %v1064
        %v3784 = vunpack.c.h.b16 %v1064
        %v3785 = vunpack.c.l.b16 %v1065
        %v3786 = vunpack.c.h.b16 %v1065
        %v3787 = vunpack.c.l.b16 %v1066
        %v3788 = vunpack.c.h.b16 %v1066
        %v3789 = vunpack.c.l.b16 %v1067
        %v3790 = vunpack.c.h.b16 %v1067
        %v3791 = vunpack.c.l.b16 %v1068
        %v3792 = vunpack.c.h.b16 %v1068
        %v3793 = vunpack.c.l.b16 %v1069
        %v3794 = vunpack.c.h.b16 %v1069
        %v3795 = vunpack.c.l.b16 %v1070
        %v3796 = vunpack.c.h.b16 %v1070
        %v3797 = vunpack.c.l.b16 %v1071
        %v3798 = vunpack.c.h.b16 %v1071
        %v3799 = vunpack.c.l.b16 %v1072
        %v3800 = vunpack.c.h.b16 %v1072
        %v3801 = vpack.c.b16 %v2235, %v2233
        %v3802 = vpack.c.b16 %v2236, %v2234
        %v3803 = vpack.c.b16 %v2239, %v2237
        %v3804 = vpack.c.b16 %v2240, %v2238
        %v3805 = vpack.c.b16 %v2243, %v2241
        %v3806 = vpack.c.b16 %v2244, %v2242
        %v3807 = vpack.c.b16 %v2247, %v2245
        %v3808 = vpack.c.b16 %v2248, %v2246
        %v3809 = vpack.c.b16 %v2251, %v2249
        %v3810 = vpack.c.b16 %v2252, %v2250
        %v3811 = vpack.c.b16 %v2255, %v2253
        %v3812 = vpack.c.b16 %v2256, %v2254
        %v3813 = vpack.c.b16 %v2259, %v2257
        %v3814 = vpack.c.b16 %v2260, %v2258
        %v3815 = vpack.c.b16 %v2263, %v2261
        %v3816 = vpack.c.b16 %v2264, %v2262
        %v3817 = vpack.c.b16 %v2267, %v2265
        %v3818 = vpack.c.b16 %v2268, %v2266
        %v3819 = vpack.c.b16 %v2271, %v2269
        %v3820 = vpack.c.b16 %v2272, %v2270
        %v3821 = vpack.c.b16 %v2275, %v2273
        %v3822 = vpack.c.b16 %v2276, %v2274
        %v3823 = vpack.c.b16 %v2279, %v2277
        %v3824 = vpack.c.b16 %v2280, %v2278
        %v3825 = vpack.c.b16 %v2283, %v2281
        %v3826 = vpack.c.b16 %v2284, %v2282
        %v3827 = vpack.c.b16 %v2287, %v2285
        %v3828 = vpack.c.b16 %v2288, %v2286
        %v3829 = vpack.c.b16 %v2291, %v2289
        %v3830 = vpack.c.b16 %v2292, %v2290
        %v3831 = vpack.c.b16 %v2295, %v2293
        %v3832 = vpack.c.b16 %v2296, %v2294
        %v3833 = vpack.c.b16 %v2299, %v2297
        %v3834 = vpack.c.b16 %v2300, %v2298
        %v3835 = vpack.c.b16 %v2303, %v2301
        %v3836 = vpack.c.b16 %v2304, %v2302
        %v3837 = vpack.c.b16 %v2307, %v2305
        %v3838 = vpack.c.b16 %v2308, %v2306
        %v3839 = vpack.c.b16 %v2311, %v2309
        %v3840 = vpack.c.b16 %v2312, %v2310
        %v3841 = vpack.c.b16 %v2315, %v2313
        %v3842 = vpack.c.b16 %v2316, %v2314
        %v3843 = vpack.c.b16 %v2319, %v2317
        %v3844 = vpack.c.b16 %v2320, %v2318
        %v3845 = vpack.c.b16 %v2323, %v2321
        %v3846 = vpack.c.b16 %v2324, %v2322
        %v3847 = vpack.c.b16 %v2327, %v2325
        %v3848 = vpack.c.b16 %v2328, %v2326
        %v3849 = vpack.c.b16 %v2331, %v2329
        %v3850 = vpack.c.b16 %v2332, %v2330
        %v3851 = vpack.c.b16 %v2335, %v2333
        %v3852 = vpack.c.b16 %v2336, %v2334
        %v3853 = vpack.c.b16 %v2339, %v2337
        %v3854 = vpack.c.b16 %v2340, %v2338
        %v3855 = vpack.c.b16 %v2343, %v2341
        %v3856 = vpack.c.b16 %v2344, %v2342
        %v3857 = vpack.c.b16 %v2347, %v2345
        %v3858 = vpack.c.b16 %v2348, %v2346
        %v3859 = vpack.c.b16 %v2351, %v2349
        %v3860 = vpack.c.b16 %v2352, %v2350
        %v3861 = vpack.c.b16 %v2355, %v2353
        %v3862 = vpack.c.b16 %v2356, %v2354
        %v3863 = vpack.c.b16 %v2359, %v2357
        %v3864 = vpack.c.b16 %v2360, %v2358
        %v3865 = vpack.c.b16 %v2363, %v2361
        %v3866 = vpack.c.b16 %v2364, %v2362
        %v3867 = vpack.c.b16 %v2367, %v2365
        %v3868 = vpack.c.b16 %v2368, %v2366
        %v3869 = vpack.c.b16 %v2371, %v2369
        %v3870 = vpack.c.b16 %v2372, %v2370
        %v3871 = vpack.c.b16 %v2375, %v2373
        %v3872 = vpack.c.b16 %v2376, %v2374
        %v3873 = vpack.c.b16 %v2379, %v2377
        %v3874 = vpack.c.b16 %v2380, %v2378
        %v3875 = vpack.c.b16 %v2383, %v2381
        %v3876 = vpack.c.b16 %v2384, %v2382
        %v3877 = vpack.c.b16 %v2387, %v2385
        %v3878 = vpack.c.b16 %v2388, %v2386
        %v3879 = vpack.c.b16 %v2391, %v2389
        %v3880 = vpack.c.b16 %v2392, %v2390
        %v3881 = vpack.c.b16 %v2395, %v2393
        %v3882 = vpack.c.b16 %v2396, %v2394
        %v3883 = vpack.c.b16 %v2399, %v2397
        %v3884 = vpack.c.b16 %v2400, %v2398
        %v3885 = vpack.c.b16 %v2403, %v2401
        %v3886 = vpack.c.b16 %v2404, %v2402
        %v3887 = vpack.c.b16 %v2407, %v2405
        %v3888 = vpack.c.b16 %v2408, %v2406
        %v3889 = vpack.c.b16 %v2411, %v2409
        %v3890 = vpack.c.b16 %v2412, %v2410
        %v3891 = vpack.c.b16 %v2415, %v2413
        %v3892 = vpack.c.b16 %v2416, %v2414
        %v3893 = vpack.c.b16 %v2419, %v2417
        %v3894 = vpack.c.b16 %v2420, %v2418
        %v3895 = vpack.c.b16 %v2423, %v2421
        %v3896 = vpack.c.b16 %v2424, %v2422
        %v3897 = vpack.c.b16 %v2427, %v2425
        %v3898 = vpack.c.b16 %v2428, %v2426
        %v3899 = vpack.c.b16 %v2431, %v2429
        %v3900 = vpack.c.b16 %v2432, %v2430
        %v3901 = vpack.c.b16 %v2435, %v2433
        %v3902 = vpack.c.b16 %v2436, %v2434
        %v3903 = vpack.c.b16 %v2439, %v2437
        %v3904 = vpack.c.b16 %v2440, %v2438
        %v3905 = vpack.c.b16 %v2443, %v2441
        %v3906 = vpack.c.b16 %v2444, %v2442
        %v3907 = vpack.c.b16 %v2447, %v2445
        %v3908 = vpack.c.b16 %v2448, %v2446
        %v3909 = vpack.c.b16 %v2451, %v2449
        %v3910 = vpack.c.b16 %v2452, %v2450
        %v3911 = vpack.c.b16 %v2455, %v2453
        %v3912 = vpack.c.b16 %v2456, %v2454
        %v3913 = vpack.c.b16 %v2459, %v2457
        %v3914 = vpack.c.b16 %v2460, %v2458
        %v3915 = vpack.c.b16 %v2463, %v2461
        %v3916 = vpack.c.b16 %v2464, %v2462
        %v3917 = vpack.c.b16 %v2467, %v2465
        %v3918 = vpack.c.b16 %v2468, %v2466
        %v3919 = vpack.c.b16 %v2471, %v2469
        %v3920 = vpack.c.b16 %v2472, %v2470
        %v3921 = vpack.c.b16 %v2475, %v2473
        %v3922 = vpack.c.b16 %v2476, %v2474
        %v3923 = vpack.c.b16 %v2479, %v2477
        %v3924 = vpack.c.b16 %v2480, %v2478
        %v3925 = vpack.c.b16 %v2483, %v2481
        %v3926 = vpack.c.b16 %v2484, %v2482
        %v3927 = vpack.c.b16 %v2487, %v2485
        %v3928 = vpack.c.b16 %v2488, %v2486
        %v3929 = vpack.c.b16 %v2491, %v2489
        %v3930 = vpack.c.b16 %v2492, %v2490
        %v3931 = vpack.c.b16 %v2495, %v2493
        %v3932 = vpack.c.b16 %v2496, %v2494
        %v3933 = vpack.c.b16 %v2499, %v2497
        %v3934 = vpack.c.b16 %v2500, %v2498
        %v3935 = vpack.c.b16 %v2503, %v2501
        %v3936 = vpack.c.b16 %v2504, %v2502
        %v3937 = vpack.c.b16 %v2507, %v2505
        %v3938 = vpack.c.b16 %v2508, %v2506
        %v3939 = vpack.c.b16 %v2511, %v2509
        %v3940 = vpack.c.b16 %v2512, %v2510
        %v3941 = vpack.c.b16 %v2515, %v2513
        %v3942 = vpack.c.b16 %v2516, %v2514
        %v3943 = vpack.c.b16 %v2519, %v2517
        %v3944 = vpack.c.b16 %v2520, %v2518
        %v3945 = vpack.c.b16 %v2523, %v2521
        %v3946 = vpack.c.b16 %v2524, %v2522
        %v3947 = vpack.c.b16 %v2527, %v2525
        %v3948 = vpack.c.b16 %v2528, %v2526
        %v3949 = vpack.c.b16 %v2531, %v2529
        %v3950 = vpack.c.b16 %v2532, %v2530
        %v3951 = vpack.c.b16 %v2535, %v2533
        %v3952 = vpack.c.b16 %v2536, %v2534
        %v3953 = vpack.c.b16 %v2539, %v2537
        %v3954 = vpack.c.b16 %v2540, %v2538
        %v3955 = vpack.c.b16 %v2543, %v2541
        %v3956 = vpack.c.b16 %v2544, %v2542
        %v3957 = vpack.c.b16 %v2547, %v2545
        %v3958 = vpack.c.b16 %v2548, %v2546
        %v3959 = vpack.c.b16 %v2551, %v2549
        %v3960 = vpack.c.b16 %v2552, %v2550
        %v3961 = vpack.c.b16 %v2555, %v2553
        %v3962 = vpack.c.b16 %v2556, %v2554
        %v3963 = vpack.c.b16 %v2559, %v2557
        %v3964 = vpack.c.b16 %v2560, %v2558
        %v3965 = vpack.c.b16 %v2563, %v2561
        %v3966 = vpack.c.b16 %v2564, %v2562
        %v3967 = vpack.c.b16 %v2567, %v2565
        %v3968 = vpack.c.b16 %v2568, %v2566
        %v3969 = vpack.c.b16 %v2571, %v2569
        %v3970 = vpack.c.b16 %v2572, %v2570
        %v3971 = vpack.c.b16 %v2575, %v2573
        %v3972 = vpack.c.b16 %v2576, %v2574
        %v3973 = vpack.c.b16 %v2579, %v2577
        %v3974 = vpack.c.b16 %v2580, %v2578
        %v3975 = vpack.c.b16 %v2583, %v2581
        %v3976 = vpack.c.b16 %v2584, %v2582
        %v3977 = vpack.c.b16 %v2587, %v2585
        %v3978 = vpack.c.b16 %v2588, %v2586
        %v3979 = vpack.c.b16 %v2591, %v2589
        %v3980 = vpack.c.b16 %v2592, %v2590
        %v3981 = vpack.c.b16 %v2595, %v2593
        %v3982 = vpack.c.b16 %v2596, %v2594
        %v3983 = vpack.c.b16 %v2599, %v2597
        %v3984 = vpack.c.b16 %v2600, %v2598
        %v3985 = vpack.c.b16 %v2603, %v2601
        %v3986 = vpack.c.b16 %v2604, %v2602
        %v3987 = vpack.c.b16 %v2607, %v2605
        %v3988 = vpack.c.b16 %v2608, %v2606
        %v3989 = vpack.c.b16 %v2611, %v2609
        %v3990 = vpack.c.b16 %v2612, %v2610
        %v3991 = vpack.c.b16 %v2615, %v2613
        %v3992 = vpack.c.b16 %v2616, %v2614
        %v3993 = vpack.c.b16 %v2619, %v2617
        %v3994 = vpack.c.b16 %v2620, %v2618
        %v3995 = vpack.c.b16 %v2623, %v2621
        %v3996 = vpack.c.b16 %v2624, %v2622
        %v3997 = vpack.c.b16 %v2627, %v2625
        %v3998 = vpack.c.b16 %v2628, %v2626
        %v3999 = vpack.c.b16 %v2631, %v2629
        %v4000 = vpack.c.b16 %v2632, %v2630
        %v4001 = vpack.c.b16 %v2635, %v2633
        %v4002 = vpack.c.b16 %v2636, %v2634
        %v4003 = vpack.c.b16 %v2639, %v2637
        %v4004 = vpack.c.b16 %v2640, %v2638
        %v4005 = vpack.c.b16 %v2643, %v2641
        %v4006 = vpack.c.b16 %v2644, %v2642
        %v4007 = vpack.c.b16 %v2647, %v2645
        %v4008 = vpack.c.b16 %v2648, %v2646
        %v4009 = vpack.c.b16 %v2651, %v2649
        %v4010 = vpack.c.b16 %v2652, %v2650
        %v4011 = vpack.c.b16 %v2655, %v2653
        %v4012 = vpack.c.b16 %v2656, %v2654
        %v4013 = vpack.c.b16 %v2659, %v2657
        %v4014 = vpack.c.b16 %v2660, %v2658
        %v4015 = vpack.c.b16 %v2663, %v2661
        %v4016 = vpack.c.b16 %v2664, %v2662
        %v4017 = vpack.c.b16 %v2667, %v2665
        %v4018 = vpack.c.b16 %v2668, %v2666
        %v4019 = vpack.c.b16 %v2671, %v2669
        %v4020 = vpack.c.b16 %v2672, %v2670
        %v4021 = vpack.c.b16 %v2675, %v2673
        %v4022 = vpack.c.b16 %v2676, %v2674
        %v4023 = vpack.c.b16 %v2679, %v2677
        %v4024 = vpack.c.b16 %v2680, %v2678
        %v4025 = vpack.c.b16 %v2683, %v2681
        %v4026 = vpack.c.b16 %v2684, %v2682
        %v4027 = vpack.c.b16 %v2687, %v2685
        %v4028 = vpack.c.b16 %v2688, %v2686
        %v4029 = vpack.c.b16 %v2691, %v2689
        %v4030 = vpack.c.b16 %v2692, %v2690
        %v4031 = vpack.c.b16 %v2695, %v2693
        %v4032 = vpack.c.b16 %v2696, %v2694
        %v4033 = vpack.c.b16 %v2699, %v2697
        %v4034 = vpack.c.b16 %v2700, %v2698
        %v4035 = vpack.c.b16 %v2703, %v2701
        %v4036 = vpack.c.b16 %v2704, %v2702
        %v4037 = vpack.c.b16 %v2707, %v2705
        %v4038 = vpack.c.b16 %v2708, %v2706
        %v4039 = vpack.c.b16 %v2711, %v2709
        %v4040 = vpack.c.b16 %v2712, %v2710
        %v4041 = vpack.c.b16 %v2715, %v2713
        %v4042 = vpack.c.b16 %v2716, %v2714
        %v4043 = vpack.c.b16 %v2719, %v2717
        %v4044 = vpack.c.b16 %v2720, %v2718
        %v4045 = vpack.c.b16 %v2723, %v2721
        %v4046 = vpack.c.b16 %v2724, %v2722
        %v4047 = vpack.c.b16 %v2727, %v2725
        %v4048 = vpack.c.b16 %v2728, %v2726
        %v4049 = vpack.c.b16 %v2731, %v2729
        %v4050 = vpack.c.b16 %v2732, %v2730
        %v4051 = vpack.c.b16 %v2735, %v2733
        %v4052 = vpack.c.b16 %v2736, %v2734
        %v4053 = vpack.c.b16 %v2739, %v2737
        %v4054 = vpack.c.b16 %v2740, %v2738
        %v4055 = vpack.c.b16 %v2743, %v2741
        %v4056 = vpack.c.b16 %v2744, %v2742
        %v4057 = vpack.c.b16 %v2747, %v2745
        %v4058 = vpack.c.b16 %v2748, %v2746
        %v4059 = vpack.c.b16 %v2751, %v2749
        %v4060 = vpack.c.b16 %v2752, %v2750
        %v4061 = vpack.c.b16 %v2755, %v2753
        %v4062 = vpack.c.b16 %v2756, %v2754
        %v4063 = vpack.c.b16 %v2759, %v2757
        %v4064 = vpack.c.b16 %v2760, %v2758
        %v4065 = vpack.c.b16 %v2763, %v2761
        %v4066 = vpack.c.b16 %v2764, %v2762
        %v4067 = vpack.c.b16 %v2767, %v2765
        %v4068 = vpack.c.b16 %v2768, %v2766
        %v4069 = vpack.c.b16 %v2771, %v2769
        %v4070 = vpack.c.b16 %v2772, %v2770
        %v4071 = vpack.c.b16 %v2775, %v2773
        %v4072 = vpack.c.b16 %v2776, %v2774
        %v4073 = vpack.c.b16 %v2779, %v2777
        %v4074 = vpack.c.b16 %v2780, %v2778
        %v4075 = vpack.c.b16 %v2783, %v2781
        %v4076 = vpack.c.b16 %v2784, %v2782
        %v4077 = vpack.c.b16 %v2787, %v2785
        %v4078 = vpack.c.b16 %v2788, %v2786
        %v4079 = vpack.c.b16 %v2791, %v2789
        %v4080 = vpack.c.b16 %v2792, %v2790
        %v4081 = vpack.c.b16 %v2795, %v2793
        %v4082 = vpack.c.b16 %v2796, %v2794
        %v4083 = vpack.c.b16 %v2799, %v2797
        %v4084 = vpack.c.b16 %v2800, %v2798
        %v4085 = vpack.c.b16 %v2803, %v2801
        %v4086 = vpack.c.b16 %v2804, %v2802
        %v4087 = vpack.c.b16 %v2807, %v2805
        %v4088 = vpack.c.b16 %v2808, %v2806
        %v4089 = vpack.c.b16 %v2811, %v2809
        %v4090 = vpack.c.b16 %v2812, %v2810
        %v4091 = vpack.c.b16 %v2815, %v2813
        %v4092 = vpack.c.b16 %v2816, %v2814
        %v4093 = vpack.c.b16 %v2819, %v2817
        %v4094 = vpack.c.b16 %v2820, %v2818
        %v4095 = vpack.c.b16 %v2823, %v2821
        %v4096 = vpack.c.b16 %v2824, %v2822
        %v4097 = vpack.c.b16 %v2827, %v2825
        %v4098 = vpack.c.b16 %v2828, %v2826
        %v4099 = vpack.c.b16 %v2831, %v2829
        %v4100 = vpack.c.b16 %v2832, %v2830
        %v4101 = vpack.c.b16 %v2835, %v2833
        %v4102 = vpack.c.b16 %v2836, %v2834
        %v4103 = vpack.c.b16 %v2839, %v2837
        %v4104 = vpack.c.b16 %v2840, %v2838
        %v4105 = vpack.c.b16 %v2843, %v2841
        %v4106 = vpack.c.b16 %v2844, %v2842
        %v4107 = vpack.c.b16 %v2847, %v2845
        %v4108 = vpack.c.b16 %v2848, %v2846
        %v4109 = vpack.c.b16 %v2851, %v2849
        %v4110 = vpack.c.b16 %v2852, %v2850
        %v4111 = vpack.c.b16 %v2855, %v2853
        %v4112 = vpack.c.b16 %v2856, %v2854
        %v4113 = vpack.c.b16 %v2859, %v2857
        %v4114 = vpack.c.b16 %v2860, %v2858
        %v4115 = vpack.c.b16 %v2863, %v2861
        %v4116 = vpack.c.b16 %v2864, %v2862
        %v4117 = vpack.c.b16 %v2867, %v2865
        %v4118 = vpack.c.b16 %v2868, %v2866
        %v4119 = vpack.c.b16 %v2871, %v2869
        %v4120 = vpack.c.b16 %v2872, %v2870
        %v4121 = vpack.c.b16 %v2875, %v2873
        %v4122 = vpack.c.b16 %v2876, %v2874
        %v4123 = vpack.c.b16 %v2879, %v2877
        %v4124 = vpack.c.b16 %v2880, %v2878
        %v4125 = vpack.c.b16 %v2883, %v2881
        %v4126 = vpack.c.b16 %v2884, %v2882
        %v4127 = vpack.c.b16 %v2887, %v2885
        %v4128 = vpack.c.b16 %v2888, %v2886
        %v4129 = vpack.c.b16 %v2891, %v2889
        %v4130 = vpack.c.b16 %v2892, %v2890
        %v4131 = vpack.c.b16 %v2895, %v2893
        %v4132 = vpack.c.b16 %v2896, %v2894
        %v4133 = vpack.c.b16 %v2899, %v2897
        %v4134 = vpack.c.b16 %v2900, %v2898
        %v4135 = vpack.c.b16 %v2903, %v2901
        %v4136 = vpack.c.b16 %v2904, %v2902
        %v4137 = vpack.c.b16 %v2907, %v2905
        %v4138 = vpack.c.b16 %v2908, %v2906
        %v4139 = vpack.c.b16 %v2911, %v2909
        %v4140 = vpack.c.b16 %v2912, %v2910
        %v4141 = vpack.c.b16 %v2915, %v2913
        %v4142 = vpack.c.b16 %v2916, %v2914
        %v4143 = vpack.c.b16 %v2919, %v2917
        %v4144 = vpack.c.b16 %v2920, %v2918
        %v4145 = vpack.c.b16 %v2923, %v2921
        %v4146 = vpack.c.b16 %v2924, %v2922
        %v4147 = vpack.c.b16 %v2927, %v2925
        %v4148 = vpack.c.b16 %v2928, %v2926
        %v4149 = vpack.c.b16 %v2931, %v2929
        %v4150 = vpack.c.b16 %v2932, %v2930
        %v4151 = vpack.c.b16 %v2935, %v2933
        %v4152 = vpack.c.b16 %v2936, %v2934
        %v4153 = vpack.c.b16 %v2939, %v2937
        %v4154 = vpack.c.b16 %v2940, %v2938
        %v4155 = vpack.c.b16 %v2943, %v2941
        %v4156 = vpack.c.b16 %v2944, %v2942
        %v4157 = vpack.c.b16 %v2947, %v2945
        %v4158 = vpack.c.b16 %v2948, %v2946
        %v4159 = vpack.c.b16 %v2951, %v2949
        %v4160 = vpack.c.b16 %v2952, %v2950
        %v4161 = vpack.c.b16 %v2955, %v2953
        %v4162 = vpack.c.b16 %v2956, %v2954
        %v4163 = vpack.c.b16 %v2959, %v2957
        %v4164 = vpack.c.b16 %v2960, %v2958
        %v4165 = vpack.c.b16 %v2963, %v2961
        %v4166 = vpack.c.b16 %v2964, %v2962
        %v4167 = vpack.c.b16 %v2967, %v2965
        %v4168 = vpack.c.b16 %v2968, %v2966
        %v4169 = vpack.c.b16 %v2971, %v2969
        %v4170 = vpack.c.b16 %v2972, %v2970
        %v4171 = vpack.c.b16 %v2975, %v2973
        %v4172 = vpack.c.b16 %v2976, %v2974
        %v4173 = vpack.c.b16 %v2979, %v2977
        %v4174 = vpack.c.b16 %v2980, %v2978
        %v4175 = vpack.c.b16 %v2983, %v2981
        %v4176 = vpack.c.b16 %v2984, %v2982
        %v4177 = vpack.c.b16 %v2987, %v2985
        %v4178 = vpack.c.b16 %v2988, %v2986
        %v4179 = vpack.c.b16 %v2991, %v2989
        %v4180 = vpack.c.b16 %v2992, %v2990
        %v4181 = vpack.c.b16 %v2995, %v2993
        %v4182 = vpack.c.b16 %v2996, %v2994
        %v4183 = vpack.c.b16 %v2999, %v2997
        %v4184 = vpack.c.b16 %v3000, %v2998
        %v4185 = vpack.c.b16 %v3003, %v3001
        %v4186 = vpack.c.b16 %v3004, %v3002
        %v4187 = vpack.c.b16 %v3007, %v3005
        %v4188 = vpack.c.b16 %v3008, %v3006
        %v4189 = vpack.c.b16 %v3011, %v3009
        %v4190 = vpack.c.b16 %v3012, %v3010
        %v4191 = vpack.c.b16 %v3015, %v3013
        %v4192 = vpack.c.b16 %v3016, %v3014
        %v4193 = vpack.c.b16 %v3019, %v3017
        %v4194 = vpack.c.b16 %v3020, %v3018
        %v4195 = vpack.c.b16 %v3023, %v3021
        %v4196 = vpack.c.b16 %v3024, %v3022
        %v4197 = vpack.c.b16 %v3027, %v3025
        %v4198 = vpack.c.b16 %v3028, %v3026
        %v4199 = vpack.c.b16 %v3031, %v3029
        %v4200 = vpack.c.b16 %v3032, %v3030
        %v4201 = vpack.c.b16 %v3035, %v3033
        %v4202 = vpack.c.b16 %v3036, %v3034
        %v4203 = vpack.c.b16 %v3039, %v3037
        %v4204 = vpack.c.b16 %v3040, %v3038
        %v4205 = vpack.c.b16 %v3043, %v3041
        %v4206 = vpack.c.b16 %v3044, %v3042
        %v4207 = vpack.c.b16 %v3047, %v3045
        %v4208 = vpack.c.b16 %v3048, %v3046
        %v4209 = vpack.c.b16 %v3051, %v3049
        %v4210 = vpack.c.b16 %v3052, %v3050
        %v4211 = vpack.c.b16 %v3055, %v3053
        %v4212 = vpack.c.b16 %v3056, %v3054
        %v4213 = vpack.c.b16 %v3059, %v3057
        %v4214 = vpack.c.b16 %v3060, %v3058
        %v4215 = vpack.c.b16 %v3063, %v3061
        %v4216 = vpack.c.b16 %v3064, %v3062
        %v4217 = vpack.c.b16 %v3067, %v3065
        %v4218 = vpack.c.b16 %v3068, %v3066
        %v4219 = vpack.c.b16 %v3071, %v3069
        %v4220 = vpack.c.b16 %v3072, %v3070
        %v4221 = vpack.c.b16 %v3075, %v3073
        %v4222 = vpack.c.b16 %v3076, %v3074
        %v4223 = vpack.c.b16 %v3079, %v3077
        %v4224 = vpack.c.b16 %v3080, %v3078
        %v4225 = vpack.c.b16 %v3083, %v3081
        %v4226 = vpack.c.b16 %v3084, %v3082
        %v4227 = vpack.c.b16 %v3087, %v3085
        %v4228 = vpack.c.b16 %v3088, %v3086
        %v4229 = vpack.c.b16 %v3091, %v3089
        %v4230 = vpack.c.b16 %v3092, %v3090
        %v4231 = vpack.c.b16 %v3095, %v3093
        %v4232 = vpack.c.b16 %v3096, %v3094
        %v4233 = vpack.c.b16 %v3099, %v3097
        %v4234 = vpack.c.b16 %v3100, %v3098
        %v4235 = vpack.c.b16 %v3103, %v3101
        %v4236 = vpack.c.b16 %v3104, %v3102
        %v4237 = vpack.c.b16 %v3107, %v3105
        %v4238 = vpack.c.b16 %v3108, %v3106
        %v4239 = vpack.c.b16 %v3111, %v3109
        %v4240 = vpack.c.b16 %v3112, %v3110
        %v4241 = vpack.c.b16 %v3115, %v3113
        %v4242 = vpack.c.b16 %v3116, %v3114
        %v4243 = vpack.c.b16 %v3119, %v3117
        %v4244 = vpack.c.b16 %v3120, %v3118
        %v4245 = vpack.c.b16 %v3123, %v3121
        %v4246 = vpack.c.b16 %v3124, %v3122
        %v4247 = vpack.c.b16 %v3127, %v3125
        %v4248 = vpack.c.b16 %v3128, %v3126
        %v4249 = vpack.c.b16 %v3131, %v3129
        %v4250 = vpack.c.b16 %v3132, %v3130
        %v4251 = vpack.c.b16 %v3135, %v3133
        %v4252 = vpack.c.b16 %v3136, %v3134
        %v4253 = vpack.c.b16 %v3139, %v3137
        %v4254 = vpack.c.b16 %v3140, %v3138
        %v4255 = vpack.c.b16 %v3143, %v3141
        %v4256 = vpack.c.b16 %v3144, %v3142
        %v4257 = vpack.c.b16 %v3147, %v3145
        %v4258 = vpack.c.b16 %v3148, %v3146
        %v4259 = vpack.c.b16 %v3151, %v3149
        %v4260 = vpack.c.b16 %v3152, %v3150
        %v4261 = vpack.c.b16 %v3155, %v3153
        %v4262 = vpack.c.b16 %v3156, %v3154
        %v4263 = vpack.c.b16 %v3159, %v3157
        %v4264 = vpack.c.b16 %v3160, %v3158
        %v4265 = vpack.c.b16 %v3163, %v3161
        %v4266 = vpack.c.b16 %v3164, %v3162
        %v4267 = vpack.c.b16 %v3167, %v3165
        %v4268 = vpack.c.b16 %v3168, %v3166
        %v4269 = vpack.c.b16 %v3171, %v3169
        %v4270 = vpack.c.b16 %v3172, %v3170
        %v4271 = vpack.c.b16 %v3175, %v3173
        %v4272 = vpack.c.b16 %v3176, %v3174
        %v4273 = vpack.c.b16 %v3179, %v3177
        %v4274 = vpack.c.b16 %v3180, %v3178
        %v4275 = vpack.c.b16 %v3183, %v3181
        %v4276 = vpack.c.b16 %v3184, %v3182
        %v4277 = vpack.c.b16 %v3187, %v3185
        %v4278 = vpack.c.b16 %v3188, %v3186
        %v4279 = vpack.c.b16 %v3191, %v3189
        %v4280 = vpack.c.b16 %v3192, %v3190
        %v4281 = vpack.c.b16 %v3195, %v3193
        %v4282 = vpack.c.b16 %v3196, %v3194
        %v4283 = vpack.c.b16 %v3199, %v3197
        %v4284 = vpack.c.b16 %v3200, %v3198
        %v4285 = vpack.c.b16 %v3203, %v3201
        %v4286 = vpack.c.b16 %v3204, %v3202
        %v4287 = vpack.c.b16 %v3207, %v3205
        %v4288 = vpack.c.b16 %v3208, %v3206
        %v4289 = vpack.c.b16 %v3211, %v3209
        %v4290 = vpack.c.b16 %v3212, %v3210
        %v4291 = vpack.c.b16 %v3215, %v3213
        %v4292 = vpack.c.b16 %v3216, %v3214
        %v4293 = vpack.c.b16 %v3219, %v3217
        %v4294 = vpack.c.b16 %v3220, %v3218
        %v4295 = vpack.c.b16 %v3223, %v3221
        %v4296 = vpack.c.b16 %v3224, %v3222
        %v4297 = vpack.c.b16 %v3227, %v3225
        %v4298 = vpack.c.b16 %v3228, %v3226
        %v4299 = vpack.c.b16 %v3231, %v3229
        %v4300 = vpack.c.b16 %v3232, %v3230
        %v4301 = vpack.c.b16 %v3235, %v3233
        %v4302 = vpack.c.b16 %v3236, %v3234
        %v4303 = vpack.c.b16 %v3239, %v3237
        %v4304 = vpack.c.b16 %v3240, %v3238
        %v4305 = vpack.c.b16 %v3243, %v3241
        %v4306 = vpack.c.b16 %v3244, %v3242
        %v4307 = vpack.c.b16 %v3247, %v3245
        %v4308 = vpack.c.b16 %v3248, %v3246
        %v4309 = vpack.c.b16 %v3251, %v3249
        %v4310 = vpack.c.b16 %v3252, %v3250
        %v4311 = vpack.c.b16 %v3255, %v3253
        %v4312 = vpack.c.b16 %v3256, %v3254
        %v4313 = vpack.c.b16 %v3259, %v3257
        %v4314 = vpack.c.b16 %v3260, %v3258
        %v4315 = vpack.c.b16 %v3263, %v3261
        %v4316 = vpack.c.b16 %v3264, %v3262
        %v4317 = vpack.c.b16 %v3267, %v3265
        %v4318 = vpack.c.b16 %v3268, %v3266
        %v4319 = vpack.c.b16 %v3271, %v3269
        %v4320 = vpack.c.b16 %v3272, %v3270
        %v4321 = vpack.c.b16 %v3275, %v3273
        %v4322 = vpack.c.b16 %v3276, %v3274
        %v4323 = vpack.c.b16 %v3279, %v3277
        %v4324 = vpack.c.b16 %v3280, %v3278
        %v4325 = vpack.c.b16 %v3283, %v3281
        %v4326 = vpack.c.b16 %v3284, %v3282
        %v4327 = vpack.c.b16 %v3287, %v3285
        %v4328 = vpack.c.b16 %v3288, %v3286
        %v4329 = vpack.c.b16 %v3291, %v3289
        %v4330 = vpack.c.b16 %v3292, %v3290
        %v4331 = vpack.c.b16 %v3295, %v3293
        %v4332 = vpack.c.b16 %v3296, %v3294
        %v4333 = vpack.c.b16 %v3299, %v3297
        %v4334 = vpack.c.b16 %v3300, %v3298
        %v4335 = vpack.c.b16 %v3303, %v3301
        %v4336 = vpack.c.b16 %v3304, %v3302
        %v4337 = vpack.c.b16 %v3307, %v3305
        %v4338 = vpack.c.b16 %v3308, %v3306
        %v4339 = vpack.c.b16 %v3311, %v3309
        %v4340 = vpack.c.b16 %v3312, %v3310
        %v4341 = vpack.c.b16 %v3315, %v3313
        %v4342 = vpack.c.b16 %v3316, %v3314
        %v4343 = vpack.c.b16 %v3319, %v3317
        %v4344 = vpack.c.b16 %v3320, %v3318
        %v4345 = vpack.c.b16 %v3323, %v3321
        %v4346 = vpack.c.b16 %v3324, %v3322
        %v4347 = vpack.c.b16 %v3327, %v3325
        %v4348 = vpack.c.b16 %v3328, %v3326
        %v4349 = vpack.c.b16 %v3331, %v3329
        %v4350 = vpack.c.b16 %v3332, %v3330
        %v4351 = vpack.c.b16 %v3335, %v3333
        %v4352 = vpack.c.b16 %v3336, %v3334
        %v4353 = vpack.c.b16 %v3339, %v3337
        %v4354 = vpack.c.b16 %v3340, %v3338
        %v4355 = vpack.c.b16 %v3343, %v3341
        %v4356 = vpack.c.b16 %v3344, %v3342
        %v4357 = vpack.c.b16 %v3347, %v3345
        %v4358 = vpack.c.b16 %v3348, %v3346
        %v4359 = vpack.c.b16 %v3351, %v3349
        %v4360 = vpack.c.b16 %v3352, %v3350
        %v4361 = vpack.c.b16 %v3355, %v3353
        %v4362 = vpack.c.b16 %v3356, %v3354
        %v4363 = vpack.c.b16 %v3359, %v3357
        %v4364 = vpack.c.b16 %v3360, %v3358
        %v4365 = vpack.c.b16 %v3363, %v3361
        %v4366 = vpack.c.b16 %v3364, %v3362
        %v4367 = vpack.c.b16 %v3367, %v3365
        %v4368 = vpack.c.b16 %v3368, %v3366
        %v4369 = vpack.c.b16 %v3371, %v3369
        %v4370 = vpack.c.b16 %v3372, %v3370
        %v4371 = vpack.c.b16 %v3375, %v3373
        %v4372 = vpack.c.b16 %v3376, %v3374
        %v4373 = vpack.c.b16 %v3379, %v3377
        %v4374 = vpack.c.b16 %v3380, %v3378
        %v4375 = vpack.c.b16 %v3383, %v3381
        %v4376 = vpack.c.b16 %v3384, %v3382
        %v4377 = vpack.c.b16 %v3387, %v3385
        %v4378 = vpack.c.b16 %v3388, %v3386
        %v4379 = vpack.c.b16 %v3391, %v3389
        %v4380 = vpack.c.b16 %v3392, %v3390
        %v4381 = vpack.c.b16 %v3395, %v3393
        %v4382 = vpack.c.b16 %v3396, %v3394
        %v4383 = vpack.c.b16 %v3399, %v3397
        %v4384 = vpack.c.b16 %v3400, %v3398
        %v4385 = vpack.c.b16 %v3403, %v3401
        %v4386 = vpack.c.b16 %v3404, %v3402
        %v4387 = vpack.c.b16 %v3407, %v3405
        %v4388 = vpack.c.b16 %v3408, %v3406
        %v4389 = vpack.c.b16 %v3411, %v3409
        %v4390 = vpack.c.b16 %v3412, %v3410
        %v4391 = vpack.c.b16 %v3415, %v3413
        %v4392 = vpack.c.b16 %v3416, %v3414
        %v4393 = vpack.c.b16 %v3419, %v3417
        %v4394 = vpack.c.b16 %v3420, %v3418
        %v4395 = vpack.c.b16 %v3423, %v3421
        %v4396 = vpack.c.b16 %v3424, %v3422
        %v4397 = vpack.c.b16 %v3427, %v3425
        %v4398 = vpack.c.b16 %v3428, %v3426
        %v4399 = vpack.c.b16 %v3431, %v3429
        %v4400 = vpack.c.b16 %v3432, %v3430
        %v4401 = vpack.c.b16 %v3435, %v3433
        %v4402 = vpack.c.b16 %v3436, %v3434
        %v4403 = vpack.c.b16 %v3439, %v3437
        %v4404 = vpack.c.b16 %v3440, %v3438
        %v4405 = vpack.c.b16 %v3443, %v3441
        %v4406 = vpack.c.b16 %v3444, %v3442
        %v4407 = vpack.c.b16 %v3447, %v3445
        %v4408 = vpack.c.b16 %v3448, %v3446
        %v4409 = vpack.c.b16 %v3451, %v3449
        %v4410 = vpack.c.b16 %v3452, %v3450
        %v4411 = vpack.c.b16 %v3455, %v3453
        %v4412 = vpack.c.b16 %v3456, %v3454
        %v4413 = vpack.c.b16 %v3459, %v3457
        %v4414 = vpack.c.b16 %v3460, %v3458
        %v4415 = vpack.c.b16 %v3463, %v3461
        %v4416 = vpack.c.b16 %v3464, %v3462
        %v4417 = vpack.c.b16 %v3467, %v3465
        %v4418 = vpack.c.b16 %v3468, %v3466
        %v4419 = vpack.c.b16 %v3471, %v3469
        %v4420 = vpack.c.b16 %v3472, %v3470
        %v4421 = vpack.c.b16 %v3475, %v3473
        %v4422 = vpack.c.b16 %v3476, %v3474
        %v4423 = vpack.c.b16 %v3479, %v3477
        %v4424 = vpack.c.b16 %v3480, %v3478
        %v4425 = vpack.c.b16 %v3483, %v3481
        %v4426 = vpack.c.b16 %v3484, %v3482
        %v4427 = vpack.c.b16 %v3487, %v3485
        %v4428 = vpack.c.b16 %v3488, %v3486
        %v4429 = vpack.c.b16 %v3491, %v3489
        %v4430 = vpack.c.b16 %v3492, %v3490
        %v4431 = vpack.c.b16 %v3495, %v3493
        %v4432 = vpack.c.b16 %v3496, %v3494
        %v4433 = vpack.c.b16 %v3499, %v3497
        %v4434 = vpack.c.b16 %v3500, %v3498
        %v4435 = vpack.c.b16 %v3503, %v3501
        %v4436 = vpack.c.b16 %v3504, %v3502
        %v4437 = vpack.c.b16 %v3507, %v3505
        %v4438 = vpack.c.b16 %v3508, %v3506
        %v4439 = vpack.c.b16 %v3511, %v3509
        %v4440 = vpack.c.b16 %v3512, %v3510
        %v4441 = vpack.c.b16 %v3515, %v3513
        %v4442 = vpack.c.b16 %v3516, %v3514
        %v4443 = vpack.c.b16 %v3519, %v3517
        %v4444 = vpack.c.b16 %v3520, %v3518
        %v4445 = vpack.c.b16 %v3523, %v3521
        %v4446 = vpack.c.b16 %v3524, %v3522
        %v4447 = vpack.c.b16 %v3527, %v3525
        %v4448 = vpack.c.b16 %v3528, %v3526
        %v4449 = vpack.c.b16 %v3531, %v3529
        %v4450 = vpack.c.b16 %v3532, %v3530
        %v4451 = vpack.c.b16 %v3535, %v3533
        %v4452 = vpack.c.b16 %v3536, %v3534
        %v4453 = vpack.c.b16 %v3539, %v3537
        %v4454 = vpack.c.b16 %v3540, %v3538
        %v4455 = vpack.c.b16 %v3543, %v3541
        %v4456 = vpack.c.b16 %v3544, %v3542
        %v4457 = vpack.c.b16 %v3547, %v3545
        %v4458 = vpack.c.b16 %v3548, %v3546
        %v4459 = vpack.c.b16 %v3551, %v3549
        %v4460 = vpack.c.b16 %v3552, %v3550
        %v4461 = vpack.c.b16 %v3555, %v3553
        %v4462 = vpack.c.b16 %v3556, %v3554
        %v4463 = vpack.c.b16 %v3559, %v3557
        %v4464 = vpack.c.b16 %v3560, %v3558
        %v4465 = vpack.c.b16 %v3563, %v3561
        %v4466 = vpack.c.b16 %v3564, %v3562
        %v4467 = vpack.c.b16 %v3567, %v3565
        %v4468 = vpack.c.b16 %v3568, %v3566
        %v4469 = vpack.c.b16 %v3571, %v3569
        %v4470 = vpack.c.b16 %v3572, %v3570
        %v4471 = vpack.c.b16 %v3575, %v3573
        %v4472 = vpack.c.b16 %v3576, %v3574
        %v4473 = vpack.c.b16 %v3579, %v3577
        %v4474 = vpack.c.b16 %v3580, %v3578
        %v4475 = vpack.c.b16 %v3583, %v3581
        %v4476 = vpack.c.b16 %v3584, %v3582
        %v4477 = vpack.c.b16 %v3587, %v3585
        %v4478 = vpack.c.b16 %v3588, %v3586
        %v4479 = vpack.c.b16 %v3591, %v3589
        %v4480 = vpack.c.b16 %v3592, %v3590
        %v4481 = vpack.c.b16 %v3595, %v3593
        %v4482 = vpack.c.b16 %v3596, %v3594
        %v4483 = vpack.c.b16 %v3599, %v3597
        %v4484 = vpack.c.b16 %v3600, %v3598
        %v4485 = vpack.c.b16 %v3603, %v3601
        %v4486 = vpack.c.b16 %v3604, %v3602
        %v4487 = vpack.c.b16 %v3607, %v3605
        %v4488 = vpack.c.b16 %v3608, %v3606
        %v4489 = vpack.c.b16 %v3611, %v3609
        %v4490 = vpack.c.b16 %v3612, %v3610
        %v4491 = vpack.c.b16 %v3615, %v3613
        %v4492 = vpack.c.b16 %v3616, %v3614
        %v4493 = vpack.c.b16 %v3619, %v3617
        %v4494 = vpack.c.b16 %v3620, %v3618
        %v4495 = vpack.c.b16 %v3623, %v3621
        %v4496 = vpack.c.b16 %v3624, %v3622
        %v4497 = vpack.c.b16 %v3627, %v3625
        %v4498 = vpack.c.b16 %v3628, %v3626
        %v4499 = vpack.c.b16 %v3631, %v3629
        %v4500 = vpack.c.b16 %v3632, %v3630
        %v4501 = vpack.c.b16 %v3635, %v3633
        %v4502 = vpack.c.b16 %v3636, %v3634
        %v4503 = vpack.c.b16 %v3639, %v3637
        %v4504 = vpack.c.b16 %v3640, %v3638
        %v4505 = vpack.c.b16 %v3643, %v3641
        %v4506 = vpack.c.b16 %v3644, %v3642
        %v4507 = vpack.c.b16 %v3647, %v3645
        %v4508 = vpack.c.b16 %v3648, %v3646
        %v4509 = vpack.c.b16 %v3651, %v3649
        %v4510 = vpack.c.b16 %v3652, %v3650
        %v4511 = vpack.c.b16 %v3655, %v3653
        %v4512 = vpack.c.b16 %v3656, %v3654
        %v4513 = vpack.c.b16 %v3659, %v3657
        %v4514 = vpack.c.b16 %v3660, %v3658
        %v4515 = vpack.c.b16 %v3663, %v3661
        %v4516 = vpack.c.b16 %v3664, %v3662
        %v4517 = vpack.c.b16 %v3667, %v3665
        %v4518 = vpack.c.b16 %v3668, %v3666
        %v4519 = vpack.c.b16 %v3671, %v3669
        %v4520 = vpack.c.b16 %v3672, %v3670
        %v4521 = vpack.c.b16 %v3675, %v3673
        %v4522 = vpack.c.b16 %v3676, %v3674
        %v4523 = vpack.c.b16 %v3679, %v3677
        %v4524 = vpack.c.b16 %v3680, %v3678
        %v4525 = vpack.c.b16 %v3683, %v3681
        %v4526 = vpack.c.b16 %v3684, %v3682
        %v4527 = vpack.c.b16 %v3687, %v3685
        %v4528 = vpack.c.b16 %v3688, %v3686
        %v4529 = vpack.c.b16 %v3691, %v3689
        %v4530 = vpack.c.b16 %v3692, %v3690
        %v4531 = vpack.c.b16 %v3695, %v3693
        %v4532 = vpack.c.b16 %v3696, %v3694
        %v4533 = vpack.c.b16 %v3699, %v3697
        %v4534 = vpack.c.b16 %v3700, %v3698
        %v4535 = vpack.c.b16 %v3703, %v3701
        %v4536 = vpack.c.b16 %v3704, %v3702
        %v4537 = vpack.c.b16 %v3707, %v3705
        %v4538 = vpack.c.b16 %v3708, %v3706
        %v4539 = vpack.c.b16 %v3711, %v3709
        %v4540 = vpack.c.b16 %v3712, %v3710
        %v4541 = vpack.c.b16 %v3715, %v3713
        %v4542 = vpack.c.b16 %v3716, %v3714
        %v4543 = vpack.c.b16 %v3719, %v3717
        %v4544 = vpack.c.b16 %v3720, %v3718
        %v4545 = vpack.c.b16 %v3723, %v3721
        %v4546 = vpack.c.b16 %v3724, %v3722
        %v4547 = vpack.c.b16 %v3727, %v3725
        %v4548 = vpack.c.b16 %v3728, %v3726
        %v4549 = vpack.c.b16 %v3731, %v3729
        %v4550 = vpack.c.b16 %v3732, %v3730
        %v4551 = vpack.c.b16 %v3735, %v3733
        %v4552 = vpack.c.b16 %v3736, %v3734
        %v4553 = vpack.c.b16 %v3739, %v3737
        %v4554 = vpack.c.b16 %v3740, %v3738
        %v4555 = vpack.c.b16 %v3743, %v3741
        %v4556 = vpack.c.b16 %v3744, %v3742
        %v4557 = vpack.c.b16 %v3747, %v3745
        %v4558 = vpack.c.b16 %v3748, %v3746
        %v4559 = vpack.c.b16 %v3751, %v3749
        %v4560 = vpack.c.b16 %v3752, %v3750
        %v4561 = vpack.c.b16 %v3755, %v3753
        %v4562 = vpack.c.b16 %v3756, %v3754
        %v4563 = vpack.c.b16 %v3759, %v3757
        %v4564 = vpack.c.b16 %v3760, %v3758
        %v4565 = vpack.c.b16 %v3763, %v3761
        %v4566 = vpack.c.b16 %v3764, %v3762
        %v4567 = vpack.c.b16 %v3767, %v3765
        %v4568 = vpack.c.b16 %v3768, %v3766
        %v4569 = vpack.c.b16 %v3771, %v3769
        %v4570 = vpack.c.b16 %v3772, %v3770
        %v4571 = vpack.c.b16 %v3775, %v3773
        %v4572 = vpack.c.b16 %v3776, %v3774
        %v4573 = vpack.c.b16 %v3779, %v3777
        %v4574 = vpack.c.b16 %v3780, %v3778
        %v4575 = vpack.c.b16 %v3783, %v3781
        %v4576 = vpack.c.b16 %v3784, %v3782
        %v4577 = vpack.c.b16 %v3787, %v3785
        %v4578 = vpack.c.b16 %v3788, %v3786
        %v4579 = vpack.c.b16 %v3791, %v3789
        %v4580 = vpack.c.b16 %v3792, %v3790
        %v4581 = vpack.c.b16 %v3795, %v3793
        %v4582 = vpack.c.b16 %v3796, %v3794
        %v4583 = vpack.c.b16 %v3799, %v3797
        %v4584 = vpack.c.b16 %v3800, %v3798
        %5369 = vmatprep.subr.bf16.mxu0 %v3802
        %5370 = vmatpush1.bf16.msra.mxu0 %v3801
        %5371 = vmatprep.subr.bf16.mxu0 %v3804
        %5372 = vmatpush1.bf16.msra.mxu0 %v3803
        %5373 = vmatprep.subr.bf16.mxu0 %v3806
        %5374 = vmatpush1.bf16.msra.mxu0 %v3805
        %5375 = vmatprep.subr.bf16.mxu0 %v3808
        %5376 = vmatpush1.bf16.msra.mxu0 %v3807
        %5377 = vmatprep.subr.bf16.mxu0 %v3810
        %5378 = vmatpush1.bf16.msra.mxu0 %v3809
        %5379 = vmatprep.subr.bf16.mxu0 %v3812
        %5380 = vmatpush1.bf16.msra.mxu0 %v3811
        %5381 = vmatprep.subr.bf16.mxu0 %v3814
        %5382 = vmatpush1.bf16.msra.mxu0 %v3813
        %5383 = vmatprep.subr.bf16.mxu0 %v3816
        %5384 = vmatpush1.bf16.msra.mxu0 %v3815
        %5385 = vmatprep.subr.bf16.mxu0 %v3818
        %5386 = vmatpush1.bf16.msra.mxu0 %v3817
        %5387 = vmatprep.subr.bf16.mxu0 %v3820
        %5388 = vmatpush1.bf16.msra.mxu0 %v3819
        %5389 = vmatprep.subr.bf16.mxu0 %v3822
        %5390 = vmatpush1.bf16.msra.mxu0 %v3821
        %5391 = vmatprep.subr.bf16.mxu0 %v3824
        %5392 = vmatpush1.bf16.msra.mxu0 %v3823
        %5393 = vmatprep.subr.bf16.mxu0 %v3826
        %5394 = vmatpush1.bf16.msra.mxu0 %v3825
        %5395 = vmatprep.subr.bf16.mxu0 %v3828
        %5396 = vmatpush1.bf16.msra.mxu0 %v3827
        %5397 = vmatprep.subr.bf16.mxu0 %v3830
        %5398 = vmatpush1.bf16.msra.mxu0 %v3829
        %5399 = vmatprep.subr.bf16.mxu0 %v3832
        %5400 = vmatpush1.bf16.msra.mxu0 %v3831
        %5401 = vmatprep.mubr.bf16.mxu0 %v1129
        %5402 = vmatmul.mubr.bf16.gmra.mrb[0].mxu0 %v1115
        %v5403 = vpop.f32.mrb[0].mxu0
        %v5404 = vadd.f32 %v1078, %v5403
        %v5405 = vpop.f32.mrb[0].mxu0
        %v5406 = vadd.f32 %v1082, %v5405
        %v5407 = vpop.f32.mrb[0].mxu0
        %v5408 = vpop.f32.mrb[0].mxu0
        %5409 = vdwg.mxu0
        %5410 = vmatprep.subr.bf16.mxu0 %v3834
        %5411 = vmatpush1.bf16.msra.mxu0 %v3833
        %5412 = vmatprep.subr.bf16.mxu0 %v3836
        %5413 = vmatpush1.bf16.msra.mxu0 %v3835
        %5414 = vmatprep.subr.bf16.mxu0 %v3838
        %5415 = vmatpush1.bf16.msra.mxu0 %v3837
        %5416 = vmatprep.subr.bf16.mxu0 %v3840
        %5417 = vmatpush1.bf16.msra.mxu0 %v3839
        %5418 = vmatprep.subr.bf16.mxu0 %v3842
        %5419 = vmatpush1.bf16.msra.mxu0 %v3841
        %5420 = vmatprep.subr.bf16.mxu0 %v3844
        %5421 = vmatpush1.bf16.msra.mxu0 %v3843
        %5422 = vmatprep.subr.bf16.mxu0 %v3846
        %5423 = vmatpush1.bf16.msra.mxu0 %v3845
        %5424 = vmatprep.subr.bf16.mxu0 %v3848
        %5425 = vmatpush1.bf16.msra.mxu0 %v3847
        %5426 = vmatprep.subr.bf16.mxu0 %v3850
        %5427 = vmatpush1.bf16.msra.mxu0 %v3849
        %5428 = vmatprep.subr.bf16.mxu0 %v3852
        %5429 = vmatpush1.bf16.msra.mxu0 %v3851
        %5430 = vmatprep.subr.bf16.mxu0 %v3854
        %5431 = vmatpush1.bf16.msra.mxu0 %v3853
        %5432 = vmatprep.subr.bf16.mxu0 %v3856
        %5433 = vmatpush1.bf16.msra.mxu0 %v3855
        %5434 = vmatprep.subr.bf16.mxu0 %v3858
        %5435 = vmatpush1.bf16.msra.mxu0 %v3857
        %5436 = vmatprep.subr.bf16.mxu0 %v3860
        %5437 = vmatpush1.bf16.msra.mxu0 %v3859
        %5438 = vmatprep.subr.bf16.mxu0 %v3862
        %5439 = vmatpush1.bf16.msra.mxu0 %v3861
        %5440 = vmatprep.subr.bf16.mxu0 %v3864
        %5441 = vmatpush1.bf16.msra.mxu0 %v3863
        %5442 = vmatprep.mubr.bf16.mxu0 %v1139
        %5443 = vmatmul.mubr.bf16.gmra.mrb[0].mxu0 %v1137
        %v5444 = vpop.f32.mrb[0].mxu0
        %v5445 = vadd.f32 %v5404, %v5444
        %v5446 = vpop.f32.mrb[0].mxu0
        %v5447 = vadd.f32 %v5406, %v5446
        %v5448 = vpop.f32.mrb[0].mxu0
        %v5449 = vpop.f32.mrb[0].mxu0
        %5450 = vdwg.mxu0
        %5451 = vmatprep.subr.bf16.mxu0 %v3866
        %5452 = vmatpush1.bf16.msra.mxu0 %v3865
        %5453 = vmatprep.subr.bf16.mxu0 %v3868
        %5454 = vmatpush1.bf16.msra.mxu0 %v3867
        %5455 = vmatprep.subr.bf16.mxu0 %v3870
        %5456 = vmatpush1.bf16.msra.mxu0 %v3869
        %5457 = vmatprep.subr.bf16.mxu0 %v3872
        %5458 = vmatpush1.bf16.msra.mxu0 %v3871
        %5459 = vmatprep.subr.bf16.mxu0 %v3874
        %5460 = vmatpush1.bf16.msra.mxu0 %v3873
        %5461 = vmatprep.subr.bf16.mxu0 %v3876
        %5462 = vmatpush1.bf16.msra.mxu0 %v3875
        %5463 = vmatprep.subr.bf16.mxu0 %v3878
        %5464 = vmatpush1.bf16.msra.mxu0 %v3877
        %5465 = vmatprep.subr.bf16.mxu0 %v3880
        %5466 = vmatpush1.bf16.msra.mxu0 %v3879
        %5467 = vmatprep.subr.bf16.mxu0 %v3882
        %5468 = vmatpush1.bf16.msra.mxu0 %v3881
        %5469 = vmatprep.subr.bf16.mxu0 %v3884
        %5470 = vmatpush1.bf16.msra.mxu0 %v3883
        %5471 = vmatprep.subr.bf16.mxu0 %v3886
        %5472 = vmatpush1.bf16.msra.mxu0 %v3885
        %5473 = vmatprep.subr.bf16.mxu0 %v3888
        %5474 = vmatpush1.bf16.msra.mxu0 %v3887
        %5475 = vmatprep.subr.bf16.mxu0 %v3890
        %5476 = vmatpush1.bf16.msra.mxu0 %v3889
        %5477 = vmatprep.subr.bf16.mxu0 %v3892
        %5478 = vmatpush1.bf16.msra.mxu0 %v3891
        %5479 = vmatprep.subr.bf16.mxu0 %v3894
        %5480 = vmatpush1.bf16.msra.mxu0 %v3893
        %5481 = vmatprep.subr.bf16.mxu0 %v3896
        %5482 = vmatpush1.bf16.msra.mxu0 %v3895
        %5483 = vmatprep.mubr.bf16.mxu0 %v1136
        %5484 = vmatmul.mubr.bf16.gmra.mrb[0].mxu0 %v1122
        %v5485 = vpop.f32.mrb[0].mxu0
        %v5486 = vadd.f32 %v5445, %v5485
        %v5487 = vpop.f32.mrb[0].mxu0
        %v5488 = vadd.f32 %v5447, %v5487
        %v5489 = vpop.f32.mrb[0].mxu0
        %v5490 = vpop.f32.mrb[0].mxu0
        %5491 = vdwg.mxu0
        %5492 = vmatprep.subr.bf16.mxu0 %v3898
        %5493 = vmatpush1.bf16.msra.mxu0 %v3897
        %5494 = vmatprep.subr.bf16.mxu0 %v3900
        %5495 = vmatpush1.bf16.msra.mxu0 %v3899
        %5496 = vmatprep.subr.bf16.mxu0 %v3902
        %5497 = vmatpush1.bf16.msra.mxu0 %v3901
        %5498 = vmatprep.subr.bf16.mxu0 %v3904
        %5499 = vmatpush1.bf16.msra.mxu0 %v3903
        %5500 = vmatprep.subr.bf16.mxu0 %v3906
        %5501 = vmatpush1.bf16.msra.mxu0 %v3905
        %5502 = vmatprep.subr.bf16.mxu0 %v3908
        %5503 = vmatpush1.bf16.msra.mxu0 %v3907
        %5504 = vmatprep.subr.bf16.mxu0 %v3910
        %5505 = vmatpush1.bf16.msra.mxu0 %v3909
        %5506 = vmatprep.subr.bf16.mxu0 %v3912
        %5507 = vmatpush1.bf16.msra.mxu0 %v3911
        %5508 = vmatprep.subr.bf16.mxu0 %v3914
        %5509 = vmatpush1.bf16.msra.mxu0 %v3913
        %5510 = vmatprep.subr.bf16.mxu0 %v3916
        %5511 = vmatpush1.bf16.msra.mxu0 %v3915
        %5512 = vmatprep.subr.bf16.mxu0 %v3918
        %5513 = vmatpush1.bf16.msra.mxu0 %v3917
        %5514 = vmatprep.subr.bf16.mxu0 %v3920
        %5515 = vmatpush1.bf16.msra.mxu0 %v3919
        %5516 = vmatprep.subr.bf16.mxu0 %v3922
        %5517 = vmatpush1.bf16.msra.mxu0 %v3921
        %5518 = vmatprep.subr.bf16.mxu0 %v3924
        %5519 = vmatpush1.bf16.msra.mxu0 %v3923
        %5520 = vmatprep.subr.bf16.mxu0 %v3926
        %5521 = vmatpush1.bf16.msra.mxu0 %v3925
        %5522 = vmatprep.subr.bf16.mxu0 %v3928
        %5523 = vmatpush1.bf16.msra.mxu0 %v3927
        %5524 = vmatprep.mubr.bf16.mxu0 %v1140
        %5525 = vmatmul.mubr.bf16.gmra.mrb[0].mxu0 %v1138
        %v5526 = vpop.f32.mrb[0].mxu0
        %v5527 = vadd.f32 %v5486, %v5526
        %v5528 = vpop.f32.mrb[0].mxu0
        %v5529 = vadd.f32 %v5488, %v5528
        %v5530 = vpop.f32.mrb[0].mxu0
        %v5531 = vpop.f32.mrb[0].mxu0
        %5532 = vdwg.mxu0
        %5533 = vmatprep.subr.bf16.mxu0 %v3930
        %5534 = vmatpush1.bf16.msra.mxu0 %v3929
        %5535 = vmatprep.subr.bf16.mxu0 %v3932
        %5536 = vmatpush1.bf16.msra.mxu0 %v3931
        %5537 = vmatprep.subr.bf16.mxu0 %v3934
        %5538 = vmatpush1.bf16.msra.mxu0 %v3933
        %5539 = vmatprep.subr.bf16.mxu0 %v3936
        %5540 = vmatpush1.bf16.msra.mxu0 %v3935
        %5541 = vmatprep.subr.bf16.mxu0 %v3938
        %5542 = vmatpush1.bf16.msra.mxu0 %v3937
        %5543 = vmatprep.subr.bf16.mxu0 %v3940
        %5544 = vmatpush1.bf16.msra.mxu0 %v3939
        %5545 = vmatprep.subr.bf16.mxu0 %v3942
        %5546 = vmatpush1.bf16.msra.mxu0 %v3941
        %5547 = vmatprep.subr.bf16.mxu0 %v3944
        %5548 = vmatpush1.bf16.msra.mxu0 %v3943
        %5549 = vmatprep.subr.bf16.mxu0 %v3946
        %5550 = vmatpush1.bf16.msra.mxu0 %v3945
        %5551 = vmatprep.subr.bf16.mxu0 %v3948
        %5552 = vmatpush1.bf16.msra.mxu0 %v3947
        %5553 = vmatprep.subr.bf16.mxu0 %v3950
        %5554 = vmatpush1.bf16.msra.mxu0 %v3949
        %5555 = vmatprep.subr.bf16.mxu0 %v3952
        %5556 = vmatpush1.bf16.msra.mxu0 %v3951
        %5557 = vmatprep.subr.bf16.mxu0 %v3954
        %5558 = vmatpush1.bf16.msra.mxu0 %v3953
        %5559 = vmatprep.subr.bf16.mxu0 %v3956
        %5560 = vmatpush1.bf16.msra.mxu0 %v3955
        %5561 = vmatprep.subr.bf16.mxu0 %v3958
        %5562 = vmatpush1.bf16.msra.mxu0 %v3957
        %5563 = vmatprep.subr.bf16.mxu0 %v3960
        %5564 = vmatpush1.bf16.msra.mxu0 %v3959
        %5565 = vmatprep.mubr.bf16.mxu0 %v1178
        %5566 = vmatmul.mubr.bf16.gmra.mrb[0].mxu0 %v1164
        %v5567 = vpop.f32.mrb[0].mxu0
        %v5568 = vadd.f32 %v5527, %v5567
        %v5569 = vpop.f32.mrb[0].mxu0
        %v5570 = vadd.f32 %v5529, %v5569
        %v5571 = vpop.f32.mrb[0].mxu0
        %v5572 = vpop.f32.mrb[0].mxu0
        %5573 = vdwg.mxu0
        %5574 = vmatprep.subr.bf16.mxu0 %v3962
        %5575 = vmatpush1.bf16.msra.mxu0 %v3961
        %5576 = vmatprep.subr.bf16.mxu0 %v3964
        %5577 = vmatpush1.bf16.msra.mxu0 %v3963
        %5578 = vmatprep.subr.bf16.mxu0 %v3966
        %5579 = vmatpush1.bf16.msra.mxu0 %v3965
        %5580 = vmatprep.subr.bf16.mxu0 %v3968
        %5581 = vmatpush1.bf16.msra.mxu0 %v3967
        %5582 = vmatprep.subr.bf16.mxu0 %v3970
        %5583 = vmatpush1.bf16.msra.mxu0 %v3969
        %5584 = vmatprep.subr.bf16.mxu0 %v3972
        %5585 = vmatpush1.bf16.msra.mxu0 %v3971
        %5586 = vmatprep.subr.bf16.mxu0 %v3974
        %5587 = vmatpush1.bf16.msra.mxu0 %v3973
        %5588 = vmatprep.subr.bf16.mxu0 %v3976
        %5589 = vmatpush1.bf16.msra.mxu0 %v3975
        %5590 = vmatprep.subr.bf16.mxu0 %v3978
        %5591 = vmatpush1.bf16.msra.mxu0 %v3977
        %5592 = vmatprep.subr.bf16.mxu0 %v3980
        %5593 = vmatpush1.bf16.msra.mxu0 %v3979
        %5594 = vmatprep.subr.bf16.mxu0 %v3982
        %5595 = vmatpush1.bf16.msra.mxu0 %v3981
        %5596 = vmatprep.subr.bf16.mxu0 %v3984
        %5597 = vmatpush1.bf16.msra.mxu0 %v3983
        %5598 = vmatprep.subr.bf16.mxu0 %v3986
        %5599 = vmatpush1.bf16.msra.mxu0 %v3985
        %5600 = vmatprep.subr.bf16.mxu0 %v3988
        %5601 = vmatpush1.bf16.msra.mxu0 %v3987
        %5602 = vmatprep.subr.bf16.mxu0 %v3990
        %5603 = vmatpush1.bf16.msra.mxu0 %v3989
        %5604 = vmatprep.subr.bf16.mxu0 %v3992
        %5605 = vmatpush1.bf16.msra.mxu0 %v3991
        %5606 = vmatprep.mubr.bf16.mxu0 %v1188
        %5607 = vmatmul.mubr.bf16.gmra.mrb[0].mxu0 %v1186
        %v5608 = vpop.f32.mrb[0].mxu0
        %v5609 = vadd.f32 %v5568, %v5608
        %v5610 = vpop.f32.mrb[0].mxu0
        %v5611 = vadd.f32 %v5570, %v5610
        %v5612 = vpop.f32.mrb[0].mxu0
        %v5613 = vpop.f32.mrb[0].mxu0
        %5614 = vdwg.mxu0
        %5615 = vmatprep.subr.bf16.mxu0 %v3994
        %5616 = vmatpush1.bf16.msra.mxu0 %v3993
        %5617 = vmatprep.subr.bf16.mxu0 %v3996
        %5618 = vmatpush1.bf16.msra.mxu0 %v3995
        %5619 = vmatprep.subr.bf16.mxu0 %v3998
        %5620 = vmatpush1.bf16.msra.mxu0 %v3997
        %5621 = vmatprep.subr.bf16.mxu0 %v4000
        %5622 = vmatpush1.bf16.msra.mxu0 %v3999
        %5623 = vmatprep.subr.bf16.mxu0 %v4002
        %5624 = vmatpush1.bf16.msra.mxu0 %v4001
        %5625 = vmatprep.subr.bf16.mxu0 %v4004
        %5626 = vmatpush1.bf16.msra.mxu0 %v4003
        %5627 = vmatprep.subr.bf16.mxu0 %v4006
        %5628 = vmatpush1.bf16.msra.mxu0 %v4005
        %5629 = vmatprep.subr.bf16.mxu0 %v4008
        %5630 = vmatpush1.bf16.msra.mxu0 %v4007
        %5631 = vmatprep.subr.bf16.mxu0 %v4010
        %5632 = vmatpush1.bf16.msra.mxu0 %v4009
        %5633 = vmatprep.subr.bf16.mxu0 %v4012
        %5634 = vmatpush1.bf16.msra.mxu0 %v4011
        %5635 = vmatprep.subr.bf16.mxu0 %v4014
        %5636 = vmatpush1.bf16.msra.mxu0 %v4013
        %5637 = vmatprep.subr.bf16.mxu0 %v4016
        %5638 = vmatpush1.bf16.msra.mxu0 %v4015
        %5639 = vmatprep.subr.bf16.mxu0 %v4018
        %5640 = vmatpush1.bf16.msra.mxu0 %v4017
        %5641 = vmatprep.subr.bf16.mxu0 %v4020
        %5642 = vmatpush1.bf16.msra.mxu0 %v4019
        %5643 = vmatprep.subr.bf16.mxu0 %v4022
        %5644 = vmatpush1.bf16.msra.mxu0 %v4021
        %5645 = vmatprep.subr.bf16.mxu0 %v4024
        %5646 = vmatpush1.bf16.msra.mxu0 %v4023
        %5647 = vmatprep.mubr.bf16.mxu0 %v1185
        %5648 = vmatmul.mubr.bf16.gmra.mrb[0].mxu0 %v1171
        %v5649 = vpop.f32.mrb[0].mxu0
        %v5650 = vadd.f32 %v5609, %v5649
        %v5651 = vpop.f32.mrb[0].mxu0
        %v5652 = vadd.f32 %v5611, %v5651
        %v5653 = vpop.f32.mrb[0].mxu0
        %v5654 = vpop.f32.mrb[0].mxu0
        %5655 = vdwg.mxu0
        %5656 = vmatprep.subr.bf16.mxu0 %v4026
        %5657 = vmatpush1.bf16.msra.mxu0 %v4025
        %5658 = vmatprep.subr.bf16.mxu0 %v4028
        %5659 = vmatpush1.bf16.msra.mxu0 %v4027
        %5660 = vmatprep.subr.bf16.mxu0 %v4030
        %5661 = vmatpush1.bf16.msra.mxu0 %v4029
        %5662 = vmatprep.subr.bf16.mxu0 %v4032
        %5663 = vmatpush1.bf16.msra.mxu0 %v4031
        %5664 = vmatprep.subr.bf16.mxu0 %v4034
        %5665 = vmatpush1.bf16.msra.mxu0 %v4033
        %5666 = vmatprep.subr.bf16.mxu0 %v4036
        %5667 = vmatpush1.bf16.msra.mxu0 %v4035
        %5668 = vmatprep.subr.bf16.mxu0 %v4038
        %5669 = vmatpush1.bf16.msra.mxu0 %v4037
        %5670 = vmatprep.subr.bf16.mxu0 %v4040
        %5671 = vmatpush1.bf16.msra.mxu0 %v4039
        %5672 = vmatprep.subr.bf16.mxu0 %v4042
        %5673 = vmatpush1.bf16.msra.mxu0 %v4041
        %5674 = vmatprep.subr.bf16.mxu0 %v4044
        %5675 = vmatpush1.bf16.msra.mxu0 %v4043
        %5676 = vmatprep.subr.bf16.mxu0 %v4046
        %5677 = vmatpush1.bf16.msra.mxu0 %v4045
        %5678 = vmatprep.subr.bf16.mxu0 %v4048
        %5679 = vmatpush1.bf16.msra.mxu0 %v4047
        %5680 = vmatprep.subr.bf16.mxu0 %v4050
        %5681 = vmatpush1.bf16.msra.mxu0 %v4049
        %5682 = vmatprep.subr.bf16.mxu0 %v4052
        %5683 = vmatpush1.bf16.msra.mxu0 %v4051
        %5684 = vmatprep.subr.bf16.mxu0 %v4054
        %5685 = vmatpush1.bf16.msra.mxu0 %v4053
        %5686 = vmatprep.subr.bf16.mxu0 %v4056
        %5687 = vmatpush1.bf16.msra.mxu0 %v4055
        %5688 = vmatprep.mubr.bf16.mxu0 %v1189
        %5689 = vmatmul.mubr.bf16.gmra.mrb[0].mxu0 %v1187
        %v5690 = vpop.f32.mrb[0].mxu0
        %v5691 = vadd.f32 %v5650, %v5690
        %v5692 = vpop.f32.mrb[0].mxu0
        %v5693 = vadd.f32 %v5652, %v5692
        %v5694 = vpop.f32.mrb[0].mxu0
        %v5695 = vpop.f32.mrb[0].mxu0
        %5696 = vdwg.mxu0
        %5697 = vmatprep.subr.bf16.mxu0 %v4058
        %5698 = vmatpush1.bf16.msra.mxu0 %v4057
        %5699 = vmatprep.subr.bf16.mxu0 %v4060
        %5700 = vmatpush1.bf16.msra.mxu0 %v4059
        %5701 = vmatprep.subr.bf16.mxu0 %v4062
        %5702 = vmatpush1.bf16.msra.mxu0 %v4061
        %5703 = vmatprep.subr.bf16.mxu0 %v4064
        %5704 = vmatpush1.bf16.msra.mxu0 %v4063
        %5705 = vmatprep.subr.bf16.mxu0 %v4066
        %5706 = vmatpush1.bf16.msra.mxu0 %v4065
        %5707 = vmatprep.subr.bf16.mxu0 %v4068
        %5708 = vmatpush1.bf16.msra.mxu0 %v4067
        %5709 = vmatprep.subr.bf16.mxu0 %v4070
        %5710 = vmatpush1.bf16.msra.mxu0 %v4069
        %5711 = vmatprep.subr.bf16.mxu0 %v4072
        %5712 = vmatpush1.bf16.msra.mxu0 %v4071
        %5713 = vmatprep.subr.bf16.mxu0 %v4074
        %5714 = vmatpush1.bf16.msra.mxu0 %v4073
        %5715 = vmatprep.subr.bf16.mxu0 %v4076
        %5716 = vmatpush1.bf16.msra.mxu0 %v4075
        %5717 = vmatprep.subr.bf16.mxu0 %v4078
        %5718 = vmatpush1.bf16.msra.mxu0 %v4077
        %5719 = vmatprep.subr.bf16.mxu0 %v4080
        %5720 = vmatpush1.bf16.msra.mxu0 %v4079
        %5721 = vmatprep.subr.bf16.mxu0 %v4082
        %5722 = vmatpush1.bf16.msra.mxu0 %v4081
        %5723 = vmatprep.subr.bf16.mxu0 %v4084
        %5724 = vmatpush1.bf16.msra.mxu0 %v4083
        %5725 = vmatprep.subr.bf16.mxu0 %v4086
        %5726 = vmatpush1.bf16.msra.mxu0 %v4085
        %5727 = vmatprep.subr.bf16.mxu0 %v4088
        %5728 = vmatpush1.bf16.msra.mxu0 %v4087
        %5729 = vmatprep.mubr.bf16.mxu0 %v1227
        %5730 = vmatmul.mubr.bf16.gmra.mrb[0].mxu0 %v1213
        %v5731 = vpop.f32.mrb[0].mxu0
        %v5732 = vadd.f32 %v5691, %v5731
        %v5733 = vpop.f32.mrb[0].mxu0
        %v5734 = vadd.f32 %v5693, %v5733
        %v5735 = vpop.f32.mrb[0].mxu0
        %v5736 = vpop.f32.mrb[0].mxu0
        %5737 = vdwg.mxu0
        %5738 = vmatprep.subr.bf16.mxu0 %v4090
        %5739 = vmatpush1.bf16.msra.mxu0 %v4089
        %5740 = vmatprep.subr.bf16.mxu0 %v4092
        %5741 = vmatpush1.bf16.msra.mxu0 %v4091
        %5742 = vmatprep.subr.bf16.mxu0 %v4094
        %5743 = vmatpush1.bf16.msra.mxu0 %v4093
        %5744 = vmatprep.subr.bf16.mxu0 %v4096
        %5745 = vmatpush1.bf16.msra.mxu0 %v4095
        %5746 = vmatprep.subr.bf16.mxu0 %v4098
        %5747 = vmatpush1.bf16.msra.mxu0 %v4097
        %5748 = vmatprep.subr.bf16.mxu0 %v4100
        %5749 = vmatpush1.bf16.msra.mxu0 %v4099
        %5750 = vmatprep.subr.bf16.mxu0 %v4102
        %5751 = vmatpush1.bf16.msra.mxu0 %v4101
        %5752 = vmatprep.subr.bf16.mxu0 %v4104
        %5753 = vmatpush1.bf16.msra.mxu0 %v4103
        %5754 = vmatprep.subr.bf16.mxu0 %v4106
        %5755 = vmatpush1.bf16.msra.mxu0 %v4105
        %5756 = vmatprep.subr.bf16.mxu0 %v4108
        %5757 = vmatpush1.bf16.msra.mxu0 %v4107
        %5758 = vmatprep.subr.bf16.mxu0 %v4110
        %5759 = vmatpush1.bf16.msra.mxu0 %v4109
        %5760 = vmatprep.subr.bf16.mxu0 %v4112
        %5761 = vmatpush1.bf16.msra.mxu0 %v4111
        %5762 = vmatprep.subr.bf16.mxu0 %v4114
        %5763 = vmatpush1.bf16.msra.mxu0 %v4113
        %5764 = vmatprep.subr.bf16.mxu0 %v4116
        %5765 = vmatpush1.bf16.msra.mxu0 %v4115
        %5766 = vmatprep.subr.bf16.mxu0 %v4118
        %5767 = vmatpush1.bf16.msra.mxu0 %v4117
        %5768 = vmatprep.subr.bf16.mxu0 %v4120
        %5769 = vmatpush1.bf16.msra.mxu0 %v4119
        %5770 = vmatprep.mubr.bf16.mxu0 %v1237
        %5771 = vmatmul.mubr.bf16.gmra.mrb[0].mxu0 %v1235
        %v5772 = vpop.f32.mrb[0].mxu0
        %v5773 = vadd.f32 %v5732, %v5772
        %v5774 = vpop.f32.mrb[0].mxu0
        %v5775 = vadd.f32 %v5734, %v5774
        %v5776 = vpop.f32.mrb[0].mxu0
        %v5777 = vpop.f32.mrb[0].mxu0
        %5778 = vdwg.mxu0
        %5779 = vmatprep.subr.bf16.mxu0 %v4122
        %5780 = vmatpush1.bf16.msra.mxu0 %v4121
        %5781 = vmatprep.subr.bf16.mxu0 %v4124
        %5782 = vmatpush1.bf16.msra.mxu0 %v4123
        %5783 = vmatprep.subr.bf16.mxu0 %v4126
        %5784 = vmatpush1.bf16.msra.mxu0 %v4125
        %5785 = vmatprep.subr.bf16.mxu0 %v4128
        %5786 = vmatpush1.bf16.msra.mxu0 %v4127
        %5787 = vmatprep.subr.bf16.mxu0 %v4130
        %5788 = vmatpush1.bf16.msra.mxu0 %v4129
        %5789 = vmatprep.subr.bf16.mxu0 %v4132
        %5790 = vmatpush1.bf16.msra.mxu0 %v4131
        %5791 = vmatprep.subr.bf16.mxu0 %v4134
        %5792 = vmatpush1.bf16.msra.mxu0 %v4133
        %5793 = vmatprep.subr.bf16.mxu0 %v4136
        %5794 = vmatpush1.bf16.msra.mxu0 %v4135
        %5795 = vmatprep.subr.bf16.mxu0 %v4138
        %5796 = vmatpush1.bf16.msra.mxu0 %v4137
        %5797 = vmatprep.subr.bf16.mxu0 %v4140
        %5798 = vmatpush1.bf16.msra.mxu0 %v4139
        %5799 = vmatprep.subr.bf16.mxu0 %v4142
        %5800 = vmatpush1.bf16.msra.mxu0 %v4141
        %5801 = vmatprep.subr.bf16.mxu0 %v4144
        %5802 = vmatpush1.bf16.msra.mxu0 %v4143
        %5803 = vmatprep.subr.bf16.mxu0 %v4146
        %5804 = vmatpush1.bf16.msra.mxu0 %v4145
        %5805 = vmatprep.subr.bf16.mxu0 %v4148
        %5806 = vmatpush1.bf16.msra.mxu0 %v4147
        %5807 = vmatprep.subr.bf16.mxu0 %v4150
        %5808 = vmatpush1.bf16.msra.mxu0 %v4149
        %5809 = vmatprep.subr.bf16.mxu0 %v4152
        %5810 = vmatpush1.bf16.msra.mxu0 %v4151
        %5811 = vmatprep.mubr.bf16.mxu0 %v1234
        %5812 = vmatmul.mubr.bf16.gmra.mrb[0].mxu0 %v1220
        %v5813 = vpop.f32.mrb[0].mxu0
        %v5814 = vadd.f32 %v5773, %v5813
        %v5815 = vpop.f32.mrb[0].mxu0
        %v5816 = vadd.f32 %v5775, %v5815
        %v5817 = vpop.f32.mrb[0].mxu0
        %v5818 = vpop.f32.mrb[0].mxu0
        %5819 = vdwg.mxu0
        %5820 = vmatprep.subr.bf16.mxu0 %v4154
        %5821 = vmatpush1.bf16.msra.mxu0 %v4153
        %5822 = vmatprep.subr.bf16.mxu0 %v4156
        %5823 = vmatpush1.bf16.msra.mxu0 %v4155
        %5824 = vmatprep.subr.bf16.mxu0 %v4158
        %5825 = vmatpush1.bf16.msra.mxu0 %v4157
        %5826 = vmatprep.subr.bf16.mxu0 %v4160
        %5827 = vmatpush1.bf16.msra.mxu0 %v4159
        %5828 = vmatprep.subr.bf16.mxu0 %v4162
        %5829 = vmatpush1.bf16.msra.mxu0 %v4161
        %5830 = vmatprep.subr.bf16.mxu0 %v4164
        %5831 = vmatpush1.bf16.msra.mxu0 %v4163
        %5832 = vmatprep.subr.bf16.mxu0 %v4166
        %5833 = vmatpush1.bf16.msra.mxu0 %v4165
        %5834 = vmatprep.subr.bf16.mxu0 %v4168
        %5835 = vmatpush1.bf16.msra.mxu0 %v4167
        %5836 = vmatprep.subr.bf16.mxu0 %v4170
        %5837 = vmatpush1.bf16.msra.mxu0 %v4169
        %5838 = vmatprep.subr.bf16.mxu0 %v4172
        %5839 = vmatpush1.bf16.msra.mxu0 %v4171
        %5840 = vmatprep.subr.bf16.mxu0 %v4174
        %5841 = vmatpush1.bf16.msra.mxu0 %v4173
        %5842 = vmatprep.subr.bf16.mxu0 %v4176
        %5843 = vmatpush1.bf16.msra.mxu0 %v4175
        %5844 = vmatprep.subr.bf16.mxu0 %v4178
        %5845 = vmatpush1.bf16.msra.mxu0 %v4177
        %5846 = vmatprep.subr.bf16.mxu0 %v4180
        %5847 = vmatpush1.bf16.msra.mxu0 %v4179
        %5848 = vmatprep.subr.bf16.mxu0 %v4182
        %5849 = vmatpush1.bf16.msra.mxu0 %v4181
        %5850 = vmatprep.subr.bf16.mxu0 %v4184
        %5851 = vmatpush1.bf16.msra.mxu0 %v4183
        %5852 = vmatprep.mubr.bf16.mxu0 %v1238
        %5853 = vmatmul.mubr.bf16.gmra.mrb[0].mxu0 %v1236
        %v5854 = vpop.f32.mrb[0].mxu0
        %v5855 = vadd.f32 %v5814, %v5854
        %v5856 = vpop.f32.mrb[0].mxu0
        %v5857 = vadd.f32 %v5816, %v5856
        %v5858 = vpop.f32.mrb[0].mxu0
        %v5859 = vpop.f32.mrb[0].mxu0
        %5860 = vdwg.mxu0
        %5861 = vmatprep.subr.bf16.mxu0 %v4186
        %5862 = vmatpush1.bf16.msra.mxu0 %v4185
        %5863 = vmatprep.subr.bf16.mxu0 %v4188
        %5864 = vmatpush1.bf16.msra.mxu0 %v4187
        %5865 = vmatprep.subr.bf16.mxu0 %v4190
        %5866 = vmatpush1.bf16.msra.mxu0 %v4189
        %5867 = vmatprep.subr.bf16.mxu0 %v4192
        %5868 = vmatpush1.bf16.msra.mxu0 %v4191
        %5869 = vmatprep.subr.bf16.mxu0 %v4194
        %5870 = vmatpush1.bf16.msra.mxu0 %v4193
        %5871 = vmatprep.subr.bf16.mxu0 %v4196
        %5872 = vmatpush1.bf16.msra.mxu0 %v4195
        %5873 = vmatprep.subr.bf16.mxu0 %v4198
        %5874 = vmatpush1.bf16.msra.mxu0 %v4197
        %5875 = vmatprep.subr.bf16.mxu0 %v4200
        %5876 = vmatpush1.bf16.msra.mxu0 %v4199
        %5877 = vmatprep.subr.bf16.mxu0 %v4202
        %5878 = vmatpush1.bf16.msra.mxu0 %v4201
        %5879 = vmatprep.subr.bf16.mxu0 %v4204
        %5880 = vmatpush1.bf16.msra.mxu0 %v4203
        %5881 = vmatprep.subr.bf16.mxu0 %v4206
        %5882 = vmatpush1.bf16.msra.mxu0 %v4205
        %5883 = vmatprep.subr.bf16.mxu0 %v4208
        %5884 = vmatpush1.bf16.msra.mxu0 %v4207
        %5885 = vmatprep.subr.bf16.mxu0 %v4210
        %5886 = vmatpush1.bf16.msra.mxu0 %v4209
        %5887 = vmatprep.subr.bf16.mxu0 %v4212
        %5888 = vmatpush1.bf16.msra.mxu0 %v4211
        %5889 = vmatprep.subr.bf16.mxu0 %v4214
        %5890 = vmatpush1.bf16.msra.mxu0 %v4213
        %5891 = vmatprep.subr.bf16.mxu0 %v4216
        %5892 = vmatpush1.bf16.msra.mxu0 %v4215
        %5893 = vmatprep.mubr.bf16.mxu0 %v1276
        %5894 = vmatmul.mubr.bf16.gmra.mrb[0].mxu0 %v1262
        %v5895 = vpop.f32.mrb[0].mxu0
        %v5896 = vadd.f32 %v5855, %v5895
        %v5897 = vpop.f32.mrb[0].mxu0
        %v5898 = vadd.f32 %v5857, %v5897
        %v5899 = vpop.f32.mrb[0].mxu0
        %v5900 = vpop.f32.mrb[0].mxu0
        %5901 = vdwg.mxu0
        %5902 = vmatprep.subr.bf16.mxu0 %v4218
        %5903 = vmatpush1.bf16.msra.mxu0 %v4217
        %5904 = vmatprep.subr.bf16.mxu0 %v4220
        %5905 = vmatpush1.bf16.msra.mxu0 %v4219
        %5906 = vmatprep.subr.bf16.mxu0 %v4222
        %5907 = vmatpush1.bf16.msra.mxu0 %v4221
        %5908 = vmatprep.subr.bf16.mxu0 %v4224
        %5909 = vmatpush1.bf16.msra.mxu0 %v4223
        %5910 = vmatprep.subr.bf16.mxu0 %v4226
        %5911 = vmatpush1.bf16.msra.mxu0 %v4225
        %5912 = vmatprep.subr.bf16.mxu0 %v4228
        %5913 = vmatpush1.bf16.msra.mxu0 %v4227
        %5914 = vmatprep.subr.bf16.mxu0 %v4230
        %5915 = vmatpush1.bf16.msra.mxu0 %v4229
        %5916 = vmatprep.subr.bf16.mxu0 %v4232
        %5917 = vmatpush1.bf16.msra.mxu0 %v4231
        %5918 = vmatprep.subr.bf16.mxu0 %v4234
        %5919 = vmatpush1.bf16.msra.mxu0 %v4233
        %5920 = vmatprep.subr.bf16.mxu0 %v4236
        %5921 = vmatpush1.bf16.msra.mxu0 %v4235
        %5922 = vmatprep.subr.bf16.mxu0 %v4238
        %5923 = vmatpush1.bf16.msra.mxu0 %v4237
        %5924 = vmatprep.subr.bf16.mxu0 %v4240
        %5925 = vmatpush1.bf16.msra.mxu0 %v4239
        %5926 = vmatprep.subr.bf16.mxu0 %v4242
        %5927 = vmatpush1.bf16.msra.mxu0 %v4241
        %5928 = vmatprep.subr.bf16.mxu0 %v4244
        %5929 = vmatpush1.bf16.msra.mxu0 %v4243
        %5930 = vmatprep.subr.bf16.mxu0 %v4246
        %5931 = vmatpush1.bf16.msra.mxu0 %v4245
        %5932 = vmatprep.subr.bf16.mxu0 %v4248
        %5933 = vmatpush1.bf16.msra.mxu0 %v4247
        %5934 = vmatprep.mubr.bf16.mxu0 %v1286
        %5935 = vmatmul.mubr.bf16.gmra.mrb[0].mxu0 %v1284
        %v5936 = vpop.f32.mrb[0].mxu0
        %v5937 = vadd.f32 %v5896, %v5936
        %v5938 = vpop.f32.mrb[0].mxu0
        %v5939 = vadd.f32 %v5898, %v5938
        %v5940 = vpop.f32.mrb[0].mxu0
        %v5941 = vpop.f32.mrb[0].mxu0
        %5942 = vdwg.mxu0
        %5943 = vmatprep.subr.bf16.mxu0 %v4250
        %5944 = vmatpush1.bf16.msra.mxu0 %v4249
        %5945 = vmatprep.subr.bf16.mxu0 %v4252
        %5946 = vmatpush1.bf16.msra.mxu0 %v4251
        %5947 = vmatprep.subr.bf16.mxu0 %v4254
        %5948 = vmatpush1.bf16.msra.mxu0 %v4253
        %5949 = vmatprep.subr.bf16.mxu0 %v4256
        %5950 = vmatpush1.bf16.msra.mxu0 %v4255
        %5951 = vmatprep.subr.bf16.mxu0 %v4258
        %5952 = vmatpush1.bf16.msra.mxu0 %v4257
        %5953 = vmatprep.subr.bf16.mxu0 %v4260
        %5954 = vmatpush1.bf16.msra.mxu0 %v4259
        %5955 = vmatprep.subr.bf16.mxu0 %v4262
        %5956 = vmatpush1.bf16.msra.mxu0 %v4261
        %5957 = vmatprep.subr.bf16.mxu0 %v4264
        %5958 = vmatpush1.bf16.msra.mxu0 %v4263
        %5959 = vmatprep.subr.bf16.mxu0 %v4266
        %5960 = vmatpush1.bf16.msra.mxu0 %v4265
        %5961 = vmatprep.subr.bf16.mxu0 %v4268
        %5962 = vmatpush1.bf16.msra.mxu0 %v4267
        %5963 = vmatprep.subr.bf16.mxu0 %v4270
        %5964 = vmatpush1.bf16.msra.mxu0 %v4269
        %5965 = vmatprep.subr.bf16.mxu0 %v4272
        %5966 = vmatpush1.bf16.msra.mxu0 %v4271
        %5967 = vmatprep.subr.bf16.mxu0 %v4274
        %5968 = vmatpush1.bf16.msra.mxu0 %v4273
        %5969 = vmatprep.subr.bf16.mxu0 %v4276
        %5970 = vmatpush1.bf16.msra.mxu0 %v4275
        %5971 = vmatprep.subr.bf16.mxu0 %v4278
        %5972 = vmatpush1.bf16.msra.mxu0 %v4277
        %5973 = vmatprep.subr.bf16.mxu0 %v4280
        %5974 = vmatpush1.bf16.msra.mxu0 %v4279
        %5975 = vmatprep.mubr.bf16.mxu0 %v1283
        %5976 = vmatmul.mubr.bf16.gmra.mrb[0].mxu0 %v1269
        %v5977 = vpop.f32.mrb[0].mxu0
        %v5978 = vadd.f32 %v5937, %v5977
        %v5979 = vpop.f32.mrb[0].mxu0
        %v5980 = vadd.f32 %v5939, %v5979
        %v5981 = vpop.f32.mrb[0].mxu0
        %v5982 = vpop.f32.mrb[0].mxu0
        %5983 = vdwg.mxu0
        %5984 = vmatprep.subr.bf16.mxu0 %v4282
        %5985 = vmatpush1.bf16.msra.mxu0 %v4281
        %5986 = vmatprep.subr.bf16.mxu0 %v4284
        %5987 = vmatpush1.bf16.msra.mxu0 %v4283
        %5988 = vmatprep.subr.bf16.mxu0 %v4286
        %5989 = vmatpush1.bf16.msra.mxu0 %v4285
        %5990 = vmatprep.subr.bf16.mxu0 %v4288
        %5991 = vmatpush1.bf16.msra.mxu0 %v4287
        %5992 = vmatprep.subr.bf16.mxu0 %v4290
        %5993 = vmatpush1.bf16.msra.mxu0 %v4289
        %5994 = vmatprep.subr.bf16.mxu0 %v4292
        %5995 = vmatpush1.bf16.msra.mxu0 %v4291
        %5996 = vmatprep.subr.bf16.mxu0 %v4294
        %5997 = vmatpush1.bf16.msra.mxu0 %v4293
        %5998 = vmatprep.subr.bf16.mxu0 %v4296
        %5999 = vmatpush1.bf16.msra.mxu0 %v4295
        %6000 = vmatprep.subr.bf16.mxu0 %v4298
        %6001 = vmatpush1.bf16.msra.mxu0 %v4297
        %6002 = vmatprep.subr.bf16.mxu0 %v4300
        %6003 = vmatpush1.bf16.msra.mxu0 %v4299
        %6004 = vmatprep.subr.bf16.mxu0 %v4302
        %6005 = vmatpush1.bf16.msra.mxu0 %v4301
        %6006 = vmatprep.subr.bf16.mxu0 %v4304
        %6007 = vmatpush1.bf16.msra.mxu0 %v4303
        %6008 = vmatprep.subr.bf16.mxu0 %v4306
        %6009 = vmatpush1.bf16.msra.mxu0 %v4305
        %6010 = vmatprep.subr.bf16.mxu0 %v4308
        %6011 = vmatpush1.bf16.msra.mxu0 %v4307
        %6012 = vmatprep.subr.bf16.mxu0 %v4310
        %6013 = vmatpush1.bf16.msra.mxu0 %v4309
        %6014 = vmatprep.subr.bf16.mxu0 %v4312
        %6015 = vmatpush1.bf16.msra.mxu0 %v4311
        %6016 = vmatprep.mubr.bf16.mxu0 %v1287
        %6017 = vmatmul.mubr.bf16.gmra.mrb[0].mxu0 %v1285
        %v6018 = vpop.f32.mrb[0].mxu0
        %v6019 = vadd.f32 %v5978, %v6018
        %v6020 = vpop.f32.mrb[0].mxu0
        %v6021 = vadd.f32 %v5980, %v6020
        %v6022 = vpop.f32.mrb[0].mxu0
        %v6023 = vpop.f32.mrb[0].mxu0
        %6024 = vdwg.mxu0
        %6025 = vmatprep.subr.bf16.mxu0 %v4314
        %6026 = vmatpush1.bf16.msra.mxu0 %v4313
        %6027 = vmatprep.subr.bf16.mxu0 %v4316
        %6028 = vmatpush1.bf16.msra.mxu0 %v4315
        %6029 = vmatprep.subr.bf16.mxu0 %v4318
        %6030 = vmatpush1.bf16.msra.mxu0 %v4317
        %6031 = vmatprep.subr.bf16.mxu0 %v4320
        %6032 = vmatpush1.bf16.msra.mxu0 %v4319
        %6033 = vmatprep.subr.bf16.mxu0 %v4322
        %6034 = vmatpush1.bf16.msra.mxu0 %v4321
        %6035 = vmatprep.subr.bf16.mxu0 %v4324
        %6036 = vmatpush1.bf16.msra.mxu0 %v4323
        %6037 = vmatprep.subr.bf16.mxu0 %v4326
        %6038 = vmatpush1.bf16.msra.mxu0 %v4325
        %6039 = vmatprep.subr.bf16.mxu0 %v4328
        %6040 = vmatpush1.bf16.msra.mxu0 %v4327
        %6041 = vmatprep.subr.bf16.mxu0 %v4330
        %6042 = vmatpush1.bf16.msra.mxu0 %v4329
        %6043 = vmatprep.subr.bf16.mxu0 %v4332
        %6044 = vmatpush1.bf16.msra.mxu0 %v4331
        %6045 = vmatprep.subr.bf16.mxu0 %v4334
        %6046 = vmatpush1.bf16.msra.mxu0 %v4333
        %6047 = vmatprep.subr.bf16.mxu0 %v4336
        %6048 = vmatpush1.bf16.msra.mxu0 %v4335
        %6049 = vmatprep.subr.bf16.mxu0 %v4338
        %6050 = vmatpush1.bf16.msra.mxu0 %v4337
        %6051 = vmatprep.subr.bf16.mxu0 %v4340
        %6052 = vmatpush1.bf16.msra.mxu0 %v4339
        %6053 = vmatprep.subr.bf16.mxu0 %v4342
        %6054 = vmatpush1.bf16.msra.mxu0 %v4341
        %6055 = vmatprep.subr.bf16.mxu0 %v4344
        %6056 = vmatpush1.bf16.msra.mxu0 %v4343
        %6057 = vmatprep.mubr.bf16.mxu0 %v1325
        %6058 = vmatmul.mubr.bf16.gmra.mrb[0].mxu0 %v1311
        %v6059 = vpop.f32.mrb[0].mxu0
        %v6060 = vadd.f32 %v6019, %v6059
        %v6061 = vpop.f32.mrb[0].mxu0
        %v6062 = vadd.f32 %v6021, %v6061
        %v6063 = vpop.f32.mrb[0].mxu0
        %v6064 = vpop.f32.mrb[0].mxu0
        %6065 = vdwg.mxu0
        %6066 = vmatprep.subr.bf16.mxu0 %v4346
        %6067 = vmatpush1.bf16.msra.mxu0 %v4345
        %6068 = vmatprep.subr.bf16.mxu0 %v4348
        %6069 = vmatpush1.bf16.msra.mxu0 %v4347
        %6070 = vmatprep.subr.bf16.mxu0 %v4350
        %6071 = vmatpush1.bf16.msra.mxu0 %v4349
        %6072 = vmatprep.subr.bf16.mxu0 %v4352
        %6073 = vmatpush1.bf16.msra.mxu0 %v4351
        %6074 = vmatprep.subr.bf16.mxu0 %v4354
        %6075 = vmatpush1.bf16.msra.mxu0 %v4353
        %6076 = vmatprep.subr.bf16.mxu0 %v4356
        %6077 = vmatpush1.bf16.msra.mxu0 %v4355
        %6078 = vmatprep.subr.bf16.mxu0 %v4358
        %6079 = vmatpush1.bf16.msra.mxu0 %v4357
        %6080 = vmatprep.subr.bf16.mxu0 %v4360
        %6081 = vmatpush1.bf16.msra.mxu0 %v4359
        %6082 = vmatprep.subr.bf16.mxu0 %v4362
        %6083 = vmatpush1.bf16.msra.mxu0 %v4361
        %6084 = vmatprep.subr.bf16.mxu0 %v4364
        %6085 = vmatpush1.bf16.msra.mxu0 %v4363
        %6086 = vmatprep.subr.bf16.mxu0 %v4366
        %6087 = vmatpush1.bf16.msra.mxu0 %v4365
        %6088 = vmatprep.subr.bf16.mxu0 %v4368
        %6089 = vmatpush1.bf16.msra.mxu0 %v4367
        %6090 = vmatprep.subr.bf16.mxu0 %v4370
        %6091 = vmatpush1.bf16.msra.mxu0 %v4369
        %6092 = vmatprep.subr.bf16.mxu0 %v4372
        %6093 = vmatpush1.bf16.msra.mxu0 %v4371
        %6094 = vmatprep.subr.bf16.mxu0 %v4374
        %6095 = vmatpush1.bf16.msra.mxu0 %v4373
        %6096 = vmatprep.subr.bf16.mxu0 %v4376
        %6097 = vmatpush1.bf16.msra.mxu0 %v4375
        %6098 = vmatprep.mubr.bf16.mxu0 %v1335
        %6099 = vmatmul.mubr.bf16.gmra.mrb[0].mxu0 %v1333
        %v6100 = vpop.f32.mrb[0].mxu0
        %v6101 = vadd.f32 %v6060, %v6100
        %v6102 = vpop.f32.mrb[0].mxu0
        %v6103 = vadd.f32 %v6062, %v6102
        %v6104 = vpop.f32.mrb[0].mxu0
        %v6105 = vpop.f32.mrb[0].mxu0
        %6106 = vdwg.mxu0
        %6107 = vmatprep.subr.bf16.mxu0 %v4378
        %6108 = vmatpush1.bf16.msra.mxu0 %v4377
        %6109 = vmatprep.subr.bf16.mxu0 %v4380
        %6110 = vmatpush1.bf16.msra.mxu0 %v4379
        %6111 = vmatprep.subr.bf16.mxu0 %v4382
        %6112 = vmatpush1.bf16.msra.mxu0 %v4381
        %6113 = vmatprep.subr.bf16.mxu0 %v4384
        %6114 = vmatpush1.bf16.msra.mxu0 %v4383
        %6115 = vmatprep.subr.bf16.mxu0 %v4386
        %6116 = vmatpush1.bf16.msra.mxu0 %v4385
        %6117 = vmatprep.subr.bf16.mxu0 %v4388
        %6118 = vmatpush1.bf16.msra.mxu0 %v4387
        %6119 = vmatprep.subr.bf16.mxu0 %v4390
        %6120 = vmatpush1.bf16.msra.mxu0 %v4389
        %6121 = vmatprep.subr.bf16.mxu0 %v4392
        %6122 = vmatpush1.bf16.msra.mxu0 %v4391
        %6123 = vmatprep.subr.bf16.mxu0 %v4394
        %6124 = vmatpush1.bf16.msra.mxu0 %v4393
        %6125 = vmatprep.subr.bf16.mxu0 %v4396
        %6126 = vmatpush1.bf16.msra.mxu0 %v4395
        %6127 = vmatprep.subr.bf16.mxu0 %v4398
        %6128 = vmatpush1.bf16.msra.mxu0 %v4397
        %6129 = vmatprep.subr.bf16.mxu0 %v4400
        %6130 = vmatpush1.bf16.msra.mxu0 %v4399
        %6131 = vmatprep.subr.bf16.mxu0 %v4402
        %6132 = vmatpush1.bf16.msra.mxu0 %v4401
        %6133 = vmatprep.subr.bf16.mxu0 %v4404
        %6134 = vmatpush1.bf16.msra.mxu0 %v4403
        %6135 = vmatprep.subr.bf16.mxu0 %v4406
        %6136 = vmatpush1.bf16.msra.mxu0 %v4405
        %6137 = vmatprep.subr.bf16.mxu0 %v4408
        %6138 = vmatpush1.bf16.msra.mxu0 %v4407
        %6139 = vmatprep.mubr.bf16.mxu0 %v1332
        %6140 = vmatmul.mubr.bf16.gmra.mrb[0].mxu0 %v1318
        %v6141 = vpop.f32.mrb[0].mxu0
        %v6142 = vadd.f32 %v6101, %v6141
        %v6143 = vpop.f32.mrb[0].mxu0
        %v6144 = vadd.f32 %v6103, %v6143
        %v6145 = vpop.f32.mrb[0].mxu0
        %v6146 = vpop.f32.mrb[0].mxu0
        %6147 = vdwg.mxu0
        %6148 = vmatprep.subr.bf16.mxu0 %v4410
        %6149 = vmatpush1.bf16.msra.mxu0 %v4409
        %6150 = vmatprep.subr.bf16.mxu0 %v4412
        %6151 = vmatpush1.bf16.msra.mxu0 %v4411
        %6152 = vmatprep.subr.bf16.mxu0 %v4414
        %6153 = vmatpush1.bf16.msra.mxu0 %v4413
        %6154 = vmatprep.subr.bf16.mxu0 %v4416
        %6155 = vmatpush1.bf16.msra.mxu0 %v4415
        %6156 = vmatprep.subr.bf16.mxu0 %v4418
        %6157 = vmatpush1.bf16.msra.mxu0 %v4417
        %6158 = vmatprep.subr.bf16.mxu0 %v4420
        %6159 = vmatpush1.bf16.msra.mxu0 %v4419
        %6160 = vmatprep.subr.bf16.mxu0 %v4422
        %6161 = vmatpush1.bf16.msra.mxu0 %v4421
        %6162 = vmatprep.subr.bf16.mxu0 %v4424
        %6163 = vmatpush1.bf16.msra.mxu0 %v4423
        %6164 = vmatprep.subr.bf16.mxu0 %v4426
        %6165 = vmatpush1.bf16.msra.mxu0 %v4425
        %6166 = vmatprep.subr.bf16.mxu0 %v4428
        %6167 = vmatpush1.bf16.msra.mxu0 %v4427
        %6168 = vmatprep.subr.bf16.mxu0 %v4430
        %6169 = vmatpush1.bf16.msra.mxu0 %v4429
        %6170 = vmatprep.subr.bf16.mxu0 %v4432
        %6171 = vmatpush1.bf16.msra.mxu0 %v4431
        %6172 = vmatprep.subr.bf16.mxu0 %v4434
        %6173 = vmatpush1.bf16.msra.mxu0 %v4433
        %6174 = vmatprep.subr.bf16.mxu0 %v4436
        %6175 = vmatpush1.bf16.msra.mxu0 %v4435
        %6176 = vmatprep.subr.bf16.mxu0 %v4438
        %6177 = vmatpush1.bf16.msra.mxu0 %v4437
        %6178 = vmatprep.subr.bf16.mxu0 %v4440
        %6179 = vmatpush1.bf16.msra.mxu0 %v4439
        %6180 = vmatprep.mubr.bf16.mxu0 %v1336
        %6181 = vmatmul.mubr.bf16.gmra.mrb[0].mxu0 %v1334
        %v6182 = vpop.f32.mrb[0].mxu0
        %v6183 = vadd.f32 %v6142, %v6182
        %v6184 = vpop.f32.mrb[0].mxu0
        %v6185 = vadd.f32 %v6144, %v6184
        %v6186 = vpop.f32.mrb[0].mxu0
        %v6187 = vpop.f32.mrb[0].mxu0
        %6188 = vdwg.mxu0
        %6189 = vmatprep.subr.bf16.mxu0 %v4442
        %6190 = vmatpush1.bf16.msra.mxu0 %v4441
        %6191 = vmatprep.subr.bf16.mxu0 %v4444
        %6192 = vmatpush1.bf16.msra.mxu0 %v4443
        %6193 = vmatprep.subr.bf16.mxu0 %v4446
        %6194 = vmatpush1.bf16.msra.mxu0 %v4445
        %6195 = vmatprep.subr.bf16.mxu0 %v4448
        %6196 = vmatpush1.bf16.msra.mxu0 %v4447
        %6197 = vmatprep.subr.bf16.mxu0 %v4450
        %6198 = vmatpush1.bf16.msra.mxu0 %v4449
        %6199 = vmatprep.subr.bf16.mxu0 %v4452
        %6200 = vmatpush1.bf16.msra.mxu0 %v4451
        %6201 = vmatprep.subr.bf16.mxu0 %v4454
        %6202 = vmatpush1.bf16.msra.mxu0 %v4453
        %6203 = vmatprep.subr.bf16.mxu0 %v4456
        %6204 = vmatpush1.bf16.msra.mxu0 %v4455
        %6205 = vmatprep.subr.bf16.mxu0 %v4458
        %6206 = vmatpush1.bf16.msra.mxu0 %v4457
        %6207 = vmatprep.subr.bf16.mxu0 %v4460
        %6208 = vmatpush1.bf16.msra.mxu0 %v4459
        %6209 = vmatprep.subr.bf16.mxu0 %v4462
        %6210 = vmatpush1.bf16.msra.mxu0 %v4461
        %6211 = vmatprep.subr.bf16.mxu0 %v4464
        %6212 = vmatpush1.bf16.msra.mxu0 %v4463
        %6213 = vmatprep.subr.bf16.mxu0 %v4466
        %6214 = vmatpush1.bf16.msra.mxu0 %v4465
        %6215 = vmatprep.subr.bf16.mxu0 %v4468
        %6216 = vmatpush1.bf16.msra.mxu0 %v4467
        %6217 = vmatprep.subr.bf16.mxu0 %v4470
        %6218 = vmatpush1.bf16.msra.mxu0 %v4469
        %6219 = vmatprep.subr.bf16.mxu0 %v4472
        %6220 = vmatpush1.bf16.msra.mxu0 %v4471
        %6221 = vmatprep.mubr.bf16.mxu0 %v1374
        %6222 = vmatmul.mubr.bf16.gmra.mrb[0].mxu0 %v1360
        %v6223 = vpop.f32.mrb[0].mxu0
        %v6224 = vadd.f32 %v6183, %v6223
        %v6225 = vpop.f32.mrb[0].mxu0
        %v6226 = vadd.f32 %v6185, %v6225
        %v6227 = vpop.f32.mrb[0].mxu0
        %v6228 = vpop.f32.mrb[0].mxu0
        %6229 = vdwg.mxu0
        %6230 = vmatprep.subr.bf16.mxu0 %v4474
        %6231 = vmatpush1.bf16.msra.mxu0 %v4473
        %6232 = vmatprep.subr.bf16.mxu0 %v4476
        %6233 = vmatpush1.bf16.msra.mxu0 %v4475
        %6234 = vmatprep.subr.bf16.mxu0 %v4478
        %6235 = vmatpush1.bf16.msra.mxu0 %v4477
        %6236 = vmatprep.subr.bf16.mxu0 %v4480
        %6237 = vmatpush1.bf16.msra.mxu0 %v4479
        %6238 = vmatprep.subr.bf16.mxu0 %v4482
        %6239 = vmatpush1.bf16.msra.mxu0 %v4481
        %6240 = vmatprep.subr.bf16.mxu0 %v4484
        %6241 = vmatpush1.bf16.msra.mxu0 %v4483
        %6242 = vmatprep.subr.bf16.mxu0 %v4486
        %6243 = vmatpush1.bf16.msra.mxu0 %v4485
        %6244 = vmatprep.subr.bf16.mxu0 %v4488
        %6245 = vmatpush1.bf16.msra.mxu0 %v4487
        %6246 = vmatprep.subr.bf16.mxu0 %v4490
        %6247 = vmatpush1.bf16.msra.mxu0 %v4489
        %6248 = vmatprep.subr.bf16.mxu0 %v4492
        %6249 = vmatpush1.bf16.msra.mxu0 %v4491
        %6250 = vmatprep.subr.bf16.mxu0 %v4494
        %6251 = vmatpush1.bf16.msra.mxu0 %v4493
        %6252 = vmatprep.subr.bf16.mxu0 %v4496
        %6253 = vmatpush1.bf16.msra.mxu0 %v4495
        %6254 = vmatprep.subr.bf16.mxu0 %v4498
        %6255 = vmatpush1.bf16.msra.mxu0 %v4497
        %6256 = vmatprep.subr.bf16.mxu0 %v4500
        %6257 = vmatpush1.bf16.msra.mxu0 %v4499
        %6258 = vmatprep.subr.bf16.mxu0 %v4502
        %6259 = vmatpush1.bf16.msra.mxu0 %v4501
        %6260 = vmatprep.subr.bf16.mxu0 %v4504
        %6261 = vmatpush1.bf16.msra.mxu0 %v4503
        %6262 = vmatprep.mubr.bf16.mxu0 %v1384
        %6263 = vmatmul.mubr.bf16.gmra.mrb[0].mxu0 %v1382
        %v6264 = vpop.f32.mrb[0].mxu0
        %v6265 = vadd.f32 %v6224, %v6264
        %v6266 = vpop.f32.mrb[0].mxu0
        %v6267 = vadd.f32 %v6226, %v6266
        %v6268 = vpop.f32.mrb[0].mxu0
        %v6269 = vpop.f32.mrb[0].mxu0
        %6270 = vdwg.mxu0
        %6271 = vmatprep.subr.bf16.mxu0 %v4506
        %6272 = vmatpush1.bf16.msra.mxu0 %v4505
        %6273 = vmatprep.subr.bf16.mxu0 %v4508
        %6274 = vmatpush1.bf16.msra.mxu0 %v4507
        %6275 = vmatprep.subr.bf16.mxu0 %v4510
        %6276 = vmatpush1.bf16.msra.mxu0 %v4509
        %6277 = vmatprep.subr.bf16.mxu0 %v4512
        %6278 = vmatpush1.bf16.msra.mxu0 %v4511
        %6279 = vmatprep.subr.bf16.mxu0 %v4514
        %6280 = vmatpush1.bf16.msra.mxu0 %v4513
        %6281 = vmatprep.subr.bf16.mxu0 %v4516
        %6282 = vmatpush1.bf16.msra.mxu0 %v4515
        %6283 = vmatprep.subr.bf16.mxu0 %v4518
        %6284 = vmatpush1.bf16.msra.mxu0 %v4517
        %6285 = vmatprep.subr.bf16.mxu0 %v4520
        %6286 = vmatpush1.bf16.msra.mxu0 %v4519
        %6287 = vmatprep.subr.bf16.mxu0 %v4522
        %6288 = vmatpush1.bf16.msra.mxu0 %v4521
        %6289 = vmatprep.subr.bf16.mxu0 %v4524
        %6290 = vmatpush1.bf16.msra.mxu0 %v4523
        %6291 = vmatprep.subr.bf16.mxu0 %v4526
        %6292 = vmatpush1.bf16.msra.mxu0 %v4525
        %6293 = vmatprep.subr.bf16.mxu0 %v4528
        %6294 = vmatpush1.bf16.msra.mxu0 %v4527
        %6295 = vmatprep.subr.bf16.mxu0 %v4530
        %6296 = vmatpush1.bf16.msra.mxu0 %v4529
        %6297 = vmatprep.subr.bf16.mxu0 %v4532
        %6298 = vmatpush1.bf16.msra.mxu0 %v4531
        %6299 = vmatprep.subr.bf16.mxu0 %v4534
        %6300 = vmatpush1.bf16.msra.mxu0 %v4533
        %6301 = vmatprep.subr.bf16.mxu0 %v4536
        %6302 = vmatpush1.bf16.msra.mxu0 %v4535
        %6303 = vmatprep.mubr.bf16.mxu0 %v1381
        %6304 = vmatmul.mubr.bf16.gmra.mrb[0].mxu0 %v1367
        %v6305 = vpop.f32.mrb[0].mxu0
        %v6306 = vadd.f32 %v6265, %v6305
        %v6307 = vpop.f32.mrb[0].mxu0
        %v6308 = vadd.f32 %v6267, %v6307
        %v6309 = vpop.f32.mrb[0].mxu0
        %v6310 = vpop.f32.mrb[0].mxu0
        %6311 = vdwg.mxu0
        %6312 = vmatprep.subr.bf16.mxu0 %v4538
        %6313 = vmatpush1.bf16.msra.mxu0 %v4537
        %6314 = vmatprep.subr.bf16.mxu0 %v4540
        %6315 = vmatpush1.bf16.msra.mxu0 %v4539
        %6316 = vmatprep.subr.bf16.mxu0 %v4542
        %6317 = vmatpush1.bf16.msra.mxu0 %v4541
        %6318 = vmatprep.subr.bf16.mxu0 %v4544
        %6319 = vmatpush1.bf16.msra.mxu0 %v4543
        %6320 = vmatprep.subr.bf16.mxu0 %v4546
        %6321 = vmatpush1.bf16.msra.mxu0 %v4545
        %6322 = vmatprep.subr.bf16.mxu0 %v4548
        %6323 = vmatpush1.bf16.msra.mxu0 %v4547
        %6324 = vmatprep.subr.bf16.mxu0 %v4550
        %6325 = vmatpush1.bf16.msra.mxu0 %v4549
        %6326 = vmatprep.subr.bf16.mxu0 %v4552
        %6327 = vmatpush1.bf16.msra.mxu0 %v4551
        %6328 = vmatprep.subr.bf16.mxu0 %v4554
        %6329 = vmatpush1.bf16.msra.mxu0 %v4553
        %6330 = vmatprep.subr.bf16.mxu0 %v4556
        %6331 = vmatpush1.bf16.msra.mxu0 %v4555
        %6332 = vmatprep.subr.bf16.mxu0 %v4558
        %6333 = vmatpush1.bf16.msra.mxu0 %v4557
        %6334 = vmatprep.subr.bf16.mxu0 %v4560
        %6335 = vmatpush1.bf16.msra.mxu0 %v4559
        %6336 = vmatprep.subr.bf16.mxu0 %v4562
        %6337 = vmatpush1.bf16.msra.mxu0 %v4561
        %6338 = vmatprep.subr.bf16.mxu0 %v4564
        %6339 = vmatpush1.bf16.msra.mxu0 %v4563
        %6340 = vmatprep.subr.bf16.mxu0 %v4566
        %6341 = vmatpush1.bf16.msra.mxu0 %v4565
        %6342 = vmatprep.subr.bf16.mxu0 %v4568
        %6343 = vmatpush1.bf16.msra.mxu0 %v4567
        %6344 = vmatprep.mubr.bf16.mxu0 %v1385
        %6345 = vmatmul.mubr.bf16.gmra.mrb[0].mxu0 %v1383
        %v6346 = vpop.f32.mrb[0].mxu0
        %v6347 = vadd.f32 %v6306, %v6346
        %v6348 = vpop.f32.mrb[0].mxu0
        %v6349 = vadd.f32 %v6308, %v6348
        %v6350 = vpop.f32.mrb[0].mxu0
        %v6351 = vpop.f32.mrb[0].mxu0
        %6352 = vdwg.mxu0
        %6353 = vmatprep.subr.bf16.mxu0 %v4570
        %6354 = vmatpush1.bf16.msra.mxu0 %v4569
        %6355 = vmatprep.subr.bf16.mxu0 %v4572
        %6356 = vmatpush1.bf16.msra.mxu0 %v4571
        %6357 = vmatprep.subr.bf16.mxu0 %v4574
        %6358 = vmatpush1.bf16.msra.mxu0 %v4573
        %6359 = vmatprep.subr.bf16.mxu0 %v4576
        %6360 = vmatpush1.bf16.msra.mxu0 %v4575
        %6361 = vmatprep.subr.bf16.mxu0 %v4578
        %6362 = vmatpush1.bf16.msra.mxu0 %v4577
        %6363 = vmatprep.subr.bf16.mxu0 %v4580
        %6364 = vmatpush1.bf16.msra.mxu0 %v4579
        %6365 = vmatprep.subr.bf16.mxu0 %v4582
        %6366 = vmatpush1.bf16.msra.mxu0 %v4581
        %6367 = vmatprep.subr.bf16.mxu0 %v4584
        %6368 = vmatpush1.bf16.msra.mxu0 %v4583
        %6369 = vmatprep.subr.bf16.mxu0 0
        %6370 = vmatpush1.bf16.msra.mxu0 0
        %6371 = vmatprep.subr.bf16.mxu0 0
        %6372 = vmatpush1.bf16.msra.mxu0 0
        %6373 = vmatprep.subr.bf16.mxu0 0
        %6374 = vmatpush1.bf16.msra.mxu0 0
        %6375 = vmatprep.subr.bf16.mxu0 0
        %6376 = vmatpush1.bf16.msra.mxu0 0
        %6377 = vmatprep.subr.bf16.mxu0 0
        %6378 = vmatpush1.bf16.msra.mxu0 0
        %6379 = vmatprep.subr.bf16.mxu0 0
        %6380 = vmatpush1.bf16.msra.mxu0 0
        %6381 = vmatprep.subr.bf16.mxu0 0
        %6382 = vmatpush1.bf16.msra.mxu0 0
        %6383 = vmatprep.subr.bf16.mxu0 0
        %6384 = vmatpush1.bf16.msra.mxu0 0
        %6385 = vmatprep.mubr.bf16.mxu0 0
        %6386 = vmatmul.mubr.bf16.gmra.mrb[0].mxu0 %v1399
        %v6387 = vpop.f32.mrb[0].mxu0
        %v6388 = vadd.f32 %v6347, %v6387
        %v6389 = vpop.f32.mrb[0].mxu0
        %v6390 = vadd.f32 %v6349, %v6389
        %v6391 = vpop.f32.mrb[0].mxu0
        %v6392 = vpop.f32.mrb[0].mxu0
        %6393 = vdwg.mxu0
        %vm6394 = vcmp.ge.f32.partialorder %v6388, 0.0
        %vm6395 = vcmp.ge.f32.partialorder %v6390, 0.0
        %v6396 = vmul.f32 %v6388, 0.1
        %v6397 = vmul.f32 %v6390, 0.1
        %v6398 = vsel %vm6394, %v6388, %v6396
        %v6399 = vsel %vm6395, %v6390, %v6397
        %s6400 = scalar_lea.vmem %s267, 1
        %v6401 = vld [vmem:[%s6400] ss:$4 sm:$0x3]
        %s6402 = scalar_lea.vmem %s267, 2
        %v6403 = vld [vmem:[%s6402] ss:$4 sm:$0x3]
        %vm6404 = vcmask 1041408
        %v6405 = vsel %vm6404, %v6398, 0.0
        %v6406 = vrot.slane %v6405, 4
        %v6407 = vadd.f32 %v6405, %v6406
        %v6408 = vrot.slane %v6407, 2
        %v6409 = vadd.f32 %v6407, %v6408
        %v6410 = vrot.slane %v6409, 1
        %v6411 = vadd.f32 %v6409, %v6410
        %v6412 = vsel %vm6404, %v6399, 0.0
        %v6413 = vrot.slane %v6412, 4
        %v6414 = vadd.f32 %v6412, %v6413
        %v6415 = vrot.slane %v6414, 2
        %v6416 = vadd.f32 %v6414, %v6415
        %v6417 = vrot.slane %v6416, 1
        %v6418 = vadd.f32 %v6416, %v6417
        %v6419 = vrcp.pop 2.0
        %v6420 = vmul.f32 %v6411, %v6419
        %v6421 = vmul.f32 %v6418, %v6419
        %v6422 = vsub.f32 %v6398, %v6420
        %v6423 = vsub.f32 %v6399, %v6421
        %v6424 = vmul.f32 %v6422, %v6422
        %v6425 = vmul.f32 %v6423, %v6423
        %v6426 = vsel %vm6404, %v6424, 0.0
        %v6427 = vrot.slane %v6426, 4
        %v6428 = vadd.f32 %v6426, %v6427
        %v6429 = vrot.slane %v6428, 2
        %v6430 = vadd.f32 %v6428, %v6429
        %v6431 = vrot.slane %v6430, 1
        %v6432 = vadd.f32 %v6430, %v6431
        %v6433 = vsel %vm6404, %v6425, 0.0
        %v6434 = vrot.slane %v6433, 4
        %v6435 = vadd.f32 %v6433, %v6434
        %v6436 = vrot.slane %v6435, 2
        %v6437 = vadd.f32 %v6435, %v6436
        %v6438 = vrot.slane %v6437, 1
        %v6439 = vadd.f32 %v6437, %v6438
        %v6440 = vmul.f32 %v6432, %v6419
        %v6441 = vmul.f32 %v6439, %v6419
        %v6442 = vadd.f32 %v6440, 1e-05
        %v6443 = vadd.f32 %v6441, 1e-05
        %v6444 = vrsqrt.pop %v6442
        %v6445 = vrsqrt.pop %v6443
        %v6446 = vmul.f32 %v6422, %v6444
        %v6447 = vmul.f32 %v6423, %v6445
        %v6449 = vlaneseq
        %v6450 = vshrl.u32 %v6449, 7
        %v6451 = vsub.s32 0, %v6450
        %v6452 = vrot.slane %v6401, %v6451
        %v6453 = vlaneseq
        %v6454 = vshrl.u32 %v6453, 7
        %v6455 = vsub.s32 1, %v6454
        %v6456 = vrot.slane %v6401, %v6455
        %v6459 = vmul.f32 %v6446, %v6452
        %v6460 = vmul.f32 %v6447, %v6456
        %v6462 = vlaneseq
        %v6463 = vshrl.u32 %v6462, 7
        %v6464 = vsub.s32 0, %v6463
        %v6465 = vrot.slane %v6403, %v6464
        %v6466 = vlaneseq
        %v6467 = vshrl.u32 %v6466, 7
        %v6468 = vsub.s32 1, %v6467
        %v6469 = vrot.slane %v6403, %v6468
        %v6472 = vadd.f32 %v6459, %v6465
        %v6473 = vadd.f32 %v6460, %v6469
        %v6474 = vld [vmem:[%s5] sm:$0x3]
        %v6475 = vld [vmem:[%s273] sm:$0xf]
        %v6476 = vld [vmem:[%s273 + $0x4] sm:$0xf]
        %v6477 = vld [vmem:[%s273 + $0x8] sm:$0xf]
        %v6478 = vld [vmem:[%s273 + $0xc] sm:$0xf]
        %v6479 = vld [vmem:[%s273 + $0x10] sm:$0xf]
        %v6480 = vld [vmem:[%s273 + $0x14] sm:$0xf]
        %v6481 = vld [vmem:[%s273 + $0x18] sm:$0xf]
        %v6482 = vld [vmem:[%s273 + $0x1c] sm:$0xf]
        %v6483 = vld [vmem:[%s273 + $0x20] sm:$0xf]
        %v6484 = vld [vmem:[%s273 + $0x24] sm:$0xf]
        %v6485 = vld [vmem:[%s273 + $0x28] sm:$0xf]
        %v6486 = vld [vmem:[%s273 + $0x2c] sm:$0xf]
        %v6487 = vld [vmem:[%s273 + $0x30] sm:$0xf]
        %v6488 = vld [vmem:[%s273 + $0x34] sm:$0xf]
        %v6489 = vld [vmem:[%s273 + $0x38] sm:$0xf]
        %v6490 = vld [vmem:[%s273 + $0x3c] sm:$0xf]
        %v6491 = vld [vmem:[%s273 + $0x40] sm:$0xf]
        %v6492 = vld [vmem:[%s273 + $0x44] sm:$0xf]
        %v6493 = vld [vmem:[%s273 + $0x48] sm:$0xf]
        %v6494 = vld [vmem:[%s273 + $0x4c] sm:$0xf]
        %v6495 = vld [vmem:[%s273 + $0x50] sm:$0xf]
        %v6496 = vld [vmem:[%s273 + $0x54] sm:$0xf]
        %v6497 = vld [vmem:[%s273 + $0x58] sm:$0xf]
        %v6498 = vld [vmem:[%s273 + $0x5c] sm:$0xf]
        %v6499 = vld [vmem:[%s273 + $0x60] sm:$0xf]
        %v6500 = vld [vmem:[%s273 + $0x64] sm:$0xf]
        %v6501 = vld [vmem:[%s273 + $0x68] sm:$0xf]
        %v6502 = vld [vmem:[%s273 + $0x6c] sm:$0xf]
        %v6503 = vld [vmem:[%s273 + $0x70] sm:$0xf]
        %v6504 = vld [vmem:[%s273 + $0x74] sm:$0xf]
        %v6505 = vld [vmem:[%s273 + $0x78] sm:$0xf]
        %v6506 = vld [vmem:[%s273 + $0x7c] sm:$0xf]
        %v6507 = vunpack.c.l.bf16 %v6475
        %v6508 = vunpack.c.l.bf16 %v6476
        %v6509 = vunpack.c.l.bf16 %v6477
        %v6510 = vunpack.c.l.bf16 %v6478
        %v6511 = vunpack.c.l.bf16 %v6479
        %v6512 = vunpack.c.l.bf16 %v6480
        %v6513 = vunpack.c.l.bf16 %v6481
        %v6514 = vunpack.c.l.bf16 %v6482
        %v6515 = vunpack.c.l.bf16 %v6483
        %v6516 = vunpack.c.l.bf16 %v6484
        %v6517 = vunpack.c.l.bf16 %v6485
        %v6518 = vunpack.c.l.bf16 %v6486
        %v6519 = vunpack.c.l.bf16 %v6487
        %v6520 = vunpack.c.l.bf16 %v6488
        %v6521 = vunpack.c.l.bf16 %v6489
        %v6522 = vunpack.c.l.bf16 %v6490
        %v6523 = vunpack.c.l.bf16 %v6491
        %v6524 = vunpack.c.l.bf16 %v6492
        %v6525 = vunpack.c.l.bf16 %v6493
        %v6526 = vunpack.c.l.bf16 %v6494
        %v6527 = vunpack.c.l.bf16 %v6495
        %v6528 = vunpack.c.l.bf16 %v6496
        %v6529 = vunpack.c.l.bf16 %v6497
        %v6530 = vunpack.c.l.bf16 %v6498
        %v6531 = vunpack.c.l.bf16 %v6499
        %v6532 = vunpack.c.l.bf16 %v6500
        %v6533 = vunpack.c.l.bf16 %v6501
        %v6534 = vunpack.c.l.bf16 %v6502
        %v6535 = vunpack.c.l.bf16 %v6503
        %v6536 = vunpack.c.l.bf16 %v6504
        %v6537 = vunpack.c.l.bf16 %v6505
        %v6538 = vunpack.c.l.bf16 %v6506
        %6539 = vmatprep.subr.mxu0 0.0
        %6540 = vmatpush1.msra.mxu0 %v6507
        %6541 = vmatprep.subr.mxu0 0.0
        %6542 = vmatpush1.msra.mxu0 %v6508
        %6543 = vmatprep.subr.mxu0 0.0
        %6544 = vmatpush1.msra.mxu0 %v6509
        %6545 = vmatprep.subr.mxu0 0.0
        %6546 = vmatpush1.msra.mxu0 %v6510
        %6547 = vmatprep.subr.mxu0 0.0
        %6548 = vmatpush1.msra.mxu0 %v6511
        %6549 = vmatprep.subr.mxu0 0.0
        %6550 = vmatpush1.msra.mxu0 %v6512
        %6551 = vmatprep.subr.mxu0 0.0
        %6552 = vmatpush1.msra.mxu0 %v6513
        %6553 = vmatprep.subr.mxu0 0.0
        %6554 = vmatpush1.msra.mxu0 %v6514
        %6555 = vmatprep.subr.mxu0 0.0
        %6556 = vmatpush1.msra.mxu0 %v6515
        %6557 = vmatprep.subr.mxu0 0.0
        %6558 = vmatpush1.msra.mxu0 %v6516
        %6559 = vmatprep.subr.mxu0 0.0
        %6560 = vmatpush1.msra.mxu0 %v6517
        %6561 = vmatprep.subr.mxu0 0.0
        %6562 = vmatpush1.msra.mxu0 %v6518
        %6563 = vmatprep.subr.mxu0 0.0
        %6564 = vmatpush1.msra.mxu0 %v6519
        %6565 = vmatprep.subr.mxu0 0.0
        %6566 = vmatpush1.msra.mxu0 %v6520
        %6567 = vmatprep.subr.mxu0 0.0
        %6568 = vmatpush1.msra.mxu0 %v6521
        %6569 = vmatprep.subr.mxu0 0.0
        %6570 = vmatpush1.msra.mxu0 %v6522
        %6571 = vmatprep.subr.mxu0 0.0
        %6572 = vmatpush1.msra.mxu0 %v6523
        %6573 = vmatprep.subr.mxu0 0.0
        %6574 = vmatpush1.msra.mxu0 %v6524
        %6575 = vmatprep.subr.mxu0 0.0
        %6576 = vmatpush1.msra.mxu0 %v6525
        %6577 = vmatprep.subr.mxu0 0.0
        %6578 = vmatpush1.msra.mxu0 %v6526
        %6579 = vmatprep.subr.mxu0 0.0
        %6580 = vmatpush1.msra.mxu0 %v6527
        %6581 = vmatprep.subr.mxu0 0.0
        %6582 = vmatpush1.msra.mxu0 %v6528
        %6583 = vmatprep.subr.mxu0 0.0
        %6584 = vmatpush1.msra.mxu0 %v6529
        %6585 = vmatprep.subr.mxu0 0.0
        %6586 = vmatpush1.msra.mxu0 %v6530
        %6587 = vmatprep.subr.mxu0 0.0
        %6588 = vmatpush1.msra.mxu0 %v6531
        %6589 = vmatprep.subr.mxu0 0.0
        %6590 = vmatpush1.msra.mxu0 %v6532
        %6591 = vmatprep.subr.mxu0 0.0
        %6592 = vmatpush1.msra.mxu0 %v6533
        %6593 = vmatprep.subr.mxu0 0.0
        %6594 = vmatpush1.msra.mxu0 %v6534
        %6595 = vmatprep.subr.mxu0 0.0
        %6596 = vmatpush1.msra.mxu0 %v6535
        %6597 = vmatprep.subr.mxu0 0.0
        %6598 = vmatpush1.msra.mxu0 %v6536
        %6599 = vmatprep.subr.mxu0 0.0
        %6600 = vmatpush1.msra.mxu0 %v6537
        %6601 = vmatprep.subr.mxu0 0.0
        %6602 = vmatpush1.msra.mxu0 %v6538
        %6603 = vmatprep.mubr.f32.mxu0 %v6473
        %6604 = vmatmul.mubr.f32.gmra.mrb[0].mxu0 %v6472
        %v6605 = vpop.f32.mrb[0].mxu0
        %v6606 = vadd.f32 0.0, %v6605
        %v6607 = vpop.f32.mrb[0].mxu0
        %6608 = vdwg.mxu0
        %v6609 = vadd.f32 %v6474, %v6606
        %vm6610 = vcmask 99328
        %6611 = vst.msk [vmem:[%s5] sm:$0x3] %vm6610, %v6609
        %p6612 = scmp.eq.s32.totalorder %s19, 3
        // Predicated region
        $region49: #{discriminator_forward.5} parent=39 // pred_check
          %p6613 = pneg %p6612
        $region50: #{discriminator_forward.5} parent=39 // pred_check_branch
          %6615 = sbr.rel (%p6613) target = $region52
        $region51: #{discriminator_forward.5} parent=39 // pred_region
          %v6616 = vld [vmem:[%s5] sm:$0x3]
          %v6617 = vld [vmem:[%s4] sm:$0x1]
          %v6618 = vlaneseq
          %v6619 = vshrl.u32 %v6618, 7
          %v6620 = vsub.s32 0, %v6619
          %v6621 = vrot.slane %v6617, %v6620
          %v6622 = vadd.f32 %v6616, %v6621
          %v6623 = vmul.f32 %v6622, 0.5
          %v6624 = vtanh.pop %v6623
          %v6625 = vadd.f32 %v6624, 1.0
          %v6626 = vmul.f32 %v6625, 0.5
          %v6627 = vld [vmem:[%s4 + $0x1] sm:$0x1]
          %v6628 = vld [vmem:[%s4 + $0x2] sm:$0x1]
          %v6629 = vsel %vm6610, %v6622, 0.0
          %v6630 = vrot.slane %v6629, 4
          %v6631 = vadd.f32 %v6629, %v6630
          %v6632 = vrot.slane %v6631, 2
          %v6633 = vadd.f32 %v6631, %v6632
          %v6634 = vrot.slane %v6633, 1
          %v6635 = vadd.f32 %v6633, %v6634
          %v6636 = vmul.f32 %v6635, %v6419
          %v6637 = vsub.f32 %v6622, %v6636
          %v6638 = vmul.f32 %v6637, %v6637
          %v6639 = vsel %vm6610, %v6638, 0.0
          %v6640 = vrot.slane %v6639, 4
          %v6641 = vadd.f32 %v6639, %v6640
          %v6642 = vrot.slane %v6641, 2
          %v6643 = vadd.f32 %v6641, %v6642
          %v6644 = vrot.slane %v6643, 1
          %v6645 = vadd.f32 %v6643, %v6644
          %v6646 = vmul.f32 %v6645, %v6419
          %v6647 = vadd.f32 %v6646, 1e-05
          %v6648 = vrsqrt.pop %v6647
          %v6649 = vmul.f32 %v6637, %v6648
          %v6650 = vlaneseq
          %v6651 = vshrl.u32 %v6650, 7
          %v6652 = vsub.s32 0, %v6651
          %v6653 = vrot.slane %v6627, %v6652
          %v6654 = vmul.f32 %v6649, %v6653
          %v6655 = vlaneseq
          %v6656 = vshrl.u32 %v6655, 7
          %v6657 = vsub.s32 0, %v6656
          %v6658 = vrot.slane %v6628, %v6657
          %v6659 = vadd.f32 %v6654, %v6658
          %vm6660 = vcmp.ge.f32.partialorder %v6659, 0.0
          %v6661 = vmul.f32 %v6659, 0.1
          %v6662 = vsel %vm6660, %v6659, %v6661
          %v6663 = vlaneseq
          %v6664 = vand.u32 %v6663, 127
          %vm6665 = vcmp.eq.s32.totalorder %v6664, 0
          %v6666 = vsel %vm6665, %v6626, %v6662
          %6667 = vst.msk [vmem:[%s5] sm:$0x3] %vm6610, %v6666
        $region52: #{discriminator_forward.5} parent=39 // pred_fallthru
          _
        // Predicated region
        $region53: #{discriminator_forward.5} parent=39 // pred_check
          %p6668 = pneg %p152
        $region54: #{discriminator_forward.5} parent=39 // pred_check_branch
          %6670 = sbr.rel (%p6668) target = $region56
        $region55: #{discriminator_forward.5} parent=39 // pred_region
          _
        $region56: #{discriminator_forward.5} parent=39 // pred_fallthru
          _
        // Predicated region
        $region57: #{discriminator_forward.5} parent=39 // pred_check
          %p6671 = pneg %p152
        $region58: #{discriminator_forward.5} parent=39 // pred_check_branch
          %6673 = sbr.rel (%p6671) target = $region60
        $region59: #{discriminator_forward.5} parent=39 // pred_region
          _
        $region60: #{discriminator_forward.5} parent=39 // pred_fallthru
          _
      $region40: #{discriminator_forward.5} parent=5 // pred_fallthru
        _
      %p6674 = scmp.le.s32.totalorder 2, %s14
      // Predicated region
      $region61: #{discriminator_forward.5} parent=5 // pred_check
        %p6675 = pneg %p6674
      $region62: #{discriminator_forward.5} parent=5 // pred_check_branch
        %6677 = sbr.rel (%p6675) target = $region64
      $region63: #{discriminator_forward.5} parent=5 // pred_region
        %s6678 = ssub.s32 %s14, 2
      $region64: #{discriminator_forward.5} parent=5 // pred_fallthru
        _
    $region6: #{discriminator_forward.5} parent=1 // loop_footer
      %s18 = sadd.s32 1, %s14
    $region7: #{discriminator_forward.5} parent=1 // loop_footer_branch
      %13 = sbr.rel target = $region3
    $region8: #{discriminator_forward.5} parent=1 // loop_exit
      _
    %6679 = vsyncpa [#allocation3], 1
    %s6680 = scalar_lea.sflag [#allocation3], 1
    %6681 = vsyncpa %s6680, 1

</llo_original>
